<compile_context>
chip_gen: v6e
topology: v6e:2x2x1
jax: 0.10.0
libtpu: 0.0.40
codegen_flags: <defaults>
</compile_context>

<pallas_src>
import functools

import jax
import jax.numpy as jnp
import numpy as np
from jax import lax
from jax.experimental import pallas as pl
from jax.experimental.pallas import tpu as pltpu


def _fused_dilation_block_kernel(x_ref, w_ref, b_ref, o_ref, pad_ref, *,
                                 H, W, C, dilations, pad_max, compute_dtype):
    """All four conv+ReLU stages for one batch element.

    x_ref  : (1, C, H, W)                 input activation (f32, NCHW)
    w_ref  : (4, C, 9*C)                  per-stage im2col weight matrices (bf16)
    b_ref  : (4, C, 1)                    per-stage biases (f32)
    o_ref  : (1, 4*C, H*W)                concatenated output (lane-dense last dim)
    pad_ref: (C, H+2*pad_max, W+2*pad_max) VMEM halo scratch (f32)
    """
    HW = H * W

    # Zero the halo scratch once; only the centre is overwritten per stage, so
    # the zero border survives all four stages.
    pad_ref[...] = jnp.zeros_like(pad_ref)

    cur = x_ref[0].astype(jnp.float32)                     # (C, H, W)
    outs = []
    for stage in range(4):                                 # statically unrolled
        d = dilations[stage]

        # Place the current activation in the centre of the padded scratch.
        pad_ref[:, pad_max:pad_max + H, pad_max:pad_max + W] = cur

        # im2col patch matrix: rows ordered (kh, kw) outer, c_in inner —
        # matches the packing of w_ref done in the wrapper.
        taps = []
        for kh in range(3):
            for kw in range(3):
                r0 = pad_max + (kh - 1) * d
                c0 = pad_max + (kw - 1) * d
                taps.append(pad_ref[:, r0:r0 + H, c0:c0 + W].reshape(C, HW))
        patches = jnp.concatenate(taps, axis=0).astype(compute_dtype)   # (9C, HW)

        # One MXU matmul per stage (bf16 x bf16 -> f32), bias + ReLU in f32.
        acc = jnp.dot(w_ref[stage], patches,
                      preferred_element_type=jnp.float32)               # (C, HW)
        acc = acc + b_ref[stage].astype(jnp.float32)                    # (C,1) bcast
        act = jnp.maximum(acc, 0.0)                                     # f32
        outs.append(act)

        if stage < 3:
            cur = act.reshape(C, H, W)                     # feed next stage (VMEM-resident)

    # Channel concat == a single lane-dense (4C, H*W) store.
    o_ref[0] = jnp.concatenate(outs, axis=0).astype(o_ref.dtype)


def dilation_block(x_nchw, params, dilation=(1, 1, 1, 1), padding=(1, 1, 1, 1),
                   compute_dtype=jnp.bfloat16):
    """Forward pass matching DilationBlock: 4x (3x3 dilated conv + ReLU), concat on channels."""
    N, C, H, W = x_nchw.shape
    dilation = tuple(int(d) for d in dilation)
    padding = tuple(int(p) for p in padding)
    # The channel concat is only shape-consistent when every stage preserves HxW,
    # i.e. padding[i] == dilation[i] for a 3x3 stride-1 conv.
    assert all(p == d for p, d in zip(padding, dilation)), (
        "DilationBlock requires padding[i] == dilation[i] so all four outputs share HxW")
    pad_max = max(padding)

    # Pack weights: OIHW (C,C,3,3) -> (C_out, 9*C_in), rows ordered (kh, kw) outer,
    # c_in inner, matching the kernel's patch-matrix layout.  bf16 MXU operands.
    w_stacked = jnp.stack(
        [jnp.transpose(params[f"w{i}"], (0, 2, 3, 1)).reshape(C, 9 * C)
         for i in range(1, 5)], axis=0).astype(compute_dtype)            # (4, C, 9C)
    b_stacked = jnp.stack(
        [params[f"b{i}"].reshape(C, 1) for i in range(1, 5)], axis=0
    ).astype(jnp.float32)                                                # (4, C, 1)

    kernel = functools.partial(
        _fused_dilation_block_kernel,
        H=H, W=W, C=C, dilations=dilation, pad_max=pad_max,
        compute_dtype=compute_dtype)

    out_flat = pl.pallas_call(
        kernel,
        out_shape=jax.ShapeDtypeStruct((N, 4 * C, H * W), x_nchw.dtype),
        grid=(N,),
        in_specs=[
            pl.BlockSpec((1, C, H, W), lambda n: (n, 0, 0, 0)),          # per-batch input
            pl.BlockSpec((4, C, 9 * C), lambda n: (0, 0, 0)),            # all 4 weight mats
            pl.BlockSpec((4, C, 1), lambda n: (0, 0, 0)),                # all 4 biases
        ],
        out_specs=pl.BlockSpec((1, 4 * C, H * W), lambda n: (n, 0, 0)),  # lane-dense output
        scratch_shapes=[
            pltpu.VMEM((C, H + 2 * pad_max, W + 2 * pad_max), jnp.float32),
        ],
        compiler_params=pltpu.CompilerParams(
            dimension_semantics=("parallel",)),
    )(x_nchw, w_stacked, b_stacked)

    # (N, 4C, H*W) -> (N, 4C, H, W): contiguous reshape, no transpose.
    return out_flat.reshape(N, 4 * C, H, W)


def init_params(key, num_channels):
    """Deterministic synthetic parameters in PyTorch layout (OIHW weights, (C,) bias)."""
    params = {}
    for i in range(1, 5):
        key, kw, kb = jax.random.split(key, 3)
        params[f"w{i}"] = jax.random.normal(
            kw, (num_channels, num_channels, 3, 3), jnp.float32) * 0.1
        params[f"b{i}"] = jax.random.normal(kb, (num_channels,), jnp.float32) * 0.1
    return params


def _reference_block(x_nchw, params, dilation=(1, 1, 1, 1), padding=(1, 1, 1, 1),
                     compute_dtype=jnp.bfloat16):
    """Pure-JAX reference (lax.conv) with matching bf16-operand / f32-accumulate math."""
    cur = x_nchw
    outs = []
    for i in range(1, 5):
        d, p = dilation[i - 1], padding[i - 1]
        y = lax.conv_general_dilated(
            cur.astype(compute_dtype), params[f"w{i}"].astype(compute_dtype),
            window_strides=(1, 1), padding=[(p, p), (p, p)],
            rhs_dilation=(d, d),
            dimension_numbers=("NCHW", "OIHW", "NCHW"),
            preferred_element_type=jnp.float32)
        y = y + params[f"b{i}"].reshape(1, -1, 1, 1)
        y = jnp.maximum(y, 0.0)
        outs.append(y)
        cur = y
    return jnp.concatenate(outs, axis=1).astype(x_nchw.dtype)


if __name__ == "__main__":
    key = jax.random.PRNGKey(0)
    key, kx = jax.random.split(key)

    N, C, H, W = 2, 4, 16, 16
    x = jax.random.normal(kx, (N, C, H, W), jnp.float32)
    params = init_params(key, C)

    out = jax.block_until_ready(dilation_block(x, params))
    assert out.shape == (N, 4 * C, H, W), out.shape

    ref = jax.block_until_ready(_reference_block(x, params))
    np.testing.assert_allclose(np.asarray(out), np.asarray(ref), rtol=2e-2, atol=2e-2)
    print("KERNEL_OK")
</pallas_src>

<mosaic_0001>
module attributes {stable_mosaic.version = 11 : i64} {
  func.func @_fused_dilation_block_kernel(%arg0: i32, %arg1: memref<1x4x16x16xf32, #tpu.memory_space<vmem>>, %arg2: memref<4x4x36xbf16, #tpu.memory_space<vmem>>, %arg3: memref<4x4x1xf32, #tpu.memory_space<vmem>>, %arg4: memref<1x16x256xf32, #tpu.memory_space<vmem>>, %arg5: memref<4x18x18xf32, #tpu.memory_space<vmem>>) attributes {dimension_semantics = [#tpu.dimension_semantics<parallel>], iteration_bounds = array<i64: 2>, scalar_prefetch = 0 : i64, scratch_operands = 1 : i64, tpu.core_type = #tpu.core_type<tc>, window_params = [{transform_indices = @transform_0, window_bounds = array<i64: 1, 4, 16, 16>}, {pipeline_mode = #tpu.pipeline_mode<synchronous>, transform_indices = @transform_1, window_bounds = array<i64: 4, 4, 36>}, {pipeline_mode = #tpu.pipeline_mode<synchronous>, transform_indices = @transform_2, window_bounds = array<i64: 4, 4, 1>}, {transform_indices = @transform_3, window_bounds = array<i64: 1, 16, 256>}]} {
    %cst = arith.constant 0.000000e+00 : f32
    %0 = vector.broadcast %cst : f32 to vector<4x18x18xf32>
    %c0 = arith.constant 0 : index
    %c0_0 = arith.constant 0 : index
    %c0_1 = arith.constant 0 : index
    %1 = vector.load %arg5[%c0, %c0_0, %c0_1] : memref<4x18x18xf32, #tpu.memory_space<vmem>>, vector<4x18x18xf32>
    tpu.vector_store %arg5[%c0, %c0_0, %c0_1], %0 {strides = array<i32>} : memref<4x18x18xf32, #tpu.memory_space<vmem>>, vector<4x18x18xf32>,
    %c0_2 = arith.constant 0 : index
    %c0_3 = arith.constant 0 : index
    %c0_4 = arith.constant 0 : index
    %c0_5 = arith.constant 0 : index
    %2 = vector.load %arg1[%c0_2, %c0_3, %c0_4, %c0_5] : memref<1x4x16x16xf32, #tpu.memory_space<vmem>>, vector<1x4x16x16xf32>
    %3 = vector.shape_cast %2 : vector<1x4x16x16xf32> to vector<4x16x16xf32>
    %c0_6 = arith.constant 0 : index
    %c1 = arith.constant 1 : index
    %c1_7 = arith.constant 1 : index
    %4 = vector.load %arg5[%c0_6, %c1, %c1_7] : memref<4x18x18xf32, #tpu.memory_space<vmem>>, vector<4x16x16xf32>
    tpu.vector_store %arg5[%c0_6, %c1, %c1_7], %3 {strides = array<i32>} : memref<4x18x18xf32, #tpu.memory_space<vmem>>, vector<4x16x16xf32>,
    %c0_8 = arith.constant 0 : index
    %c0_9 = arith.constant 0 : index
    %c0_10 = arith.constant 0 : index
    %5 = vector.load %arg5[%c0_8, %c0_9, %c0_10] : memref<4x18x18xf32, #tpu.memory_space<vmem>>, vector<4x16x16xf32>
    %6 = vector.shape_cast %5 : vector<4x16x16xf32> to vector<4x256xf32>
    %c0_11 = arith.constant 0 : index
    %c0_12 = arith.constant 0 : index
    %c1_13 = arith.constant 1 : index
    %7 = vector.load %arg5[%c0_11, %c0_12, %c1_13] : memref<4x18x18xf32, #tpu.memory_space<vmem>>, vector<4x16x16xf32>
    %8 = vector.shape_cast %7 : vector<4x16x16xf32> to vector<4x256xf32>
    %c0_14 = arith.constant 0 : index
    %c0_15 = arith.constant 0 : index
    %c2 = arith.constant 2 : index
    %9 = vector.load %arg5[%c0_14, %c0_15, %c2] : memref<4x18x18xf32, #tpu.memory_space<vmem>>, vector<4x16x16xf32>
    %10 = vector.shape_cast %9 : vector<4x16x16xf32> to vector<4x256xf32>
    %c0_16 = arith.constant 0 : index
    %c1_17 = arith.constant 1 : index
    %c0_18 = arith.constant 0 : index
    %11 = vector.load %arg5[%c0_16, %c1_17, %c0_18] : memref<4x18x18xf32, #tpu.memory_space<vmem>>, vector<4x16x16xf32>
    %12 = vector.shape_cast %11 : vector<4x16x16xf32> to vector<4x256xf32>
    %c0_19 = arith.constant 0 : index
    %c1_20 = arith.constant 1 : index
    %c1_21 = arith.constant 1 : index
    %13 = vector.load %arg5[%c0_19, %c1_20, %c1_21] : memref<4x18x18xf32, #tpu.memory_space<vmem>>, vector<4x16x16xf32>
    %14 = vector.shape_cast %13 : vector<4x16x16xf32> to vector<4x256xf32>
    %c0_22 = arith.constant 0 : index
    %c1_23 = arith.constant 1 : index
    %c2_24 = arith.constant 2 : index
    %15 = vector.load %arg5[%c0_22, %c1_23, %c2_24] : memref<4x18x18xf32, #tpu.memory_space<vmem>>, vector<4x16x16xf32>
    %16 = vector.shape_cast %15 : vector<4x16x16xf32> to vector<4x256xf32>
    %c0_25 = arith.constant 0 : index
    %c2_26 = arith.constant 2 : index
    %c0_27 = arith.constant 0 : index
    %17 = vector.load %arg5[%c0_25, %c2_26, %c0_27] : memref<4x18x18xf32, #tpu.memory_space<vmem>>, vector<4x16x16xf32>
    %18 = vector.shape_cast %17 : vector<4x16x16xf32> to vector<4x256xf32>
    %c0_28 = arith.constant 0 : index
    %c2_29 = arith.constant 2 : index
    %c1_30 = arith.constant 1 : index
    %19 = vector.load %arg5[%c0_28, %c2_29, %c1_30] : memref<4x18x18xf32, #tpu.memory_space<vmem>>, vector<4x16x16xf32>
    %20 = vector.shape_cast %19 : vector<4x16x16xf32> to vector<4x256xf32>
    %c0_31 = arith.constant 0 : index
    %c2_32 = arith.constant 2 : index
    %c2_33 = arith.constant 2 : index
    %21 = vector.load %arg5[%c0_31, %c2_32, %c2_33] : memref<4x18x18xf32, #tpu.memory_space<vmem>>, vector<4x16x16xf32>
    %22 = vector.shape_cast %21 : vector<4x16x16xf32> to vector<4x256xf32>
    %23 = tpu.concatenate %6, %8, %10, %12, %14, %16, %18, %20, %22 in 0 : vector<4x256xf32>, vector<4x256xf32>, vector<4x256xf32>, vector<4x256xf32>, vector<4x256xf32>, vector<4x256xf32>, vector<4x256xf32>, vector<4x256xf32>, vector<4x256xf32> -> vector<36x256xf32>
    %24 = arith.truncf %23 : vector<36x256xf32> to vector<36x256xbf16>
    %c0_34 = arith.constant 0 : index
    %c0_35 = arith.constant 0 : index
    %c0_36 = arith.constant 0 : index
    %25 = vector.load %arg2[%c0_34, %c0_35, %c0_36] : memref<4x4x36xbf16, #tpu.memory_space<vmem>>, vector<1x4x36xbf16>
    %26 = vector.shape_cast %25 : vector<1x4x36xbf16> to vector<4x36xbf16>
    %cst_37 = arith.constant dense<0.000000e+00> : vector<4x256xf32>
    %27 = tpu.matmul %26, %24, %cst_37 {dimension_numbers = #tpu.dot_dimension_numbers<[1], [0], [0], [1], [0, 0, 1, 1], [], []>} : vector<4x36xbf16>, vector<36x256xbf16>, vector<4x256xf32> -> vector<4x256xf32>
    %c0_38 = arith.constant 0 : index
    %c0_39 = arith.constant 0 : index
    %c0_40 = arith.constant 0 : index
    %28 = vector.load %arg3[%c0_38, %c0_39, %c0_40] : memref<4x4x1xf32, #tpu.memory_space<vmem>>, vector<1x4x1xf32>
    %29 = vector.shape_cast %28 : vector<1x4x1xf32> to vector<4x1xf32>
    %30 = vector.broadcast %29 : vector<4x1xf32> to vector<4x256xf32>
    %31 = arith.addf %27, %30 : vector<4x256xf32>
    %cst_41 = arith.constant 0.000000e+00 : f32
    %32 = vector.broadcast %cst_41 : f32 to vector<4x256xf32>
    %33 = arith.maximumf %31, %32 : vector<4x256xf32>
    %34 = vector.shape_cast %33 : vector<4x256xf32> to vector<4x16x16xf32>
    %c0_42 = arith.constant 0 : index
    %c1_43 = arith.constant 1 : index
    %c1_44 = arith.constant 1 : index
    %35 = vector.load %arg5[%c0_42, %c1_43, %c1_44] : memref<4x18x18xf32, #tpu.memory_space<vmem>>, vector<4x16x16xf32>
    tpu.vector_store %arg5[%c0_42, %c1_43, %c1_44], %34 {strides = array<i32>} : memref<4x18x18xf32, #tpu.memory_space<vmem>>, vector<4x16x16xf32>,
    %c0_45 = arith.constant 0 : index
    %c0_46 = arith.constant 0 : index
    %c0_47 = arith.constant 0 : index
    %36 = vector.load %arg5[%c0_45, %c0_46, %c0_47] : memref<4x18x18xf32, #tpu.memory_space<vmem>>, vector<4x16x16xf32>
    %37 = vector.shape_cast %36 : vector<4x16x16xf32> to vector<4x256xf32>
    %c0_48 = arith.constant 0 : index
    %c0_49 = arith.constant 0 : index
    %c1_50 = arith.constant 1 : index
    %38 = vector.load %arg5[%c0_48, %c0_49, %c1_50] : memref<4x18x18xf32, #tpu.memory_space<vmem>>, vector<4x16x16xf32>
    %39 = vector.shape_cast %38 : vector<4x16x16xf32> to vector<4x256xf32>
    %c0_51 = arith.constant 0 : index
    %c0_52 = arith.constant 0 : index
    %c2_53 = arith.constant 2 : index
    %40 = vector.load %arg5[%c0_51, %c0_52, %c2_53] : memref<4x18x18xf32, #tpu.memory_space<vmem>>, vector<4x16x16xf32>
    %41 = vector.shape_cast %40 : vector<4x16x16xf32> to vector<4x256xf32>
    %c0_54 = arith.constant 0 : index
    %c1_55 = arith.constant 1 : index
    %c0_56 = arith.constant 0 : index
    %42 = vector.load %arg5[%c0_54, %c1_55, %c0_56] : memref<4x18x18xf32, #tpu.memory_space<vmem>>, vector<4x16x16xf32>
    %43 = vector.shape_cast %42 : vector<4x16x16xf32> to vector<4x256xf32>
    %c0_57 = arith.constant 0 : index
    %c1_58 = arith.constant 1 : index
    %c1_59 = arith.constant 1 : index
    %44 = vector.load %arg5[%c0_57, %c1_58, %c1_59] : memref<4x18x18xf32, #tpu.memory_space<vmem>>, vector<4x16x16xf32>
    %45 = vector.shape_cast %44 : vector<4x16x16xf32> to vector<4x256xf32>
    %c0_60 = arith.constant 0 : index
    %c1_61 = arith.constant 1 : index
    %c2_62 = arith.constant 2 : index
    %46 = vector.load %arg5[%c0_60, %c1_61, %c2_62] : memref<4x18x18xf32, #tpu.memory_space<vmem>>, vector<4x16x16xf32>
    %47 = vector.shape_cast %46 : vector<4x16x16xf32> to vector<4x256xf32>
    %c0_63 = arith.constant 0 : index
    %c2_64 = arith.constant 2 : index
    %c0_65 = arith.constant 0 : index
    %48 = vector.load %arg5[%c0_63, %c2_64, %c0_65] : memref<4x18x18xf32, #tpu.memory_space<vmem>>, vector<4x16x16xf32>
    %49 = vector.shape_cast %48 : vector<4x16x16xf32> to vector<4x256xf32>
    %c0_66 = arith.constant 0 : index
    %c2_67 = arith.constant 2 : index
    %c1_68 = arith.constant 1 : index
    %50 = vector.load %arg5[%c0_66, %c2_67, %c1_68] : memref<4x18x18xf32, #tpu.memory_space<vmem>>, vector<4x16x16xf32>
    %51 = vector.shape_cast %50 : vector<4x16x16xf32> to vector<4x256xf32>
    %c0_69 = arith.constant 0 : index
    %c2_70 = arith.constant 2 : index
    %c2_71 = arith.constant 2 : index
    %52 = vector.load %arg5[%c0_69, %c2_70, %c2_71] : memref<4x18x18xf32, #tpu.memory_space<vmem>>, vector<4x16x16xf32>
    %53 = vector.shape_cast %52 : vector<4x16x16xf32> to vector<4x256xf32>
    %54 = tpu.concatenate %37, %39, %41, %43, %45, %47, %49, %51, %53 in 0 : vector<4x256xf32>, vector<4x256xf32>, vector<4x256xf32>, vector<4x256xf32>, vector<4x256xf32>, vector<4x256xf32>, vector<4x256xf32>, vector<4x256xf32>, vector<4x256xf32> -> vector<36x256xf32>
    %55 = arith.truncf %54 : vector<36x256xf32> to vector<36x256xbf16>
    %c1_72 = arith.constant 1 : index
    %c0_73 = arith.constant 0 : index
    %c0_74 = arith.constant 0 : index
    %56 = vector.load %arg2[%c1_72, %c0_73, %c0_74] : memref<4x4x36xbf16, #tpu.memory_space<vmem>>, vector<1x4x36xbf16>
    %57 = vector.shape_cast %56 : vector<1x4x36xbf16> to vector<4x36xbf16>
    %cst_75 = arith.constant dense<0.000000e+00> : vector<4x256xf32>
    %58 = tpu.matmul %57, %55, %cst_75 {dimension_numbers = #tpu.dot_dimension_numbers<[1], [0], [0], [1], [0, 0, 1, 1], [], []>} : vector<4x36xbf16>, vector<36x256xbf16>, vector<4x256xf32> -> vector<4x256xf32>
    %c1_76 = arith.constant 1 : index
    %c0_77 = arith.constant 0 : index
    %c0_78 = arith.constant 0 : index
    %59 = vector.load %arg3[%c1_76, %c0_77, %c0_78] : memref<4x4x1xf32, #tpu.memory_space<vmem>>, vector<1x4x1xf32>
    %60 = vector.shape_cast %59 : vector<1x4x1xf32> to vector<4x1xf32>
    %61 = vector.broadcast %60 : vector<4x1xf32> to vector<4x256xf32>
    %62 = arith.addf %58, %61 : vector<4x256xf32>
    %cst_79 = arith.constant 0.000000e+00 : f32
    %63 = vector.broadcast %cst_79 : f32 to vector<4x256xf32>
    %64 = arith.maximumf %62, %63 : vector<4x256xf32>
    %65 = vector.shape_cast %64 : vector<4x256xf32> to vector<4x16x16xf32>
    %c0_80 = arith.constant 0 : index
    %c1_81 = arith.constant 1 : index
    %c1_82 = arith.constant 1 : index
    %66 = vector.load %arg5[%c0_80, %c1_81, %c1_82] : memref<4x18x18xf32, #tpu.memory_space<vmem>>, vector<4x16x16xf32>
    tpu.vector_store %arg5[%c0_80, %c1_81, %c1_82], %65 {strides = array<i32>} : memref<4x18x18xf32, #tpu.memory_space<vmem>>, vector<4x16x16xf32>,
    %c0_83 = arith.constant 0 : index
    %c0_84 = arith.constant 0 : index
    %c0_85 = arith.constant 0 : index
    %67 = vector.load %arg5[%c0_83, %c0_84, %c0_85] : memref<4x18x18xf32, #tpu.memory_space<vmem>>, vector<4x16x16xf32>
    %68 = vector.shape_cast %67 : vector<4x16x16xf32> to vector<4x256xf32>
    %c0_86 = arith.constant 0 : index
    %c0_87 = arith.constant 0 : index
    %c1_88 = arith.constant 1 : index
    %69 = vector.load %arg5[%c0_86, %c0_87, %c1_88] : memref<4x18x18xf32, #tpu.memory_space<vmem>>, vector<4x16x16xf32>
    %70 = vector.shape_cast %69 : vector<4x16x16xf32> to vector<4x256xf32>
    %c0_89 = arith.constant 0 : index
    %c0_90 = arith.constant 0 : index
    %c2_91 = arith.constant 2 : index
    %71 = vector.load %arg5[%c0_89, %c0_90, %c2_91] : memref<4x18x18xf32, #tpu.memory_space<vmem>>, vector<4x16x16xf32>
    %72 = vector.shape_cast %71 : vector<4x16x16xf32> to vector<4x256xf32>
    %c0_92 = arith.constant 0 : index
    %c1_93 = arith.constant 1 : index
    %c0_94 = arith.constant 0 : index
    %73 = vector.load %arg5[%c0_92, %c1_93, %c0_94] : memref<4x18x18xf32, #tpu.memory_space<vmem>>, vector<4x16x16xf32>
    %74 = vector.shape_cast %73 : vector<4x16x16xf32> to vector<4x256xf32>
    %c0_95 = arith.constant 0 : index
    %c1_96 = arith.constant 1 : index
    %c1_97 = arith.constant 1 : index
    %75 = vector.load %arg5[%c0_95, %c1_96, %c1_97] : memref<4x18x18xf32, #tpu.memory_space<vmem>>, vector<4x16x16xf32>
    %76 = vector.shape_cast %75 : vector<4x16x16xf32> to vector<4x256xf32>
    %c0_98 = arith.constant 0 : index
    %c1_99 = arith.constant 1 : index
    %c2_100 = arith.constant 2 : index
    %77 = vector.load %arg5[%c0_98, %c1_99, %c2_100] : memref<4x18x18xf32, #tpu.memory_space<vmem>>, vector<4x16x16xf32>
    %78 = vector.shape_cast %77 : vector<4x16x16xf32> to vector<4x256xf32>
    %c0_101 = arith.constant 0 : index
    %c2_102 = arith.constant 2 : index
    %c0_103 = arith.constant 0 : index
    %79 = vector.load %arg5[%c0_101, %c2_102, %c0_103] : memref<4x18x18xf32, #tpu.memory_space<vmem>>, vector<4x16x16xf32>
    %80 = vector.shape_cast %79 : vector<4x16x16xf32> to vector<4x256xf32>
    %c0_104 = arith.constant 0 : index
    %c2_105 = arith.constant 2 : index
    %c1_106 = arith.constant 1 : index
    %81 = vector.load %arg5[%c0_104, %c2_105, %c1_106] : memref<4x18x18xf32, #tpu.memory_space<vmem>>, vector<4x16x16xf32>
    %82 = vector.shape_cast %81 : vector<4x16x16xf32> to vector<4x256xf32>
    %c0_107 = arith.constant 0 : index
    %c2_108 = arith.constant 2 : index
    %c2_109 = arith.constant 2 : index
    %83 = vector.load %arg5[%c0_107, %c2_108, %c2_109] : memref<4x18x18xf32, #tpu.memory_space<vmem>>, vector<4x16x16xf32>
    %84 = vector.shape_cast %83 : vector<4x16x16xf32> to vector<4x256xf32>
    %85 = tpu.concatenate %68, %70, %72, %74, %76, %78, %80, %82, %84 in 0 : vector<4x256xf32>, vector<4x256xf32>, vector<4x256xf32>, vector<4x256xf32>, vector<4x256xf32>, vector<4x256xf32>, vector<4x256xf32>, vector<4x256xf32>, vector<4x256xf32> -> vector<36x256xf32>
    %86 = arith.truncf %85 : vector<36x256xf32> to vector<36x256xbf16>
    %c2_110 = arith.constant 2 : index
    %c0_111 = arith.constant 0 : index
    %c0_112 = arith.constant 0 : index
    %87 = vector.load %arg2[%c2_110, %c0_111, %c0_112] : memref<4x4x36xbf16, #tpu.memory_space<vmem>>, vector<1x4x36xbf16>
    %88 = vector.shape_cast %87 : vector<1x4x36xbf16> to vector<4x36xbf16>
    %cst_113 = arith.constant dense<0.000000e+00> : vector<4x256xf32>
    %89 = tpu.matmul %88, %86, %cst_113 {dimension_numbers = #tpu.dot_dimension_numbers<[1], [0], [0], [1], [0, 0, 1, 1], [], []>} : vector<4x36xbf16>, vector<36x256xbf16>, vector<4x256xf32> -> vector<4x256xf32>
    %c2_114 = arith.constant 2 : index
    %c0_115 = arith.constant 0 : index
    %c0_116 = arith.constant 0 : index
    %90 = vector.load %arg3[%c2_114, %c0_115, %c0_116] : memref<4x4x1xf32, #tpu.memory_space<vmem>>, vector<1x4x1xf32>
    %91 = vector.shape_cast %90 : vector<1x4x1xf32> to vector<4x1xf32>
    %92 = vector.broadcast %91 : vector<4x1xf32> to vector<4x256xf32>
    %93 = arith.addf %89, %92 : vector<4x256xf32>
    %cst_117 = arith.constant 0.000000e+00 : f32
    %94 = vector.broadcast %cst_117 : f32 to vector<4x256xf32>
    %95 = arith.maximumf %93, %94 : vector<4x256xf32>
    %96 = vector.shape_cast %95 : vector<4x256xf32> to vector<4x16x16xf32>
    %c0_118 = arith.constant 0 : index
    %c1_119 = arith.constant 1 : index
    %c1_120 = arith.constant 1 : index
    %97 = vector.load %arg5[%c0_118, %c1_119, %c1_120] : memref<4x18x18xf32, #tpu.memory_space<vmem>>, vector<4x16x16xf32>
    tpu.vector_store %arg5[%c0_118, %c1_119, %c1_120], %96 {strides = array<i32>} : memref<4x18x18xf32, #tpu.memory_space<vmem>>, vector<4x16x16xf32>,
    %c0_121 = arith.constant 0 : index
    %c0_122 = arith.constant 0 : index
    %c0_123 = arith.constant 0 : index
    %98 = vector.load %arg5[%c0_121, %c0_122, %c0_123] : memref<4x18x18xf32, #tpu.memory_space<vmem>>, vector<4x16x16xf32>
    %99 = vector.shape_cast %98 : vector<4x16x16xf32> to vector<4x256xf32>
    %c0_124 = arith.constant 0 : index
    %c0_125 = arith.constant 0 : index
    %c1_126 = arith.constant 1 : index
    %100 = vector.load %arg5[%c0_124, %c0_125, %c1_126] : memref<4x18x18xf32, #tpu.memory_space<vmem>>, vector<4x16x16xf32>
    %101 = vector.shape_cast %100 : vector<4x16x16xf32> to vector<4x256xf32>
    %c0_127 = arith.constant 0 : index
    %c0_128 = arith.constant 0 : index
    %c2_129 = arith.constant 2 : index
    %102 = vector.load %arg5[%c0_127, %c0_128, %c2_129] : memref<4x18x18xf32, #tpu.memory_space<vmem>>, vector<4x16x16xf32>
    %103 = vector.shape_cast %102 : vector<4x16x16xf32> to vector<4x256xf32>
    %c0_130 = arith.constant 0 : index
    %c1_131 = arith.constant 1 : index
    %c0_132 = arith.constant 0 : index
    %104 = vector.load %arg5[%c0_130, %c1_131, %c0_132] : memref<4x18x18xf32, #tpu.memory_space<vmem>>, vector<4x16x16xf32>
    %105 = vector.shape_cast %104 : vector<4x16x16xf32> to vector<4x256xf32>
    %c0_133 = arith.constant 0 : index
    %c1_134 = arith.constant 1 : index
    %c1_135 = arith.constant 1 : index
    %106 = vector.load %arg5[%c0_133, %c1_134, %c1_135] : memref<4x18x18xf32, #tpu.memory_space<vmem>>, vector<4x16x16xf32>
    %107 = vector.shape_cast %106 : vector<4x16x16xf32> to vector<4x256xf32>
    %c0_136 = arith.constant 0 : index
    %c1_137 = arith.constant 1 : index
    %c2_138 = arith.constant 2 : index
    %108 = vector.load %arg5[%c0_136, %c1_137, %c2_138] : memref<4x18x18xf32, #tpu.memory_space<vmem>>, vector<4x16x16xf32>
    %109 = vector.shape_cast %108 : vector<4x16x16xf32> to vector<4x256xf32>
    %c0_139 = arith.constant 0 : index
    %c2_140 = arith.constant 2 : index
    %c0_141 = arith.constant 0 : index
    %110 = vector.load %arg5[%c0_139, %c2_140, %c0_141] : memref<4x18x18xf32, #tpu.memory_space<vmem>>, vector<4x16x16xf32>
    %111 = vector.shape_cast %110 : vector<4x16x16xf32> to vector<4x256xf32>
    %c0_142 = arith.constant 0 : index
    %c2_143 = arith.constant 2 : index
    %c1_144 = arith.constant 1 : index
    %112 = vector.load %arg5[%c0_142, %c2_143, %c1_144] : memref<4x18x18xf32, #tpu.memory_space<vmem>>, vector<4x16x16xf32>
    %113 = vector.shape_cast %112 : vector<4x16x16xf32> to vector<4x256xf32>
    %c0_145 = arith.constant 0 : index
    %c2_146 = arith.constant 2 : index
    %c2_147 = arith.constant 2 : index
    %114 = vector.load %arg5[%c0_145, %c2_146, %c2_147] : memref<4x18x18xf32, #tpu.memory_space<vmem>>, vector<4x16x16xf32>
    %115 = vector.shape_cast %114 : vector<4x16x16xf32> to vector<4x256xf32>
    %116 = tpu.concatenate %99, %101, %103, %105, %107, %109, %111, %113, %115 in 0 : vector<4x256xf32>, vector<4x256xf32>, vector<4x256xf32>, vector<4x256xf32>, vector<4x256xf32>, vector<4x256xf32>, vector<4x256xf32>, vector<4x256xf32>, vector<4x256xf32> -> vector<36x256xf32>
    %117 = arith.truncf %116 : vector<36x256xf32> to vector<36x256xbf16>
    %c3 = arith.constant 3 : index
    %c0_148 = arith.constant 0 : index
    %c0_149 = arith.constant 0 : index
    %118 = vector.load %arg2[%c3, %c0_148, %c0_149] : memref<4x4x36xbf16, #tpu.memory_space<vmem>>, vector<1x4x36xbf16>
    %119 = vector.shape_cast %118 : vector<1x4x36xbf16> to vector<4x36xbf16>
    %cst_150 = arith.constant dense<0.000000e+00> : vector<4x256xf32>
    %120 = tpu.matmul %119, %117, %cst_150 {dimension_numbers = #tpu.dot_dimension_numbers<[1], [0], [0], [1], [0, 0, 1, 1], [], []>} : vector<4x36xbf16>, vector<36x256xbf16>, vector<4x256xf32> -> vector<4x256xf32>
    %c3_151 = arith.constant 3 : index
    %c0_152 = arith.constant 0 : index
    %c0_153 = arith.constant 0 : index
    %121 = vector.load %arg3[%c3_151, %c0_152, %c0_153] : memref<4x4x1xf32, #tpu.memory_space<vmem>>, vector<1x4x1xf32>
    %122 = vector.shape_cast %121 : vector<1x4x1xf32> to vector<4x1xf32>
    %123 = vector.broadcast %122 : vector<4x1xf32> to vector<4x256xf32>
    %124 = arith.addf %120, %123 : vector<4x256xf32>
    %cst_154 = arith.constant 0.000000e+00 : f32
    %125 = vector.broadcast %cst_154 : f32 to vector<4x256xf32>
    %126 = arith.maximumf %124, %125 : vector<4x256xf32>
    %127 = tpu.concatenate %33, %64, %95, %126 in 0 : vector<4x256xf32>, vector<4x256xf32>, vector<4x256xf32>, vector<4x256xf32> -> vector<16x256xf32>
    %c0_155 = arith.constant 0 : index
    %c0_156 = arith.constant 0 : index
    %c0_157 = arith.constant 0 : index
    %128 = vector.load %arg4[%c0_155, %c0_156, %c0_157] : memref<1x16x256xf32, #tpu.memory_space<vmem>>, vector<1x16x256xf32>
    %129 = vector.shape_cast %128 : vector<1x16x256xf32> to vector<16x256xf32>
    %130 = vector.shape_cast %127 : vector<16x256xf32> to vector<1x16x256xf32>
    tpu.vector_store %arg4[%c0_155, %c0_156, %c0_157], %130 {strides = array<i32>} : memref<1x16x256xf32, #tpu.memory_space<vmem>>, vector<1x16x256xf32>,
    return
  }
  func.func @transform_0(%arg0: i32) -> (i32, i32, i32, i32) {
    %c0_i32 = arith.constant 0 : i32
    %c0_i32_0 = arith.constant 0 : i32
    %c0_i32_1 = arith.constant 0 : i32
    %c0_i32_2 = arith.constant 0 : i32
    return %arg0, %c0_i32, %c0_i32_0, %c0_i32_1 : i32, i32, i32, i32
  }
  func.func @transform_1(%arg0: i32) -> (i32, i32, i32) {
    %c0_i32 = arith.constant 0 : i32
    %c0_i32_0 = arith.constant 0 : i32
    %c0_i32_1 = arith.constant 0 : i32
    %c0_i32_2 = arith.constant 0 : i32
    return %c0_i32, %c0_i32_0, %c0_i32_1 : i32, i32, i32
  }
  func.func @transform_2(%arg0: i32) -> (i32, i32, i32) {
    %c0_i32 = arith.constant 0 : i32
    %c0_i32_0 = arith.constant 0 : i32
    %c0_i32_1 = arith.constant 0 : i32
    %c0_i32_2 = arith.constant 0 : i32
    return %c0_i32, %c0_i32_0, %c0_i32_1 : i32, i32, i32
  }
  func.func @transform_3(%arg0: i32) -> (i32, i32, i32) {
    %c0_i32 = arith.constant 0 : i32
    %c0_i32_0 = arith.constant 0 : i32
    %c0_i32_1 = arith.constant 0 : i32
    return %arg0, %c0_i32, %c0_i32_0 : i32, i32, i32
  }
}

</mosaic_0001>

<llo_original>
// kernel: tpu_custom_call.1
$region0: #{tpu_custom_call.1}
  #allocation0 [shape = 'u32[]', space=smem, size = 0x4, offset = 0x4, fixed_abs, tag = 'smem constant byte address 0x4 - core index']
  #allocation1 [shape = 'u32[144,128]{1,0:T(1,128)}', space=vmem, size = 0x12000, scoped, tag = 'internal scratch']
  #allocation2 [shape = 'f32[4,18,18]{2,1,0:T(8,128)}', space=vmem, size = 0xc000, scoped, tag = 'scratch operand']
  %s0 = inlined_call_operand.hbm [shape: f32[2,4,16,16], index: 0, kind: input, shape index: {}]
  %s1 = inlined_call_operand.vmem [shape: bf16[4,4,36], index: 1, kind: input, shape index: {}]
  %s2 = inlined_call_operand.vmem [shape: f32[4,4,1], index: 2, kind: input, shape index: {}]
  %s3 = inlined_call_operand.hbm [shape: f32[2,16,256], index: 3, kind: output, shape index: {}]
  %s4 = sld [smem:[#allocation0]]
  $region49: #{tpu_custom_call.1} parent=0
    _
  %s6 = ssub.s32 1, %s4
  %s7 = scalar_select 0, %s6, %s4
  $region1: #{tpu_custom_call.1} parent=0
    #allocation3 [shape = 'u8[65536]{0}', space=vmem, size = 0x10000, scoped, tag = 'input window, operand 0']
    #allocation4 [shape = 's32[2]{0}', space=sflag, size = 0x8, scoped, tag = 'scoped memory for tpu_custom_call.1']
    #allocation5 [shape = 's32[2]{0}', space=sflag, size = 0x8, scoped, tag = 'scoped memory for tpu_custom_call.1']
    #allocation6 [shape = 'u8[32768]{0}', space=vmem, size = 0x8000, scoped, tag = 'output window, operand 0']
    %8 = vsyncpa [#allocation4], 0
    %s9 = scalar_lea.sflag [#allocation4], 1
    %10 = vsyncpa %s9, 0
    %11 = vsyncpa [#allocation5], 0
    %s12 = scalar_lea.sflag [#allocation5], 1
    %13 = vsyncpa %s12, 0
    loop: start=0, step=1, limit=4
    $region2: #{tpu_custom_call.1} parent=1 // loop_pre_header
      _
    $region3: #{tpu_custom_call.1} parent=1 // loop_header
      %s15 = sphi 0, %s19
      %p16 = scmp.ge.s32.totalorder %s15, 4
      %s25 = sphi 0, %s27
      %s28 = sphi 0, %s25
      %s29 = sphi 0, %s28
      %s45 = sphi 0, %s29
      %s49 = sphi 0, %s49
      %s51 = sphi 0, %s49
      %s52 = sphi 0, %s51
      %s66 = sphi 0, %s52
      %s70 = sphi 0, %s70
      %s72 = sphi 0, %s70
      %s73 = sphi 0, %s72
      %s87 = sphi 0, %s73
      %s93 = sphi 0, %s95
      %s96 = sphi 0, %s93
      %s97 = sphi 0, %s96
      %s113 = sphi 0, %s97
    $region4: #{tpu_custom_call.1} parent=1 // loop_header_branch
      %18 = sbr.rel (%p16) target = $region8
    $region5: #{tpu_custom_call.1} parent=1 // loop_body
      %s20 = ssub.s32 %s15, 1
      %s21 = ssub.s32 %s15, 2
      %s22 = sadd.s32 %s15, 1
      %s23 = ssub.s32 %s15, %s22
      %p24 = scmp.eq.s32.totalorder %s23, 0
      %s26 = sadd.s32 %s25, 1
      %s27 = scalar_select %p24, %s25, %s26
      %p30 = pneg %p24
      %p31 = scmp.eq.s32.totalorder %s15, 1
      %p32 = por %p30, %p31
      %p33 = scmp.ne.s32.totalorder %s25, %s28
      %p34 = scmp.eq.s32.totalorder %s15, 0
      %p35 = por %p33, %p34
      %p36 = scmp.ne.s32.totalorder %s25, %s28
      %p37 = scmp.eq.s32.totalorder %s20, 1
      %p38 = por %p36, %p37
      %p39 = scmp.ne.s32.totalorder %s28, %s29
      %p40 = scmp.eq.s32.totalorder %s20, 0
      %p41 = por %p39, %p40
      %p42 = scmp.ne.s32.totalorder %s28, %s29
      %p43 = scmp.eq.s32.totalorder %s21, 1
      %p44 = por %p42, %p43
      %p46 = scmp.ne.s32.totalorder %s29, %s45
      %p47 = scmp.eq.s32.totalorder %s21, 0
      %p48 = por %p46, %p47
      %s50 = sadd.s32 %s49, 1
      %p53 = scmp.eq.s32.totalorder %s15, 1
      %p54 = scmp.ne.s32.totalorder %s49, %s51
      %p55 = scmp.eq.s32.totalorder %s15, 0
      %p56 = por %p54, %p55
      %p57 = scmp.ne.s32.totalorder %s49, %s51
      %p58 = scmp.eq.s32.totalorder %s20, 1
      %p59 = por %p57, %p58
      %p60 = scmp.ne.s32.totalorder %s51, %s52
      %p61 = scmp.eq.s32.totalorder %s20, 0
      %p62 = por %p60, %p61
      %p63 = scmp.ne.s32.totalorder %s51, %s52
      %p64 = scmp.eq.s32.totalorder %s21, 1
      %p65 = por %p63, %p64
      %p67 = scmp.ne.s32.totalorder %s52, %s66
      %p68 = scmp.eq.s32.totalorder %s21, 0
      %p69 = por %p67, %p68
      %s71 = sadd.s32 %s70, 1
      %p74 = scmp.eq.s32.totalorder %s15, 1
      %p75 = scmp.ne.s32.totalorder %s70, %s72
      %p76 = scmp.eq.s32.totalorder %s15, 0
      %p77 = por %p75, %p76
      %p78 = scmp.ne.s32.totalorder %s70, %s72
      %p79 = scmp.eq.s32.totalorder %s20, 1
      %p80 = por %p78, %p79
      %p81 = scmp.ne.s32.totalorder %s72, %s73
      %p82 = scmp.eq.s32.totalorder %s20, 0
      %p83 = por %p81, %p82
      %p84 = scmp.ne.s32.totalorder %s72, %s73
      %p85 = scmp.eq.s32.totalorder %s21, 1
      %p86 = por %p84, %p85
      %p88 = scmp.ne.s32.totalorder %s73, %s87
      %p89 = scmp.eq.s32.totalorder %s21, 0
      %p90 = por %p88, %p89
      %s91 = ssub.s32 %s15, %s22
      %p92 = scmp.eq.s32.totalorder %s91, 0
      %s94 = sadd.s32 %s93, 1
      %s95 = scalar_select %p92, %s93, %s94
      %p98 = pneg %p92
      %p99 = scmp.eq.s32.totalorder %s15, 1
      %p100 = por %p98, %p99
      %p101 = scmp.ne.s32.totalorder %s93, %s96
      %p102 = scmp.eq.s32.totalorder %s15, 0
      %p103 = por %p101, %p102
      %p104 = scmp.ne.s32.totalorder %s93, %s96
      %p105 = scmp.eq.s32.totalorder %s20, 1
      %p106 = por %p104, %p105
      %p107 = scmp.ne.s32.totalorder %s96, %s97
      %p108 = scmp.eq.s32.totalorder %s20, 0
      %p109 = por %p107, %p108
      %p110 = scmp.ne.s32.totalorder %s96, %s97
      %p111 = scmp.eq.s32.totalorder %s21, 1
      %p112 = por %p110, %p111
      %p114 = scmp.ne.s32.totalorder %s97, %s113
      %p115 = scmp.eq.s32.totalorder %s21, 0
      %p116 = por %p114, %p115
      %p117 = scmp.le.s32.totalorder 1, %s15
      %p118 = scmp.lt.s32.totalorder %s15, 3
      %p119 = pnand %p117, %p118
      %p120 = pneg %p119
      // Predicated region
      $region9: #{tpu_custom_call.1} parent=5 // pred_check
        _
      $region10: #{tpu_custom_call.1} parent=5 // pred_check_branch
        %122 = sbr.rel (%p119) target = $region12
      $region11: #{tpu_custom_call.1} parent=5 // pred_region
        %s123 = ssub.s32 %s15, 1
        // Predicated region
        $region13: #{tpu_custom_call.1} parent=11 // pred_check
          %p124 = pneg %p62
        $region14: #{tpu_custom_call.1} parent=11 // pred_check_branch
          %126 = sbr.rel (%p124) target = $region16
        $region15: #{tpu_custom_call.1} parent=11 // pred_region
          _
        $region16: #{tpu_custom_call.1} parent=11 // pred_fallthru
          _
        // Predicated region
        $region17: #{tpu_custom_call.1} parent=11 // pred_check
          %p127 = pneg %p83
        $region18: #{tpu_custom_call.1} parent=11 // pred_check_branch
          %129 = sbr.rel (%p127) target = $region20
        $region19: #{tpu_custom_call.1} parent=11 // pred_region
          _
        $region20: #{tpu_custom_call.1} parent=11 // pred_fallthru
          _
      $region12: #{tpu_custom_call.1} parent=5 // pred_fallthru
        _
      %p130 = scmp.lt.s32.totalorder %s15, 2
      // Predicated region
      $region21: #{tpu_custom_call.1} parent=5 // pred_check
        %p131 = pneg %p130
      $region22: #{tpu_custom_call.1} parent=5 // pred_check_branch
        %133 = sbr.rel (%p131) target = $region24
      $region23: #{tpu_custom_call.1} parent=5 // pred_region
        // Predicated region
        $region25: #{tpu_custom_call.1} parent=23 // pred_check
          %p134 = pneg %p35
        $region26: #{tpu_custom_call.1} parent=23 // pred_check_branch
          %136 = sbr.rel (%p134) target = $region28
        $region27: #{tpu_custom_call.1} parent=23 // pred_region
          %s137 = sand.u32 %s25, 1
          %s138 = scalar_lea.sflag [#allocation4], %s137
          %s139 = sand.u32 %s25, 1
          %s140 = smul.addr %s139, 64
          %s141 = scalar_lea.vmem [#allocation3], %s140
          %s143 = ssub.s32 1024, 1024
          %144 = vsyncadd %s138, %s143
          %s145 = smul.addr %s15, 8
          %s146 = smul.addr %s145, 128
          %s147 = scalar_lea.hbm %s0, %s146
          %s148 = sshll.u32 %s141, 4
          %s149 = int_to_ptr.vmem [resolvable:$true] %s148
          %154 = dma.hbm_to_vmem [thread:$0]  %s147, 1024, %s149, %s138, 128, 128, 8
        $region28: #{tpu_custom_call.1} parent=23 // pred_fallthru
          _
      $region24: #{tpu_custom_call.1} parent=5 // pred_fallthru
        _
      %p155 = scmp.le.s32.totalorder 1, %s15
      %p156 = scmp.lt.s32.totalorder %s15, 3
      %p157 = pnand %p155, %p156
      %p158 = pneg %p157
      // Predicated region
      $region29: #{tpu_custom_call.1} parent=5 // pred_check
        _
      $region30: #{tpu_custom_call.1} parent=5 // pred_check_branch
        %160 = sbr.rel (%p157) target = $region32
      $region31: #{tpu_custom_call.1} parent=5 // pred_region
        %s161 = ssub.s32 %s15, 1
        %s162 = sand.u32 %s28, 1
        %s163 = scalar_lea.sflag [#allocation4], %s162
        %s164 = sand.u32 %s28, 1
        %s165 = smul.addr %s164, 64
        %s166 = scalar_lea.vmem [#allocation3], %s165
        // Predicated region
        $region33: #{tpu_custom_call.1} parent=31 // pred_check
          %p167 = pneg %p41
        $region34: #{tpu_custom_call.1} parent=31 // pred_check_branch
          %169 = sbr.rel (%p167) target = $region36
        $region35: #{tpu_custom_call.1} parent=31 // pred_region
          %170 = dma.done %s163, 1024
        $region36: #{tpu_custom_call.1} parent=31 // pred_fallthru
          _
        %s171 = sand.u32 %s28, 1
        %s172 = scalar_lea.sflag [#allocation4], %s171
        %s173 = sand.u32 %s28, 1
        %s174 = smul.addr %s173, 64
        %s175 = scalar_lea.vmem [#allocation3], %s174
        %p176 = pneg %p41
        %p177 = pneg %p38
        %p178 = pneg %p62
        %p179 = pneg %p59
        %p180 = pneg %p83
        %p181 = pneg %p80
        %p182 = pneg %p109
        %p183 = pneg %p106
        %s184 = sand.u32 %s96, 1
        %s185 = scalar_lea.sflag [#allocation5], %s184
        %s186 = sand.u32 %s96, 1
        %s187 = smul.addr %s186, 32
        %s188 = scalar_lea.vmem [#allocation6], %s187
        %vm190 = vcmask 146432
        %191 = vst.msk [vmem:[#allocation2] sm:$0xff] %vm190, 0.0
        %192 = vst.msk [vmem:[#allocation2 + $0x8] sm:$0xff] %vm190, 0.0
        %vm193 = vcmask 140288
        %194 = vst.msk [vmem:[#allocation2 + $0x10] sm:$0x3] %vm193, 0.0
        %195 = vst.msk [vmem:[#allocation2 + $0x18] sm:$0xff] %vm190, 0.0
        %196 = vst.msk [vmem:[#allocation2 + $0x20] sm:$0xff] %vm190, 0.0
        %197 = vst.msk [vmem:[#allocation2 + $0x28] sm:$0x3] %vm193, 0.0
        %198 = vst.msk [vmem:[#allocation2 + $0x30] sm:$0xff] %vm190, 0.0
        %199 = vst.msk [vmem:[#allocation2 + $0x38] sm:$0xff] %vm190, 0.0
        %200 = vst.msk [vmem:[#allocation2 + $0x40] sm:$0x3] %vm193, 0.0
        %201 = vst.msk [vmem:[#allocation2 + $0x48] sm:$0xff] %vm190, 0.0
        %202 = vst.msk [vmem:[#allocation2 + $0x50] sm:$0xff] %vm190, 0.0
        %203 = vst.msk [vmem:[#allocation2 + $0x58] sm:$0x3] %vm193, 0.0
        %v204 = vld [vmem:[%s166] sm:$0xff]
        %v205 = vld [vmem:[%s166 + $0x8] sm:$0xff]
        %v206 = vld [vmem:[%s166 + $0x10] sm:$0xff]
        %v207 = vld [vmem:[%s166 + $0x18] sm:$0xff]
        %v208 = vld [vmem:[%s166 + $0x20] sm:$0xff]
        %v209 = vld [vmem:[%s166 + $0x28] sm:$0xff]
        %v210 = vld [vmem:[%s166 + $0x30] sm:$0xff]
        %v211 = vld [vmem:[%s166 + $0x38] sm:$0xff]
        %220 = vrot.lane.b32.xlu0 %v204, 1
        %v221 = vpop.permute.xlu0 %220
        %222 = vrot.lane.b32.xlu0 %v205, 1
        %v223 = vpop.permute.xlu0 %222
        %224 = vrot.lane.b32.xlu0 %v206, 1
        %v225 = vpop.permute.xlu0 %224
        %226 = vrot.lane.b32.xlu0 %v207, 1
        %v227 = vpop.permute.xlu0 %226
        %228 = vrot.lane.b32.xlu0 %v208, 1
        %v229 = vpop.permute.xlu0 %228
        %230 = vrot.lane.b32.xlu0 %v209, 1
        %v231 = vpop.permute.xlu0 %230
        %232 = vrot.lane.b32.xlu0 %v210, 1
        %v233 = vpop.permute.xlu0 %232
        %234 = vrot.lane.b32.xlu0 %v211, 1
        %v235 = vpop.permute.xlu0 %234
        %vm244 = vcmask 138248
        %245 = vst.msk [vmem:[#allocation2 + $0x1] sm:$0xff] %vm244, %v221
        %246 = vst.msk [vmem:[#allocation2 + $0x9] sm:$0xff] %vm244, %v223
        %247 = vst.msk [vmem:[#allocation2 + $0x19] sm:$0xff] %vm244, %v225
        %248 = vst.msk [vmem:[#allocation2 + $0x21] sm:$0xff] %vm244, %v227
        %249 = vst.msk [vmem:[#allocation2 + $0x31] sm:$0xff] %vm244, %v229
        %250 = vst.msk [vmem:[#allocation2 + $0x39] sm:$0xff] %vm244, %v231
        %251 = vst.msk [vmem:[#allocation2 + $0x49] sm:$0xff] %vm244, %v233
        %252 = vst.msk [vmem:[#allocation2 + $0x51] sm:$0xff] %vm244, %v235
        %v253 = vld [vmem:[#allocation2] sm:$0xff]
        %v254 = vld [vmem:[#allocation2 + $0x8] sm:$0xff]
        %v255 = vld [vmem:[#allocation2 + $0x18] sm:$0xff]
        %v256 = vld [vmem:[#allocation2 + $0x20] sm:$0xff]
        %v257 = vld [vmem:[#allocation2 + $0x30] sm:$0xff]
        %v258 = vld [vmem:[#allocation2 + $0x38] sm:$0xff]
        %v259 = vld [vmem:[#allocation2 + $0x48] sm:$0xff]
        %v260 = vld [vmem:[#allocation2 + $0x50] sm:$0xff]
        %v261 = vcombine.low %v253, %v257
        %v262 = vcombine.high %v253, %v257
        %v264 = vunpack.c.l.s4 1983009808
        %v265 = vunpack.c.0.s8 %v264
        %v266 = vlaneseq
        %v267 = vshrl.u32 %v266, 7
        %v268 = vsub.s32 %v265, %v267
        %v269 = vrot.slane %v261, %v268
        %v271 = vunpack.c.l.s4 1983009808
        %v272 = vunpack.c.0.s8 %v271
        %v273 = vlaneseq
        %v274 = vshrl.u32 %v273, 7
        %v275 = vsub.s32 %v272, %v274
        %v276 = vrot.slane %v262, %v275
        %v277 = vcombine.low %v255, %v259
        %v278 = vcombine.high %v255, %v259
        %v280 = vunpack.c.l.s4 1983009808
        %v281 = vunpack.c.0.s8 %v280
        %v282 = vlaneseq
        %v283 = vshrl.u32 %v282, 7
        %v284 = vsub.s32 %v281, %v283
        %v285 = vrot.slane %v277, %v284
        %v287 = vunpack.c.l.s4 1983009808
        %v288 = vunpack.c.0.s8 %v287
        %v289 = vlaneseq
        %v290 = vshrl.u32 %v289, 7
        %v291 = vsub.s32 %v288, %v290
        %v292 = vrot.slane %v278, %v291
        %v293 = vcombine.low %v269, %v285
        %v294 = vcombine.high %v269, %v285
        %v296 = vunpack.c.l.s4 1934713408
        %v297 = vunpack.c.0.s8 %v296
        %v298 = vlaneseq
        %v299 = vshrl.u32 %v298, 7
        %v300 = vsub.s32 %v297, %v299
        %v301 = vrot.slane %v293, %v300
        %v303 = vunpack.c.l.s4 1934713408
        %v304 = vunpack.c.0.s8 %v303
        %v305 = vlaneseq
        %v306 = vshrl.u32 %v305, 7
        %v307 = vsub.s32 %v304, %v306
        %v308 = vrot.slane %v294, %v307
        %v309 = vcombine.low %v276, %v292
        %v310 = vcombine.high %v276, %v292
        %v312 = vunpack.c.l.s4 1934713408
        %v313 = vunpack.c.0.s8 %v312
        %v314 = vlaneseq
        %v315 = vshrl.u32 %v314, 7
        %v316 = vsub.s32 %v313, %v315
        %v317 = vrot.slane %v309, %v316
        %v319 = vunpack.c.l.s4 1934713408
        %v320 = vunpack.c.0.s8 %v319
        %v321 = vlaneseq
        %v322 = vshrl.u32 %v321, 7
        %v323 = vsub.s32 %v320, %v322
        %v324 = vrot.slane %v310, %v323
        %v325 = vcombine.high %v301, 0.0
        %v326 = vcombine.high %v308, 0.0
        %v327 = vcombine.high %v317, 0.0
        %v328 = vcombine.high %v324, 0.0
        %v329 = vcombine.low %v254, %v258
        %v330 = vcombine.high %v254, %v258
        %v332 = vunpack.c.l.s4 1983009808
        %v333 = vunpack.c.0.s8 %v332
        %v334 = vlaneseq
        %v335 = vshrl.u32 %v334, 7
        %v336 = vsub.s32 %v333, %v335
        %v337 = vrot.slane %v329, %v336
        %v339 = vunpack.c.l.s4 1983009808
        %v340 = vunpack.c.0.s8 %v339
        %v341 = vlaneseq
        %v342 = vshrl.u32 %v341, 7
        %v343 = vsub.s32 %v340, %v342
        %v344 = vrot.slane %v330, %v343
        %v345 = vcombine.low %v256, %v260
        %v346 = vcombine.high %v256, %v260
        %v348 = vunpack.c.l.s4 1983009808
        %v349 = vunpack.c.0.s8 %v348
        %v350 = vlaneseq
        %v351 = vshrl.u32 %v350, 7
        %v352 = vsub.s32 %v349, %v351
        %v353 = vrot.slane %v345, %v352
        %v355 = vunpack.c.l.s4 1983009808
        %v356 = vunpack.c.0.s8 %v355
        %v357 = vlaneseq
        %v358 = vshrl.u32 %v357, 7
        %v359 = vsub.s32 %v356, %v358
        %v360 = vrot.slane %v346, %v359
        %v361 = vcombine.low %v337, %v353
        %v362 = vcombine.high %v337, %v353
        %v364 = vunpack.c.l.s4 1934713408
        %v365 = vunpack.c.0.s8 %v364
        %v366 = vlaneseq
        %v367 = vshrl.u32 %v366, 7
        %v368 = vsub.s32 %v365, %v367
        %v369 = vrot.slane %v361, %v368
        %v371 = vunpack.c.l.s4 1934713408
        %v372 = vunpack.c.0.s8 %v371
        %v373 = vlaneseq
        %v374 = vshrl.u32 %v373, 7
        %v375 = vsub.s32 %v372, %v374
        %v376 = vrot.slane %v362, %v375
        %v377 = vcombine.low %v344, %v360
        %v378 = vcombine.high %v344, %v360
        %v380 = vunpack.c.l.s4 1934713408
        %v381 = vunpack.c.0.s8 %v380
        %v382 = vlaneseq
        %v383 = vshrl.u32 %v382, 7
        %v384 = vsub.s32 %v381, %v383
        %v385 = vrot.slane %v377, %v384
        %v387 = vunpack.c.l.s4 1934713408
        %v388 = vunpack.c.0.s8 %v387
        %v389 = vlaneseq
        %v390 = vshrl.u32 %v389, 7
        %v391 = vsub.s32 %v388, %v390
        %v392 = vrot.slane %v378, %v391
        %v393 = vcombine.high %v369, 0.0
        %v394 = vcombine.high %v376, 0.0
        %v395 = vcombine.high %v385, 0.0
        %v396 = vcombine.high %v392, 0.0
        %398 = vrot.lane.b32.xlu0 %v325, 16
        %v399 = vpop.permute.xlu0 %398
        %402 = vrot.lane.b32.xlu0 %v308, 32
        %v403 = vpop.permute.xlu0 %402
        %406 = vrot.lane.b32.xlu0 %v326, 48
        %v407 = vpop.permute.xlu0 %406
        %410 = vrot.lane.b32.xlu0 %v317, 64
        %v411 = vpop.permute.xlu0 %410
        %414 = vrot.lane.b32.xlu0 %v327, 80
        %v415 = vpop.permute.xlu0 %414
        %418 = vrot.lane.b32.xlu0 %v324, 96
        %v419 = vpop.permute.xlu0 %418
        %422 = vrot.lane.b32.xlu0 %v328, 112
        %v423 = vpop.permute.xlu0 %422
        %426 = vrot.lane.b32.xlu0 %v393, 16
        %v427 = vpop.permute.xlu0 %426
        %430 = vrot.lane.b32.xlu0 %v376, 32
        %v431 = vpop.permute.xlu0 %430
        %434 = vrot.lane.b32.xlu0 %v394, 48
        %v435 = vpop.permute.xlu0 %434
        %438 = vrot.lane.b32.xlu0 %v385, 64
        %v439 = vpop.permute.xlu0 %438
        %442 = vrot.lane.b32.xlu0 %v395, 80
        %v443 = vpop.permute.xlu0 %442
        %446 = vrot.lane.b32.xlu0 %v392, 96
        %v447 = vpop.permute.xlu0 %446
        %450 = vrot.lane.b32.xlu0 %v396, 112
        %v451 = vpop.permute.xlu0 %450
        %vm453 = vcmask 130048
        %v454 = vsel %vm453, %v301, %v399
        %vm455 = vcmask 261120
        %v456 = vsel %vm455, %v454, %v403
        %vm457 = vcmask 392192
        %v458 = vsel %vm457, %v456, %v407
        %vm459 = vcmask 523264
        %v460 = vsel %vm459, %v458, %v411
        %vm461 = vcmask 654336
        %v462 = vsel %vm461, %v460, %v415
        %vm463 = vcmask 785408
        %v464 = vsel %vm463, %v462, %v419
        %vm465 = vcmask 916480
        %v466 = vsel %vm465, %v464, %v423
        %v467 = vsel %vm453, %v369, %v427
        %v468 = vsel %vm455, %v467, %v431
        %v469 = vsel %vm457, %v468, %v435
        %v470 = vsel %vm459, %v469, %v439
        %v471 = vsel %vm461, %v470, %v443
        %v472 = vsel %vm463, %v471, %v447
        %v473 = vsel %vm465, %v472, %v451
        %482 = vrot.lane.b32.xlu0 %v253, 127
        %v483 = vpop.permute.xlu0 %482
        %484 = vrot.lane.b32.xlu0 %v254, 127
        %v485 = vpop.permute.xlu0 %484
        %486 = vrot.lane.b32.xlu0 %v255, 127
        %v487 = vpop.permute.xlu0 %486
        %488 = vrot.lane.b32.xlu0 %v256, 127
        %v489 = vpop.permute.xlu0 %488
        %490 = vrot.lane.b32.xlu0 %v257, 127
        %v491 = vpop.permute.xlu0 %490
        %492 = vrot.lane.b32.xlu0 %v258, 127
        %v493 = vpop.permute.xlu0 %492
        %494 = vrot.lane.b32.xlu0 %v259, 127
        %v495 = vpop.permute.xlu0 %494
        %496 = vrot.lane.b32.xlu0 %v260, 127
        %v497 = vpop.permute.xlu0 %496
        %v506 = vcombine.low %v483, %v491
        %v507 = vcombine.high %v483, %v491
        %v509 = vunpack.c.l.s4 1983009808
        %v510 = vunpack.c.0.s8 %v509
        %v511 = vlaneseq
        %v512 = vshrl.u32 %v511, 7
        %v513 = vsub.s32 %v510, %v512
        %v514 = vrot.slane %v506, %v513
        %v516 = vunpack.c.l.s4 1983009808
        %v517 = vunpack.c.0.s8 %v516
        %v518 = vlaneseq
        %v519 = vshrl.u32 %v518, 7
        %v520 = vsub.s32 %v517, %v519
        %v521 = vrot.slane %v507, %v520
        %v522 = vcombine.low %v487, %v495
        %v523 = vcombine.high %v487, %v495
        %v525 = vunpack.c.l.s4 1983009808
        %v526 = vunpack.c.0.s8 %v525
        %v527 = vlaneseq
        %v528 = vshrl.u32 %v527, 7
        %v529 = vsub.s32 %v526, %v528
        %v530 = vrot.slane %v522, %v529
        %v532 = vunpack.c.l.s4 1983009808
        %v533 = vunpack.c.0.s8 %v532
        %v534 = vlaneseq
        %v535 = vshrl.u32 %v534, 7
        %v536 = vsub.s32 %v533, %v535
        %v537 = vrot.slane %v523, %v536
        %v538 = vcombine.low %v514, %v530
        %v539 = vcombine.high %v514, %v530
        %v541 = vunpack.c.l.s4 1934713408
        %v542 = vunpack.c.0.s8 %v541
        %v543 = vlaneseq
        %v544 = vshrl.u32 %v543, 7
        %v545 = vsub.s32 %v542, %v544
        %v546 = vrot.slane %v538, %v545
        %v548 = vunpack.c.l.s4 1934713408
        %v549 = vunpack.c.0.s8 %v548
        %v550 = vlaneseq
        %v551 = vshrl.u32 %v550, 7
        %v552 = vsub.s32 %v549, %v551
        %v553 = vrot.slane %v539, %v552
        %v554 = vcombine.low %v521, %v537
        %v555 = vcombine.high %v521, %v537
        %v557 = vunpack.c.l.s4 1934713408
        %v558 = vunpack.c.0.s8 %v557
        %v559 = vlaneseq
        %v560 = vshrl.u32 %v559, 7
        %v561 = vsub.s32 %v558, %v560
        %v562 = vrot.slane %v554, %v561
        %v564 = vunpack.c.l.s4 1934713408
        %v565 = vunpack.c.0.s8 %v564
        %v566 = vlaneseq
        %v567 = vshrl.u32 %v566, 7
        %v568 = vsub.s32 %v565, %v567
        %v569 = vrot.slane %v555, %v568
        %v570 = vcombine.high %v546, 0.0
        %v571 = vcombine.high %v553, 0.0
        %v572 = vcombine.high %v562, 0.0
        %v573 = vcombine.high %v569, 0.0
        %v574 = vcombine.low %v485, %v493
        %v575 = vcombine.high %v485, %v493
        %v577 = vunpack.c.l.s4 1983009808
        %v578 = vunpack.c.0.s8 %v577
        %v579 = vlaneseq
        %v580 = vshrl.u32 %v579, 7
        %v581 = vsub.s32 %v578, %v580
        %v582 = vrot.slane %v574, %v581
        %v584 = vunpack.c.l.s4 1983009808
        %v585 = vunpack.c.0.s8 %v584
        %v586 = vlaneseq
        %v587 = vshrl.u32 %v586, 7
        %v588 = vsub.s32 %v585, %v587
        %v589 = vrot.slane %v575, %v588
        %v590 = vcombine.low %v489, %v497
        %v591 = vcombine.high %v489, %v497
        %v593 = vunpack.c.l.s4 1983009808
        %v594 = vunpack.c.0.s8 %v593
        %v595 = vlaneseq
        %v596 = vshrl.u32 %v595, 7
        %v597 = vsub.s32 %v594, %v596
        %v598 = vrot.slane %v590, %v597
        %v600 = vunpack.c.l.s4 1983009808
        %v601 = vunpack.c.0.s8 %v600
        %v602 = vlaneseq
        %v603 = vshrl.u32 %v602, 7
        %v604 = vsub.s32 %v601, %v603
        %v605 = vrot.slane %v591, %v604
        %v606 = vcombine.low %v582, %v598
        %v607 = vcombine.high %v582, %v598
        %v609 = vunpack.c.l.s4 1934713408
        %v610 = vunpack.c.0.s8 %v609
        %v611 = vlaneseq
        %v612 = vshrl.u32 %v611, 7
        %v613 = vsub.s32 %v610, %v612
        %v614 = vrot.slane %v606, %v613
        %v616 = vunpack.c.l.s4 1934713408
        %v617 = vunpack.c.0.s8 %v616
        %v618 = vlaneseq
        %v619 = vshrl.u32 %v618, 7
        %v620 = vsub.s32 %v617, %v619
        %v621 = vrot.slane %v607, %v620
        %v622 = vcombine.low %v589, %v605
        %v623 = vcombine.high %v589, %v605
        %v625 = vunpack.c.l.s4 1934713408
        %v626 = vunpack.c.0.s8 %v625
        %v627 = vlaneseq
        %v628 = vshrl.u32 %v627, 7
        %v629 = vsub.s32 %v626, %v628
        %v630 = vrot.slane %v622, %v629
        %v632 = vunpack.c.l.s4 1934713408
        %v633 = vunpack.c.0.s8 %v632
        %v634 = vlaneseq
        %v635 = vshrl.u32 %v634, 7
        %v636 = vsub.s32 %v633, %v635
        %v637 = vrot.slane %v623, %v636
        %v638 = vcombine.high %v614, 0.0
        %v639 = vcombine.high %v621, 0.0
        %v640 = vcombine.high %v630, 0.0
        %v641 = vcombine.high %v637, 0.0
        %643 = vrot.lane.b32.xlu0 %v570, 16
        %v644 = vpop.permute.xlu0 %643
        %647 = vrot.lane.b32.xlu0 %v553, 32
        %v648 = vpop.permute.xlu0 %647
        %651 = vrot.lane.b32.xlu0 %v571, 48
        %v652 = vpop.permute.xlu0 %651
        %655 = vrot.lane.b32.xlu0 %v562, 64
        %v656 = vpop.permute.xlu0 %655
        %659 = vrot.lane.b32.xlu0 %v572, 80
        %v660 = vpop.permute.xlu0 %659
        %663 = vrot.lane.b32.xlu0 %v569, 96
        %v664 = vpop.permute.xlu0 %663
        %667 = vrot.lane.b32.xlu0 %v573, 112
        %v668 = vpop.permute.xlu0 %667
        %671 = vrot.lane.b32.xlu0 %v638, 16
        %v672 = vpop.permute.xlu0 %671
        %675 = vrot.lane.b32.xlu0 %v621, 32
        %v676 = vpop.permute.xlu0 %675
        %679 = vrot.lane.b32.xlu0 %v639, 48
        %v680 = vpop.permute.xlu0 %679
        %683 = vrot.lane.b32.xlu0 %v630, 64
        %v684 = vpop.permute.xlu0 %683
        %687 = vrot.lane.b32.xlu0 %v640, 80
        %v688 = vpop.permute.xlu0 %687
        %691 = vrot.lane.b32.xlu0 %v637, 96
        %v692 = vpop.permute.xlu0 %691
        %695 = vrot.lane.b32.xlu0 %v641, 112
        %v696 = vpop.permute.xlu0 %695
        %v698 = vsel %vm453, %v546, %v644
        %v699 = vsel %vm455, %v698, %v648
        %v700 = vsel %vm457, %v699, %v652
        %v701 = vsel %vm459, %v700, %v656
        %v702 = vsel %vm461, %v701, %v660
        %v703 = vsel %vm463, %v702, %v664
        %v704 = vsel %vm465, %v703, %v668
        %v705 = vsel %vm453, %v614, %v672
        %v706 = vsel %vm455, %v705, %v676
        %v707 = vsel %vm457, %v706, %v680
        %v708 = vsel %vm459, %v707, %v684
        %v709 = vsel %vm461, %v708, %v688
        %v710 = vsel %vm463, %v709, %v692
        %v711 = vsel %vm465, %v710, %v696
        %712 = vrot.lane.b32.xlu0 %v253, 126
        %v713 = vpop.permute.xlu0 %712
        %714 = vrot.lane.b32.xlu0 %v254, 126
        %v715 = vpop.permute.xlu0 %714
        %716 = vrot.lane.b32.xlu0 %v255, 126
        %v717 = vpop.permute.xlu0 %716
        %718 = vrot.lane.b32.xlu0 %v256, 126
        %v719 = vpop.permute.xlu0 %718
        %720 = vrot.lane.b32.xlu0 %v257, 126
        %v721 = vpop.permute.xlu0 %720
        %722 = vrot.lane.b32.xlu0 %v258, 126
        %v723 = vpop.permute.xlu0 %722
        %724 = vrot.lane.b32.xlu0 %v259, 126
        %v725 = vpop.permute.xlu0 %724
        %726 = vrot.lane.b32.xlu0 %v260, 126
        %v727 = vpop.permute.xlu0 %726
        %v736 = vcombine.low %v713, %v721
        %v737 = vcombine.high %v713, %v721
        %v739 = vunpack.c.l.s4 1983009808
        %v740 = vunpack.c.0.s8 %v739
        %v741 = vlaneseq
        %v742 = vshrl.u32 %v741, 7
        %v743 = vsub.s32 %v740, %v742
        %v744 = vrot.slane %v736, %v743
        %v746 = vunpack.c.l.s4 1983009808
        %v747 = vunpack.c.0.s8 %v746
        %v748 = vlaneseq
        %v749 = vshrl.u32 %v748, 7
        %v750 = vsub.s32 %v747, %v749
        %v751 = vrot.slane %v737, %v750
        %v752 = vcombine.low %v717, %v725
        %v753 = vcombine.high %v717, %v725
        %v755 = vunpack.c.l.s4 1983009808
        %v756 = vunpack.c.0.s8 %v755
        %v757 = vlaneseq
        %v758 = vshrl.u32 %v757, 7
        %v759 = vsub.s32 %v756, %v758
        %v760 = vrot.slane %v752, %v759
        %v762 = vunpack.c.l.s4 1983009808
        %v763 = vunpack.c.0.s8 %v762
        %v764 = vlaneseq
        %v765 = vshrl.u32 %v764, 7
        %v766 = vsub.s32 %v763, %v765
        %v767 = vrot.slane %v753, %v766
        %v768 = vcombine.low %v744, %v760
        %v769 = vcombine.high %v744, %v760
        %v771 = vunpack.c.l.s4 1934713408
        %v772 = vunpack.c.0.s8 %v771
        %v773 = vlaneseq
        %v774 = vshrl.u32 %v773, 7
        %v775 = vsub.s32 %v772, %v774
        %v776 = vrot.slane %v768, %v775
        %v778 = vunpack.c.l.s4 1934713408
        %v779 = vunpack.c.0.s8 %v778
        %v780 = vlaneseq
        %v781 = vshrl.u32 %v780, 7
        %v782 = vsub.s32 %v779, %v781
        %v783 = vrot.slane %v769, %v782
        %v784 = vcombine.low %v751, %v767
        %v785 = vcombine.high %v751, %v767
        %v787 = vunpack.c.l.s4 1934713408
        %v788 = vunpack.c.0.s8 %v787
        %v789 = vlaneseq
        %v790 = vshrl.u32 %v789, 7
        %v791 = vsub.s32 %v788, %v790
        %v792 = vrot.slane %v784, %v791
        %v794 = vunpack.c.l.s4 1934713408
        %v795 = vunpack.c.0.s8 %v794
        %v796 = vlaneseq
        %v797 = vshrl.u32 %v796, 7
        %v798 = vsub.s32 %v795, %v797
        %v799 = vrot.slane %v785, %v798
        %v800 = vcombine.high %v776, 0.0
        %v801 = vcombine.high %v783, 0.0
        %v802 = vcombine.high %v792, 0.0
        %v803 = vcombine.high %v799, 0.0
        %v804 = vcombine.low %v715, %v723
        %v805 = vcombine.high %v715, %v723
        %v807 = vunpack.c.l.s4 1983009808
        %v808 = vunpack.c.0.s8 %v807
        %v809 = vlaneseq
        %v810 = vshrl.u32 %v809, 7
        %v811 = vsub.s32 %v808, %v810
        %v812 = vrot.slane %v804, %v811
        %v814 = vunpack.c.l.s4 1983009808
        %v815 = vunpack.c.0.s8 %v814
        %v816 = vlaneseq
        %v817 = vshrl.u32 %v816, 7
        %v818 = vsub.s32 %v815, %v817
        %v819 = vrot.slane %v805, %v818
        %v820 = vcombine.low %v719, %v727
        %v821 = vcombine.high %v719, %v727
        %v823 = vunpack.c.l.s4 1983009808
        %v824 = vunpack.c.0.s8 %v823
        %v825 = vlaneseq
        %v826 = vshrl.u32 %v825, 7
        %v827 = vsub.s32 %v824, %v826
        %v828 = vrot.slane %v820, %v827
        %v830 = vunpack.c.l.s4 1983009808
        %v831 = vunpack.c.0.s8 %v830
        %v832 = vlaneseq
        %v833 = vshrl.u32 %v832, 7
        %v834 = vsub.s32 %v831, %v833
        %v835 = vrot.slane %v821, %v834
        %v836 = vcombine.low %v812, %v828
        %v837 = vcombine.high %v812, %v828
        %v839 = vunpack.c.l.s4 1934713408
        %v840 = vunpack.c.0.s8 %v839
        %v841 = vlaneseq
        %v842 = vshrl.u32 %v841, 7
        %v843 = vsub.s32 %v840, %v842
        %v844 = vrot.slane %v836, %v843
        %v846 = vunpack.c.l.s4 1934713408
        %v847 = vunpack.c.0.s8 %v846
        %v848 = vlaneseq
        %v849 = vshrl.u32 %v848, 7
        %v850 = vsub.s32 %v847, %v849
        %v851 = vrot.slane %v837, %v850
        %v852 = vcombine.low %v819, %v835
        %v853 = vcombine.high %v819, %v835
        %v855 = vunpack.c.l.s4 1934713408
        %v856 = vunpack.c.0.s8 %v855
        %v857 = vlaneseq
        %v858 = vshrl.u32 %v857, 7
        %v859 = vsub.s32 %v856, %v858
        %v860 = vrot.slane %v852, %v859
        %v862 = vunpack.c.l.s4 1934713408
        %v863 = vunpack.c.0.s8 %v862
        %v864 = vlaneseq
        %v865 = vshrl.u32 %v864, 7
        %v866 = vsub.s32 %v863, %v865
        %v867 = vrot.slane %v853, %v866
        %v868 = vcombine.high %v844, 0.0
        %v869 = vcombine.high %v851, 0.0
        %v870 = vcombine.high %v860, 0.0
        %v871 = vcombine.high %v867, 0.0
        %873 = vrot.lane.b32.xlu0 %v800, 16
        %v874 = vpop.permute.xlu0 %873
        %877 = vrot.lane.b32.xlu0 %v783, 32
        %v878 = vpop.permute.xlu0 %877
        %881 = vrot.lane.b32.xlu0 %v801, 48
        %v882 = vpop.permute.xlu0 %881
        %885 = vrot.lane.b32.xlu0 %v792, 64
        %v886 = vpop.permute.xlu0 %885
        %889 = vrot.lane.b32.xlu0 %v802, 80
        %v890 = vpop.permute.xlu0 %889
        %893 = vrot.lane.b32.xlu0 %v799, 96
        %v894 = vpop.permute.xlu0 %893
        %897 = vrot.lane.b32.xlu0 %v803, 112
        %v898 = vpop.permute.xlu0 %897
        %901 = vrot.lane.b32.xlu0 %v868, 16
        %v902 = vpop.permute.xlu0 %901
        %905 = vrot.lane.b32.xlu0 %v851, 32
        %v906 = vpop.permute.xlu0 %905
        %909 = vrot.lane.b32.xlu0 %v869, 48
        %v910 = vpop.permute.xlu0 %909
        %913 = vrot.lane.b32.xlu0 %v860, 64
        %v914 = vpop.permute.xlu0 %913
        %917 = vrot.lane.b32.xlu0 %v870, 80
        %v918 = vpop.permute.xlu0 %917
        %921 = vrot.lane.b32.xlu0 %v867, 96
        %v922 = vpop.permute.xlu0 %921
        %925 = vrot.lane.b32.xlu0 %v871, 112
        %v926 = vpop.permute.xlu0 %925
        %v928 = vsel %vm453, %v776, %v874
        %v929 = vsel %vm455, %v928, %v878
        %v930 = vsel %vm457, %v929, %v882
        %v931 = vsel %vm459, %v930, %v886
        %v932 = vsel %vm461, %v931, %v890
        %v933 = vsel %vm463, %v932, %v894
        %v934 = vsel %vm465, %v933, %v898
        %v935 = vsel %vm453, %v844, %v902
        %v936 = vsel %vm455, %v935, %v906
        %v937 = vsel %vm457, %v936, %v910
        %v938 = vsel %vm459, %v937, %v914
        %v939 = vsel %vm461, %v938, %v918
        %v940 = vsel %vm463, %v939, %v922
        %v941 = vsel %vm465, %v940, %v926
        %v942 = vld [vmem:[#allocation2 + $0x1] sm:$0xff]
        %v943 = vld [vmem:[#allocation2 + $0x9] sm:$0xff]
        %v944 = vld [vmem:[#allocation2 + $0x19] sm:$0xff]
        %v945 = vld [vmem:[#allocation2 + $0x21] sm:$0xff]
        %v946 = vld [vmem:[#allocation2 + $0x31] sm:$0xff]
        %v947 = vld [vmem:[#allocation2 + $0x39] sm:$0xff]
        %v948 = vld [vmem:[#allocation2 + $0x49] sm:$0xff]
        %v949 = vld [vmem:[#allocation2 + $0x51] sm:$0xff]
        %v950 = vcombine.low %v942, %v946
        %v951 = vcombine.high %v942, %v946
        %v953 = vunpack.c.l.s4 1983009808
        %v954 = vunpack.c.0.s8 %v953
        %v955 = vlaneseq
        %v956 = vshrl.u32 %v955, 7
        %v957 = vsub.s32 %v954, %v956
        %v958 = vrot.slane %v950, %v957
        %v960 = vunpack.c.l.s4 1983009808
        %v961 = vunpack.c.0.s8 %v960
        %v962 = vlaneseq
        %v963 = vshrl.u32 %v962, 7
        %v964 = vsub.s32 %v961, %v963
        %v965 = vrot.slane %v951, %v964
        %v966 = vcombine.low %v944, %v948
        %v967 = vcombine.high %v944, %v948
        %v969 = vunpack.c.l.s4 1983009808
        %v970 = vunpack.c.0.s8 %v969
        %v971 = vlaneseq
        %v972 = vshrl.u32 %v971, 7
        %v973 = vsub.s32 %v970, %v972
        %v974 = vrot.slane %v966, %v973
        %v976 = vunpack.c.l.s4 1983009808
        %v977 = vunpack.c.0.s8 %v976
        %v978 = vlaneseq
        %v979 = vshrl.u32 %v978, 7
        %v980 = vsub.s32 %v977, %v979
        %v981 = vrot.slane %v967, %v980
        %v982 = vcombine.low %v958, %v974
        %v983 = vcombine.high %v958, %v974
        %v985 = vunpack.c.l.s4 1934713408
        %v986 = vunpack.c.0.s8 %v985
        %v987 = vlaneseq
        %v988 = vshrl.u32 %v987, 7
        %v989 = vsub.s32 %v986, %v988
        %v990 = vrot.slane %v982, %v989
        %v992 = vunpack.c.l.s4 1934713408
        %v993 = vunpack.c.0.s8 %v992
        %v994 = vlaneseq
        %v995 = vshrl.u32 %v994, 7
        %v996 = vsub.s32 %v993, %v995
        %v997 = vrot.slane %v983, %v996
        %v998 = vcombine.low %v965, %v981
        %v999 = vcombine.high %v965, %v981
        %v1001 = vunpack.c.l.s4 1934713408
        %v1002 = vunpack.c.0.s8 %v1001
        %v1003 = vlaneseq
        %v1004 = vshrl.u32 %v1003, 7
        %v1005 = vsub.s32 %v1002, %v1004
        %v1006 = vrot.slane %v998, %v1005
        %v1008 = vunpack.c.l.s4 1934713408
        %v1009 = vunpack.c.0.s8 %v1008
        %v1010 = vlaneseq
        %v1011 = vshrl.u32 %v1010, 7
        %v1012 = vsub.s32 %v1009, %v1011
        %v1013 = vrot.slane %v999, %v1012
        %v1014 = vcombine.high %v990, 0.0
        %v1015 = vcombine.high %v997, 0.0
        %v1016 = vcombine.high %v1006, 0.0
        %v1017 = vcombine.high %v1013, 0.0
        %v1018 = vcombine.low %v943, %v947
        %v1019 = vcombine.high %v943, %v947
        %v1021 = vunpack.c.l.s4 1983009808
        %v1022 = vunpack.c.0.s8 %v1021
        %v1023 = vlaneseq
        %v1024 = vshrl.u32 %v1023, 7
        %v1025 = vsub.s32 %v1022, %v1024
        %v1026 = vrot.slane %v1018, %v1025
        %v1028 = vunpack.c.l.s4 1983009808
        %v1029 = vunpack.c.0.s8 %v1028
        %v1030 = vlaneseq
        %v1031 = vshrl.u32 %v1030, 7
        %v1032 = vsub.s32 %v1029, %v1031
        %v1033 = vrot.slane %v1019, %v1032
        %v1034 = vcombine.low %v945, %v949
        %v1035 = vcombine.high %v945, %v949
        %v1037 = vunpack.c.l.s4 1983009808
        %v1038 = vunpack.c.0.s8 %v1037
        %v1039 = vlaneseq
        %v1040 = vshrl.u32 %v1039, 7
        %v1041 = vsub.s32 %v1038, %v1040
        %v1042 = vrot.slane %v1034, %v1041
        %v1044 = vunpack.c.l.s4 1983009808
        %v1045 = vunpack.c.0.s8 %v1044
        %v1046 = vlaneseq
        %v1047 = vshrl.u32 %v1046, 7
        %v1048 = vsub.s32 %v1045, %v1047
        %v1049 = vrot.slane %v1035, %v1048
        %v1050 = vcombine.low %v1026, %v1042
        %v1051 = vcombine.high %v1026, %v1042
        %v1053 = vunpack.c.l.s4 1934713408
        %v1054 = vunpack.c.0.s8 %v1053
        %v1055 = vlaneseq
        %v1056 = vshrl.u32 %v1055, 7
        %v1057 = vsub.s32 %v1054, %v1056
        %v1058 = vrot.slane %v1050, %v1057
        %v1060 = vunpack.c.l.s4 1934713408
        %v1061 = vunpack.c.0.s8 %v1060
        %v1062 = vlaneseq
        %v1063 = vshrl.u32 %v1062, 7
        %v1064 = vsub.s32 %v1061, %v1063
        %v1065 = vrot.slane %v1051, %v1064
        %v1066 = vcombine.low %v1033, %v1049
        %v1067 = vcombine.high %v1033, %v1049
        %v1069 = vunpack.c.l.s4 1934713408
        %v1070 = vunpack.c.0.s8 %v1069
        %v1071 = vlaneseq
        %v1072 = vshrl.u32 %v1071, 7
        %v1073 = vsub.s32 %v1070, %v1072
        %v1074 = vrot.slane %v1066, %v1073
        %v1076 = vunpack.c.l.s4 1934713408
        %v1077 = vunpack.c.0.s8 %v1076
        %v1078 = vlaneseq
        %v1079 = vshrl.u32 %v1078, 7
        %v1080 = vsub.s32 %v1077, %v1079
        %v1081 = vrot.slane %v1067, %v1080
        %v1082 = vcombine.high %v1058, 0.0
        %v1083 = vcombine.high %v1065, 0.0
        %v1084 = vcombine.high %v1074, 0.0
        %v1085 = vcombine.high %v1081, 0.0
        %1087 = vrot.lane.b32.xlu0 %v1014, 16
        %v1088 = vpop.permute.xlu0 %1087
        %1091 = vrot.lane.b32.xlu0 %v997, 32
        %v1092 = vpop.permute.xlu0 %1091
        %1095 = vrot.lane.b32.xlu0 %v1015, 48
        %v1096 = vpop.permute.xlu0 %1095
        %1099 = vrot.lane.b32.xlu0 %v1006, 64
        %v1100 = vpop.permute.xlu0 %1099
        %1103 = vrot.lane.b32.xlu0 %v1016, 80
        %v1104 = vpop.permute.xlu0 %1103
        %1107 = vrot.lane.b32.xlu0 %v1013, 96
        %v1108 = vpop.permute.xlu0 %1107
        %1111 = vrot.lane.b32.xlu0 %v1017, 112
        %v1112 = vpop.permute.xlu0 %1111
        %1115 = vrot.lane.b32.xlu0 %v1082, 16
        %v1116 = vpop.permute.xlu0 %1115
        %1119 = vrot.lane.b32.xlu0 %v1065, 32
        %v1120 = vpop.permute.xlu0 %1119
        %1123 = vrot.lane.b32.xlu0 %v1083, 48
        %v1124 = vpop.permute.xlu0 %1123
        %1127 = vrot.lane.b32.xlu0 %v1074, 64
        %v1128 = vpop.permute.xlu0 %1127
        %1131 = vrot.lane.b32.xlu0 %v1084, 80
        %v1132 = vpop.permute.xlu0 %1131
        %1135 = vrot.lane.b32.xlu0 %v1081, 96
        %v1136 = vpop.permute.xlu0 %1135
        %1139 = vrot.lane.b32.xlu0 %v1085, 112
        %v1140 = vpop.permute.xlu0 %1139
        %v1142 = vsel %vm453, %v990, %v1088
        %v1143 = vsel %vm455, %v1142, %v1092
        %v1144 = vsel %vm457, %v1143, %v1096
        %v1145 = vsel %vm459, %v1144, %v1100
        %v1146 = vsel %vm461, %v1145, %v1104
        %v1147 = vsel %vm463, %v1146, %v1108
        %v1148 = vsel %vm465, %v1147, %v1112
        %v1149 = vsel %vm453, %v1058, %v1116
        %v1150 = vsel %vm455, %v1149, %v1120
        %v1151 = vsel %vm457, %v1150, %v1124
        %v1152 = vsel %vm459, %v1151, %v1128
        %v1153 = vsel %vm461, %v1152, %v1132
        %v1154 = vsel %vm463, %v1153, %v1136
        %v1155 = vsel %vm465, %v1154, %v1140
        %1164 = vrot.lane.b32.xlu0 %v942, 127
        %v1165 = vpop.permute.xlu0 %1164
        %1166 = vrot.lane.b32.xlu0 %v943, 127
        %v1167 = vpop.permute.xlu0 %1166
        %1168 = vrot.lane.b32.xlu0 %v944, 127
        %v1169 = vpop.permute.xlu0 %1168
        %1170 = vrot.lane.b32.xlu0 %v945, 127
        %v1171 = vpop.permute.xlu0 %1170
        %1172 = vrot.lane.b32.xlu0 %v946, 127
        %v1173 = vpop.permute.xlu0 %1172
        %1174 = vrot.lane.b32.xlu0 %v947, 127
        %v1175 = vpop.permute.xlu0 %1174
        %1176 = vrot.lane.b32.xlu0 %v948, 127
        %v1177 = vpop.permute.xlu0 %1176
        %1178 = vrot.lane.b32.xlu0 %v949, 127
        %v1179 = vpop.permute.xlu0 %1178
        %v1188 = vcombine.low %v1165, %v1173
        %v1189 = vcombine.high %v1165, %v1173
        %v1191 = vunpack.c.l.s4 1983009808
        %v1192 = vunpack.c.0.s8 %v1191
        %v1193 = vlaneseq
        %v1194 = vshrl.u32 %v1193, 7
        %v1195 = vsub.s32 %v1192, %v1194
        %v1196 = vrot.slane %v1188, %v1195
        %v1198 = vunpack.c.l.s4 1983009808
        %v1199 = vunpack.c.0.s8 %v1198
        %v1200 = vlaneseq
        %v1201 = vshrl.u32 %v1200, 7
        %v1202 = vsub.s32 %v1199, %v1201
        %v1203 = vrot.slane %v1189, %v1202
        %v1204 = vcombine.low %v1169, %v1177
        %v1205 = vcombine.high %v1169, %v1177
        %v1207 = vunpack.c.l.s4 1983009808
        %v1208 = vunpack.c.0.s8 %v1207
        %v1209 = vlaneseq
        %v1210 = vshrl.u32 %v1209, 7
        %v1211 = vsub.s32 %v1208, %v1210
        %v1212 = vrot.slane %v1204, %v1211
        %v1214 = vunpack.c.l.s4 1983009808
        %v1215 = vunpack.c.0.s8 %v1214
        %v1216 = vlaneseq
        %v1217 = vshrl.u32 %v1216, 7
        %v1218 = vsub.s32 %v1215, %v1217
        %v1219 = vrot.slane %v1205, %v1218
        %v1220 = vcombine.low %v1196, %v1212
        %v1221 = vcombine.high %v1196, %v1212
        %v1223 = vunpack.c.l.s4 1934713408
        %v1224 = vunpack.c.0.s8 %v1223
        %v1225 = vlaneseq
        %v1226 = vshrl.u32 %v1225, 7
        %v1227 = vsub.s32 %v1224, %v1226
        %v1228 = vrot.slane %v1220, %v1227
        %v1230 = vunpack.c.l.s4 1934713408
        %v1231 = vunpack.c.0.s8 %v1230
        %v1232 = vlaneseq
        %v1233 = vshrl.u32 %v1232, 7
        %v1234 = vsub.s32 %v1231, %v1233
        %v1235 = vrot.slane %v1221, %v1234
        %v1236 = vcombine.low %v1203, %v1219
        %v1237 = vcombine.high %v1203, %v1219
        %v1239 = vunpack.c.l.s4 1934713408
        %v1240 = vunpack.c.0.s8 %v1239
        %v1241 = vlaneseq
        %v1242 = vshrl.u32 %v1241, 7
        %v1243 = vsub.s32 %v1240, %v1242
        %v1244 = vrot.slane %v1236, %v1243
        %v1246 = vunpack.c.l.s4 1934713408
        %v1247 = vunpack.c.0.s8 %v1246
        %v1248 = vlaneseq
        %v1249 = vshrl.u32 %v1248, 7
        %v1250 = vsub.s32 %v1247, %v1249
        %v1251 = vrot.slane %v1237, %v1250
        %v1252 = vcombine.high %v1228, 0.0
        %v1253 = vcombine.high %v1235, 0.0
        %v1254 = vcombine.high %v1244, 0.0
        %v1255 = vcombine.high %v1251, 0.0
        %v1256 = vcombine.low %v1167, %v1175
        %v1257 = vcombine.high %v1167, %v1175
        %v1259 = vunpack.c.l.s4 1983009808
        %v1260 = vunpack.c.0.s8 %v1259
        %v1261 = vlaneseq
        %v1262 = vshrl.u32 %v1261, 7
        %v1263 = vsub.s32 %v1260, %v1262
        %v1264 = vrot.slane %v1256, %v1263
        %v1266 = vunpack.c.l.s4 1983009808
        %v1267 = vunpack.c.0.s8 %v1266
        %v1268 = vlaneseq
        %v1269 = vshrl.u32 %v1268, 7
        %v1270 = vsub.s32 %v1267, %v1269
        %v1271 = vrot.slane %v1257, %v1270
        %v1272 = vcombine.low %v1171, %v1179
        %v1273 = vcombine.high %v1171, %v1179
        %v1275 = vunpack.c.l.s4 1983009808
        %v1276 = vunpack.c.0.s8 %v1275
        %v1277 = vlaneseq
        %v1278 = vshrl.u32 %v1277, 7
        %v1279 = vsub.s32 %v1276, %v1278
        %v1280 = vrot.slane %v1272, %v1279
        %v1282 = vunpack.c.l.s4 1983009808
        %v1283 = vunpack.c.0.s8 %v1282
        %v1284 = vlaneseq
        %v1285 = vshrl.u32 %v1284, 7
        %v1286 = vsub.s32 %v1283, %v1285
        %v1287 = vrot.slane %v1273, %v1286
        %v1288 = vcombine.low %v1264, %v1280
        %v1289 = vcombine.high %v1264, %v1280
        %v1291 = vunpack.c.l.s4 1934713408
        %v1292 = vunpack.c.0.s8 %v1291
        %v1293 = vlaneseq
        %v1294 = vshrl.u32 %v1293, 7
        %v1295 = vsub.s32 %v1292, %v1294
        %v1296 = vrot.slane %v1288, %v1295
        %v1298 = vunpack.c.l.s4 1934713408
        %v1299 = vunpack.c.0.s8 %v1298
        %v1300 = vlaneseq
        %v1301 = vshrl.u32 %v1300, 7
        %v1302 = vsub.s32 %v1299, %v1301
        %v1303 = vrot.slane %v1289, %v1302
        %v1304 = vcombine.low %v1271, %v1287
        %v1305 = vcombine.high %v1271, %v1287
        %v1307 = vunpack.c.l.s4 1934713408
        %v1308 = vunpack.c.0.s8 %v1307
        %v1309 = vlaneseq
        %v1310 = vshrl.u32 %v1309, 7
        %v1311 = vsub.s32 %v1308, %v1310
        %v1312 = vrot.slane %v1304, %v1311
        %v1314 = vunpack.c.l.s4 1934713408
        %v1315 = vunpack.c.0.s8 %v1314
        %v1316 = vlaneseq
        %v1317 = vshrl.u32 %v1316, 7
        %v1318 = vsub.s32 %v1315, %v1317
        %v1319 = vrot.slane %v1305, %v1318
        %v1320 = vcombine.high %v1296, 0.0
        %v1321 = vcombine.high %v1303, 0.0
        %v1322 = vcombine.high %v1312, 0.0
        %v1323 = vcombine.high %v1319, 0.0
        %1325 = vrot.lane.b32.xlu0 %v1252, 16
        %v1326 = vpop.permute.xlu0 %1325
        %1329 = vrot.lane.b32.xlu0 %v1235, 32
        %v1330 = vpop.permute.xlu0 %1329
        %1333 = vrot.lane.b32.xlu0 %v1253, 48
        %v1334 = vpop.permute.xlu0 %1333
        %1337 = vrot.lane.b32.xlu0 %v1244, 64
        %v1338 = vpop.permute.xlu0 %1337
        %1341 = vrot.lane.b32.xlu0 %v1254, 80
        %v1342 = vpop.permute.xlu0 %1341
        %1345 = vrot.lane.b32.xlu0 %v1251, 96
        %v1346 = vpop.permute.xlu0 %1345
        %1349 = vrot.lane.b32.xlu0 %v1255, 112
        %v1350 = vpop.permute.xlu0 %1349
        %1353 = vrot.lane.b32.xlu0 %v1320, 16
        %v1354 = vpop.permute.xlu0 %1353
        %1357 = vrot.lane.b32.xlu0 %v1303, 32
        %v1358 = vpop.permute.xlu0 %1357
        %1361 = vrot.lane.b32.xlu0 %v1321, 48
        %v1362 = vpop.permute.xlu0 %1361
        %1365 = vrot.lane.b32.xlu0 %v1312, 64
        %v1366 = vpop.permute.xlu0 %1365
        %1369 = vrot.lane.b32.xlu0 %v1322, 80
        %v1370 = vpop.permute.xlu0 %1369
        %1373 = vrot.lane.b32.xlu0 %v1319, 96
        %v1374 = vpop.permute.xlu0 %1373
        %1377 = vrot.lane.b32.xlu0 %v1323, 112
        %v1378 = vpop.permute.xlu0 %1377
        %v1380 = vsel %vm453, %v1228, %v1326
        %v1381 = vsel %vm455, %v1380, %v1330
        %v1382 = vsel %vm457, %v1381, %v1334
        %v1383 = vsel %vm459, %v1382, %v1338
        %v1384 = vsel %vm461, %v1383, %v1342
        %v1385 = vsel %vm463, %v1384, %v1346
        %v1386 = vsel %vm465, %v1385, %v1350
        %v1387 = vsel %vm453, %v1296, %v1354
        %v1388 = vsel %vm455, %v1387, %v1358
        %v1389 = vsel %vm457, %v1388, %v1362
        %v1390 = vsel %vm459, %v1389, %v1366
        %v1391 = vsel %vm461, %v1390, %v1370
        %v1392 = vsel %vm463, %v1391, %v1374
        %v1393 = vsel %vm465, %v1392, %v1378
        %1394 = vrot.lane.b32.xlu0 %v942, 126
        %v1395 = vpop.permute.xlu0 %1394
        %1396 = vrot.lane.b32.xlu0 %v943, 126
        %v1397 = vpop.permute.xlu0 %1396
        %1398 = vrot.lane.b32.xlu0 %v944, 126
        %v1399 = vpop.permute.xlu0 %1398
        %1400 = vrot.lane.b32.xlu0 %v945, 126
        %v1401 = vpop.permute.xlu0 %1400
        %1402 = vrot.lane.b32.xlu0 %v946, 126
        %v1403 = vpop.permute.xlu0 %1402
        %1404 = vrot.lane.b32.xlu0 %v947, 126
        %v1405 = vpop.permute.xlu0 %1404
        %1406 = vrot.lane.b32.xlu0 %v948, 126
        %v1407 = vpop.permute.xlu0 %1406
        %1408 = vrot.lane.b32.xlu0 %v949, 126
        %v1409 = vpop.permute.xlu0 %1408
        %v1418 = vcombine.low %v1395, %v1403
        %v1419 = vcombine.high %v1395, %v1403
        %v1421 = vunpack.c.l.s4 1983009808
        %v1422 = vunpack.c.0.s8 %v1421
        %v1423 = vlaneseq
        %v1424 = vshrl.u32 %v1423, 7
        %v1425 = vsub.s32 %v1422, %v1424
        %v1426 = vrot.slane %v1418, %v1425
        %v1428 = vunpack.c.l.s4 1983009808
        %v1429 = vunpack.c.0.s8 %v1428
        %v1430 = vlaneseq
        %v1431 = vshrl.u32 %v1430, 7
        %v1432 = vsub.s32 %v1429, %v1431
        %v1433 = vrot.slane %v1419, %v1432
        %v1434 = vcombine.low %v1399, %v1407
        %v1435 = vcombine.high %v1399, %v1407
        %v1437 = vunpack.c.l.s4 1983009808
        %v1438 = vunpack.c.0.s8 %v1437
        %v1439 = vlaneseq
        %v1440 = vshrl.u32 %v1439, 7
        %v1441 = vsub.s32 %v1438, %v1440
        %v1442 = vrot.slane %v1434, %v1441
        %v1444 = vunpack.c.l.s4 1983009808
        %v1445 = vunpack.c.0.s8 %v1444
        %v1446 = vlaneseq
        %v1447 = vshrl.u32 %v1446, 7
        %v1448 = vsub.s32 %v1445, %v1447
        %v1449 = vrot.slane %v1435, %v1448
        %v1450 = vcombine.low %v1426, %v1442
        %v1451 = vcombine.high %v1426, %v1442
        %v1453 = vunpack.c.l.s4 1934713408
        %v1454 = vunpack.c.0.s8 %v1453
        %v1455 = vlaneseq
        %v1456 = vshrl.u32 %v1455, 7
        %v1457 = vsub.s32 %v1454, %v1456
        %v1458 = vrot.slane %v1450, %v1457
        %v1460 = vunpack.c.l.s4 1934713408
        %v1461 = vunpack.c.0.s8 %v1460
        %v1462 = vlaneseq
        %v1463 = vshrl.u32 %v1462, 7
        %v1464 = vsub.s32 %v1461, %v1463
        %v1465 = vrot.slane %v1451, %v1464
        %v1466 = vcombine.low %v1433, %v1449
        %v1467 = vcombine.high %v1433, %v1449
        %v1469 = vunpack.c.l.s4 1934713408
        %v1470 = vunpack.c.0.s8 %v1469
        %v1471 = vlaneseq
        %v1472 = vshrl.u32 %v1471, 7
        %v1473 = vsub.s32 %v1470, %v1472
        %v1474 = vrot.slane %v1466, %v1473
        %v1476 = vunpack.c.l.s4 1934713408
        %v1477 = vunpack.c.0.s8 %v1476
        %v1478 = vlaneseq
        %v1479 = vshrl.u32 %v1478, 7
        %v1480 = vsub.s32 %v1477, %v1479
        %v1481 = vrot.slane %v1467, %v1480
        %v1482 = vcombine.high %v1458, 0.0
        %v1483 = vcombine.high %v1465, 0.0
        %v1484 = vcombine.high %v1474, 0.0
        %v1485 = vcombine.high %v1481, 0.0
        %v1486 = vcombine.low %v1397, %v1405
        %v1487 = vcombine.high %v1397, %v1405
        %v1489 = vunpack.c.l.s4 1983009808
        %v1490 = vunpack.c.0.s8 %v1489
        %v1491 = vlaneseq
        %v1492 = vshrl.u32 %v1491, 7
        %v1493 = vsub.s32 %v1490, %v1492
        %v1494 = vrot.slane %v1486, %v1493
        %v1496 = vunpack.c.l.s4 1983009808
        %v1497 = vunpack.c.0.s8 %v1496
        %v1498 = vlaneseq
        %v1499 = vshrl.u32 %v1498, 7
        %v1500 = vsub.s32 %v1497, %v1499
        %v1501 = vrot.slane %v1487, %v1500
        %v1502 = vcombine.low %v1401, %v1409
        %v1503 = vcombine.high %v1401, %v1409
        %v1505 = vunpack.c.l.s4 1983009808
        %v1506 = vunpack.c.0.s8 %v1505
        %v1507 = vlaneseq
        %v1508 = vshrl.u32 %v1507, 7
        %v1509 = vsub.s32 %v1506, %v1508
        %v1510 = vrot.slane %v1502, %v1509
        %v1512 = vunpack.c.l.s4 1983009808
        %v1513 = vunpack.c.0.s8 %v1512
        %v1514 = vlaneseq
        %v1515 = vshrl.u32 %v1514, 7
        %v1516 = vsub.s32 %v1513, %v1515
        %v1517 = vrot.slane %v1503, %v1516
        %v1518 = vcombine.low %v1494, %v1510
        %v1519 = vcombine.high %v1494, %v1510
        %v1521 = vunpack.c.l.s4 1934713408
        %v1522 = vunpack.c.0.s8 %v1521
        %v1523 = vlaneseq
        %v1524 = vshrl.u32 %v1523, 7
        %v1525 = vsub.s32 %v1522, %v1524
        %v1526 = vrot.slane %v1518, %v1525
        %v1528 = vunpack.c.l.s4 1934713408
        %v1529 = vunpack.c.0.s8 %v1528
        %v1530 = vlaneseq
        %v1531 = vshrl.u32 %v1530, 7
        %v1532 = vsub.s32 %v1529, %v1531
        %v1533 = vrot.slane %v1519, %v1532
        %v1534 = vcombine.low %v1501, %v1517
        %v1535 = vcombine.high %v1501, %v1517
        %v1537 = vunpack.c.l.s4 1934713408
        %v1538 = vunpack.c.0.s8 %v1537
        %v1539 = vlaneseq
        %v1540 = vshrl.u32 %v1539, 7
        %v1541 = vsub.s32 %v1538, %v1540
        %v1542 = vrot.slane %v1534, %v1541
        %v1544 = vunpack.c.l.s4 1934713408
        %v1545 = vunpack.c.0.s8 %v1544
        %v1546 = vlaneseq
        %v1547 = vshrl.u32 %v1546, 7
        %v1548 = vsub.s32 %v1545, %v1547
        %v1549 = vrot.slane %v1535, %v1548
        %v1550 = vcombine.high %v1526, 0.0
        %v1551 = vcombine.high %v1533, 0.0
        %v1552 = vcombine.high %v1542, 0.0
        %v1553 = vcombine.high %v1549, 0.0
        %1555 = vrot.lane.b32.xlu0 %v1482, 16
        %v1556 = vpop.permute.xlu0 %1555
        %1559 = vrot.lane.b32.xlu0 %v1465, 32
        %v1560 = vpop.permute.xlu0 %1559
        %1563 = vrot.lane.b32.xlu0 %v1483, 48
        %v1564 = vpop.permute.xlu0 %1563
        %1567 = vrot.lane.b32.xlu0 %v1474, 64
        %v1568 = vpop.permute.xlu0 %1567
        %1571 = vrot.lane.b32.xlu0 %v1484, 80
        %v1572 = vpop.permute.xlu0 %1571
        %1575 = vrot.lane.b32.xlu0 %v1481, 96
        %v1576 = vpop.permute.xlu0 %1575
        %1579 = vrot.lane.b32.xlu0 %v1485, 112
        %v1580 = vpop.permute.xlu0 %1579
        %1583 = vrot.lane.b32.xlu0 %v1550, 16
        %v1584 = vpop.permute.xlu0 %1583
        %1587 = vrot.lane.b32.xlu0 %v1533, 32
        %v1588 = vpop.permute.xlu0 %1587
        %1591 = vrot.lane.b32.xlu0 %v1551, 48
        %v1592 = vpop.permute.xlu0 %1591
        %1595 = vrot.lane.b32.xlu0 %v1542, 64
        %v1596 = vpop.permute.xlu0 %1595
        %1599 = vrot.lane.b32.xlu0 %v1552, 80
        %v1600 = vpop.permute.xlu0 %1599
        %1603 = vrot.lane.b32.xlu0 %v1549, 96
        %v1604 = vpop.permute.xlu0 %1603
        %1607 = vrot.lane.b32.xlu0 %v1553, 112
        %v1608 = vpop.permute.xlu0 %1607
        %v1610 = vsel %vm453, %v1458, %v1556
        %v1611 = vsel %vm455, %v1610, %v1560
        %v1612 = vsel %vm457, %v1611, %v1564
        %v1613 = vsel %vm459, %v1612, %v1568
        %v1614 = vsel %vm461, %v1613, %v1572
        %v1615 = vsel %vm463, %v1614, %v1576
        %v1616 = vsel %vm465, %v1615, %v1580
        %v1617 = vsel %vm453, %v1526, %v1584
        %v1618 = vsel %vm455, %v1617, %v1588
        %v1619 = vsel %vm457, %v1618, %v1592
        %v1620 = vsel %vm459, %v1619, %v1596
        %v1621 = vsel %vm461, %v1620, %v1600
        %v1622 = vsel %vm463, %v1621, %v1604
        %v1623 = vsel %vm465, %v1622, %v1608
        %v1624 = vld [vmem:[#allocation2 + $0x2] sm:$0xff]
        %v1625 = vld [vmem:[#allocation2 + $0xa] sm:$0xff]
        %v1626 = vld [vmem:[#allocation2 + $0x1a] sm:$0xff]
        %v1627 = vld [vmem:[#allocation2 + $0x22] sm:$0xff]
        %v1628 = vld [vmem:[#allocation2 + $0x32] sm:$0xff]
        %v1629 = vld [vmem:[#allocation2 + $0x3a] sm:$0xff]
        %v1630 = vld [vmem:[#allocation2 + $0x4a] sm:$0xff]
        %v1631 = vld [vmem:[#allocation2 + $0x52] sm:$0xff]
        %v1632 = vcombine.low %v1624, %v1628
        %v1633 = vcombine.high %v1624, %v1628
        %v1635 = vunpack.c.l.s4 1983009808
        %v1636 = vunpack.c.0.s8 %v1635
        %v1637 = vlaneseq
        %v1638 = vshrl.u32 %v1637, 7
        %v1639 = vsub.s32 %v1636, %v1638
        %v1640 = vrot.slane %v1632, %v1639
        %v1642 = vunpack.c.l.s4 1983009808
        %v1643 = vunpack.c.0.s8 %v1642
        %v1644 = vlaneseq
        %v1645 = vshrl.u32 %v1644, 7
        %v1646 = vsub.s32 %v1643, %v1645
        %v1647 = vrot.slane %v1633, %v1646
        %v1648 = vcombine.low %v1626, %v1630
        %v1649 = vcombine.high %v1626, %v1630
        %v1651 = vunpack.c.l.s4 1983009808
        %v1652 = vunpack.c.0.s8 %v1651
        %v1653 = vlaneseq
        %v1654 = vshrl.u32 %v1653, 7
        %v1655 = vsub.s32 %v1652, %v1654
        %v1656 = vrot.slane %v1648, %v1655
        %v1658 = vunpack.c.l.s4 1983009808
        %v1659 = vunpack.c.0.s8 %v1658
        %v1660 = vlaneseq
        %v1661 = vshrl.u32 %v1660, 7
        %v1662 = vsub.s32 %v1659, %v1661
        %v1663 = vrot.slane %v1649, %v1662
        %v1664 = vcombine.low %v1640, %v1656
        %v1665 = vcombine.high %v1640, %v1656
        %v1667 = vunpack.c.l.s4 1934713408
        %v1668 = vunpack.c.0.s8 %v1667
        %v1669 = vlaneseq
        %v1670 = vshrl.u32 %v1669, 7
        %v1671 = vsub.s32 %v1668, %v1670
        %v1672 = vrot.slane %v1664, %v1671
        %v1674 = vunpack.c.l.s4 1934713408
        %v1675 = vunpack.c.0.s8 %v1674
        %v1676 = vlaneseq
        %v1677 = vshrl.u32 %v1676, 7
        %v1678 = vsub.s32 %v1675, %v1677
        %v1679 = vrot.slane %v1665, %v1678
        %v1680 = vcombine.low %v1647, %v1663
        %v1681 = vcombine.high %v1647, %v1663
        %v1683 = vunpack.c.l.s4 1934713408
        %v1684 = vunpack.c.0.s8 %v1683
        %v1685 = vlaneseq
        %v1686 = vshrl.u32 %v1685, 7
        %v1687 = vsub.s32 %v1684, %v1686
        %v1688 = vrot.slane %v1680, %v1687
        %v1690 = vunpack.c.l.s4 1934713408
        %v1691 = vunpack.c.0.s8 %v1690
        %v1692 = vlaneseq
        %v1693 = vshrl.u32 %v1692, 7
        %v1694 = vsub.s32 %v1691, %v1693
        %v1695 = vrot.slane %v1681, %v1694
        %v1696 = vcombine.high %v1672, 0.0
        %v1697 = vcombine.high %v1679, 0.0
        %v1698 = vcombine.high %v1688, 0.0
        %v1699 = vcombine.high %v1695, 0.0
        %v1700 = vcombine.low %v1625, %v1629
        %v1701 = vcombine.high %v1625, %v1629
        %v1703 = vunpack.c.l.s4 1983009808
        %v1704 = vunpack.c.0.s8 %v1703
        %v1705 = vlaneseq
        %v1706 = vshrl.u32 %v1705, 7
        %v1707 = vsub.s32 %v1704, %v1706
        %v1708 = vrot.slane %v1700, %v1707
        %v1710 = vunpack.c.l.s4 1983009808
        %v1711 = vunpack.c.0.s8 %v1710
        %v1712 = vlaneseq
        %v1713 = vshrl.u32 %v1712, 7
        %v1714 = vsub.s32 %v1711, %v1713
        %v1715 = vrot.slane %v1701, %v1714
        %v1716 = vcombine.low %v1627, %v1631
        %v1717 = vcombine.high %v1627, %v1631
        %v1719 = vunpack.c.l.s4 1983009808
        %v1720 = vunpack.c.0.s8 %v1719
        %v1721 = vlaneseq
        %v1722 = vshrl.u32 %v1721, 7
        %v1723 = vsub.s32 %v1720, %v1722
        %v1724 = vrot.slane %v1716, %v1723
        %v1726 = vunpack.c.l.s4 1983009808
        %v1727 = vunpack.c.0.s8 %v1726
        %v1728 = vlaneseq
        %v1729 = vshrl.u32 %v1728, 7
        %v1730 = vsub.s32 %v1727, %v1729
        %v1731 = vrot.slane %v1717, %v1730
        %v1732 = vcombine.low %v1708, %v1724
        %v1733 = vcombine.high %v1708, %v1724
        %v1735 = vunpack.c.l.s4 1934713408
        %v1736 = vunpack.c.0.s8 %v1735
        %v1737 = vlaneseq
        %v1738 = vshrl.u32 %v1737, 7
        %v1739 = vsub.s32 %v1736, %v1738
        %v1740 = vrot.slane %v1732, %v1739
        %v1742 = vunpack.c.l.s4 1934713408
        %v1743 = vunpack.c.0.s8 %v1742
        %v1744 = vlaneseq
        %v1745 = vshrl.u32 %v1744, 7
        %v1746 = vsub.s32 %v1743, %v1745
        %v1747 = vrot.slane %v1733, %v1746
        %v1748 = vcombine.low %v1715, %v1731
        %v1749 = vcombine.high %v1715, %v1731
        %v1751 = vunpack.c.l.s4 1934713408
        %v1752 = vunpack.c.0.s8 %v1751
        %v1753 = vlaneseq
        %v1754 = vshrl.u32 %v1753, 7
        %v1755 = vsub.s32 %v1752, %v1754
        %v1756 = vrot.slane %v1748, %v1755
        %v1758 = vunpack.c.l.s4 1934713408
        %v1759 = vunpack.c.0.s8 %v1758
        %v1760 = vlaneseq
        %v1761 = vshrl.u32 %v1760, 7
        %v1762 = vsub.s32 %v1759, %v1761
        %v1763 = vrot.slane %v1749, %v1762
        %v1764 = vcombine.high %v1740, 0.0
        %v1765 = vcombine.high %v1747, 0.0
        %v1766 = vcombine.high %v1756, 0.0
        %v1767 = vcombine.high %v1763, 0.0
        %1769 = vrot.lane.b32.xlu0 %v1696, 16
        %v1770 = vpop.permute.xlu0 %1769
        %1773 = vrot.lane.b32.xlu0 %v1679, 32
        %v1774 = vpop.permute.xlu0 %1773
        %1777 = vrot.lane.b32.xlu0 %v1697, 48
        %v1778 = vpop.permute.xlu0 %1777
        %1781 = vrot.lane.b32.xlu0 %v1688, 64
        %v1782 = vpop.permute.xlu0 %1781
        %1785 = vrot.lane.b32.xlu0 %v1698, 80
        %v1786 = vpop.permute.xlu0 %1785
        %1789 = vrot.lane.b32.xlu0 %v1695, 96
        %v1790 = vpop.permute.xlu0 %1789
        %1793 = vrot.lane.b32.xlu0 %v1699, 112
        %v1794 = vpop.permute.xlu0 %1793
        %1797 = vrot.lane.b32.xlu0 %v1764, 16
        %v1798 = vpop.permute.xlu0 %1797
        %1801 = vrot.lane.b32.xlu0 %v1747, 32
        %v1802 = vpop.permute.xlu0 %1801
        %1805 = vrot.lane.b32.xlu0 %v1765, 48
        %v1806 = vpop.permute.xlu0 %1805
        %1809 = vrot.lane.b32.xlu0 %v1756, 64
        %v1810 = vpop.permute.xlu0 %1809
        %1813 = vrot.lane.b32.xlu0 %v1766, 80
        %v1814 = vpop.permute.xlu0 %1813
        %1817 = vrot.lane.b32.xlu0 %v1763, 96
        %v1818 = vpop.permute.xlu0 %1817
        %1821 = vrot.lane.b32.xlu0 %v1767, 112
        %v1822 = vpop.permute.xlu0 %1821
        %v1824 = vsel %vm453, %v1672, %v1770
        %v1825 = vsel %vm455, %v1824, %v1774
        %v1826 = vsel %vm457, %v1825, %v1778
        %v1827 = vsel %vm459, %v1826, %v1782
        %v1828 = vsel %vm461, %v1827, %v1786
        %v1829 = vsel %vm463, %v1828, %v1790
        %v1830 = vsel %vm465, %v1829, %v1794
        %v1831 = vsel %vm453, %v1740, %v1798
        %v1832 = vsel %vm455, %v1831, %v1802
        %v1833 = vsel %vm457, %v1832, %v1806
        %v1834 = vsel %vm459, %v1833, %v1810
        %v1835 = vsel %vm461, %v1834, %v1814
        %v1836 = vsel %vm463, %v1835, %v1818
        %v1837 = vsel %vm465, %v1836, %v1822
        %1846 = vrot.lane.b32.xlu0 %v1624, 127
        %v1847 = vpop.permute.xlu0 %1846
        %1848 = vrot.lane.b32.xlu0 %v1625, 127
        %v1849 = vpop.permute.xlu0 %1848
        %1850 = vrot.lane.b32.xlu0 %v1626, 127
        %v1851 = vpop.permute.xlu0 %1850
        %1852 = vrot.lane.b32.xlu0 %v1627, 127
        %v1853 = vpop.permute.xlu0 %1852
        %1854 = vrot.lane.b32.xlu0 %v1628, 127
        %v1855 = vpop.permute.xlu0 %1854
        %1856 = vrot.lane.b32.xlu0 %v1629, 127
        %v1857 = vpop.permute.xlu0 %1856
        %1858 = vrot.lane.b32.xlu0 %v1630, 127
        %v1859 = vpop.permute.xlu0 %1858
        %1860 = vrot.lane.b32.xlu0 %v1631, 127
        %v1861 = vpop.permute.xlu0 %1860
        %v1870 = vcombine.low %v1847, %v1855
        %v1871 = vcombine.high %v1847, %v1855
        %v1873 = vunpack.c.l.s4 1983009808
        %v1874 = vunpack.c.0.s8 %v1873
        %v1875 = vlaneseq
        %v1876 = vshrl.u32 %v1875, 7
        %v1877 = vsub.s32 %v1874, %v1876
        %v1878 = vrot.slane %v1870, %v1877
        %v1880 = vunpack.c.l.s4 1983009808
        %v1881 = vunpack.c.0.s8 %v1880
        %v1882 = vlaneseq
        %v1883 = vshrl.u32 %v1882, 7
        %v1884 = vsub.s32 %v1881, %v1883
        %v1885 = vrot.slane %v1871, %v1884
        %v1886 = vcombine.low %v1851, %v1859
        %v1887 = vcombine.high %v1851, %v1859
        %v1889 = vunpack.c.l.s4 1983009808
        %v1890 = vunpack.c.0.s8 %v1889
        %v1891 = vlaneseq
        %v1892 = vshrl.u32 %v1891, 7
        %v1893 = vsub.s32 %v1890, %v1892
        %v1894 = vrot.slane %v1886, %v1893
        %v1896 = vunpack.c.l.s4 1983009808
        %v1897 = vunpack.c.0.s8 %v1896
        %v1898 = vlaneseq
        %v1899 = vshrl.u32 %v1898, 7
        %v1900 = vsub.s32 %v1897, %v1899
        %v1901 = vrot.slane %v1887, %v1900
        %v1902 = vcombine.low %v1878, %v1894
        %v1903 = vcombine.high %v1878, %v1894
        %v1905 = vunpack.c.l.s4 1934713408
        %v1906 = vunpack.c.0.s8 %v1905
        %v1907 = vlaneseq
        %v1908 = vshrl.u32 %v1907, 7
        %v1909 = vsub.s32 %v1906, %v1908
        %v1910 = vrot.slane %v1902, %v1909
        %v1912 = vunpack.c.l.s4 1934713408
        %v1913 = vunpack.c.0.s8 %v1912
        %v1914 = vlaneseq
        %v1915 = vshrl.u32 %v1914, 7
        %v1916 = vsub.s32 %v1913, %v1915
        %v1917 = vrot.slane %v1903, %v1916
        %v1918 = vcombine.low %v1885, %v1901
        %v1919 = vcombine.high %v1885, %v1901
        %v1921 = vunpack.c.l.s4 1934713408
        %v1922 = vunpack.c.0.s8 %v1921
        %v1923 = vlaneseq
        %v1924 = vshrl.u32 %v1923, 7
        %v1925 = vsub.s32 %v1922, %v1924
        %v1926 = vrot.slane %v1918, %v1925
        %v1928 = vunpack.c.l.s4 1934713408
        %v1929 = vunpack.c.0.s8 %v1928
        %v1930 = vlaneseq
        %v1931 = vshrl.u32 %v1930, 7
        %v1932 = vsub.s32 %v1929, %v1931
        %v1933 = vrot.slane %v1919, %v1932
        %v1934 = vcombine.high %v1910, 0.0
        %v1935 = vcombine.high %v1917, 0.0
        %v1936 = vcombine.high %v1926, 0.0
        %v1937 = vcombine.high %v1933, 0.0
        %v1938 = vcombine.low %v1849, %v1857
        %v1939 = vcombine.high %v1849, %v1857
        %v1941 = vunpack.c.l.s4 1983009808
        %v1942 = vunpack.c.0.s8 %v1941
        %v1943 = vlaneseq
        %v1944 = vshrl.u32 %v1943, 7
        %v1945 = vsub.s32 %v1942, %v1944
        %v1946 = vrot.slane %v1938, %v1945
        %v1948 = vunpack.c.l.s4 1983009808
        %v1949 = vunpack.c.0.s8 %v1948
        %v1950 = vlaneseq
        %v1951 = vshrl.u32 %v1950, 7
        %v1952 = vsub.s32 %v1949, %v1951
        %v1953 = vrot.slane %v1939, %v1952
        %v1954 = vcombine.low %v1853, %v1861
        %v1955 = vcombine.high %v1853, %v1861
        %v1957 = vunpack.c.l.s4 1983009808
        %v1958 = vunpack.c.0.s8 %v1957
        %v1959 = vlaneseq
        %v1960 = vshrl.u32 %v1959, 7
        %v1961 = vsub.s32 %v1958, %v1960
        %v1962 = vrot.slane %v1954, %v1961
        %v1964 = vunpack.c.l.s4 1983009808
        %v1965 = vunpack.c.0.s8 %v1964
        %v1966 = vlaneseq
        %v1967 = vshrl.u32 %v1966, 7
        %v1968 = vsub.s32 %v1965, %v1967
        %v1969 = vrot.slane %v1955, %v1968
        %v1970 = vcombine.low %v1946, %v1962
        %v1971 = vcombine.high %v1946, %v1962
        %v1973 = vunpack.c.l.s4 1934713408
        %v1974 = vunpack.c.0.s8 %v1973
        %v1975 = vlaneseq
        %v1976 = vshrl.u32 %v1975, 7
        %v1977 = vsub.s32 %v1974, %v1976
        %v1978 = vrot.slane %v1970, %v1977
        %v1980 = vunpack.c.l.s4 1934713408
        %v1981 = vunpack.c.0.s8 %v1980
        %v1982 = vlaneseq
        %v1983 = vshrl.u32 %v1982, 7
        %v1984 = vsub.s32 %v1981, %v1983
        %v1985 = vrot.slane %v1971, %v1984
        %v1986 = vcombine.low %v1953, %v1969
        %v1987 = vcombine.high %v1953, %v1969
        %v1989 = vunpack.c.l.s4 1934713408
        %v1990 = vunpack.c.0.s8 %v1989
        %v1991 = vlaneseq
        %v1992 = vshrl.u32 %v1991, 7
        %v1993 = vsub.s32 %v1990, %v1992
        %v1994 = vrot.slane %v1986, %v1993
        %v1996 = vunpack.c.l.s4 1934713408
        %v1997 = vunpack.c.0.s8 %v1996
        %v1998 = vlaneseq
        %v1999 = vshrl.u32 %v1998, 7
        %v2000 = vsub.s32 %v1997, %v1999
        %v2001 = vrot.slane %v1987, %v2000
        %v2002 = vcombine.high %v1978, 0.0
        %v2003 = vcombine.high %v1985, 0.0
        %v2004 = vcombine.high %v1994, 0.0
        %v2005 = vcombine.high %v2001, 0.0
        %2007 = vrot.lane.b32.xlu0 %v1934, 16
        %v2008 = vpop.permute.xlu0 %2007
        %2011 = vrot.lane.b32.xlu0 %v1917, 32
        %v2012 = vpop.permute.xlu0 %2011
        %2015 = vrot.lane.b32.xlu0 %v1935, 48
        %v2016 = vpop.permute.xlu0 %2015
        %2019 = vrot.lane.b32.xlu0 %v1926, 64
        %v2020 = vpop.permute.xlu0 %2019
        %2023 = vrot.lane.b32.xlu0 %v1936, 80
        %v2024 = vpop.permute.xlu0 %2023
        %2027 = vrot.lane.b32.xlu0 %v1933, 96
        %v2028 = vpop.permute.xlu0 %2027
        %2031 = vrot.lane.b32.xlu0 %v1937, 112
        %v2032 = vpop.permute.xlu0 %2031
        %2035 = vrot.lane.b32.xlu0 %v2002, 16
        %v2036 = vpop.permute.xlu0 %2035
        %2039 = vrot.lane.b32.xlu0 %v1985, 32
        %v2040 = vpop.permute.xlu0 %2039
        %2043 = vrot.lane.b32.xlu0 %v2003, 48
        %v2044 = vpop.permute.xlu0 %2043
        %2047 = vrot.lane.b32.xlu0 %v1994, 64
        %v2048 = vpop.permute.xlu0 %2047
        %2051 = vrot.lane.b32.xlu0 %v2004, 80
        %v2052 = vpop.permute.xlu0 %2051
        %2055 = vrot.lane.b32.xlu0 %v2001, 96
        %v2056 = vpop.permute.xlu0 %2055
        %2059 = vrot.lane.b32.xlu0 %v2005, 112
        %v2060 = vpop.permute.xlu0 %2059
        %v2062 = vsel %vm453, %v1910, %v2008
        %v2063 = vsel %vm455, %v2062, %v2012
        %v2064 = vsel %vm457, %v2063, %v2016
        %v2065 = vsel %vm459, %v2064, %v2020
        %v2066 = vsel %vm461, %v2065, %v2024
        %v2067 = vsel %vm463, %v2066, %v2028
        %v2068 = vsel %vm465, %v2067, %v2032
        %v2069 = vsel %vm453, %v1978, %v2036
        %v2070 = vsel %vm455, %v2069, %v2040
        %v2071 = vsel %vm457, %v2070, %v2044
        %v2072 = vsel %vm459, %v2071, %v2048
        %v2073 = vsel %vm461, %v2072, %v2052
        %v2074 = vsel %vm463, %v2073, %v2056
        %v2075 = vsel %vm465, %v2074, %v2060
        %2076 = vrot.lane.b32.xlu0 %v1624, 126
        %v2077 = vpop.permute.xlu0 %2076
        %2078 = vrot.lane.b32.xlu0 %v1625, 126
        %v2079 = vpop.permute.xlu0 %2078
        %2080 = vrot.lane.b32.xlu0 %v1626, 126
        %v2081 = vpop.permute.xlu0 %2080
        %2082 = vrot.lane.b32.xlu0 %v1627, 126
        %v2083 = vpop.permute.xlu0 %2082
        %2084 = vrot.lane.b32.xlu0 %v1628, 126
        %v2085 = vpop.permute.xlu0 %2084
        %2086 = vrot.lane.b32.xlu0 %v1629, 126
        %v2087 = vpop.permute.xlu0 %2086
        %2088 = vrot.lane.b32.xlu0 %v1630, 126
        %v2089 = vpop.permute.xlu0 %2088
        %2090 = vrot.lane.b32.xlu0 %v1631, 126
        %v2091 = vpop.permute.xlu0 %2090
        %v2100 = vcombine.low %v2077, %v2085
        %v2101 = vcombine.high %v2077, %v2085
        %v2103 = vunpack.c.l.s4 1983009808
        %v2104 = vunpack.c.0.s8 %v2103
        %v2105 = vlaneseq
        %v2106 = vshrl.u32 %v2105, 7
        %v2107 = vsub.s32 %v2104, %v2106
        %v2108 = vrot.slane %v2100, %v2107
        %v2110 = vunpack.c.l.s4 1983009808
        %v2111 = vunpack.c.0.s8 %v2110
        %v2112 = vlaneseq
        %v2113 = vshrl.u32 %v2112, 7
        %v2114 = vsub.s32 %v2111, %v2113
        %v2115 = vrot.slane %v2101, %v2114
        %v2116 = vcombine.low %v2081, %v2089
        %v2117 = vcombine.high %v2081, %v2089
        %v2119 = vunpack.c.l.s4 1983009808
        %v2120 = vunpack.c.0.s8 %v2119
        %v2121 = vlaneseq
        %v2122 = vshrl.u32 %v2121, 7
        %v2123 = vsub.s32 %v2120, %v2122
        %v2124 = vrot.slane %v2116, %v2123
        %v2126 = vunpack.c.l.s4 1983009808
        %v2127 = vunpack.c.0.s8 %v2126
        %v2128 = vlaneseq
        %v2129 = vshrl.u32 %v2128, 7
        %v2130 = vsub.s32 %v2127, %v2129
        %v2131 = vrot.slane %v2117, %v2130
        %v2132 = vcombine.low %v2108, %v2124
        %v2133 = vcombine.high %v2108, %v2124
        %v2135 = vunpack.c.l.s4 1934713408
        %v2136 = vunpack.c.0.s8 %v2135
        %v2137 = vlaneseq
        %v2138 = vshrl.u32 %v2137, 7
        %v2139 = vsub.s32 %v2136, %v2138
        %v2140 = vrot.slane %v2132, %v2139
        %v2142 = vunpack.c.l.s4 1934713408
        %v2143 = vunpack.c.0.s8 %v2142
        %v2144 = vlaneseq
        %v2145 = vshrl.u32 %v2144, 7
        %v2146 = vsub.s32 %v2143, %v2145
        %v2147 = vrot.slane %v2133, %v2146
        %v2148 = vcombine.low %v2115, %v2131
        %v2149 = vcombine.high %v2115, %v2131
        %v2151 = vunpack.c.l.s4 1934713408
        %v2152 = vunpack.c.0.s8 %v2151
        %v2153 = vlaneseq
        %v2154 = vshrl.u32 %v2153, 7
        %v2155 = vsub.s32 %v2152, %v2154
        %v2156 = vrot.slane %v2148, %v2155
        %v2158 = vunpack.c.l.s4 1934713408
        %v2159 = vunpack.c.0.s8 %v2158
        %v2160 = vlaneseq
        %v2161 = vshrl.u32 %v2160, 7
        %v2162 = vsub.s32 %v2159, %v2161
        %v2163 = vrot.slane %v2149, %v2162
        %v2164 = vcombine.high %v2140, 0.0
        %v2165 = vcombine.high %v2147, 0.0
        %v2166 = vcombine.high %v2156, 0.0
        %v2167 = vcombine.high %v2163, 0.0
        %v2168 = vcombine.low %v2079, %v2087
        %v2169 = vcombine.high %v2079, %v2087
        %v2171 = vunpack.c.l.s4 1983009808
        %v2172 = vunpack.c.0.s8 %v2171
        %v2173 = vlaneseq
        %v2174 = vshrl.u32 %v2173, 7
        %v2175 = vsub.s32 %v2172, %v2174
        %v2176 = vrot.slane %v2168, %v2175
        %v2178 = vunpack.c.l.s4 1983009808
        %v2179 = vunpack.c.0.s8 %v2178
        %v2180 = vlaneseq
        %v2181 = vshrl.u32 %v2180, 7
        %v2182 = vsub.s32 %v2179, %v2181
        %v2183 = vrot.slane %v2169, %v2182
        %v2184 = vcombine.low %v2083, %v2091
        %v2185 = vcombine.high %v2083, %v2091
        %v2187 = vunpack.c.l.s4 1983009808
        %v2188 = vunpack.c.0.s8 %v2187
        %v2189 = vlaneseq
        %v2190 = vshrl.u32 %v2189, 7
        %v2191 = vsub.s32 %v2188, %v2190
        %v2192 = vrot.slane %v2184, %v2191
        %v2194 = vunpack.c.l.s4 1983009808
        %v2195 = vunpack.c.0.s8 %v2194
        %v2196 = vlaneseq
        %v2197 = vshrl.u32 %v2196, 7
        %v2198 = vsub.s32 %v2195, %v2197
        %v2199 = vrot.slane %v2185, %v2198
        %v2200 = vcombine.low %v2176, %v2192
        %v2201 = vcombine.high %v2176, %v2192
        %v2203 = vunpack.c.l.s4 1934713408
        %v2204 = vunpack.c.0.s8 %v2203
        %v2205 = vlaneseq
        %v2206 = vshrl.u32 %v2205, 7
        %v2207 = vsub.s32 %v2204, %v2206
        %v2208 = vrot.slane %v2200, %v2207
        %v2210 = vunpack.c.l.s4 1934713408
        %v2211 = vunpack.c.0.s8 %v2210
        %v2212 = vlaneseq
        %v2213 = vshrl.u32 %v2212, 7
        %v2214 = vsub.s32 %v2211, %v2213
        %v2215 = vrot.slane %v2201, %v2214
        %v2216 = vcombine.low %v2183, %v2199
        %v2217 = vcombine.high %v2183, %v2199
        %v2219 = vunpack.c.l.s4 1934713408
        %v2220 = vunpack.c.0.s8 %v2219
        %v2221 = vlaneseq
        %v2222 = vshrl.u32 %v2221, 7
        %v2223 = vsub.s32 %v2220, %v2222
        %v2224 = vrot.slane %v2216, %v2223
        %v2226 = vunpack.c.l.s4 1934713408
        %v2227 = vunpack.c.0.s8 %v2226
        %v2228 = vlaneseq
        %v2229 = vshrl.u32 %v2228, 7
        %v2230 = vsub.s32 %v2227, %v2229
        %v2231 = vrot.slane %v2217, %v2230
        %v2232 = vcombine.high %v2208, 0.0
        %v2233 = vcombine.high %v2215, 0.0
        %v2234 = vcombine.high %v2224, 0.0
        %v2235 = vcombine.high %v2231, 0.0
        %2237 = vrot.lane.b32.xlu0 %v2164, 16
        %v2238 = vpop.permute.xlu0 %2237
        %2241 = vrot.lane.b32.xlu0 %v2147, 32
        %v2242 = vpop.permute.xlu0 %2241
        %2245 = vrot.lane.b32.xlu0 %v2165, 48
        %v2246 = vpop.permute.xlu0 %2245
        %2249 = vrot.lane.b32.xlu0 %v2156, 64
        %v2250 = vpop.permute.xlu0 %2249
        %2253 = vrot.lane.b32.xlu0 %v2166, 80
        %v2254 = vpop.permute.xlu0 %2253
        %2257 = vrot.lane.b32.xlu0 %v2163, 96
        %v2258 = vpop.permute.xlu0 %2257
        %2261 = vrot.lane.b32.xlu0 %v2167, 112
        %v2262 = vpop.permute.xlu0 %2261
        %2265 = vrot.lane.b32.xlu0 %v2232, 16
        %v2266 = vpop.permute.xlu0 %2265
        %2269 = vrot.lane.b32.xlu0 %v2215, 32
        %v2270 = vpop.permute.xlu0 %2269
        %2273 = vrot.lane.b32.xlu0 %v2233, 48
        %v2274 = vpop.permute.xlu0 %2273
        %2277 = vrot.lane.b32.xlu0 %v2224, 64
        %v2278 = vpop.permute.xlu0 %2277
        %2281 = vrot.lane.b32.xlu0 %v2234, 80
        %v2282 = vpop.permute.xlu0 %2281
        %2285 = vrot.lane.b32.xlu0 %v2231, 96
        %v2286 = vpop.permute.xlu0 %2285
        %2289 = vrot.lane.b32.xlu0 %v2235, 112
        %v2290 = vpop.permute.xlu0 %2289
        %v2292 = vsel %vm453, %v2140, %v2238
        %v2293 = vsel %vm455, %v2292, %v2242
        %v2294 = vsel %vm457, %v2293, %v2246
        %v2295 = vsel %vm459, %v2294, %v2250
        %v2296 = vsel %vm461, %v2295, %v2254
        %v2297 = vsel %vm463, %v2296, %v2258
        %v2298 = vsel %vm465, %v2297, %v2262
        %v2299 = vsel %vm453, %v2208, %v2266
        %v2300 = vsel %vm455, %v2299, %v2270
        %v2301 = vsel %vm457, %v2300, %v2274
        %v2302 = vsel %vm459, %v2301, %v2278
        %v2303 = vsel %vm461, %v2302, %v2282
        %v2304 = vsel %vm463, %v2303, %v2286
        %v2305 = vsel %vm465, %v2304, %v2290
        %v2308 = vrot.slane %v704, 4
        %v2309 = vrot.slane %v711, 4
        %v2314 = vrot.slane %v1148, 4
        %v2315 = vrot.slane %v1155, 4
        %v2320 = vrot.slane %v1616, 4
        %v2321 = vrot.slane %v1623, 4
        %v2326 = vrot.slane %v2068, 4
        %v2327 = vrot.slane %v2075, 4
        %vm2330 = vcmask 1043456
        %v2331 = vsel %vm2330, %v466, %v2308
        %v2332 = vsel %vm2330, %v473, %v2309
        %v2333 = vsel %vm2330, %v934, %v2314
        %v2334 = vsel %vm2330, %v941, %v2315
        %v2335 = vsel %vm2330, %v1386, %v2320
        %v2336 = vsel %vm2330, %v1393, %v2321
        %v2337 = vsel %vm2330, %v1830, %v2326
        %v2338 = vsel %vm2330, %v1837, %v2327
        %v2339 = vpack.c.bf16 %v2333, %v2331
        %v2340 = vpack.c.bf16 %v2334, %v2332
        %v2341 = vpack.c.bf16 %v2337, %v2335
        %v2342 = vpack.c.bf16 %v2338, %v2336
        %v2343 = vpack.c.bf16 %v2298, %v2298
        %v2344 = vpack.c.bf16 %v2305, %v2305
        %v2345 = vld [vmem:[%s1] sm:$0x3]
        %v2346 = vld [vmem:[%s2] sm:$0xf]
        %2348 = vset.pattern.permute.xlu0 0
        %2349 = vperm.xlu0 %2348, %v2346
        %v2350 = vpop.permute.xlu0 %2349
        %vm2352 = vcmask 293888
        %v2354 = vsel %vm2352, %v2345, 0
        %vm2356 = vcmask 1041408
        %v2358 = vsel %vm2356, %v2343, 0
        %v2361 = vsel %vm2356, %v2344, 0
        %2363 = vmatprep.subr.bf16.mxu0 0
        %2364 = vmatpush1.bf16.msra.mxu0 0
        %2365 = vmatprep.subr.bf16.mxu0 0
        %2366 = vmatpush1.bf16.msra.mxu0 0
        %2367 = vmatprep.subr.bf16.mxu0 0
        %2368 = vmatpush1.bf16.msra.mxu0 0
        %2369 = vmatprep.subr.bf16.mxu0 0
        %2370 = vmatpush1.bf16.msra.mxu0 0
        %2371 = vmatprep.subr.bf16.mxu0 0
        %2372 = vmatpush1.bf16.msra.mxu0 0
        %2373 = vmatprep.subr.bf16.mxu0 %v2361
        %2374 = vmatpush1.bf16.msra.mxu0 %v2358
        %2375 = vmatprep.subr.bf16.mxu0 %v2342
        %2376 = vmatpush1.bf16.msra.mxu0 %v2341
        %2377 = vmatprep.subr.bf16.mxu0 %v2340
        %2378 = vmatpush1.bf16.msra.mxu0 %v2339
        %2379 = vmatprep.subr.bf16.mxu0 0
        %2380 = vmatpush2.bf16.msra.mxu0 0
        %2381 = vmatprep.subr.bf16.mxu0 0
        %2382 = vmatpush2.bf16.msra.mxu0 0
        %2383 = vmatprep.subr.bf16.mxu0 0
        %2384 = vmatpush2.bf16.msra.mxu0 0
        %2385 = vmatprep.subr.bf16.mxu0 0
        %2386 = vmatpush2.bf16.msra.mxu0 0
        %2387 = vmatprep.subr.bf16.mxu0 0
        %2388 = vmatpush2.bf16.msra.mxu0 0
        %2389 = vmatprep.subr.bf16.mxu0 0
        %2390 = vmatpush2.bf16.msra.mxu0 0
        %2391 = vmatprep.subr.bf16.mxu0 0
        %2392 = vmatpush2.bf16.msra.mxu0 0
        %2393 = vmatprep.subr.bf16.mxu0 0
        %2394 = vmatpush2.bf16.msra.mxu0 0
        %2395 = vmatprep.mubr.bf16.mxu0 0
        %2396 = vmatmul.mubr.bf16.gmra.mxu0 %v2354
        %v2397 = vpop.f32.mrf.mxu0
        %v2398 = vadd.f32 %v2350, %v2397
        %v2399 = vpop.f32.mrf.mxu0
        %v2400 = vadd.f32 %v2350, %v2399
        %v2401 = vpop.f32.mrf.mxu0
        %v2402 = vpop.f32.mrf.mxu0
        %2403 = vdwg.mxu0
        %v2404 = vmax.f32 %v2398, 0.0
        %v2405 = vmax.f32 %v2400, 0.0
        %2407 = vrot.lane.b32.xlu0 %v2404, 112
        %v2408 = vpop.permute.xlu0 %2407
        %2410 = vrot.lane.b32.xlu0 %v2404, 96
        %v2411 = vpop.permute.xlu0 %2410
        %2413 = vrot.lane.b32.xlu0 %v2404, 80
        %v2414 = vpop.permute.xlu0 %2413
        %2416 = vrot.lane.b32.xlu0 %v2404, 64
        %v2417 = vpop.permute.xlu0 %2416
        %2419 = vrot.lane.b32.xlu0 %v2404, 48
        %v2420 = vpop.permute.xlu0 %2419
        %2422 = vrot.lane.b32.xlu0 %v2404, 32
        %v2423 = vpop.permute.xlu0 %2422
        %2425 = vrot.lane.b32.xlu0 %v2404, 16
        %v2426 = vpop.permute.xlu0 %2425
        %2429 = vrot.lane.b32.xlu0 %v2405, 112
        %v2430 = vpop.permute.xlu0 %2429
        %2432 = vrot.lane.b32.xlu0 %v2405, 96
        %v2433 = vpop.permute.xlu0 %2432
        %2435 = vrot.lane.b32.xlu0 %v2405, 80
        %v2436 = vpop.permute.xlu0 %2435
        %2438 = vrot.lane.b32.xlu0 %v2405, 64
        %v2439 = vpop.permute.xlu0 %2438
        %2441 = vrot.lane.b32.xlu0 %v2405, 48
        %v2442 = vpop.permute.xlu0 %2441
        %2444 = vrot.lane.b32.xlu0 %v2405, 32
        %v2445 = vpop.permute.xlu0 %2444
        %2447 = vrot.lane.b32.xlu0 %v2405, 16
        %v2448 = vpop.permute.xlu0 %2447
        %v2450 = vcombine.low %v2404, %v2411
        %v2452 = vunpack.c.l.s4 1983009808
        %v2453 = vunpack.c.0.s8 %v2452
        %v2454 = vlaneseq
        %v2455 = vshrl.u32 %v2454, 7
        %v2456 = vsub.s32 %v2453, %v2455
        %v2457 = vrot.slane %v2450, %v2456
        %v2458 = vcombine.low %v2408, %v2414
        %v2460 = vunpack.c.l.s4 1983009808
        %v2461 = vunpack.c.0.s8 %v2460
        %v2462 = vlaneseq
        %v2463 = vshrl.u32 %v2462, 7
        %v2464 = vsub.s32 %v2461, %v2463
        %v2465 = vrot.slane %v2458, %v2464
        %v2466 = vcombine.low %v2417, %v2423
        %v2468 = vunpack.c.l.s4 1983009808
        %v2469 = vunpack.c.0.s8 %v2468
        %v2470 = vlaneseq
        %v2471 = vshrl.u32 %v2470, 7
        %v2472 = vsub.s32 %v2469, %v2471
        %v2473 = vrot.slane %v2466, %v2472
        %v2474 = vcombine.low %v2420, %v2426
        %v2476 = vunpack.c.l.s4 1983009808
        %v2477 = vunpack.c.0.s8 %v2476
        %v2478 = vlaneseq
        %v2479 = vshrl.u32 %v2478, 7
        %v2480 = vsub.s32 %v2477, %v2479
        %v2481 = vrot.slane %v2474, %v2480
        %v2482 = vcombine.low %v2457, %v2465
        %v2483 = vcombine.high %v2457, %v2465
        %v2485 = vunpack.c.l.s4 1934713408
        %v2486 = vunpack.c.0.s8 %v2485
        %v2487 = vlaneseq
        %v2488 = vshrl.u32 %v2487, 7
        %v2489 = vsub.s32 %v2486, %v2488
        %v2490 = vrot.slane %v2482, %v2489
        %v2492 = vunpack.c.l.s4 1934713408
        %v2493 = vunpack.c.0.s8 %v2492
        %v2494 = vlaneseq
        %v2495 = vshrl.u32 %v2494, 7
        %v2496 = vsub.s32 %v2493, %v2495
        %v2497 = vrot.slane %v2483, %v2496
        %v2498 = vcombine.low %v2473, %v2481
        %v2499 = vcombine.high %v2473, %v2481
        %v2501 = vunpack.c.l.s4 1934713408
        %v2502 = vunpack.c.0.s8 %v2501
        %v2503 = vlaneseq
        %v2504 = vshrl.u32 %v2503, 7
        %v2505 = vsub.s32 %v2502, %v2504
        %v2506 = vrot.slane %v2498, %v2505
        %v2508 = vunpack.c.l.s4 1934713408
        %v2509 = vunpack.c.0.s8 %v2508
        %v2510 = vlaneseq
        %v2511 = vshrl.u32 %v2510, 7
        %v2512 = vsub.s32 %v2509, %v2511
        %v2513 = vrot.slane %v2499, %v2512
        %v2514 = vcombine.low %v2490, %v2506
        %v2515 = vcombine.high %v2490, %v2506
        %v2516 = vcombine.low %v2497, %v2513
        %v2517 = vcombine.high %v2497, %v2513
        %v2518 = vcombine.low %v2405, %v2433
        %v2520 = vunpack.c.l.s4 1983009808
        %v2521 = vunpack.c.0.s8 %v2520
        %v2522 = vlaneseq
        %v2523 = vshrl.u32 %v2522, 7
        %v2524 = vsub.s32 %v2521, %v2523
        %v2525 = vrot.slane %v2518, %v2524
        %v2526 = vcombine.low %v2430, %v2436
        %v2528 = vunpack.c.l.s4 1983009808
        %v2529 = vunpack.c.0.s8 %v2528
        %v2530 = vlaneseq
        %v2531 = vshrl.u32 %v2530, 7
        %v2532 = vsub.s32 %v2529, %v2531
        %v2533 = vrot.slane %v2526, %v2532
        %v2534 = vcombine.low %v2439, %v2445
        %v2536 = vunpack.c.l.s4 1983009808
        %v2537 = vunpack.c.0.s8 %v2536
        %v2538 = vlaneseq
        %v2539 = vshrl.u32 %v2538, 7
        %v2540 = vsub.s32 %v2537, %v2539
        %v2541 = vrot.slane %v2534, %v2540
        %v2542 = vcombine.low %v2442, %v2448
        %v2544 = vunpack.c.l.s4 1983009808
        %v2545 = vunpack.c.0.s8 %v2544
        %v2546 = vlaneseq
        %v2547 = vshrl.u32 %v2546, 7
        %v2548 = vsub.s32 %v2545, %v2547
        %v2549 = vrot.slane %v2542, %v2548
        %v2550 = vcombine.low %v2525, %v2533
        %v2551 = vcombine.high %v2525, %v2533
        %v2553 = vunpack.c.l.s4 1934713408
        %v2554 = vunpack.c.0.s8 %v2553
        %v2555 = vlaneseq
        %v2556 = vshrl.u32 %v2555, 7
        %v2557 = vsub.s32 %v2554, %v2556
        %v2558 = vrot.slane %v2550, %v2557
        %v2560 = vunpack.c.l.s4 1934713408
        %v2561 = vunpack.c.0.s8 %v2560
        %v2562 = vlaneseq
        %v2563 = vshrl.u32 %v2562, 7
        %v2564 = vsub.s32 %v2561, %v2563
        %v2565 = vrot.slane %v2551, %v2564
        %v2566 = vcombine.low %v2541, %v2549
        %v2567 = vcombine.high %v2541, %v2549
        %v2569 = vunpack.c.l.s4 1934713408
        %v2570 = vunpack.c.0.s8 %v2569
        %v2571 = vlaneseq
        %v2572 = vshrl.u32 %v2571, 7
        %v2573 = vsub.s32 %v2570, %v2572
        %v2574 = vrot.slane %v2566, %v2573
        %v2576 = vunpack.c.l.s4 1934713408
        %v2577 = vunpack.c.0.s8 %v2576
        %v2578 = vlaneseq
        %v2579 = vshrl.u32 %v2578, 7
        %v2580 = vsub.s32 %v2577, %v2579
        %v2581 = vrot.slane %v2567, %v2580
        %v2582 = vcombine.low %v2558, %v2574
        %v2583 = vcombine.high %v2558, %v2574
        %v2584 = vcombine.low %v2565, %v2581
        %v2585 = vcombine.high %v2565, %v2581
        %2594 = vrot.lane.b32.xlu0 %v2514, 1
        %v2595 = vpop.permute.xlu0 %2594
        %2596 = vrot.lane.b32.xlu0 %v2582, 1
        %v2597 = vpop.permute.xlu0 %2596
        %2598 = vrot.lane.b32.xlu0 %v2515, 1
        %v2599 = vpop.permute.xlu0 %2598
        %2600 = vrot.lane.b32.xlu0 %v2583, 1
        %v2601 = vpop.permute.xlu0 %2600
        %2602 = vrot.lane.b32.xlu0 %v2516, 1
        %v2603 = vpop.permute.xlu0 %2602
        %2604 = vrot.lane.b32.xlu0 %v2584, 1
        %v2605 = vpop.permute.xlu0 %2604
        %2606 = vrot.lane.b32.xlu0 %v2517, 1
        %v2607 = vpop.permute.xlu0 %2606
        %2608 = vrot.lane.b32.xlu0 %v2585, 1
        %v2609 = vpop.permute.xlu0 %2608
        %2618 = vst.msk [vmem:[#allocation2 + $0x1] sm:$0xff] %vm244, %v2595
        %2619 = vst.msk [vmem:[#allocation2 + $0x9] sm:$0xff] %vm244, %v2597
        %2620 = vst.msk [vmem:[#allocation2 + $0x19] sm:$0xff] %vm244, %v2599
        %2621 = vst.msk [vmem:[#allocation2 + $0x21] sm:$0xff] %vm244, %v2601
        %2622 = vst.msk [vmem:[#allocation2 + $0x31] sm:$0xff] %vm244, %v2603
        %2623 = vst.msk [vmem:[#allocation2 + $0x39] sm:$0xff] %vm244, %v2605
        %2624 = vst.msk [vmem:[#allocation2 + $0x49] sm:$0xff] %vm244, %v2607
        %2625 = vst.msk [vmem:[#allocation2 + $0x51] sm:$0xff] %vm244, %v2609
        %v2626 = vld [vmem:[#allocation2] sm:$0xff]
        %v2627 = vld [vmem:[#allocation2 + $0x8] sm:$0xff]
        %v2628 = vld [vmem:[#allocation2 + $0x18] sm:$0xff]
        %v2629 = vld [vmem:[#allocation2 + $0x20] sm:$0xff]
        %v2630 = vld [vmem:[#allocation2 + $0x30] sm:$0xff]
        %v2631 = vld [vmem:[#allocation2 + $0x38] sm:$0xff]
        %v2632 = vld [vmem:[#allocation2 + $0x48] sm:$0xff]
        %v2633 = vld [vmem:[#allocation2 + $0x50] sm:$0xff]
        %v2634 = vcombine.low %v2626, %v2630
        %v2635 = vcombine.high %v2626, %v2630
        %v2637 = vunpack.c.l.s4 1983009808
        %v2638 = vunpack.c.0.s8 %v2637
        %v2639 = vlaneseq
        %v2640 = vshrl.u32 %v2639, 7
        %v2641 = vsub.s32 %v2638, %v2640
        %v2642 = vrot.slane %v2634, %v2641
        %v2644 = vunpack.c.l.s4 1983009808
        %v2645 = vunpack.c.0.s8 %v2644
        %v2646 = vlaneseq
        %v2647 = vshrl.u32 %v2646, 7
        %v2648 = vsub.s32 %v2645, %v2647
        %v2649 = vrot.slane %v2635, %v2648
        %v2650 = vcombine.low %v2628, %v2632
        %v2651 = vcombine.high %v2628, %v2632
        %v2653 = vunpack.c.l.s4 1983009808
        %v2654 = vunpack.c.0.s8 %v2653
        %v2655 = vlaneseq
        %v2656 = vshrl.u32 %v2655, 7
        %v2657 = vsub.s32 %v2654, %v2656
        %v2658 = vrot.slane %v2650, %v2657
        %v2660 = vunpack.c.l.s4 1983009808
        %v2661 = vunpack.c.0.s8 %v2660
        %v2662 = vlaneseq
        %v2663 = vshrl.u32 %v2662, 7
        %v2664 = vsub.s32 %v2661, %v2663
        %v2665 = vrot.slane %v2651, %v2664
        %v2666 = vcombine.low %v2642, %v2658
        %v2667 = vcombine.high %v2642, %v2658
        %v2669 = vunpack.c.l.s4 1934713408
        %v2670 = vunpack.c.0.s8 %v2669
        %v2671 = vlaneseq
        %v2672 = vshrl.u32 %v2671, 7
        %v2673 = vsub.s32 %v2670, %v2672
        %v2674 = vrot.slane %v2666, %v2673
        %v2676 = vunpack.c.l.s4 1934713408
        %v2677 = vunpack.c.0.s8 %v2676
        %v2678 = vlaneseq
        %v2679 = vshrl.u32 %v2678, 7
        %v2680 = vsub.s32 %v2677, %v2679
        %v2681 = vrot.slane %v2667, %v2680
        %v2682 = vcombine.low %v2649, %v2665
        %v2683 = vcombine.high %v2649, %v2665
        %v2685 = vunpack.c.l.s4 1934713408
        %v2686 = vunpack.c.0.s8 %v2685
        %v2687 = vlaneseq
        %v2688 = vshrl.u32 %v2687, 7
        %v2689 = vsub.s32 %v2686, %v2688
        %v2690 = vrot.slane %v2682, %v2689
        %v2692 = vunpack.c.l.s4 1934713408
        %v2693 = vunpack.c.0.s8 %v2692
        %v2694 = vlaneseq
        %v2695 = vshrl.u32 %v2694, 7
        %v2696 = vsub.s32 %v2693, %v2695
        %v2697 = vrot.slane %v2683, %v2696
        %v2698 = vcombine.high %v2674, 0.0
        %v2699 = vcombine.high %v2681, 0.0
        %v2700 = vcombine.high %v2690, 0.0
        %v2701 = vcombine.high %v2697, 0.0
        %v2702 = vcombine.low %v2627, %v2631
        %v2703 = vcombine.high %v2627, %v2631
        %v2705 = vunpack.c.l.s4 1983009808
        %v2706 = vunpack.c.0.s8 %v2705
        %v2707 = vlaneseq
        %v2708 = vshrl.u32 %v2707, 7
        %v2709 = vsub.s32 %v2706, %v2708
        %v2710 = vrot.slane %v2702, %v2709
        %v2712 = vunpack.c.l.s4 1983009808
        %v2713 = vunpack.c.0.s8 %v2712
        %v2714 = vlaneseq
        %v2715 = vshrl.u32 %v2714, 7
        %v2716 = vsub.s32 %v2713, %v2715
        %v2717 = vrot.slane %v2703, %v2716
        %v2718 = vcombine.low %v2629, %v2633
        %v2719 = vcombine.high %v2629, %v2633
        %v2721 = vunpack.c.l.s4 1983009808
        %v2722 = vunpack.c.0.s8 %v2721
        %v2723 = vlaneseq
        %v2724 = vshrl.u32 %v2723, 7
        %v2725 = vsub.s32 %v2722, %v2724
        %v2726 = vrot.slane %v2718, %v2725
        %v2728 = vunpack.c.l.s4 1983009808
        %v2729 = vunpack.c.0.s8 %v2728
        %v2730 = vlaneseq
        %v2731 = vshrl.u32 %v2730, 7
        %v2732 = vsub.s32 %v2729, %v2731
        %v2733 = vrot.slane %v2719, %v2732
        %v2734 = vcombine.low %v2710, %v2726
        %v2735 = vcombine.high %v2710, %v2726
        %v2737 = vunpack.c.l.s4 1934713408
        %v2738 = vunpack.c.0.s8 %v2737
        %v2739 = vlaneseq
        %v2740 = vshrl.u32 %v2739, 7
        %v2741 = vsub.s32 %v2738, %v2740
        %v2742 = vrot.slane %v2734, %v2741
        %v2744 = vunpack.c.l.s4 1934713408
        %v2745 = vunpack.c.0.s8 %v2744
        %v2746 = vlaneseq
        %v2747 = vshrl.u32 %v2746, 7
        %v2748 = vsub.s32 %v2745, %v2747
        %v2749 = vrot.slane %v2735, %v2748
        %v2750 = vcombine.low %v2717, %v2733
        %v2751 = vcombine.high %v2717, %v2733
        %v2753 = vunpack.c.l.s4 1934713408
        %v2754 = vunpack.c.0.s8 %v2753
        %v2755 = vlaneseq
        %v2756 = vshrl.u32 %v2755, 7
        %v2757 = vsub.s32 %v2754, %v2756
        %v2758 = vrot.slane %v2750, %v2757
        %v2760 = vunpack.c.l.s4 1934713408
        %v2761 = vunpack.c.0.s8 %v2760
        %v2762 = vlaneseq
        %v2763 = vshrl.u32 %v2762, 7
        %v2764 = vsub.s32 %v2761, %v2763
        %v2765 = vrot.slane %v2751, %v2764
        %v2766 = vcombine.high %v2742, 0.0
        %v2767 = vcombine.high %v2749, 0.0
        %v2768 = vcombine.high %v2758, 0.0
        %v2769 = vcombine.high %v2765, 0.0
        %2771 = vrot.lane.b32.xlu0 %v2698, 16
        %v2772 = vpop.permute.xlu0 %2771
        %2775 = vrot.lane.b32.xlu0 %v2681, 32
        %v2776 = vpop.permute.xlu0 %2775
        %2779 = vrot.lane.b32.xlu0 %v2699, 48
        %v2780 = vpop.permute.xlu0 %2779
        %2783 = vrot.lane.b32.xlu0 %v2690, 64
        %v2784 = vpop.permute.xlu0 %2783
        %2787 = vrot.lane.b32.xlu0 %v2700, 80
        %v2788 = vpop.permute.xlu0 %2787
        %2791 = vrot.lane.b32.xlu0 %v2697, 96
        %v2792 = vpop.permute.xlu0 %2791
        %2795 = vrot.lane.b32.xlu0 %v2701, 112
        %v2796 = vpop.permute.xlu0 %2795
        %2799 = vrot.lane.b32.xlu0 %v2766, 16
        %v2800 = vpop.permute.xlu0 %2799
        %2803 = vrot.lane.b32.xlu0 %v2749, 32
        %v2804 = vpop.permute.xlu0 %2803
        %2807 = vrot.lane.b32.xlu0 %v2767, 48
        %v2808 = vpop.permute.xlu0 %2807
        %2811 = vrot.lane.b32.xlu0 %v2758, 64
        %v2812 = vpop.permute.xlu0 %2811
        %2815 = vrot.lane.b32.xlu0 %v2768, 80
        %v2816 = vpop.permute.xlu0 %2815
        %2819 = vrot.lane.b32.xlu0 %v2765, 96
        %v2820 = vpop.permute.xlu0 %2819
        %2823 = vrot.lane.b32.xlu0 %v2769, 112
        %v2824 = vpop.permute.xlu0 %2823
        %v2826 = vsel %vm453, %v2674, %v2772
        %v2827 = vsel %vm455, %v2826, %v2776
        %v2828 = vsel %vm457, %v2827, %v2780
        %v2829 = vsel %vm459, %v2828, %v2784
        %v2830 = vsel %vm461, %v2829, %v2788
        %v2831 = vsel %vm463, %v2830, %v2792
        %v2832 = vsel %vm465, %v2831, %v2796
        %v2833 = vsel %vm453, %v2742, %v2800
        %v2834 = vsel %vm455, %v2833, %v2804
        %v2835 = vsel %vm457, %v2834, %v2808
        %v2836 = vsel %vm459, %v2835, %v2812
        %v2837 = vsel %vm461, %v2836, %v2816
        %v2838 = vsel %vm463, %v2837, %v2820
        %v2839 = vsel %vm465, %v2838, %v2824
        %2848 = vrot.lane.b32.xlu0 %v2626, 127
        %v2849 = vpop.permute.xlu0 %2848
        %2850 = vrot.lane.b32.xlu0 %v2627, 127
        %v2851 = vpop.permute.xlu0 %2850
        %2852 = vrot.lane.b32.xlu0 %v2628, 127
        %v2853 = vpop.permute.xlu0 %2852
        %2854 = vrot.lane.b32.xlu0 %v2629, 127
        %v2855 = vpop.permute.xlu0 %2854
        %2856 = vrot.lane.b32.xlu0 %v2630, 127
        %v2857 = vpop.permute.xlu0 %2856
        %2858 = vrot.lane.b32.xlu0 %v2631, 127
        %v2859 = vpop.permute.xlu0 %2858
        %2860 = vrot.lane.b32.xlu0 %v2632, 127
        %v2861 = vpop.permute.xlu0 %2860
        %2862 = vrot.lane.b32.xlu0 %v2633, 127
        %v2863 = vpop.permute.xlu0 %2862
        %v2872 = vcombine.low %v2849, %v2857
        %v2873 = vcombine.high %v2849, %v2857
        %v2875 = vunpack.c.l.s4 1983009808
        %v2876 = vunpack.c.0.s8 %v2875
        %v2877 = vlaneseq
        %v2878 = vshrl.u32 %v2877, 7
        %v2879 = vsub.s32 %v2876, %v2878
        %v2880 = vrot.slane %v2872, %v2879
        %v2882 = vunpack.c.l.s4 1983009808
        %v2883 = vunpack.c.0.s8 %v2882
        %v2884 = vlaneseq
        %v2885 = vshrl.u32 %v2884, 7
        %v2886 = vsub.s32 %v2883, %v2885
        %v2887 = vrot.slane %v2873, %v2886
        %v2888 = vcombine.low %v2853, %v2861
        %v2889 = vcombine.high %v2853, %v2861
        %v2891 = vunpack.c.l.s4 1983009808
        %v2892 = vunpack.c.0.s8 %v2891
        %v2893 = vlaneseq
        %v2894 = vshrl.u32 %v2893, 7
        %v2895 = vsub.s32 %v2892, %v2894
        %v2896 = vrot.slane %v2888, %v2895
        %v2898 = vunpack.c.l.s4 1983009808
        %v2899 = vunpack.c.0.s8 %v2898
        %v2900 = vlaneseq
        %v2901 = vshrl.u32 %v2900, 7
        %v2902 = vsub.s32 %v2899, %v2901
        %v2903 = vrot.slane %v2889, %v2902
        %v2904 = vcombine.low %v2880, %v2896
        %v2905 = vcombine.high %v2880, %v2896
        %v2907 = vunpack.c.l.s4 1934713408
        %v2908 = vunpack.c.0.s8 %v2907
        %v2909 = vlaneseq
        %v2910 = vshrl.u32 %v2909, 7
        %v2911 = vsub.s32 %v2908, %v2910
        %v2912 = vrot.slane %v2904, %v2911
        %v2914 = vunpack.c.l.s4 1934713408
        %v2915 = vunpack.c.0.s8 %v2914
        %v2916 = vlaneseq
        %v2917 = vshrl.u32 %v2916, 7
        %v2918 = vsub.s32 %v2915, %v2917
        %v2919 = vrot.slane %v2905, %v2918
        %v2920 = vcombine.low %v2887, %v2903
        %v2921 = vcombine.high %v2887, %v2903
        %v2923 = vunpack.c.l.s4 1934713408
        %v2924 = vunpack.c.0.s8 %v2923
        %v2925 = vlaneseq
        %v2926 = vshrl.u32 %v2925, 7
        %v2927 = vsub.s32 %v2924, %v2926
        %v2928 = vrot.slane %v2920, %v2927
        %v2930 = vunpack.c.l.s4 1934713408
        %v2931 = vunpack.c.0.s8 %v2930
        %v2932 = vlaneseq
        %v2933 = vshrl.u32 %v2932, 7
        %v2934 = vsub.s32 %v2931, %v2933
        %v2935 = vrot.slane %v2921, %v2934
        %v2936 = vcombine.high %v2912, 0.0
        %v2937 = vcombine.high %v2919, 0.0
        %v2938 = vcombine.high %v2928, 0.0
        %v2939 = vcombine.high %v2935, 0.0
        %v2940 = vcombine.low %v2851, %v2859
        %v2941 = vcombine.high %v2851, %v2859
        %v2943 = vunpack.c.l.s4 1983009808
        %v2944 = vunpack.c.0.s8 %v2943
        %v2945 = vlaneseq
        %v2946 = vshrl.u32 %v2945, 7
        %v2947 = vsub.s32 %v2944, %v2946
        %v2948 = vrot.slane %v2940, %v2947
        %v2950 = vunpack.c.l.s4 1983009808
        %v2951 = vunpack.c.0.s8 %v2950
        %v2952 = vlaneseq
        %v2953 = vshrl.u32 %v2952, 7
        %v2954 = vsub.s32 %v2951, %v2953
        %v2955 = vrot.slane %v2941, %v2954
        %v2956 = vcombine.low %v2855, %v2863
        %v2957 = vcombine.high %v2855, %v2863
        %v2959 = vunpack.c.l.s4 1983009808
        %v2960 = vunpack.c.0.s8 %v2959
        %v2961 = vlaneseq
        %v2962 = vshrl.u32 %v2961, 7
        %v2963 = vsub.s32 %v2960, %v2962
        %v2964 = vrot.slane %v2956, %v2963
        %v2966 = vunpack.c.l.s4 1983009808
        %v2967 = vunpack.c.0.s8 %v2966
        %v2968 = vlaneseq
        %v2969 = vshrl.u32 %v2968, 7
        %v2970 = vsub.s32 %v2967, %v2969
        %v2971 = vrot.slane %v2957, %v2970
        %v2972 = vcombine.low %v2948, %v2964
        %v2973 = vcombine.high %v2948, %v2964
        %v2975 = vunpack.c.l.s4 1934713408
        %v2976 = vunpack.c.0.s8 %v2975
        %v2977 = vlaneseq
        %v2978 = vshrl.u32 %v2977, 7
        %v2979 = vsub.s32 %v2976, %v2978
        %v2980 = vrot.slane %v2972, %v2979
        %v2982 = vunpack.c.l.s4 1934713408
        %v2983 = vunpack.c.0.s8 %v2982
        %v2984 = vlaneseq
        %v2985 = vshrl.u32 %v2984, 7
        %v2986 = vsub.s32 %v2983, %v2985
        %v2987 = vrot.slane %v2973, %v2986
        %v2988 = vcombine.low %v2955, %v2971
        %v2989 = vcombine.high %v2955, %v2971
        %v2991 = vunpack.c.l.s4 1934713408
        %v2992 = vunpack.c.0.s8 %v2991
        %v2993 = vlaneseq
        %v2994 = vshrl.u32 %v2993, 7
        %v2995 = vsub.s32 %v2992, %v2994
        %v2996 = vrot.slane %v2988, %v2995
        %v2998 = vunpack.c.l.s4 1934713408
        %v2999 = vunpack.c.0.s8 %v2998
        %v3000 = vlaneseq
        %v3001 = vshrl.u32 %v3000, 7
        %v3002 = vsub.s32 %v2999, %v3001
        %v3003 = vrot.slane %v2989, %v3002
        %v3004 = vcombine.high %v2980, 0.0
        %v3005 = vcombine.high %v2987, 0.0
        %v3006 = vcombine.high %v2996, 0.0
        %v3007 = vcombine.high %v3003, 0.0
        %3009 = vrot.lane.b32.xlu0 %v2936, 16
        %v3010 = vpop.permute.xlu0 %3009
        %3013 = vrot.lane.b32.xlu0 %v2919, 32
        %v3014 = vpop.permute.xlu0 %3013
        %3017 = vrot.lane.b32.xlu0 %v2937, 48
        %v3018 = vpop.permute.xlu0 %3017
        %3021 = vrot.lane.b32.xlu0 %v2928, 64
        %v3022 = vpop.permute.xlu0 %3021
        %3025 = vrot.lane.b32.xlu0 %v2938, 80
        %v3026 = vpop.permute.xlu0 %3025
        %3029 = vrot.lane.b32.xlu0 %v2935, 96
        %v3030 = vpop.permute.xlu0 %3029
        %3033 = vrot.lane.b32.xlu0 %v2939, 112
        %v3034 = vpop.permute.xlu0 %3033
        %3037 = vrot.lane.b32.xlu0 %v3004, 16
        %v3038 = vpop.permute.xlu0 %3037
        %3041 = vrot.lane.b32.xlu0 %v2987, 32
        %v3042 = vpop.permute.xlu0 %3041
        %3045 = vrot.lane.b32.xlu0 %v3005, 48
        %v3046 = vpop.permute.xlu0 %3045
        %3049 = vrot.lane.b32.xlu0 %v2996, 64
        %v3050 = vpop.permute.xlu0 %3049
        %3053 = vrot.lane.b32.xlu0 %v3006, 80
        %v3054 = vpop.permute.xlu0 %3053
        %3057 = vrot.lane.b32.xlu0 %v3003, 96
        %v3058 = vpop.permute.xlu0 %3057
        %3061 = vrot.lane.b32.xlu0 %v3007, 112
        %v3062 = vpop.permute.xlu0 %3061
        %v3064 = vsel %vm453, %v2912, %v3010
        %v3065 = vsel %vm455, %v3064, %v3014
        %v3066 = vsel %vm457, %v3065, %v3018
        %v3067 = vsel %vm459, %v3066, %v3022
        %v3068 = vsel %vm461, %v3067, %v3026
        %v3069 = vsel %vm463, %v3068, %v3030
        %v3070 = vsel %vm465, %v3069, %v3034
        %v3071 = vsel %vm453, %v2980, %v3038
        %v3072 = vsel %vm455, %v3071, %v3042
        %v3073 = vsel %vm457, %v3072, %v3046
        %v3074 = vsel %vm459, %v3073, %v3050
        %v3075 = vsel %vm461, %v3074, %v3054
        %v3076 = vsel %vm463, %v3075, %v3058
        %v3077 = vsel %vm465, %v3076, %v3062
        %3078 = vrot.lane.b32.xlu0 %v2626, 126
        %v3079 = vpop.permute.xlu0 %3078
        %3080 = vrot.lane.b32.xlu0 %v2627, 126
        %v3081 = vpop.permute.xlu0 %3080
        %3082 = vrot.lane.b32.xlu0 %v2628, 126
        %v3083 = vpop.permute.xlu0 %3082
        %3084 = vrot.lane.b32.xlu0 %v2629, 126
        %v3085 = vpop.permute.xlu0 %3084
        %3086 = vrot.lane.b32.xlu0 %v2630, 126
        %v3087 = vpop.permute.xlu0 %3086
        %3088 = vrot.lane.b32.xlu0 %v2631, 126
        %v3089 = vpop.permute.xlu0 %3088
        %3090 = vrot.lane.b32.xlu0 %v2632, 126
        %v3091 = vpop.permute.xlu0 %3090
        %3092 = vrot.lane.b32.xlu0 %v2633, 126
        %v3093 = vpop.permute.xlu0 %3092
        %v3102 = vcombine.low %v3079, %v3087
        %v3103 = vcombine.high %v3079, %v3087
        %v3105 = vunpack.c.l.s4 1983009808
        %v3106 = vunpack.c.0.s8 %v3105
        %v3107 = vlaneseq
        %v3108 = vshrl.u32 %v3107, 7
        %v3109 = vsub.s32 %v3106, %v3108
        %v3110 = vrot.slane %v3102, %v3109
        %v3112 = vunpack.c.l.s4 1983009808
        %v3113 = vunpack.c.0.s8 %v3112
        %v3114 = vlaneseq
        %v3115 = vshrl.u32 %v3114, 7
        %v3116 = vsub.s32 %v3113, %v3115
        %v3117 = vrot.slane %v3103, %v3116
        %v3118 = vcombine.low %v3083, %v3091
        %v3119 = vcombine.high %v3083, %v3091
        %v3121 = vunpack.c.l.s4 1983009808
        %v3122 = vunpack.c.0.s8 %v3121
        %v3123 = vlaneseq
        %v3124 = vshrl.u32 %v3123, 7
        %v3125 = vsub.s32 %v3122, %v3124
        %v3126 = vrot.slane %v3118, %v3125
        %v3128 = vunpack.c.l.s4 1983009808
        %v3129 = vunpack.c.0.s8 %v3128
        %v3130 = vlaneseq
        %v3131 = vshrl.u32 %v3130, 7
        %v3132 = vsub.s32 %v3129, %v3131
        %v3133 = vrot.slane %v3119, %v3132
        %v3134 = vcombine.low %v3110, %v3126
        %v3135 = vcombine.high %v3110, %v3126
        %v3137 = vunpack.c.l.s4 1934713408
        %v3138 = vunpack.c.0.s8 %v3137
        %v3139 = vlaneseq
        %v3140 = vshrl.u32 %v3139, 7
        %v3141 = vsub.s32 %v3138, %v3140
        %v3142 = vrot.slane %v3134, %v3141
        %v3144 = vunpack.c.l.s4 1934713408
        %v3145 = vunpack.c.0.s8 %v3144
        %v3146 = vlaneseq
        %v3147 = vshrl.u32 %v3146, 7
        %v3148 = vsub.s32 %v3145, %v3147
        %v3149 = vrot.slane %v3135, %v3148
        %v3150 = vcombine.low %v3117, %v3133
        %v3151 = vcombine.high %v3117, %v3133
        %v3153 = vunpack.c.l.s4 1934713408
        %v3154 = vunpack.c.0.s8 %v3153
        %v3155 = vlaneseq
        %v3156 = vshrl.u32 %v3155, 7
        %v3157 = vsub.s32 %v3154, %v3156
        %v3158 = vrot.slane %v3150, %v3157
        %v3160 = vunpack.c.l.s4 1934713408
        %v3161 = vunpack.c.0.s8 %v3160
        %v3162 = vlaneseq
        %v3163 = vshrl.u32 %v3162, 7
        %v3164 = vsub.s32 %v3161, %v3163
        %v3165 = vrot.slane %v3151, %v3164
        %v3166 = vcombine.high %v3142, 0.0
        %v3167 = vcombine.high %v3149, 0.0
        %v3168 = vcombine.high %v3158, 0.0
        %v3169 = vcombine.high %v3165, 0.0
        %v3170 = vcombine.low %v3081, %v3089
        %v3171 = vcombine.high %v3081, %v3089
        %v3173 = vunpack.c.l.s4 1983009808
        %v3174 = vunpack.c.0.s8 %v3173
        %v3175 = vlaneseq
        %v3176 = vshrl.u32 %v3175, 7
        %v3177 = vsub.s32 %v3174, %v3176
        %v3178 = vrot.slane %v3170, %v3177
        %v3180 = vunpack.c.l.s4 1983009808
        %v3181 = vunpack.c.0.s8 %v3180
        %v3182 = vlaneseq
        %v3183 = vshrl.u32 %v3182, 7
        %v3184 = vsub.s32 %v3181, %v3183
        %v3185 = vrot.slane %v3171, %v3184
        %v3186 = vcombine.low %v3085, %v3093
        %v3187 = vcombine.high %v3085, %v3093
        %v3189 = vunpack.c.l.s4 1983009808
        %v3190 = vunpack.c.0.s8 %v3189
        %v3191 = vlaneseq
        %v3192 = vshrl.u32 %v3191, 7
        %v3193 = vsub.s32 %v3190, %v3192
        %v3194 = vrot.slane %v3186, %v3193
        %v3196 = vunpack.c.l.s4 1983009808
        %v3197 = vunpack.c.0.s8 %v3196
        %v3198 = vlaneseq
        %v3199 = vshrl.u32 %v3198, 7
        %v3200 = vsub.s32 %v3197, %v3199
        %v3201 = vrot.slane %v3187, %v3200
        %v3202 = vcombine.low %v3178, %v3194
        %v3203 = vcombine.high %v3178, %v3194
        %v3205 = vunpack.c.l.s4 1934713408
        %v3206 = vunpack.c.0.s8 %v3205
        %v3207 = vlaneseq
        %v3208 = vshrl.u32 %v3207, 7
        %v3209 = vsub.s32 %v3206, %v3208
        %v3210 = vrot.slane %v3202, %v3209
        %v3212 = vunpack.c.l.s4 1934713408
        %v3213 = vunpack.c.0.s8 %v3212
        %v3214 = vlaneseq
        %v3215 = vshrl.u32 %v3214, 7
        %v3216 = vsub.s32 %v3213, %v3215
        %v3217 = vrot.slane %v3203, %v3216
        %v3218 = vcombine.low %v3185, %v3201
        %v3219 = vcombine.high %v3185, %v3201
        %v3221 = vunpack.c.l.s4 1934713408
        %v3222 = vunpack.c.0.s8 %v3221
        %v3223 = vlaneseq
        %v3224 = vshrl.u32 %v3223, 7
        %v3225 = vsub.s32 %v3222, %v3224
        %v3226 = vrot.slane %v3218, %v3225
        %v3228 = vunpack.c.l.s4 1934713408
        %v3229 = vunpack.c.0.s8 %v3228
        %v3230 = vlaneseq
        %v3231 = vshrl.u32 %v3230, 7
        %v3232 = vsub.s32 %v3229, %v3231
        %v3233 = vrot.slane %v3219, %v3232
        %v3234 = vcombine.high %v3210, 0.0
        %v3235 = vcombine.high %v3217, 0.0
        %v3236 = vcombine.high %v3226, 0.0
        %v3237 = vcombine.high %v3233, 0.0
        %3239 = vrot.lane.b32.xlu0 %v3166, 16
        %v3240 = vpop.permute.xlu0 %3239
        %3243 = vrot.lane.b32.xlu0 %v3149, 32
        %v3244 = vpop.permute.xlu0 %3243
        %3247 = vrot.lane.b32.xlu0 %v3167, 48
        %v3248 = vpop.permute.xlu0 %3247
        %3251 = vrot.lane.b32.xlu0 %v3158, 64
        %v3252 = vpop.permute.xlu0 %3251
        %3255 = vrot.lane.b32.xlu0 %v3168, 80
        %v3256 = vpop.permute.xlu0 %3255
        %3259 = vrot.lane.b32.xlu0 %v3165, 96
        %v3260 = vpop.permute.xlu0 %3259
        %3263 = vrot.lane.b32.xlu0 %v3169, 112
        %v3264 = vpop.permute.xlu0 %3263
        %3267 = vrot.lane.b32.xlu0 %v3234, 16
        %v3268 = vpop.permute.xlu0 %3267
        %3271 = vrot.lane.b32.xlu0 %v3217, 32
        %v3272 = vpop.permute.xlu0 %3271
        %3275 = vrot.lane.b32.xlu0 %v3235, 48
        %v3276 = vpop.permute.xlu0 %3275
        %3279 = vrot.lane.b32.xlu0 %v3226, 64
        %v3280 = vpop.permute.xlu0 %3279
        %3283 = vrot.lane.b32.xlu0 %v3236, 80
        %v3284 = vpop.permute.xlu0 %3283
        %3287 = vrot.lane.b32.xlu0 %v3233, 96
        %v3288 = vpop.permute.xlu0 %3287
        %3291 = vrot.lane.b32.xlu0 %v3237, 112
        %v3292 = vpop.permute.xlu0 %3291
        %v3294 = vsel %vm453, %v3142, %v3240
        %v3295 = vsel %vm455, %v3294, %v3244
        %v3296 = vsel %vm457, %v3295, %v3248
        %v3297 = vsel %vm459, %v3296, %v3252
        %v3298 = vsel %vm461, %v3297, %v3256
        %v3299 = vsel %vm463, %v3298, %v3260
        %v3300 = vsel %vm465, %v3299, %v3264
        %v3301 = vsel %vm453, %v3210, %v3268
        %v3302 = vsel %vm455, %v3301, %v3272
        %v3303 = vsel %vm457, %v3302, %v3276
        %v3304 = vsel %vm459, %v3303, %v3280
        %v3305 = vsel %vm461, %v3304, %v3284
        %v3306 = vsel %vm463, %v3305, %v3288
        %v3307 = vsel %vm465, %v3306, %v3292
        %v3308 = vld [vmem:[#allocation2 + $0x1] sm:$0xff]
        %v3309 = vld [vmem:[#allocation2 + $0x9] sm:$0xff]
        %v3310 = vld [vmem:[#allocation2 + $0x19] sm:$0xff]
        %v3311 = vld [vmem:[#allocation2 + $0x21] sm:$0xff]
        %v3312 = vld [vmem:[#allocation2 + $0x31] sm:$0xff]
        %v3313 = vld [vmem:[#allocation2 + $0x39] sm:$0xff]
        %v3314 = vld [vmem:[#allocation2 + $0x49] sm:$0xff]
        %v3315 = vld [vmem:[#allocation2 + $0x51] sm:$0xff]
        %v3316 = vcombine.low %v3308, %v3312
        %v3317 = vcombine.high %v3308, %v3312
        %v3319 = vunpack.c.l.s4 1983009808
        %v3320 = vunpack.c.0.s8 %v3319
        %v3321 = vlaneseq
        %v3322 = vshrl.u32 %v3321, 7
        %v3323 = vsub.s32 %v3320, %v3322
        %v3324 = vrot.slane %v3316, %v3323
        %v3326 = vunpack.c.l.s4 1983009808
        %v3327 = vunpack.c.0.s8 %v3326
        %v3328 = vlaneseq
        %v3329 = vshrl.u32 %v3328, 7
        %v3330 = vsub.s32 %v3327, %v3329
        %v3331 = vrot.slane %v3317, %v3330
        %v3332 = vcombine.low %v3310, %v3314
        %v3333 = vcombine.high %v3310, %v3314
        %v3335 = vunpack.c.l.s4 1983009808
        %v3336 = vunpack.c.0.s8 %v3335
        %v3337 = vlaneseq
        %v3338 = vshrl.u32 %v3337, 7
        %v3339 = vsub.s32 %v3336, %v3338
        %v3340 = vrot.slane %v3332, %v3339
        %v3342 = vunpack.c.l.s4 1983009808
        %v3343 = vunpack.c.0.s8 %v3342
        %v3344 = vlaneseq
        %v3345 = vshrl.u32 %v3344, 7
        %v3346 = vsub.s32 %v3343, %v3345
        %v3347 = vrot.slane %v3333, %v3346
        %v3348 = vcombine.low %v3324, %v3340
        %v3349 = vcombine.high %v3324, %v3340
        %v3351 = vunpack.c.l.s4 1934713408
        %v3352 = vunpack.c.0.s8 %v3351
        %v3353 = vlaneseq
        %v3354 = vshrl.u32 %v3353, 7
        %v3355 = vsub.s32 %v3352, %v3354
        %v3356 = vrot.slane %v3348, %v3355
        %v3358 = vunpack.c.l.s4 1934713408
        %v3359 = vunpack.c.0.s8 %v3358
        %v3360 = vlaneseq
        %v3361 = vshrl.u32 %v3360, 7
        %v3362 = vsub.s32 %v3359, %v3361
        %v3363 = vrot.slane %v3349, %v3362
        %v3364 = vcombine.low %v3331, %v3347
        %v3365 = vcombine.high %v3331, %v3347
        %v3367 = vunpack.c.l.s4 1934713408
        %v3368 = vunpack.c.0.s8 %v3367
        %v3369 = vlaneseq
        %v3370 = vshrl.u32 %v3369, 7
        %v3371 = vsub.s32 %v3368, %v3370
        %v3372 = vrot.slane %v3364, %v3371
        %v3374 = vunpack.c.l.s4 1934713408
        %v3375 = vunpack.c.0.s8 %v3374
        %v3376 = vlaneseq
        %v3377 = vshrl.u32 %v3376, 7
        %v3378 = vsub.s32 %v3375, %v3377
        %v3379 = vrot.slane %v3365, %v3378
        %v3380 = vcombine.high %v3356, 0.0
        %v3381 = vcombine.high %v3363, 0.0
        %v3382 = vcombine.high %v3372, 0.0
        %v3383 = vcombine.high %v3379, 0.0
        %v3384 = vcombine.low %v3309, %v3313
        %v3385 = vcombine.high %v3309, %v3313
        %v3387 = vunpack.c.l.s4 1983009808
        %v3388 = vunpack.c.0.s8 %v3387
        %v3389 = vlaneseq
        %v3390 = vshrl.u32 %v3389, 7
        %v3391 = vsub.s32 %v3388, %v3390
        %v3392 = vrot.slane %v3384, %v3391
        %v3394 = vunpack.c.l.s4 1983009808
        %v3395 = vunpack.c.0.s8 %v3394
        %v3396 = vlaneseq
        %v3397 = vshrl.u32 %v3396, 7
        %v3398 = vsub.s32 %v3395, %v3397
        %v3399 = vrot.slane %v3385, %v3398
        %v3400 = vcombine.low %v3311, %v3315
        %v3401 = vcombine.high %v3311, %v3315
        %v3403 = vunpack.c.l.s4 1983009808
        %v3404 = vunpack.c.0.s8 %v3403
        %v3405 = vlaneseq
        %v3406 = vshrl.u32 %v3405, 7
        %v3407 = vsub.s32 %v3404, %v3406
        %v3408 = vrot.slane %v3400, %v3407
        %v3410 = vunpack.c.l.s4 1983009808
        %v3411 = vunpack.c.0.s8 %v3410
        %v3412 = vlaneseq
        %v3413 = vshrl.u32 %v3412, 7
        %v3414 = vsub.s32 %v3411, %v3413
        %v3415 = vrot.slane %v3401, %v3414
        %v3416 = vcombine.low %v3392, %v3408
        %v3417 = vcombine.high %v3392, %v3408
        %v3419 = vunpack.c.l.s4 1934713408
        %v3420 = vunpack.c.0.s8 %v3419
        %v3421 = vlaneseq
        %v3422 = vshrl.u32 %v3421, 7
        %v3423 = vsub.s32 %v3420, %v3422
        %v3424 = vrot.slane %v3416, %v3423
        %v3426 = vunpack.c.l.s4 1934713408
        %v3427 = vunpack.c.0.s8 %v3426
        %v3428 = vlaneseq
        %v3429 = vshrl.u32 %v3428, 7
        %v3430 = vsub.s32 %v3427, %v3429
        %v3431 = vrot.slane %v3417, %v3430
        %v3432 = vcombine.low %v3399, %v3415
        %v3433 = vcombine.high %v3399, %v3415
        %v3435 = vunpack.c.l.s4 1934713408
        %v3436 = vunpack.c.0.s8 %v3435
        %v3437 = vlaneseq
        %v3438 = vshrl.u32 %v3437, 7
        %v3439 = vsub.s32 %v3436, %v3438
        %v3440 = vrot.slane %v3432, %v3439
        %v3442 = vunpack.c.l.s4 1934713408
        %v3443 = vunpack.c.0.s8 %v3442
        %v3444 = vlaneseq
        %v3445 = vshrl.u32 %v3444, 7
        %v3446 = vsub.s32 %v3443, %v3445
        %v3447 = vrot.slane %v3433, %v3446
        %v3448 = vcombine.high %v3424, 0.0
        %v3449 = vcombine.high %v3431, 0.0
        %v3450 = vcombine.high %v3440, 0.0
        %v3451 = vcombine.high %v3447, 0.0
        %3453 = vrot.lane.b32.xlu0 %v3380, 16
        %v3454 = vpop.permute.xlu0 %3453
        %3457 = vrot.lane.b32.xlu0 %v3363, 32
        %v3458 = vpop.permute.xlu0 %3457
        %3461 = vrot.lane.b32.xlu0 %v3381, 48
        %v3462 = vpop.permute.xlu0 %3461
        %3465 = vrot.lane.b32.xlu0 %v3372, 64
        %v3466 = vpop.permute.xlu0 %3465
        %3469 = vrot.lane.b32.xlu0 %v3382, 80
        %v3470 = vpop.permute.xlu0 %3469
        %3473 = vrot.lane.b32.xlu0 %v3379, 96
        %v3474 = vpop.permute.xlu0 %3473
        %3477 = vrot.lane.b32.xlu0 %v3383, 112
        %v3478 = vpop.permute.xlu0 %3477
        %3481 = vrot.lane.b32.xlu0 %v3448, 16
        %v3482 = vpop.permute.xlu0 %3481
        %3485 = vrot.lane.b32.xlu0 %v3431, 32
        %v3486 = vpop.permute.xlu0 %3485
        %3489 = vrot.lane.b32.xlu0 %v3449, 48
        %v3490 = vpop.permute.xlu0 %3489
        %3493 = vrot.lane.b32.xlu0 %v3440, 64
        %v3494 = vpop.permute.xlu0 %3493
        %3497 = vrot.lane.b32.xlu0 %v3450, 80
        %v3498 = vpop.permute.xlu0 %3497
        %3501 = vrot.lane.b32.xlu0 %v3447, 96
        %v3502 = vpop.permute.xlu0 %3501
        %3505 = vrot.lane.b32.xlu0 %v3451, 112
        %v3506 = vpop.permute.xlu0 %3505
        %v3508 = vsel %vm453, %v3356, %v3454
        %v3509 = vsel %vm455, %v3508, %v3458
        %v3510 = vsel %vm457, %v3509, %v3462
        %v3511 = vsel %vm459, %v3510, %v3466
        %v3512 = vsel %vm461, %v3511, %v3470
        %v3513 = vsel %vm463, %v3512, %v3474
        %v3514 = vsel %vm465, %v3513, %v3478
        %v3515 = vsel %vm453, %v3424, %v3482
        %v3516 = vsel %vm455, %v3515, %v3486
        %v3517 = vsel %vm457, %v3516, %v3490
        %v3518 = vsel %vm459, %v3517, %v3494
        %v3519 = vsel %vm461, %v3518, %v3498
        %v3520 = vsel %vm463, %v3519, %v3502
        %v3521 = vsel %vm465, %v3520, %v3506
        %3530 = vrot.lane.b32.xlu0 %v3308, 127
        %v3531 = vpop.permute.xlu0 %3530
        %3532 = vrot.lane.b32.xlu0 %v3309, 127
        %v3533 = vpop.permute.xlu0 %3532
        %3534 = vrot.lane.b32.xlu0 %v3310, 127
        %v3535 = vpop.permute.xlu0 %3534
        %3536 = vrot.lane.b32.xlu0 %v3311, 127
        %v3537 = vpop.permute.xlu0 %3536
        %3538 = vrot.lane.b32.xlu0 %v3312, 127
        %v3539 = vpop.permute.xlu0 %3538
        %3540 = vrot.lane.b32.xlu0 %v3313, 127
        %v3541 = vpop.permute.xlu0 %3540
        %3542 = vrot.lane.b32.xlu0 %v3314, 127
        %v3543 = vpop.permute.xlu0 %3542
        %3544 = vrot.lane.b32.xlu0 %v3315, 127
        %v3545 = vpop.permute.xlu0 %3544
        %v3554 = vcombine.low %v3531, %v3539
        %v3555 = vcombine.high %v3531, %v3539
        %v3557 = vunpack.c.l.s4 1983009808
        %v3558 = vunpack.c.0.s8 %v3557
        %v3559 = vlaneseq
        %v3560 = vshrl.u32 %v3559, 7
        %v3561 = vsub.s32 %v3558, %v3560
        %v3562 = vrot.slane %v3554, %v3561
        %v3564 = vunpack.c.l.s4 1983009808
        %v3565 = vunpack.c.0.s8 %v3564
        %v3566 = vlaneseq
        %v3567 = vshrl.u32 %v3566, 7
        %v3568 = vsub.s32 %v3565, %v3567
        %v3569 = vrot.slane %v3555, %v3568
        %v3570 = vcombine.low %v3535, %v3543
        %v3571 = vcombine.high %v3535, %v3543
        %v3573 = vunpack.c.l.s4 1983009808
        %v3574 = vunpack.c.0.s8 %v3573
        %v3575 = vlaneseq
        %v3576 = vshrl.u32 %v3575, 7
        %v3577 = vsub.s32 %v3574, %v3576
        %v3578 = vrot.slane %v3570, %v3577
        %v3580 = vunpack.c.l.s4 1983009808
        %v3581 = vunpack.c.0.s8 %v3580
        %v3582 = vlaneseq
        %v3583 = vshrl.u32 %v3582, 7
        %v3584 = vsub.s32 %v3581, %v3583
        %v3585 = vrot.slane %v3571, %v3584
        %v3586 = vcombine.low %v3562, %v3578
        %v3587 = vcombine.high %v3562, %v3578
        %v3589 = vunpack.c.l.s4 1934713408
        %v3590 = vunpack.c.0.s8 %v3589
        %v3591 = vlaneseq
        %v3592 = vshrl.u32 %v3591, 7
        %v3593 = vsub.s32 %v3590, %v3592
        %v3594 = vrot.slane %v3586, %v3593
        %v3596 = vunpack.c.l.s4 1934713408
        %v3597 = vunpack.c.0.s8 %v3596
        %v3598 = vlaneseq
        %v3599 = vshrl.u32 %v3598, 7
        %v3600 = vsub.s32 %v3597, %v3599
        %v3601 = vrot.slane %v3587, %v3600
        %v3602 = vcombine.low %v3569, %v3585
        %v3603 = vcombine.high %v3569, %v3585
        %v3605 = vunpack.c.l.s4 1934713408
        %v3606 = vunpack.c.0.s8 %v3605
        %v3607 = vlaneseq
        %v3608 = vshrl.u32 %v3607, 7
        %v3609 = vsub.s32 %v3606, %v3608
        %v3610 = vrot.slane %v3602, %v3609
        %v3612 = vunpack.c.l.s4 1934713408
        %v3613 = vunpack.c.0.s8 %v3612
        %v3614 = vlaneseq
        %v3615 = vshrl.u32 %v3614, 7
        %v3616 = vsub.s32 %v3613, %v3615
        %v3617 = vrot.slane %v3603, %v3616
        %v3618 = vcombine.high %v3594, 0.0
        %v3619 = vcombine.high %v3601, 0.0
        %v3620 = vcombine.high %v3610, 0.0
        %v3621 = vcombine.high %v3617, 0.0
        %v3622 = vcombine.low %v3533, %v3541
        %v3623 = vcombine.high %v3533, %v3541
        %v3625 = vunpack.c.l.s4 1983009808
        %v3626 = vunpack.c.0.s8 %v3625
        %v3627 = vlaneseq
        %v3628 = vshrl.u32 %v3627, 7
        %v3629 = vsub.s32 %v3626, %v3628
        %v3630 = vrot.slane %v3622, %v3629
        %v3632 = vunpack.c.l.s4 1983009808
        %v3633 = vunpack.c.0.s8 %v3632
        %v3634 = vlaneseq
        %v3635 = vshrl.u32 %v3634, 7
        %v3636 = vsub.s32 %v3633, %v3635
        %v3637 = vrot.slane %v3623, %v3636
        %v3638 = vcombine.low %v3537, %v3545
        %v3639 = vcombine.high %v3537, %v3545
        %v3641 = vunpack.c.l.s4 1983009808
        %v3642 = vunpack.c.0.s8 %v3641
        %v3643 = vlaneseq
        %v3644 = vshrl.u32 %v3643, 7
        %v3645 = vsub.s32 %v3642, %v3644
        %v3646 = vrot.slane %v3638, %v3645
        %v3648 = vunpack.c.l.s4 1983009808
        %v3649 = vunpack.c.0.s8 %v3648
        %v3650 = vlaneseq
        %v3651 = vshrl.u32 %v3650, 7
        %v3652 = vsub.s32 %v3649, %v3651
        %v3653 = vrot.slane %v3639, %v3652
        %v3654 = vcombine.low %v3630, %v3646
        %v3655 = vcombine.high %v3630, %v3646
        %v3657 = vunpack.c.l.s4 1934713408
        %v3658 = vunpack.c.0.s8 %v3657
        %v3659 = vlaneseq
        %v3660 = vshrl.u32 %v3659, 7
        %v3661 = vsub.s32 %v3658, %v3660
        %v3662 = vrot.slane %v3654, %v3661
        %v3664 = vunpack.c.l.s4 1934713408
        %v3665 = vunpack.c.0.s8 %v3664
        %v3666 = vlaneseq
        %v3667 = vshrl.u32 %v3666, 7
        %v3668 = vsub.s32 %v3665, %v3667
        %v3669 = vrot.slane %v3655, %v3668
        %v3670 = vcombine.low %v3637, %v3653
        %v3671 = vcombine.high %v3637, %v3653
        %v3673 = vunpack.c.l.s4 1934713408
        %v3674 = vunpack.c.0.s8 %v3673
        %v3675 = vlaneseq
        %v3676 = vshrl.u32 %v3675, 7
        %v3677 = vsub.s32 %v3674, %v3676
        %v3678 = vrot.slane %v3670, %v3677
        %v3680 = vunpack.c.l.s4 1934713408
        %v3681 = vunpack.c.0.s8 %v3680
        %v3682 = vlaneseq
        %v3683 = vshrl.u32 %v3682, 7
        %v3684 = vsub.s32 %v3681, %v3683
        %v3685 = vrot.slane %v3671, %v3684
        %v3686 = vcombine.high %v3662, 0.0
        %v3687 = vcombine.high %v3669, 0.0
        %v3688 = vcombine.high %v3678, 0.0
        %v3689 = vcombine.high %v3685, 0.0
        %3691 = vrot.lane.b32.xlu0 %v3618, 16
        %v3692 = vpop.permute.xlu0 %3691
        %3695 = vrot.lane.b32.xlu0 %v3601, 32
        %v3696 = vpop.permute.xlu0 %3695
        %3699 = vrot.lane.b32.xlu0 %v3619, 48
        %v3700 = vpop.permute.xlu0 %3699
        %3703 = vrot.lane.b32.xlu0 %v3610, 64
        %v3704 = vpop.permute.xlu0 %3703
        %3707 = vrot.lane.b32.xlu0 %v3620, 80
        %v3708 = vpop.permute.xlu0 %3707
        %3711 = vrot.lane.b32.xlu0 %v3617, 96
        %v3712 = vpop.permute.xlu0 %3711
        %3715 = vrot.lane.b32.xlu0 %v3621, 112
        %v3716 = vpop.permute.xlu0 %3715
        %3719 = vrot.lane.b32.xlu0 %v3686, 16
        %v3720 = vpop.permute.xlu0 %3719
        %3723 = vrot.lane.b32.xlu0 %v3669, 32
        %v3724 = vpop.permute.xlu0 %3723
        %3727 = vrot.lane.b32.xlu0 %v3687, 48
        %v3728 = vpop.permute.xlu0 %3727
        %3731 = vrot.lane.b32.xlu0 %v3678, 64
        %v3732 = vpop.permute.xlu0 %3731
        %3735 = vrot.lane.b32.xlu0 %v3688, 80
        %v3736 = vpop.permute.xlu0 %3735
        %3739 = vrot.lane.b32.xlu0 %v3685, 96
        %v3740 = vpop.permute.xlu0 %3739
        %3743 = vrot.lane.b32.xlu0 %v3689, 112
        %v3744 = vpop.permute.xlu0 %3743
        %v3746 = vsel %vm453, %v3594, %v3692
        %v3747 = vsel %vm455, %v3746, %v3696
        %v3748 = vsel %vm457, %v3747, %v3700
        %v3749 = vsel %vm459, %v3748, %v3704
        %v3750 = vsel %vm461, %v3749, %v3708
        %v3751 = vsel %vm463, %v3750, %v3712
        %v3752 = vsel %vm465, %v3751, %v3716
        %v3753 = vsel %vm453, %v3662, %v3720
        %v3754 = vsel %vm455, %v3753, %v3724
        %v3755 = vsel %vm457, %v3754, %v3728
        %v3756 = vsel %vm459, %v3755, %v3732
        %v3757 = vsel %vm461, %v3756, %v3736
        %v3758 = vsel %vm463, %v3757, %v3740
        %v3759 = vsel %vm465, %v3758, %v3744
        %3760 = vrot.lane.b32.xlu0 %v3308, 126
        %v3761 = vpop.permute.xlu0 %3760
        %3762 = vrot.lane.b32.xlu0 %v3309, 126
        %v3763 = vpop.permute.xlu0 %3762
        %3764 = vrot.lane.b32.xlu0 %v3310, 126
        %v3765 = vpop.permute.xlu0 %3764
        %3766 = vrot.lane.b32.xlu0 %v3311, 126
        %v3767 = vpop.permute.xlu0 %3766
        %3768 = vrot.lane.b32.xlu0 %v3312, 126
        %v3769 = vpop.permute.xlu0 %3768
        %3770 = vrot.lane.b32.xlu0 %v3313, 126
        %v3771 = vpop.permute.xlu0 %3770
        %3772 = vrot.lane.b32.xlu0 %v3314, 126
        %v3773 = vpop.permute.xlu0 %3772
        %3774 = vrot.lane.b32.xlu0 %v3315, 126
        %v3775 = vpop.permute.xlu0 %3774
        %v3784 = vcombine.low %v3761, %v3769
        %v3785 = vcombine.high %v3761, %v3769
        %v3787 = vunpack.c.l.s4 1983009808
        %v3788 = vunpack.c.0.s8 %v3787
        %v3789 = vlaneseq
        %v3790 = vshrl.u32 %v3789, 7
        %v3791 = vsub.s32 %v3788, %v3790
        %v3792 = vrot.slane %v3784, %v3791
        %v3794 = vunpack.c.l.s4 1983009808
        %v3795 = vunpack.c.0.s8 %v3794
        %v3796 = vlaneseq
        %v3797 = vshrl.u32 %v3796, 7
        %v3798 = vsub.s32 %v3795, %v3797
        %v3799 = vrot.slane %v3785, %v3798
        %v3800 = vcombine.low %v3765, %v3773
        %v3801 = vcombine.high %v3765, %v3773
        %v3803 = vunpack.c.l.s4 1983009808
        %v3804 = vunpack.c.0.s8 %v3803
        %v3805 = vlaneseq
        %v3806 = vshrl.u32 %v3805, 7
        %v3807 = vsub.s32 %v3804, %v3806
        %v3808 = vrot.slane %v3800, %v3807
        %v3810 = vunpack.c.l.s4 1983009808
        %v3811 = vunpack.c.0.s8 %v3810
        %v3812 = vlaneseq
        %v3813 = vshrl.u32 %v3812, 7
        %v3814 = vsub.s32 %v3811, %v3813
        %v3815 = vrot.slane %v3801, %v3814
        %v3816 = vcombine.low %v3792, %v3808
        %v3817 = vcombine.high %v3792, %v3808
        %v3819 = vunpack.c.l.s4 1934713408
        %v3820 = vunpack.c.0.s8 %v3819
        %v3821 = vlaneseq
        %v3822 = vshrl.u32 %v3821, 7
        %v3823 = vsub.s32 %v3820, %v3822
        %v3824 = vrot.slane %v3816, %v3823
        %v3826 = vunpack.c.l.s4 1934713408
        %v3827 = vunpack.c.0.s8 %v3826
        %v3828 = vlaneseq
        %v3829 = vshrl.u32 %v3828, 7
        %v3830 = vsub.s32 %v3827, %v3829
        %v3831 = vrot.slane %v3817, %v3830
        %v3832 = vcombine.low %v3799, %v3815
        %v3833 = vcombine.high %v3799, %v3815
        %v3835 = vunpack.c.l.s4 1934713408
        %v3836 = vunpack.c.0.s8 %v3835
        %v3837 = vlaneseq
        %v3838 = vshrl.u32 %v3837, 7
        %v3839 = vsub.s32 %v3836, %v3838
        %v3840 = vrot.slane %v3832, %v3839
        %v3842 = vunpack.c.l.s4 1934713408
        %v3843 = vunpack.c.0.s8 %v3842
        %v3844 = vlaneseq
        %v3845 = vshrl.u32 %v3844, 7
        %v3846 = vsub.s32 %v3843, %v3845
        %v3847 = vrot.slane %v3833, %v3846
        %v3848 = vcombine.high %v3824, 0.0
        %v3849 = vcombine.high %v3831, 0.0
        %v3850 = vcombine.high %v3840, 0.0
        %v3851 = vcombine.high %v3847, 0.0
        %v3852 = vcombine.low %v3763, %v3771
        %v3853 = vcombine.high %v3763, %v3771
        %v3855 = vunpack.c.l.s4 1983009808
        %v3856 = vunpack.c.0.s8 %v3855
        %v3857 = vlaneseq
        %v3858 = vshrl.u32 %v3857, 7
        %v3859 = vsub.s32 %v3856, %v3858
        %v3860 = vrot.slane %v3852, %v3859
        %v3862 = vunpack.c.l.s4 1983009808
        %v3863 = vunpack.c.0.s8 %v3862
        %v3864 = vlaneseq
        %v3865 = vshrl.u32 %v3864, 7
        %v3866 = vsub.s32 %v3863, %v3865
        %v3867 = vrot.slane %v3853, %v3866
        %v3868 = vcombine.low %v3767, %v3775
        %v3869 = vcombine.high %v3767, %v3775
        %v3871 = vunpack.c.l.s4 1983009808
        %v3872 = vunpack.c.0.s8 %v3871
        %v3873 = vlaneseq
        %v3874 = vshrl.u32 %v3873, 7
        %v3875 = vsub.s32 %v3872, %v3874
        %v3876 = vrot.slane %v3868, %v3875
        %v3878 = vunpack.c.l.s4 1983009808
        %v3879 = vunpack.c.0.s8 %v3878
        %v3880 = vlaneseq
        %v3881 = vshrl.u32 %v3880, 7
        %v3882 = vsub.s32 %v3879, %v3881
        %v3883 = vrot.slane %v3869, %v3882
        %v3884 = vcombine.low %v3860, %v3876
        %v3885 = vcombine.high %v3860, %v3876
        %v3887 = vunpack.c.l.s4 1934713408
        %v3888 = vunpack.c.0.s8 %v3887
        %v3889 = vlaneseq
        %v3890 = vshrl.u32 %v3889, 7
        %v3891 = vsub.s32 %v3888, %v3890
        %v3892 = vrot.slane %v3884, %v3891
        %v3894 = vunpack.c.l.s4 1934713408
        %v3895 = vunpack.c.0.s8 %v3894
        %v3896 = vlaneseq
        %v3897 = vshrl.u32 %v3896, 7
        %v3898 = vsub.s32 %v3895, %v3897
        %v3899 = vrot.slane %v3885, %v3898
        %v3900 = vcombine.low %v3867, %v3883
        %v3901 = vcombine.high %v3867, %v3883
        %v3903 = vunpack.c.l.s4 1934713408
        %v3904 = vunpack.c.0.s8 %v3903
        %v3905 = vlaneseq
        %v3906 = vshrl.u32 %v3905, 7
        %v3907 = vsub.s32 %v3904, %v3906
        %v3908 = vrot.slane %v3900, %v3907
        %v3910 = vunpack.c.l.s4 1934713408
        %v3911 = vunpack.c.0.s8 %v3910
        %v3912 = vlaneseq
        %v3913 = vshrl.u32 %v3912, 7
        %v3914 = vsub.s32 %v3911, %v3913
        %v3915 = vrot.slane %v3901, %v3914
        %v3916 = vcombine.high %v3892, 0.0
        %v3917 = vcombine.high %v3899, 0.0
        %v3918 = vcombine.high %v3908, 0.0
        %v3919 = vcombine.high %v3915, 0.0
        %3921 = vrot.lane.b32.xlu0 %v3848, 16
        %v3922 = vpop.permute.xlu0 %3921
        %3925 = vrot.lane.b32.xlu0 %v3831, 32
        %v3926 = vpop.permute.xlu0 %3925
        %3929 = vrot.lane.b32.xlu0 %v3849, 48
        %v3930 = vpop.permute.xlu0 %3929
        %3933 = vrot.lane.b32.xlu0 %v3840, 64
        %v3934 = vpop.permute.xlu0 %3933
        %3937 = vrot.lane.b32.xlu0 %v3850, 80
        %v3938 = vpop.permute.xlu0 %3937
        %3941 = vrot.lane.b32.xlu0 %v3847, 96
        %v3942 = vpop.permute.xlu0 %3941
        %3945 = vrot.lane.b32.xlu0 %v3851, 112
        %v3946 = vpop.permute.xlu0 %3945
        %3949 = vrot.lane.b32.xlu0 %v3916, 16
        %v3950 = vpop.permute.xlu0 %3949
        %3953 = vrot.lane.b32.xlu0 %v3899, 32
        %v3954 = vpop.permute.xlu0 %3953
        %3957 = vrot.lane.b32.xlu0 %v3917, 48
        %v3958 = vpop.permute.xlu0 %3957
        %3961 = vrot.lane.b32.xlu0 %v3908, 64
        %v3962 = vpop.permute.xlu0 %3961
        %3965 = vrot.lane.b32.xlu0 %v3918, 80
        %v3966 = vpop.permute.xlu0 %3965
        %3969 = vrot.lane.b32.xlu0 %v3915, 96
        %v3970 = vpop.permute.xlu0 %3969
        %3973 = vrot.lane.b32.xlu0 %v3919, 112
        %v3974 = vpop.permute.xlu0 %3973
        %v3976 = vsel %vm453, %v3824, %v3922
        %v3977 = vsel %vm455, %v3976, %v3926
        %v3978 = vsel %vm457, %v3977, %v3930
        %v3979 = vsel %vm459, %v3978, %v3934
        %v3980 = vsel %vm461, %v3979, %v3938
        %v3981 = vsel %vm463, %v3980, %v3942
        %v3982 = vsel %vm465, %v3981, %v3946
        %v3983 = vsel %vm453, %v3892, %v3950
        %v3984 = vsel %vm455, %v3983, %v3954
        %v3985 = vsel %vm457, %v3984, %v3958
        %v3986 = vsel %vm459, %v3985, %v3962
        %v3987 = vsel %vm461, %v3986, %v3966
        %v3988 = vsel %vm463, %v3987, %v3970
        %v3989 = vsel %vm465, %v3988, %v3974
        %v3990 = vld [vmem:[#allocation2 + $0x2] sm:$0xff]
        %v3991 = vld [vmem:[#allocation2 + $0xa] sm:$0xff]
        %v3992 = vld [vmem:[#allocation2 + $0x1a] sm:$0xff]
        %v3993 = vld [vmem:[#allocation2 + $0x22] sm:$0xff]
        %v3994 = vld [vmem:[#allocation2 + $0x32] sm:$0xff]
        %v3995 = vld [vmem:[#allocation2 + $0x3a] sm:$0xff]
        %v3996 = vld [vmem:[#allocation2 + $0x4a] sm:$0xff]
        %v3997 = vld [vmem:[#allocation2 + $0x52] sm:$0xff]
        %v3998 = vcombine.low %v3990, %v3994
        %v3999 = vcombine.high %v3990, %v3994
        %v4001 = vunpack.c.l.s4 1983009808
        %v4002 = vunpack.c.0.s8 %v4001
        %v4003 = vlaneseq
        %v4004 = vshrl.u32 %v4003, 7
        %v4005 = vsub.s32 %v4002, %v4004
        %v4006 = vrot.slane %v3998, %v4005
        %v4008 = vunpack.c.l.s4 1983009808
        %v4009 = vunpack.c.0.s8 %v4008
        %v4010 = vlaneseq
        %v4011 = vshrl.u32 %v4010, 7
        %v4012 = vsub.s32 %v4009, %v4011
        %v4013 = vrot.slane %v3999, %v4012
        %v4014 = vcombine.low %v3992, %v3996
        %v4015 = vcombine.high %v3992, %v3996
        %v4017 = vunpack.c.l.s4 1983009808
        %v4018 = vunpack.c.0.s8 %v4017
        %v4019 = vlaneseq
        %v4020 = vshrl.u32 %v4019, 7
        %v4021 = vsub.s32 %v4018, %v4020
        %v4022 = vrot.slane %v4014, %v4021
        %v4024 = vunpack.c.l.s4 1983009808
        %v4025 = vunpack.c.0.s8 %v4024
        %v4026 = vlaneseq
        %v4027 = vshrl.u32 %v4026, 7
        %v4028 = vsub.s32 %v4025, %v4027
        %v4029 = vrot.slane %v4015, %v4028
        %v4030 = vcombine.low %v4006, %v4022
        %v4031 = vcombine.high %v4006, %v4022
        %v4033 = vunpack.c.l.s4 1934713408
        %v4034 = vunpack.c.0.s8 %v4033
        %v4035 = vlaneseq
        %v4036 = vshrl.u32 %v4035, 7
        %v4037 = vsub.s32 %v4034, %v4036
        %v4038 = vrot.slane %v4030, %v4037
        %v4040 = vunpack.c.l.s4 1934713408
        %v4041 = vunpack.c.0.s8 %v4040
        %v4042 = vlaneseq
        %v4043 = vshrl.u32 %v4042, 7
        %v4044 = vsub.s32 %v4041, %v4043
        %v4045 = vrot.slane %v4031, %v4044
        %v4046 = vcombine.low %v4013, %v4029
        %v4047 = vcombine.high %v4013, %v4029
        %v4049 = vunpack.c.l.s4 1934713408
        %v4050 = vunpack.c.0.s8 %v4049
        %v4051 = vlaneseq
        %v4052 = vshrl.u32 %v4051, 7
        %v4053 = vsub.s32 %v4050, %v4052
        %v4054 = vrot.slane %v4046, %v4053
        %v4056 = vunpack.c.l.s4 1934713408
        %v4057 = vunpack.c.0.s8 %v4056
        %v4058 = vlaneseq
        %v4059 = vshrl.u32 %v4058, 7
        %v4060 = vsub.s32 %v4057, %v4059
        %v4061 = vrot.slane %v4047, %v4060
        %v4062 = vcombine.high %v4038, 0.0
        %v4063 = vcombine.high %v4045, 0.0
        %v4064 = vcombine.high %v4054, 0.0
        %v4065 = vcombine.high %v4061, 0.0
        %v4066 = vcombine.low %v3991, %v3995
        %v4067 = vcombine.high %v3991, %v3995
        %v4069 = vunpack.c.l.s4 1983009808
        %v4070 = vunpack.c.0.s8 %v4069
        %v4071 = vlaneseq
        %v4072 = vshrl.u32 %v4071, 7
        %v4073 = vsub.s32 %v4070, %v4072
        %v4074 = vrot.slane %v4066, %v4073
        %v4076 = vunpack.c.l.s4 1983009808
        %v4077 = vunpack.c.0.s8 %v4076
        %v4078 = vlaneseq
        %v4079 = vshrl.u32 %v4078, 7
        %v4080 = vsub.s32 %v4077, %v4079
        %v4081 = vrot.slane %v4067, %v4080
        %v4082 = vcombine.low %v3993, %v3997
        %v4083 = vcombine.high %v3993, %v3997
        %v4085 = vunpack.c.l.s4 1983009808
        %v4086 = vunpack.c.0.s8 %v4085
        %v4087 = vlaneseq
        %v4088 = vshrl.u32 %v4087, 7
        %v4089 = vsub.s32 %v4086, %v4088
        %v4090 = vrot.slane %v4082, %v4089
        %v4092 = vunpack.c.l.s4 1983009808
        %v4093 = vunpack.c.0.s8 %v4092
        %v4094 = vlaneseq
        %v4095 = vshrl.u32 %v4094, 7
        %v4096 = vsub.s32 %v4093, %v4095
        %v4097 = vrot.slane %v4083, %v4096
        %v4098 = vcombine.low %v4074, %v4090
        %v4099 = vcombine.high %v4074, %v4090
        %v4101 = vunpack.c.l.s4 1934713408
        %v4102 = vunpack.c.0.s8 %v4101
        %v4103 = vlaneseq
        %v4104 = vshrl.u32 %v4103, 7
        %v4105 = vsub.s32 %v4102, %v4104
        %v4106 = vrot.slane %v4098, %v4105
        %v4108 = vunpack.c.l.s4 1934713408
        %v4109 = vunpack.c.0.s8 %v4108
        %v4110 = vlaneseq
        %v4111 = vshrl.u32 %v4110, 7
        %v4112 = vsub.s32 %v4109, %v4111
        %v4113 = vrot.slane %v4099, %v4112
        %v4114 = vcombine.low %v4081, %v4097
        %v4115 = vcombine.high %v4081, %v4097
        %v4117 = vunpack.c.l.s4 1934713408
        %v4118 = vunpack.c.0.s8 %v4117
        %v4119 = vlaneseq
        %v4120 = vshrl.u32 %v4119, 7
        %v4121 = vsub.s32 %v4118, %v4120
        %v4122 = vrot.slane %v4114, %v4121
        %v4124 = vunpack.c.l.s4 1934713408
        %v4125 = vunpack.c.0.s8 %v4124
        %v4126 = vlaneseq
        %v4127 = vshrl.u32 %v4126, 7
        %v4128 = vsub.s32 %v4125, %v4127
        %v4129 = vrot.slane %v4115, %v4128
        %v4130 = vcombine.high %v4106, 0.0
        %v4131 = vcombine.high %v4113, 0.0
        %v4132 = vcombine.high %v4122, 0.0
        %v4133 = vcombine.high %v4129, 0.0
        %4135 = vrot.lane.b32.xlu0 %v4062, 16
        %v4136 = vpop.permute.xlu0 %4135
        %4139 = vrot.lane.b32.xlu0 %v4045, 32
        %v4140 = vpop.permute.xlu0 %4139
        %4143 = vrot.lane.b32.xlu0 %v4063, 48
        %v4144 = vpop.permute.xlu0 %4143
        %4147 = vrot.lane.b32.xlu0 %v4054, 64
        %v4148 = vpop.permute.xlu0 %4147
        %4151 = vrot.lane.b32.xlu0 %v4064, 80
        %v4152 = vpop.permute.xlu0 %4151
        %4155 = vrot.lane.b32.xlu0 %v4061, 96
        %v4156 = vpop.permute.xlu0 %4155
        %4159 = vrot.lane.b32.xlu0 %v4065, 112
        %v4160 = vpop.permute.xlu0 %4159
        %4163 = vrot.lane.b32.xlu0 %v4130, 16
        %v4164 = vpop.permute.xlu0 %4163
        %4167 = vrot.lane.b32.xlu0 %v4113, 32
        %v4168 = vpop.permute.xlu0 %4167
        %4171 = vrot.lane.b32.xlu0 %v4131, 48
        %v4172 = vpop.permute.xlu0 %4171
        %4175 = vrot.lane.b32.xlu0 %v4122, 64
        %v4176 = vpop.permute.xlu0 %4175
        %4179 = vrot.lane.b32.xlu0 %v4132, 80
        %v4180 = vpop.permute.xlu0 %4179
        %4183 = vrot.lane.b32.xlu0 %v4129, 96
        %v4184 = vpop.permute.xlu0 %4183
        %4187 = vrot.lane.b32.xlu0 %v4133, 112
        %v4188 = vpop.permute.xlu0 %4187
        %v4190 = vsel %vm453, %v4038, %v4136
        %v4191 = vsel %vm455, %v4190, %v4140
        %v4192 = vsel %vm457, %v4191, %v4144
        %v4193 = vsel %vm459, %v4192, %v4148
        %v4194 = vsel %vm461, %v4193, %v4152
        %v4195 = vsel %vm463, %v4194, %v4156
        %v4196 = vsel %vm465, %v4195, %v4160
        %v4197 = vsel %vm453, %v4106, %v4164
        %v4198 = vsel %vm455, %v4197, %v4168
        %v4199 = vsel %vm457, %v4198, %v4172
        %v4200 = vsel %vm459, %v4199, %v4176
        %v4201 = vsel %vm461, %v4200, %v4180
        %v4202 = vsel %vm463, %v4201, %v4184
        %v4203 = vsel %vm465, %v4202, %v4188
        %4212 = vrot.lane.b32.xlu0 %v3990, 127
        %v4213 = vpop.permute.xlu0 %4212
        %4214 = vrot.lane.b32.xlu0 %v3991, 127
        %v4215 = vpop.permute.xlu0 %4214
        %4216 = vrot.lane.b32.xlu0 %v3992, 127
        %v4217 = vpop.permute.xlu0 %4216
        %4218 = vrot.lane.b32.xlu0 %v3993, 127
        %v4219 = vpop.permute.xlu0 %4218
        %4220 = vrot.lane.b32.xlu0 %v3994, 127
        %v4221 = vpop.permute.xlu0 %4220
        %4222 = vrot.lane.b32.xlu0 %v3995, 127
        %v4223 = vpop.permute.xlu0 %4222
        %4224 = vrot.lane.b32.xlu0 %v3996, 127
        %v4225 = vpop.permute.xlu0 %4224
        %4226 = vrot.lane.b32.xlu0 %v3997, 127
        %v4227 = vpop.permute.xlu0 %4226
        %v4236 = vcombine.low %v4213, %v4221
        %v4237 = vcombine.high %v4213, %v4221
        %v4239 = vunpack.c.l.s4 1983009808
        %v4240 = vunpack.c.0.s8 %v4239
        %v4241 = vlaneseq
        %v4242 = vshrl.u32 %v4241, 7
        %v4243 = vsub.s32 %v4240, %v4242
        %v4244 = vrot.slane %v4236, %v4243
        %v4246 = vunpack.c.l.s4 1983009808
        %v4247 = vunpack.c.0.s8 %v4246
        %v4248 = vlaneseq
        %v4249 = vshrl.u32 %v4248, 7
        %v4250 = vsub.s32 %v4247, %v4249
        %v4251 = vrot.slane %v4237, %v4250
        %v4252 = vcombine.low %v4217, %v4225
        %v4253 = vcombine.high %v4217, %v4225
        %v4255 = vunpack.c.l.s4 1983009808
        %v4256 = vunpack.c.0.s8 %v4255
        %v4257 = vlaneseq
        %v4258 = vshrl.u32 %v4257, 7
        %v4259 = vsub.s32 %v4256, %v4258
        %v4260 = vrot.slane %v4252, %v4259
        %v4262 = vunpack.c.l.s4 1983009808
        %v4263 = vunpack.c.0.s8 %v4262
        %v4264 = vlaneseq
        %v4265 = vshrl.u32 %v4264, 7
        %v4266 = vsub.s32 %v4263, %v4265
        %v4267 = vrot.slane %v4253, %v4266
        %v4268 = vcombine.low %v4244, %v4260
        %v4269 = vcombine.high %v4244, %v4260
        %v4271 = vunpack.c.l.s4 1934713408
        %v4272 = vunpack.c.0.s8 %v4271
        %v4273 = vlaneseq
        %v4274 = vshrl.u32 %v4273, 7
        %v4275 = vsub.s32 %v4272, %v4274
        %v4276 = vrot.slane %v4268, %v4275
        %v4278 = vunpack.c.l.s4 1934713408
        %v4279 = vunpack.c.0.s8 %v4278
        %v4280 = vlaneseq
        %v4281 = vshrl.u32 %v4280, 7
        %v4282 = vsub.s32 %v4279, %v4281
        %v4283 = vrot.slane %v4269, %v4282
        %v4284 = vcombine.low %v4251, %v4267
        %v4285 = vcombine.high %v4251, %v4267
        %v4287 = vunpack.c.l.s4 1934713408
        %v4288 = vunpack.c.0.s8 %v4287
        %v4289 = vlaneseq
        %v4290 = vshrl.u32 %v4289, 7
        %v4291 = vsub.s32 %v4288, %v4290
        %v4292 = vrot.slane %v4284, %v4291
        %v4294 = vunpack.c.l.s4 1934713408
        %v4295 = vunpack.c.0.s8 %v4294
        %v4296 = vlaneseq
        %v4297 = vshrl.u32 %v4296, 7
        %v4298 = vsub.s32 %v4295, %v4297
        %v4299 = vrot.slane %v4285, %v4298
        %v4300 = vcombine.high %v4276, 0.0
        %v4301 = vcombine.high %v4283, 0.0
        %v4302 = vcombine.high %v4292, 0.0
        %v4303 = vcombine.high %v4299, 0.0
        %v4304 = vcombine.low %v4215, %v4223
        %v4305 = vcombine.high %v4215, %v4223
        %v4307 = vunpack.c.l.s4 1983009808
        %v4308 = vunpack.c.0.s8 %v4307
        %v4309 = vlaneseq
        %v4310 = vshrl.u32 %v4309, 7
        %v4311 = vsub.s32 %v4308, %v4310
        %v4312 = vrot.slane %v4304, %v4311
        %v4314 = vunpack.c.l.s4 1983009808
        %v4315 = vunpack.c.0.s8 %v4314
        %v4316 = vlaneseq
        %v4317 = vshrl.u32 %v4316, 7
        %v4318 = vsub.s32 %v4315, %v4317
        %v4319 = vrot.slane %v4305, %v4318
        %v4320 = vcombine.low %v4219, %v4227
        %v4321 = vcombine.high %v4219, %v4227
        %v4323 = vunpack.c.l.s4 1983009808
        %v4324 = vunpack.c.0.s8 %v4323
        %v4325 = vlaneseq
        %v4326 = vshrl.u32 %v4325, 7
        %v4327 = vsub.s32 %v4324, %v4326
        %v4328 = vrot.slane %v4320, %v4327
        %v4330 = vunpack.c.l.s4 1983009808
        %v4331 = vunpack.c.0.s8 %v4330
        %v4332 = vlaneseq
        %v4333 = vshrl.u32 %v4332, 7
        %v4334 = vsub.s32 %v4331, %v4333
        %v4335 = vrot.slane %v4321, %v4334
        %v4336 = vcombine.low %v4312, %v4328
        %v4337 = vcombine.high %v4312, %v4328
        %v4339 = vunpack.c.l.s4 1934713408
        %v4340 = vunpack.c.0.s8 %v4339
        %v4341 = vlaneseq
        %v4342 = vshrl.u32 %v4341, 7
        %v4343 = vsub.s32 %v4340, %v4342
        %v4344 = vrot.slane %v4336, %v4343
        %v4346 = vunpack.c.l.s4 1934713408
        %v4347 = vunpack.c.0.s8 %v4346
        %v4348 = vlaneseq
        %v4349 = vshrl.u32 %v4348, 7
        %v4350 = vsub.s32 %v4347, %v4349
        %v4351 = vrot.slane %v4337, %v4350
        %v4352 = vcombine.low %v4319, %v4335
        %v4353 = vcombine.high %v4319, %v4335
        %v4355 = vunpack.c.l.s4 1934713408
        %v4356 = vunpack.c.0.s8 %v4355
        %v4357 = vlaneseq
        %v4358 = vshrl.u32 %v4357, 7
        %v4359 = vsub.s32 %v4356, %v4358
        %v4360 = vrot.slane %v4352, %v4359
        %v4362 = vunpack.c.l.s4 1934713408
        %v4363 = vunpack.c.0.s8 %v4362
        %v4364 = vlaneseq
        %v4365 = vshrl.u32 %v4364, 7
        %v4366 = vsub.s32 %v4363, %v4365
        %v4367 = vrot.slane %v4353, %v4366
        %v4368 = vcombine.high %v4344, 0.0
        %v4369 = vcombine.high %v4351, 0.0
        %v4370 = vcombine.high %v4360, 0.0
        %v4371 = vcombine.high %v4367, 0.0
        %4373 = vrot.lane.b32.xlu0 %v4300, 16
        %v4374 = vpop.permute.xlu0 %4373
        %4377 = vrot.lane.b32.xlu0 %v4283, 32
        %v4378 = vpop.permute.xlu0 %4377
        %4381 = vrot.lane.b32.xlu0 %v4301, 48
        %v4382 = vpop.permute.xlu0 %4381
        %4385 = vrot.lane.b32.xlu0 %v4292, 64
        %v4386 = vpop.permute.xlu0 %4385
        %4389 = vrot.lane.b32.xlu0 %v4302, 80
        %v4390 = vpop.permute.xlu0 %4389
        %4393 = vrot.lane.b32.xlu0 %v4299, 96
        %v4394 = vpop.permute.xlu0 %4393
        %4397 = vrot.lane.b32.xlu0 %v4303, 112
        %v4398 = vpop.permute.xlu0 %4397
        %4401 = vrot.lane.b32.xlu0 %v4368, 16
        %v4402 = vpop.permute.xlu0 %4401
        %4405 = vrot.lane.b32.xlu0 %v4351, 32
        %v4406 = vpop.permute.xlu0 %4405
        %4409 = vrot.lane.b32.xlu0 %v4369, 48
        %v4410 = vpop.permute.xlu0 %4409
        %4413 = vrot.lane.b32.xlu0 %v4360, 64
        %v4414 = vpop.permute.xlu0 %4413
        %4417 = vrot.lane.b32.xlu0 %v4370, 80
        %v4418 = vpop.permute.xlu0 %4417
        %4421 = vrot.lane.b32.xlu0 %v4367, 96
        %v4422 = vpop.permute.xlu0 %4421
        %4425 = vrot.lane.b32.xlu0 %v4371, 112
        %v4426 = vpop.permute.xlu0 %4425
        %v4428 = vsel %vm453, %v4276, %v4374
        %v4429 = vsel %vm455, %v4428, %v4378
        %v4430 = vsel %vm457, %v4429, %v4382
        %v4431 = vsel %vm459, %v4430, %v4386
        %v4432 = vsel %vm461, %v4431, %v4390
        %v4433 = vsel %vm463, %v4432, %v4394
        %v4434 = vsel %vm465, %v4433, %v4398
        %v4435 = vsel %vm453, %v4344, %v4402
        %v4436 = vsel %vm455, %v4435, %v4406
        %v4437 = vsel %vm457, %v4436, %v4410
        %v4438 = vsel %vm459, %v4437, %v4414
        %v4439 = vsel %vm461, %v4438, %v4418
        %v4440 = vsel %vm463, %v4439, %v4422
        %v4441 = vsel %vm465, %v4440, %v4426
        %4442 = vrot.lane.b32.xlu0 %v3990, 126
        %v4443 = vpop.permute.xlu0 %4442
        %4444 = vrot.lane.b32.xlu0 %v3991, 126
        %v4445 = vpop.permute.xlu0 %4444
        %4446 = vrot.lane.b32.xlu0 %v3992, 126
        %v4447 = vpop.permute.xlu0 %4446
        %4448 = vrot.lane.b32.xlu0 %v3993, 126
        %v4449 = vpop.permute.xlu0 %4448
        %4450 = vrot.lane.b32.xlu0 %v3994, 126
        %v4451 = vpop.permute.xlu0 %4450
        %4452 = vrot.lane.b32.xlu0 %v3995, 126
        %v4453 = vpop.permute.xlu0 %4452
        %4454 = vrot.lane.b32.xlu0 %v3996, 126
        %v4455 = vpop.permute.xlu0 %4454
        %4456 = vrot.lane.b32.xlu0 %v3997, 126
        %v4457 = vpop.permute.xlu0 %4456
        %v4466 = vcombine.low %v4443, %v4451
        %v4467 = vcombine.high %v4443, %v4451
        %v4469 = vunpack.c.l.s4 1983009808
        %v4470 = vunpack.c.0.s8 %v4469
        %v4471 = vlaneseq
        %v4472 = vshrl.u32 %v4471, 7
        %v4473 = vsub.s32 %v4470, %v4472
        %v4474 = vrot.slane %v4466, %v4473
        %v4476 = vunpack.c.l.s4 1983009808
        %v4477 = vunpack.c.0.s8 %v4476
        %v4478 = vlaneseq
        %v4479 = vshrl.u32 %v4478, 7
        %v4480 = vsub.s32 %v4477, %v4479
        %v4481 = vrot.slane %v4467, %v4480
        %v4482 = vcombine.low %v4447, %v4455
        %v4483 = vcombine.high %v4447, %v4455
        %v4485 = vunpack.c.l.s4 1983009808
        %v4486 = vunpack.c.0.s8 %v4485
        %v4487 = vlaneseq
        %v4488 = vshrl.u32 %v4487, 7
        %v4489 = vsub.s32 %v4486, %v4488
        %v4490 = vrot.slane %v4482, %v4489
        %v4492 = vunpack.c.l.s4 1983009808
        %v4493 = vunpack.c.0.s8 %v4492
        %v4494 = vlaneseq
        %v4495 = vshrl.u32 %v4494, 7
        %v4496 = vsub.s32 %v4493, %v4495
        %v4497 = vrot.slane %v4483, %v4496
        %v4498 = vcombine.low %v4474, %v4490
        %v4499 = vcombine.high %v4474, %v4490
        %v4501 = vunpack.c.l.s4 1934713408
        %v4502 = vunpack.c.0.s8 %v4501
        %v4503 = vlaneseq
        %v4504 = vshrl.u32 %v4503, 7
        %v4505 = vsub.s32 %v4502, %v4504
        %v4506 = vrot.slane %v4498, %v4505
        %v4508 = vunpack.c.l.s4 1934713408
        %v4509 = vunpack.c.0.s8 %v4508
        %v4510 = vlaneseq
        %v4511 = vshrl.u32 %v4510, 7
        %v4512 = vsub.s32 %v4509, %v4511
        %v4513 = vrot.slane %v4499, %v4512
        %v4514 = vcombine.low %v4481, %v4497
        %v4515 = vcombine.high %v4481, %v4497
        %v4517 = vunpack.c.l.s4 1934713408
        %v4518 = vunpack.c.0.s8 %v4517
        %v4519 = vlaneseq
        %v4520 = vshrl.u32 %v4519, 7
        %v4521 = vsub.s32 %v4518, %v4520
        %v4522 = vrot.slane %v4514, %v4521
        %v4524 = vunpack.c.l.s4 1934713408
        %v4525 = vunpack.c.0.s8 %v4524
        %v4526 = vlaneseq
        %v4527 = vshrl.u32 %v4526, 7
        %v4528 = vsub.s32 %v4525, %v4527
        %v4529 = vrot.slane %v4515, %v4528
        %v4530 = vcombine.high %v4506, 0.0
        %v4531 = vcombine.high %v4513, 0.0
        %v4532 = vcombine.high %v4522, 0.0
        %v4533 = vcombine.high %v4529, 0.0
        %v4534 = vcombine.low %v4445, %v4453
        %v4535 = vcombine.high %v4445, %v4453
        %v4537 = vunpack.c.l.s4 1983009808
        %v4538 = vunpack.c.0.s8 %v4537
        %v4539 = vlaneseq
        %v4540 = vshrl.u32 %v4539, 7
        %v4541 = vsub.s32 %v4538, %v4540
        %v4542 = vrot.slane %v4534, %v4541
        %v4544 = vunpack.c.l.s4 1983009808
        %v4545 = vunpack.c.0.s8 %v4544
        %v4546 = vlaneseq
        %v4547 = vshrl.u32 %v4546, 7
        %v4548 = vsub.s32 %v4545, %v4547
        %v4549 = vrot.slane %v4535, %v4548
        %v4550 = vcombine.low %v4449, %v4457
        %v4551 = vcombine.high %v4449, %v4457
        %v4553 = vunpack.c.l.s4 1983009808
        %v4554 = vunpack.c.0.s8 %v4553
        %v4555 = vlaneseq
        %v4556 = vshrl.u32 %v4555, 7
        %v4557 = vsub.s32 %v4554, %v4556
        %v4558 = vrot.slane %v4550, %v4557
        %v4560 = vunpack.c.l.s4 1983009808
        %v4561 = vunpack.c.0.s8 %v4560
        %v4562 = vlaneseq
        %v4563 = vshrl.u32 %v4562, 7
        %v4564 = vsub.s32 %v4561, %v4563
        %v4565 = vrot.slane %v4551, %v4564
        %v4566 = vcombine.low %v4542, %v4558
        %v4567 = vcombine.high %v4542, %v4558
        %v4569 = vunpack.c.l.s4 1934713408
        %v4570 = vunpack.c.0.s8 %v4569
        %v4571 = vlaneseq
        %v4572 = vshrl.u32 %v4571, 7
        %v4573 = vsub.s32 %v4570, %v4572
        %v4574 = vrot.slane %v4566, %v4573
        %v4576 = vunpack.c.l.s4 1934713408
        %v4577 = vunpack.c.0.s8 %v4576
        %v4578 = vlaneseq
        %v4579 = vshrl.u32 %v4578, 7
        %v4580 = vsub.s32 %v4577, %v4579
        %v4581 = vrot.slane %v4567, %v4580
        %v4582 = vcombine.low %v4549, %v4565
        %v4583 = vcombine.high %v4549, %v4565
        %v4585 = vunpack.c.l.s4 1934713408
        %v4586 = vunpack.c.0.s8 %v4585
        %v4587 = vlaneseq
        %v4588 = vshrl.u32 %v4587, 7
        %v4589 = vsub.s32 %v4586, %v4588
        %v4590 = vrot.slane %v4582, %v4589
        %v4592 = vunpack.c.l.s4 1934713408
        %v4593 = vunpack.c.0.s8 %v4592
        %v4594 = vlaneseq
        %v4595 = vshrl.u32 %v4594, 7
        %v4596 = vsub.s32 %v4593, %v4595
        %v4597 = vrot.slane %v4583, %v4596
        %v4598 = vcombine.high %v4574, 0.0
        %v4599 = vcombine.high %v4581, 0.0
        %v4600 = vcombine.high %v4590, 0.0
        %v4601 = vcombine.high %v4597, 0.0
        %4603 = vrot.lane.b32.xlu0 %v4530, 16
        %v4604 = vpop.permute.xlu0 %4603
        %4607 = vrot.lane.b32.xlu0 %v4513, 32
        %v4608 = vpop.permute.xlu0 %4607
        %4611 = vrot.lane.b32.xlu0 %v4531, 48
        %v4612 = vpop.permute.xlu0 %4611
        %4615 = vrot.lane.b32.xlu0 %v4522, 64
        %v4616 = vpop.permute.xlu0 %4615
        %4619 = vrot.lane.b32.xlu0 %v4532, 80
        %v4620 = vpop.permute.xlu0 %4619
        %4623 = vrot.lane.b32.xlu0 %v4529, 96
        %v4624 = vpop.permute.xlu0 %4623
        %4627 = vrot.lane.b32.xlu0 %v4533, 112
        %v4628 = vpop.permute.xlu0 %4627
        %4631 = vrot.lane.b32.xlu0 %v4598, 16
        %v4632 = vpop.permute.xlu0 %4631
        %4635 = vrot.lane.b32.xlu0 %v4581, 32
        %v4636 = vpop.permute.xlu0 %4635
        %4639 = vrot.lane.b32.xlu0 %v4599, 48
        %v4640 = vpop.permute.xlu0 %4639
        %4643 = vrot.lane.b32.xlu0 %v4590, 64
        %v4644 = vpop.permute.xlu0 %4643
        %4647 = vrot.lane.b32.xlu0 %v4600, 80
        %v4648 = vpop.permute.xlu0 %4647
        %4651 = vrot.lane.b32.xlu0 %v4597, 96
        %v4652 = vpop.permute.xlu0 %4651
        %4655 = vrot.lane.b32.xlu0 %v4601, 112
        %v4656 = vpop.permute.xlu0 %4655
        %v4658 = vsel %vm453, %v4506, %v4604
        %v4659 = vsel %vm455, %v4658, %v4608
        %v4660 = vsel %vm457, %v4659, %v4612
        %v4661 = vsel %vm459, %v4660, %v4616
        %v4662 = vsel %vm461, %v4661, %v4620
        %v4663 = vsel %vm463, %v4662, %v4624
        %v4664 = vsel %vm465, %v4663, %v4628
        %v4665 = vsel %vm453, %v4574, %v4632
        %v4666 = vsel %vm455, %v4665, %v4636
        %v4667 = vsel %vm457, %v4666, %v4640
        %v4668 = vsel %vm459, %v4667, %v4644
        %v4669 = vsel %vm461, %v4668, %v4648
        %v4670 = vsel %vm463, %v4669, %v4652
        %v4671 = vsel %vm465, %v4670, %v4656
        %v4674 = vrot.slane %v3070, 4
        %v4675 = vrot.slane %v3077, 4
        %v4680 = vrot.slane %v3514, 4
        %v4681 = vrot.slane %v3521, 4
        %v4686 = vrot.slane %v3982, 4
        %v4687 = vrot.slane %v3989, 4
        %v4692 = vrot.slane %v4434, 4
        %v4693 = vrot.slane %v4441, 4
        %v4696 = vsel %vm2330, %v2832, %v4674
        %v4697 = vsel %vm2330, %v2839, %v4675
        %v4698 = vsel %vm2330, %v3300, %v4680
        %v4699 = vsel %vm2330, %v3307, %v4681
        %v4700 = vsel %vm2330, %v3752, %v4686
        %v4701 = vsel %vm2330, %v3759, %v4687
        %v4702 = vsel %vm2330, %v4196, %v4692
        %v4703 = vsel %vm2330, %v4203, %v4693
        %v4704 = vpack.c.bf16 %v4698, %v4696
        %v4705 = vpack.c.bf16 %v4699, %v4697
        %v4706 = vpack.c.bf16 %v4702, %v4700
        %v4707 = vpack.c.bf16 %v4703, %v4701
        %v4708 = vpack.c.bf16 %v4664, %v4664
        %v4709 = vpack.c.bf16 %v4671, %v4671
        %s4710 = scalar_lea.vmem %s1, 2
        %v4711 = vld [vmem:[%s4710] sm:$0x3]
        %s4712 = scalar_lea.vmem %s2, 4
        %v4713 = vld [vmem:[%s4712] sm:$0xf]
        %4715 = vset.pattern.permute.xlu0 0
        %4716 = vperm.xlu0 %4715, %v4713
        %v4717 = vpop.permute.xlu0 %4716
        %v4720 = vsel %vm2352, %v4711, 0
        %v4723 = vsel %vm2356, %v4708, 0
        %v4726 = vsel %vm2356, %v4709, 0
        %4728 = vmatprep.subr.bf16.mxu0 0
        %4729 = vmatpush1.bf16.msra.mxu0 0
        %4730 = vmatprep.subr.bf16.mxu0 0
        %4731 = vmatpush1.bf16.msra.mxu0 0
        %4732 = vmatprep.subr.bf16.mxu0 0
        %4733 = vmatpush1.bf16.msra.mxu0 0
        %4734 = vmatprep.subr.bf16.mxu0 0
        %4735 = vmatpush1.bf16.msra.mxu0 0
        %4736 = vmatprep.subr.bf16.mxu0 0
        %4737 = vmatpush1.bf16.msra.mxu0 0
        %4738 = vmatprep.subr.bf16.mxu0 %v4726
        %4739 = vmatpush1.bf16.msra.mxu0 %v4723
        %4740 = vmatprep.subr.bf16.mxu0 %v4707
        %4741 = vmatpush1.bf16.msra.mxu0 %v4706
        %4742 = vmatprep.subr.bf16.mxu0 %v4705
        %4743 = vmatpush1.bf16.msra.mxu0 %v4704
        %4744 = vmatprep.subr.bf16.mxu0 0
        %4745 = vmatpush2.bf16.msra.mxu0 0
        %4746 = vmatprep.subr.bf16.mxu0 0
        %4747 = vmatpush2.bf16.msra.mxu0 0
        %4748 = vmatprep.subr.bf16.mxu0 0
        %4749 = vmatpush2.bf16.msra.mxu0 0
        %4750 = vmatprep.subr.bf16.mxu0 0
        %4751 = vmatpush2.bf16.msra.mxu0 0
        %4752 = vmatprep.subr.bf16.mxu0 0
        %4753 = vmatpush2.bf16.msra.mxu0 0
        %4754 = vmatprep.subr.bf16.mxu0 0
        %4755 = vmatpush2.bf16.msra.mxu0 0
        %4756 = vmatprep.subr.bf16.mxu0 0
        %4757 = vmatpush2.bf16.msra.mxu0 0
        %4758 = vmatprep.subr.bf16.mxu0 0
        %4759 = vmatpush2.bf16.msra.mxu0 0
        %4760 = vmatprep.mubr.bf16.mxu0 0
        %4761 = vmatmul.mubr.bf16.gmra.mxu0 %v4720
        %v4762 = vpop.f32.mrf.mxu0
        %v4763 = vadd.f32 %v4717, %v4762
        %v4764 = vpop.f32.mrf.mxu0
        %v4765 = vadd.f32 %v4717, %v4764
        %v4766 = vpop.f32.mrf.mxu0
        %v4767 = vpop.f32.mrf.mxu0
        %4768 = vdwg.mxu0
        %v4769 = vmax.f32 %v4763, 0.0
        %v4770 = vmax.f32 %v4765, 0.0
        %4772 = vrot.lane.b32.xlu0 %v4769, 112
        %v4773 = vpop.permute.xlu0 %4772
        %4775 = vrot.lane.b32.xlu0 %v4769, 96
        %v4776 = vpop.permute.xlu0 %4775
        %4778 = vrot.lane.b32.xlu0 %v4769, 80
        %v4779 = vpop.permute.xlu0 %4778
        %4781 = vrot.lane.b32.xlu0 %v4769, 64
        %v4782 = vpop.permute.xlu0 %4781
        %4784 = vrot.lane.b32.xlu0 %v4769, 48
        %v4785 = vpop.permute.xlu0 %4784
        %4787 = vrot.lane.b32.xlu0 %v4769, 32
        %v4788 = vpop.permute.xlu0 %4787
        %4790 = vrot.lane.b32.xlu0 %v4769, 16
        %v4791 = vpop.permute.xlu0 %4790
        %4794 = vrot.lane.b32.xlu0 %v4770, 112
        %v4795 = vpop.permute.xlu0 %4794
        %4797 = vrot.lane.b32.xlu0 %v4770, 96
        %v4798 = vpop.permute.xlu0 %4797
        %4800 = vrot.lane.b32.xlu0 %v4770, 80
        %v4801 = vpop.permute.xlu0 %4800
        %4803 = vrot.lane.b32.xlu0 %v4770, 64
        %v4804 = vpop.permute.xlu0 %4803
        %4806 = vrot.lane.b32.xlu0 %v4770, 48
        %v4807 = vpop.permute.xlu0 %4806
        %4809 = vrot.lane.b32.xlu0 %v4770, 32
        %v4810 = vpop.permute.xlu0 %4809
        %4812 = vrot.lane.b32.xlu0 %v4770, 16
        %v4813 = vpop.permute.xlu0 %4812
        %v4815 = vcombine.low %v4769, %v4776
        %v4817 = vunpack.c.l.s4 1983009808
        %v4818 = vunpack.c.0.s8 %v4817
        %v4819 = vlaneseq
        %v4820 = vshrl.u32 %v4819, 7
        %v4821 = vsub.s32 %v4818, %v4820
        %v4822 = vrot.slane %v4815, %v4821
        %v4823 = vcombine.low %v4773, %v4779
        %v4825 = vunpack.c.l.s4 1983009808
        %v4826 = vunpack.c.0.s8 %v4825
        %v4827 = vlaneseq
        %v4828 = vshrl.u32 %v4827, 7
        %v4829 = vsub.s32 %v4826, %v4828
        %v4830 = vrot.slane %v4823, %v4829
        %v4831 = vcombine.low %v4782, %v4788
        %v4833 = vunpack.c.l.s4 1983009808
        %v4834 = vunpack.c.0.s8 %v4833
        %v4835 = vlaneseq
        %v4836 = vshrl.u32 %v4835, 7
        %v4837 = vsub.s32 %v4834, %v4836
        %v4838 = vrot.slane %v4831, %v4837
        %v4839 = vcombine.low %v4785, %v4791
        %v4841 = vunpack.c.l.s4 1983009808
        %v4842 = vunpack.c.0.s8 %v4841
        %v4843 = vlaneseq
        %v4844 = vshrl.u32 %v4843, 7
        %v4845 = vsub.s32 %v4842, %v4844
        %v4846 = vrot.slane %v4839, %v4845
        %v4847 = vcombine.low %v4822, %v4830
        %v4848 = vcombine.high %v4822, %v4830
        %v4850 = vunpack.c.l.s4 1934713408
        %v4851 = vunpack.c.0.s8 %v4850
        %v4852 = vlaneseq
        %v4853 = vshrl.u32 %v4852, 7
        %v4854 = vsub.s32 %v4851, %v4853
        %v4855 = vrot.slane %v4847, %v4854
        %v4857 = vunpack.c.l.s4 1934713408
        %v4858 = vunpack.c.0.s8 %v4857
        %v4859 = vlaneseq
        %v4860 = vshrl.u32 %v4859, 7
        %v4861 = vsub.s32 %v4858, %v4860
        %v4862 = vrot.slane %v4848, %v4861
        %v4863 = vcombine.low %v4838, %v4846
        %v4864 = vcombine.high %v4838, %v4846
        %v4866 = vunpack.c.l.s4 1934713408
        %v4867 = vunpack.c.0.s8 %v4866
        %v4868 = vlaneseq
        %v4869 = vshrl.u32 %v4868, 7
        %v4870 = vsub.s32 %v4867, %v4869
        %v4871 = vrot.slane %v4863, %v4870
        %v4873 = vunpack.c.l.s4 1934713408
        %v4874 = vunpack.c.0.s8 %v4873
        %v4875 = vlaneseq
        %v4876 = vshrl.u32 %v4875, 7
        %v4877 = vsub.s32 %v4874, %v4876
        %v4878 = vrot.slane %v4864, %v4877
        %v4879 = vcombine.low %v4855, %v4871
        %v4880 = vcombine.high %v4855, %v4871
        %v4881 = vcombine.low %v4862, %v4878
        %v4882 = vcombine.high %v4862, %v4878
        %v4883 = vcombine.low %v4770, %v4798
        %v4885 = vunpack.c.l.s4 1983009808
        %v4886 = vunpack.c.0.s8 %v4885
        %v4887 = vlaneseq
        %v4888 = vshrl.u32 %v4887, 7
        %v4889 = vsub.s32 %v4886, %v4888
        %v4890 = vrot.slane %v4883, %v4889
        %v4891 = vcombine.low %v4795, %v4801
        %v4893 = vunpack.c.l.s4 1983009808
        %v4894 = vunpack.c.0.s8 %v4893
        %v4895 = vlaneseq
        %v4896 = vshrl.u32 %v4895, 7
        %v4897 = vsub.s32 %v4894, %v4896
        %v4898 = vrot.slane %v4891, %v4897
        %v4899 = vcombine.low %v4804, %v4810
        %v4901 = vunpack.c.l.s4 1983009808
        %v4902 = vunpack.c.0.s8 %v4901
        %v4903 = vlaneseq
        %v4904 = vshrl.u32 %v4903, 7
        %v4905 = vsub.s32 %v4902, %v4904
        %v4906 = vrot.slane %v4899, %v4905
        %v4907 = vcombine.low %v4807, %v4813
        %v4909 = vunpack.c.l.s4 1983009808
        %v4910 = vunpack.c.0.s8 %v4909
        %v4911 = vlaneseq
        %v4912 = vshrl.u32 %v4911, 7
        %v4913 = vsub.s32 %v4910, %v4912
        %v4914 = vrot.slane %v4907, %v4913
        %v4915 = vcombine.low %v4890, %v4898
        %v4916 = vcombine.high %v4890, %v4898
        %v4918 = vunpack.c.l.s4 1934713408
        %v4919 = vunpack.c.0.s8 %v4918
        %v4920 = vlaneseq
        %v4921 = vshrl.u32 %v4920, 7
        %v4922 = vsub.s32 %v4919, %v4921
        %v4923 = vrot.slane %v4915, %v4922
        %v4925 = vunpack.c.l.s4 1934713408
        %v4926 = vunpack.c.0.s8 %v4925
        %v4927 = vlaneseq
        %v4928 = vshrl.u32 %v4927, 7
        %v4929 = vsub.s32 %v4926, %v4928
        %v4930 = vrot.slane %v4916, %v4929
        %v4931 = vcombine.low %v4906, %v4914
        %v4932 = vcombine.high %v4906, %v4914
        %v4934 = vunpack.c.l.s4 1934713408
        %v4935 = vunpack.c.0.s8 %v4934
        %v4936 = vlaneseq
        %v4937 = vshrl.u32 %v4936, 7
        %v4938 = vsub.s32 %v4935, %v4937
        %v4939 = vrot.slane %v4931, %v4938
        %v4941 = vunpack.c.l.s4 1934713408
        %v4942 = vunpack.c.0.s8 %v4941
        %v4943 = vlaneseq
        %v4944 = vshrl.u32 %v4943, 7
        %v4945 = vsub.s32 %v4942, %v4944
        %v4946 = vrot.slane %v4932, %v4945
        %v4947 = vcombine.low %v4923, %v4939
        %v4948 = vcombine.high %v4923, %v4939
        %v4949 = vcombine.low %v4930, %v4946
        %v4950 = vcombine.high %v4930, %v4946
        %4959 = vrot.lane.b32.xlu0 %v4879, 1
        %v4960 = vpop.permute.xlu0 %4959
        %4961 = vrot.lane.b32.xlu0 %v4947, 1
        %v4962 = vpop.permute.xlu0 %4961
        %4963 = vrot.lane.b32.xlu0 %v4880, 1
        %v4964 = vpop.permute.xlu0 %4963
        %4965 = vrot.lane.b32.xlu0 %v4948, 1
        %v4966 = vpop.permute.xlu0 %4965
        %4967 = vrot.lane.b32.xlu0 %v4881, 1
        %v4968 = vpop.permute.xlu0 %4967
        %4969 = vrot.lane.b32.xlu0 %v4949, 1
        %v4970 = vpop.permute.xlu0 %4969
        %4971 = vrot.lane.b32.xlu0 %v4882, 1
        %v4972 = vpop.permute.xlu0 %4971
        %4973 = vrot.lane.b32.xlu0 %v4950, 1
        %v4974 = vpop.permute.xlu0 %4973
        %4983 = vst.msk [vmem:[#allocation2 + $0x1] sm:$0xff] %vm244, %v4960
        %4984 = vst.msk [vmem:[#allocation2 + $0x9] sm:$0xff] %vm244, %v4962
        %4985 = vst.msk [vmem:[#allocation2 + $0x19] sm:$0xff] %vm244, %v4964
        %4986 = vst.msk [vmem:[#allocation2 + $0x21] sm:$0xff] %vm244, %v4966
        %4987 = vst.msk [vmem:[#allocation2 + $0x31] sm:$0xff] %vm244, %v4968
        %4988 = vst.msk [vmem:[#allocation2 + $0x39] sm:$0xff] %vm244, %v4970
        %4989 = vst.msk [vmem:[#allocation2 + $0x49] sm:$0xff] %vm244, %v4972
        %4990 = vst.msk [vmem:[#allocation2 + $0x51] sm:$0xff] %vm244, %v4974
        %v4991 = vld [vmem:[#allocation2] sm:$0xff]
        %v4992 = vld [vmem:[#allocation2 + $0x8] sm:$0xff]
        %v4993 = vld [vmem:[#allocation2 + $0x18] sm:$0xff]
        %v4994 = vld [vmem:[#allocation2 + $0x20] sm:$0xff]
        %v4995 = vld [vmem:[#allocation2 + $0x30] sm:$0xff]
        %v4996 = vld [vmem:[#allocation2 + $0x38] sm:$0xff]
        %v4997 = vld [vmem:[#allocation2 + $0x48] sm:$0xff]
        %v4998 = vld [vmem:[#allocation2 + $0x50] sm:$0xff]
        %v4999 = vcombine.low %v4991, %v4995
        %v5000 = vcombine.high %v4991, %v4995
        %v5002 = vunpack.c.l.s4 1983009808
        %v5003 = vunpack.c.0.s8 %v5002
        %v5004 = vlaneseq
        %v5005 = vshrl.u32 %v5004, 7
        %v5006 = vsub.s32 %v5003, %v5005
        %v5007 = vrot.slane %v4999, %v5006
        %v5009 = vunpack.c.l.s4 1983009808
        %v5010 = vunpack.c.0.s8 %v5009
        %v5011 = vlaneseq
        %v5012 = vshrl.u32 %v5011, 7
        %v5013 = vsub.s32 %v5010, %v5012
        %v5014 = vrot.slane %v5000, %v5013
        %v5015 = vcombine.low %v4993, %v4997
        %v5016 = vcombine.high %v4993, %v4997
        %v5018 = vunpack.c.l.s4 1983009808
        %v5019 = vunpack.c.0.s8 %v5018
        %v5020 = vlaneseq
        %v5021 = vshrl.u32 %v5020, 7
        %v5022 = vsub.s32 %v5019, %v5021
        %v5023 = vrot.slane %v5015, %v5022
        %v5025 = vunpack.c.l.s4 1983009808
        %v5026 = vunpack.c.0.s8 %v5025
        %v5027 = vlaneseq
        %v5028 = vshrl.u32 %v5027, 7
        %v5029 = vsub.s32 %v5026, %v5028
        %v5030 = vrot.slane %v5016, %v5029
        %v5031 = vcombine.low %v5007, %v5023
        %v5032 = vcombine.high %v5007, %v5023
        %v5034 = vunpack.c.l.s4 1934713408
        %v5035 = vunpack.c.0.s8 %v5034
        %v5036 = vlaneseq
        %v5037 = vshrl.u32 %v5036, 7
        %v5038 = vsub.s32 %v5035, %v5037
        %v5039 = vrot.slane %v5031, %v5038
        %v5041 = vunpack.c.l.s4 1934713408
        %v5042 = vunpack.c.0.s8 %v5041
        %v5043 = vlaneseq
        %v5044 = vshrl.u32 %v5043, 7
        %v5045 = vsub.s32 %v5042, %v5044
        %v5046 = vrot.slane %v5032, %v5045
        %v5047 = vcombine.low %v5014, %v5030
        %v5048 = vcombine.high %v5014, %v5030
        %v5050 = vunpack.c.l.s4 1934713408
        %v5051 = vunpack.c.0.s8 %v5050
        %v5052 = vlaneseq
        %v5053 = vshrl.u32 %v5052, 7
        %v5054 = vsub.s32 %v5051, %v5053
        %v5055 = vrot.slane %v5047, %v5054
        %v5057 = vunpack.c.l.s4 1934713408
        %v5058 = vunpack.c.0.s8 %v5057
        %v5059 = vlaneseq
        %v5060 = vshrl.u32 %v5059, 7
        %v5061 = vsub.s32 %v5058, %v5060
        %v5062 = vrot.slane %v5048, %v5061
        %v5063 = vcombine.high %v5039, 0.0
        %v5064 = vcombine.high %v5046, 0.0
        %v5065 = vcombine.high %v5055, 0.0
        %v5066 = vcombine.high %v5062, 0.0
        %v5067 = vcombine.low %v4992, %v4996
        %v5068 = vcombine.high %v4992, %v4996
        %v5070 = vunpack.c.l.s4 1983009808
        %v5071 = vunpack.c.0.s8 %v5070
        %v5072 = vlaneseq
        %v5073 = vshrl.u32 %v5072, 7
        %v5074 = vsub.s32 %v5071, %v5073
        %v5075 = vrot.slane %v5067, %v5074
        %v5077 = vunpack.c.l.s4 1983009808
        %v5078 = vunpack.c.0.s8 %v5077
        %v5079 = vlaneseq
        %v5080 = vshrl.u32 %v5079, 7
        %v5081 = vsub.s32 %v5078, %v5080
        %v5082 = vrot.slane %v5068, %v5081
        %v5083 = vcombine.low %v4994, %v4998
        %v5084 = vcombine.high %v4994, %v4998
        %v5086 = vunpack.c.l.s4 1983009808
        %v5087 = vunpack.c.0.s8 %v5086
        %v5088 = vlaneseq
        %v5089 = vshrl.u32 %v5088, 7
        %v5090 = vsub.s32 %v5087, %v5089
        %v5091 = vrot.slane %v5083, %v5090
        %v5093 = vunpack.c.l.s4 1983009808
        %v5094 = vunpack.c.0.s8 %v5093
        %v5095 = vlaneseq
        %v5096 = vshrl.u32 %v5095, 7
        %v5097 = vsub.s32 %v5094, %v5096
        %v5098 = vrot.slane %v5084, %v5097
        %v5099 = vcombine.low %v5075, %v5091
        %v5100 = vcombine.high %v5075, %v5091
        %v5102 = vunpack.c.l.s4 1934713408
        %v5103 = vunpack.c.0.s8 %v5102
        %v5104 = vlaneseq
        %v5105 = vshrl.u32 %v5104, 7
        %v5106 = vsub.s32 %v5103, %v5105
        %v5107 = vrot.slane %v5099, %v5106
        %v5109 = vunpack.c.l.s4 1934713408
        %v5110 = vunpack.c.0.s8 %v5109
        %v5111 = vlaneseq
        %v5112 = vshrl.u32 %v5111, 7
        %v5113 = vsub.s32 %v5110, %v5112
        %v5114 = vrot.slane %v5100, %v5113
        %v5115 = vcombine.low %v5082, %v5098
        %v5116 = vcombine.high %v5082, %v5098
        %v5118 = vunpack.c.l.s4 1934713408
        %v5119 = vunpack.c.0.s8 %v5118
        %v5120 = vlaneseq
        %v5121 = vshrl.u32 %v5120, 7
        %v5122 = vsub.s32 %v5119, %v5121
        %v5123 = vrot.slane %v5115, %v5122
        %v5125 = vunpack.c.l.s4 1934713408
        %v5126 = vunpack.c.0.s8 %v5125
        %v5127 = vlaneseq
        %v5128 = vshrl.u32 %v5127, 7
        %v5129 = vsub.s32 %v5126, %v5128
        %v5130 = vrot.slane %v5116, %v5129
        %v5131 = vcombine.high %v5107, 0.0
        %v5132 = vcombine.high %v5114, 0.0
        %v5133 = vcombine.high %v5123, 0.0
        %v5134 = vcombine.high %v5130, 0.0
        %5136 = vrot.lane.b32.xlu0 %v5063, 16
        %v5137 = vpop.permute.xlu0 %5136
        %5140 = vrot.lane.b32.xlu0 %v5046, 32
        %v5141 = vpop.permute.xlu0 %5140
        %5144 = vrot.lane.b32.xlu0 %v5064, 48
        %v5145 = vpop.permute.xlu0 %5144
        %5148 = vrot.lane.b32.xlu0 %v5055, 64
        %v5149 = vpop.permute.xlu0 %5148
        %5152 = vrot.lane.b32.xlu0 %v5065, 80
        %v5153 = vpop.permute.xlu0 %5152
        %5156 = vrot.lane.b32.xlu0 %v5062, 96
        %v5157 = vpop.permute.xlu0 %5156
        %5160 = vrot.lane.b32.xlu0 %v5066, 112
        %v5161 = vpop.permute.xlu0 %5160
        %5164 = vrot.lane.b32.xlu0 %v5131, 16
        %v5165 = vpop.permute.xlu0 %5164
        %5168 = vrot.lane.b32.xlu0 %v5114, 32
        %v5169 = vpop.permute.xlu0 %5168
        %5172 = vrot.lane.b32.xlu0 %v5132, 48
        %v5173 = vpop.permute.xlu0 %5172
        %5176 = vrot.lane.b32.xlu0 %v5123, 64
        %v5177 = vpop.permute.xlu0 %5176
        %5180 = vrot.lane.b32.xlu0 %v5133, 80
        %v5181 = vpop.permute.xlu0 %5180
        %5184 = vrot.lane.b32.xlu0 %v5130, 96
        %v5185 = vpop.permute.xlu0 %5184
        %5188 = vrot.lane.b32.xlu0 %v5134, 112
        %v5189 = vpop.permute.xlu0 %5188
        %v5191 = vsel %vm453, %v5039, %v5137
        %v5192 = vsel %vm455, %v5191, %v5141
        %v5193 = vsel %vm457, %v5192, %v5145
        %v5194 = vsel %vm459, %v5193, %v5149
        %v5195 = vsel %vm461, %v5194, %v5153
        %v5196 = vsel %vm463, %v5195, %v5157
        %v5197 = vsel %vm465, %v5196, %v5161
        %v5198 = vsel %vm453, %v5107, %v5165
        %v5199 = vsel %vm455, %v5198, %v5169
        %v5200 = vsel %vm457, %v5199, %v5173
        %v5201 = vsel %vm459, %v5200, %v5177
        %v5202 = vsel %vm461, %v5201, %v5181
        %v5203 = vsel %vm463, %v5202, %v5185
        %v5204 = vsel %vm465, %v5203, %v5189
        %5213 = vrot.lane.b32.xlu0 %v4991, 127
        %v5214 = vpop.permute.xlu0 %5213
        %5215 = vrot.lane.b32.xlu0 %v4992, 127
        %v5216 = vpop.permute.xlu0 %5215
        %5217 = vrot.lane.b32.xlu0 %v4993, 127
        %v5218 = vpop.permute.xlu0 %5217
        %5219 = vrot.lane.b32.xlu0 %v4994, 127
        %v5220 = vpop.permute.xlu0 %5219
        %5221 = vrot.lane.b32.xlu0 %v4995, 127
        %v5222 = vpop.permute.xlu0 %5221
        %5223 = vrot.lane.b32.xlu0 %v4996, 127
        %v5224 = vpop.permute.xlu0 %5223
        %5225 = vrot.lane.b32.xlu0 %v4997, 127
        %v5226 = vpop.permute.xlu0 %5225
        %5227 = vrot.lane.b32.xlu0 %v4998, 127
        %v5228 = vpop.permute.xlu0 %5227
        %v5237 = vcombine.low %v5214, %v5222
        %v5238 = vcombine.high %v5214, %v5222
        %v5240 = vunpack.c.l.s4 1983009808
        %v5241 = vunpack.c.0.s8 %v5240
        %v5242 = vlaneseq
        %v5243 = vshrl.u32 %v5242, 7
        %v5244 = vsub.s32 %v5241, %v5243
        %v5245 = vrot.slane %v5237, %v5244
        %v5247 = vunpack.c.l.s4 1983009808
        %v5248 = vunpack.c.0.s8 %v5247
        %v5249 = vlaneseq
        %v5250 = vshrl.u32 %v5249, 7
        %v5251 = vsub.s32 %v5248, %v5250
        %v5252 = vrot.slane %v5238, %v5251
        %v5253 = vcombine.low %v5218, %v5226
        %v5254 = vcombine.high %v5218, %v5226
        %v5256 = vunpack.c.l.s4 1983009808
        %v5257 = vunpack.c.0.s8 %v5256
        %v5258 = vlaneseq
        %v5259 = vshrl.u32 %v5258, 7
        %v5260 = vsub.s32 %v5257, %v5259
        %v5261 = vrot.slane %v5253, %v5260
        %v5263 = vunpack.c.l.s4 1983009808
        %v5264 = vunpack.c.0.s8 %v5263
        %v5265 = vlaneseq
        %v5266 = vshrl.u32 %v5265, 7
        %v5267 = vsub.s32 %v5264, %v5266
        %v5268 = vrot.slane %v5254, %v5267
        %v5269 = vcombine.low %v5245, %v5261
        %v5270 = vcombine.high %v5245, %v5261
        %v5272 = vunpack.c.l.s4 1934713408
        %v5273 = vunpack.c.0.s8 %v5272
        %v5274 = vlaneseq
        %v5275 = vshrl.u32 %v5274, 7
        %v5276 = vsub.s32 %v5273, %v5275
        %v5277 = vrot.slane %v5269, %v5276
        %v5279 = vunpack.c.l.s4 1934713408
        %v5280 = vunpack.c.0.s8 %v5279
        %v5281 = vlaneseq
        %v5282 = vshrl.u32 %v5281, 7
        %v5283 = vsub.s32 %v5280, %v5282
        %v5284 = vrot.slane %v5270, %v5283
        %v5285 = vcombine.low %v5252, %v5268
        %v5286 = vcombine.high %v5252, %v5268
        %v5288 = vunpack.c.l.s4 1934713408
        %v5289 = vunpack.c.0.s8 %v5288
        %v5290 = vlaneseq
        %v5291 = vshrl.u32 %v5290, 7
        %v5292 = vsub.s32 %v5289, %v5291
        %v5293 = vrot.slane %v5285, %v5292
        %v5295 = vunpack.c.l.s4 1934713408
        %v5296 = vunpack.c.0.s8 %v5295
        %v5297 = vlaneseq
        %v5298 = vshrl.u32 %v5297, 7
        %v5299 = vsub.s32 %v5296, %v5298
        %v5300 = vrot.slane %v5286, %v5299
        %v5301 = vcombine.high %v5277, 0.0
        %v5302 = vcombine.high %v5284, 0.0
        %v5303 = vcombine.high %v5293, 0.0
        %v5304 = vcombine.high %v5300, 0.0
        %v5305 = vcombine.low %v5216, %v5224
        %v5306 = vcombine.high %v5216, %v5224
        %v5308 = vunpack.c.l.s4 1983009808
        %v5309 = vunpack.c.0.s8 %v5308
        %v5310 = vlaneseq
        %v5311 = vshrl.u32 %v5310, 7
        %v5312 = vsub.s32 %v5309, %v5311
        %v5313 = vrot.slane %v5305, %v5312
        %v5315 = vunpack.c.l.s4 1983009808
        %v5316 = vunpack.c.0.s8 %v5315
        %v5317 = vlaneseq
        %v5318 = vshrl.u32 %v5317, 7
        %v5319 = vsub.s32 %v5316, %v5318
        %v5320 = vrot.slane %v5306, %v5319
        %v5321 = vcombine.low %v5220, %v5228
        %v5322 = vcombine.high %v5220, %v5228
        %v5324 = vunpack.c.l.s4 1983009808
        %v5325 = vunpack.c.0.s8 %v5324
        %v5326 = vlaneseq
        %v5327 = vshrl.u32 %v5326, 7
        %v5328 = vsub.s32 %v5325, %v5327
        %v5329 = vrot.slane %v5321, %v5328
        %v5331 = vunpack.c.l.s4 1983009808
        %v5332 = vunpack.c.0.s8 %v5331
        %v5333 = vlaneseq
        %v5334 = vshrl.u32 %v5333, 7
        %v5335 = vsub.s32 %v5332, %v5334
        %v5336 = vrot.slane %v5322, %v5335
        %v5337 = vcombine.low %v5313, %v5329
        %v5338 = vcombine.high %v5313, %v5329
        %v5340 = vunpack.c.l.s4 1934713408
        %v5341 = vunpack.c.0.s8 %v5340
        %v5342 = vlaneseq
        %v5343 = vshrl.u32 %v5342, 7
        %v5344 = vsub.s32 %v5341, %v5343
        %v5345 = vrot.slane %v5337, %v5344
        %v5347 = vunpack.c.l.s4 1934713408
        %v5348 = vunpack.c.0.s8 %v5347
        %v5349 = vlaneseq
        %v5350 = vshrl.u32 %v5349, 7
        %v5351 = vsub.s32 %v5348, %v5350
        %v5352 = vrot.slane %v5338, %v5351
        %v5353 = vcombine.low %v5320, %v5336
        %v5354 = vcombine.high %v5320, %v5336
        %v5356 = vunpack.c.l.s4 1934713408
        %v5357 = vunpack.c.0.s8 %v5356
        %v5358 = vlaneseq
        %v5359 = vshrl.u32 %v5358, 7
        %v5360 = vsub.s32 %v5357, %v5359
        %v5361 = vrot.slane %v5353, %v5360
        %v5363 = vunpack.c.l.s4 1934713408
        %v5364 = vunpack.c.0.s8 %v5363
        %v5365 = vlaneseq
        %v5366 = vshrl.u32 %v5365, 7
        %v5367 = vsub.s32 %v5364, %v5366
        %v5368 = vrot.slane %v5354, %v5367
        %v5369 = vcombine.high %v5345, 0.0
        %v5370 = vcombine.high %v5352, 0.0
        %v5371 = vcombine.high %v5361, 0.0
        %v5372 = vcombine.high %v5368, 0.0
        %5374 = vrot.lane.b32.xlu0 %v5301, 16
        %v5375 = vpop.permute.xlu0 %5374
        %5378 = vrot.lane.b32.xlu0 %v5284, 32
        %v5379 = vpop.permute.xlu0 %5378
        %5382 = vrot.lane.b32.xlu0 %v5302, 48
        %v5383 = vpop.permute.xlu0 %5382
        %5386 = vrot.lane.b32.xlu0 %v5293, 64
        %v5387 = vpop.permute.xlu0 %5386
        %5390 = vrot.lane.b32.xlu0 %v5303, 80
        %v5391 = vpop.permute.xlu0 %5390
        %5394 = vrot.lane.b32.xlu0 %v5300, 96
        %v5395 = vpop.permute.xlu0 %5394
        %5398 = vrot.lane.b32.xlu0 %v5304, 112
        %v5399 = vpop.permute.xlu0 %5398
        %5402 = vrot.lane.b32.xlu0 %v5369, 16
        %v5403 = vpop.permute.xlu0 %5402
        %5406 = vrot.lane.b32.xlu0 %v5352, 32
        %v5407 = vpop.permute.xlu0 %5406
        %5410 = vrot.lane.b32.xlu0 %v5370, 48
        %v5411 = vpop.permute.xlu0 %5410
        %5414 = vrot.lane.b32.xlu0 %v5361, 64
        %v5415 = vpop.permute.xlu0 %5414
        %5418 = vrot.lane.b32.xlu0 %v5371, 80
        %v5419 = vpop.permute.xlu0 %5418
        %5422 = vrot.lane.b32.xlu0 %v5368, 96
        %v5423 = vpop.permute.xlu0 %5422
        %5426 = vrot.lane.b32.xlu0 %v5372, 112
        %v5427 = vpop.permute.xlu0 %5426
        %v5429 = vsel %vm453, %v5277, %v5375
        %v5430 = vsel %vm455, %v5429, %v5379
        %v5431 = vsel %vm457, %v5430, %v5383
        %v5432 = vsel %vm459, %v5431, %v5387
        %v5433 = vsel %vm461, %v5432, %v5391
        %v5434 = vsel %vm463, %v5433, %v5395
        %v5435 = vsel %vm465, %v5434, %v5399
        %v5436 = vsel %vm453, %v5345, %v5403
        %v5437 = vsel %vm455, %v5436, %v5407
        %v5438 = vsel %vm457, %v5437, %v5411
        %v5439 = vsel %vm459, %v5438, %v5415
        %v5440 = vsel %vm461, %v5439, %v5419
        %v5441 = vsel %vm463, %v5440, %v5423
        %v5442 = vsel %vm465, %v5441, %v5427
        %5443 = vrot.lane.b32.xlu0 %v4991, 126
        %v5444 = vpop.permute.xlu0 %5443
        %5445 = vrot.lane.b32.xlu0 %v4992, 126
        %v5446 = vpop.permute.xlu0 %5445
        %5447 = vrot.lane.b32.xlu0 %v4993, 126
        %v5448 = vpop.permute.xlu0 %5447
        %5449 = vrot.lane.b32.xlu0 %v4994, 126
        %v5450 = vpop.permute.xlu0 %5449
        %5451 = vrot.lane.b32.xlu0 %v4995, 126
        %v5452 = vpop.permute.xlu0 %5451
        %5453 = vrot.lane.b32.xlu0 %v4996, 126
        %v5454 = vpop.permute.xlu0 %5453
        %5455 = vrot.lane.b32.xlu0 %v4997, 126
        %v5456 = vpop.permute.xlu0 %5455
        %5457 = vrot.lane.b32.xlu0 %v4998, 126
        %v5458 = vpop.permute.xlu0 %5457
        %v5467 = vcombine.low %v5444, %v5452
        %v5468 = vcombine.high %v5444, %v5452
        %v5470 = vunpack.c.l.s4 1983009808
        %v5471 = vunpack.c.0.s8 %v5470
        %v5472 = vlaneseq
        %v5473 = vshrl.u32 %v5472, 7
        %v5474 = vsub.s32 %v5471, %v5473
        %v5475 = vrot.slane %v5467, %v5474
        %v5477 = vunpack.c.l.s4 1983009808
        %v5478 = vunpack.c.0.s8 %v5477
        %v5479 = vlaneseq
        %v5480 = vshrl.u32 %v5479, 7
        %v5481 = vsub.s32 %v5478, %v5480
        %v5482 = vrot.slane %v5468, %v5481
        %v5483 = vcombine.low %v5448, %v5456
        %v5484 = vcombine.high %v5448, %v5456
        %v5486 = vunpack.c.l.s4 1983009808
        %v5487 = vunpack.c.0.s8 %v5486
        %v5488 = vlaneseq
        %v5489 = vshrl.u32 %v5488, 7
        %v5490 = vsub.s32 %v5487, %v5489
        %v5491 = vrot.slane %v5483, %v5490
        %v5493 = vunpack.c.l.s4 1983009808
        %v5494 = vunpack.c.0.s8 %v5493
        %v5495 = vlaneseq
        %v5496 = vshrl.u32 %v5495, 7
        %v5497 = vsub.s32 %v5494, %v5496
        %v5498 = vrot.slane %v5484, %v5497
        %v5499 = vcombine.low %v5475, %v5491
        %v5500 = vcombine.high %v5475, %v5491
        %v5502 = vunpack.c.l.s4 1934713408
        %v5503 = vunpack.c.0.s8 %v5502
        %v5504 = vlaneseq
        %v5505 = vshrl.u32 %v5504, 7
        %v5506 = vsub.s32 %v5503, %v5505
        %v5507 = vrot.slane %v5499, %v5506
        %v5509 = vunpack.c.l.s4 1934713408
        %v5510 = vunpack.c.0.s8 %v5509
        %v5511 = vlaneseq
        %v5512 = vshrl.u32 %v5511, 7
        %v5513 = vsub.s32 %v5510, %v5512
        %v5514 = vrot.slane %v5500, %v5513
        %v5515 = vcombine.low %v5482, %v5498
        %v5516 = vcombine.high %v5482, %v5498
        %v5518 = vunpack.c.l.s4 1934713408
        %v5519 = vunpack.c.0.s8 %v5518
        %v5520 = vlaneseq
        %v5521 = vshrl.u32 %v5520, 7
        %v5522 = vsub.s32 %v5519, %v5521
        %v5523 = vrot.slane %v5515, %v5522
        %v5525 = vunpack.c.l.s4 1934713408
        %v5526 = vunpack.c.0.s8 %v5525
        %v5527 = vlaneseq
        %v5528 = vshrl.u32 %v5527, 7
        %v5529 = vsub.s32 %v5526, %v5528
        %v5530 = vrot.slane %v5516, %v5529
        %v5531 = vcombine.high %v5507, 0.0
        %v5532 = vcombine.high %v5514, 0.0
        %v5533 = vcombine.high %v5523, 0.0
        %v5534 = vcombine.high %v5530, 0.0
        %v5535 = vcombine.low %v5446, %v5454
        %v5536 = vcombine.high %v5446, %v5454
        %v5538 = vunpack.c.l.s4 1983009808
        %v5539 = vunpack.c.0.s8 %v5538
        %v5540 = vlaneseq
        %v5541 = vshrl.u32 %v5540, 7
        %v5542 = vsub.s32 %v5539, %v5541
        %v5543 = vrot.slane %v5535, %v5542
        %v5545 = vunpack.c.l.s4 1983009808
        %v5546 = vunpack.c.0.s8 %v5545
        %v5547 = vlaneseq
        %v5548 = vshrl.u32 %v5547, 7
        %v5549 = vsub.s32 %v5546, %v5548
        %v5550 = vrot.slane %v5536, %v5549
        %v5551 = vcombine.low %v5450, %v5458
        %v5552 = vcombine.high %v5450, %v5458
        %v5554 = vunpack.c.l.s4 1983009808
        %v5555 = vunpack.c.0.s8 %v5554
        %v5556 = vlaneseq
        %v5557 = vshrl.u32 %v5556, 7
        %v5558 = vsub.s32 %v5555, %v5557
        %v5559 = vrot.slane %v5551, %v5558
        %v5561 = vunpack.c.l.s4 1983009808
        %v5562 = vunpack.c.0.s8 %v5561
        %v5563 = vlaneseq
        %v5564 = vshrl.u32 %v5563, 7
        %v5565 = vsub.s32 %v5562, %v5564
        %v5566 = vrot.slane %v5552, %v5565
        %v5567 = vcombine.low %v5543, %v5559
        %v5568 = vcombine.high %v5543, %v5559
        %v5570 = vunpack.c.l.s4 1934713408
        %v5571 = vunpack.c.0.s8 %v5570
        %v5572 = vlaneseq
        %v5573 = vshrl.u32 %v5572, 7
        %v5574 = vsub.s32 %v5571, %v5573
        %v5575 = vrot.slane %v5567, %v5574
        %v5577 = vunpack.c.l.s4 1934713408
        %v5578 = vunpack.c.0.s8 %v5577
        %v5579 = vlaneseq
        %v5580 = vshrl.u32 %v5579, 7
        %v5581 = vsub.s32 %v5578, %v5580
        %v5582 = vrot.slane %v5568, %v5581
        %v5583 = vcombine.low %v5550, %v5566
        %v5584 = vcombine.high %v5550, %v5566
        %v5586 = vunpack.c.l.s4 1934713408
        %v5587 = vunpack.c.0.s8 %v5586
        %v5588 = vlaneseq
        %v5589 = vshrl.u32 %v5588, 7
        %v5590 = vsub.s32 %v5587, %v5589
        %v5591 = vrot.slane %v5583, %v5590
        %v5593 = vunpack.c.l.s4 1934713408
        %v5594 = vunpack.c.0.s8 %v5593
        %v5595 = vlaneseq
        %v5596 = vshrl.u32 %v5595, 7
        %v5597 = vsub.s32 %v5594, %v5596
        %v5598 = vrot.slane %v5584, %v5597
        %v5599 = vcombine.high %v5575, 0.0
        %v5600 = vcombine.high %v5582, 0.0
        %v5601 = vcombine.high %v5591, 0.0
        %v5602 = vcombine.high %v5598, 0.0
        %5604 = vrot.lane.b32.xlu0 %v5531, 16
        %v5605 = vpop.permute.xlu0 %5604
        %5608 = vrot.lane.b32.xlu0 %v5514, 32
        %v5609 = vpop.permute.xlu0 %5608
        %5612 = vrot.lane.b32.xlu0 %v5532, 48
        %v5613 = vpop.permute.xlu0 %5612
        %5616 = vrot.lane.b32.xlu0 %v5523, 64
        %v5617 = vpop.permute.xlu0 %5616
        %5620 = vrot.lane.b32.xlu0 %v5533, 80
        %v5621 = vpop.permute.xlu0 %5620
        %5624 = vrot.lane.b32.xlu0 %v5530, 96
        %v5625 = vpop.permute.xlu0 %5624
        %5628 = vrot.lane.b32.xlu0 %v5534, 112
        %v5629 = vpop.permute.xlu0 %5628
        %5632 = vrot.lane.b32.xlu0 %v5599, 16
        %v5633 = vpop.permute.xlu0 %5632
        %5636 = vrot.lane.b32.xlu0 %v5582, 32
        %v5637 = vpop.permute.xlu0 %5636
        %5640 = vrot.lane.b32.xlu0 %v5600, 48
        %v5641 = vpop.permute.xlu0 %5640
        %5644 = vrot.lane.b32.xlu0 %v5591, 64
        %v5645 = vpop.permute.xlu0 %5644
        %5648 = vrot.lane.b32.xlu0 %v5601, 80
        %v5649 = vpop.permute.xlu0 %5648
        %5652 = vrot.lane.b32.xlu0 %v5598, 96
        %v5653 = vpop.permute.xlu0 %5652
        %5656 = vrot.lane.b32.xlu0 %v5602, 112
        %v5657 = vpop.permute.xlu0 %5656
        %v5659 = vsel %vm453, %v5507, %v5605
        %v5660 = vsel %vm455, %v5659, %v5609
        %v5661 = vsel %vm457, %v5660, %v5613
        %v5662 = vsel %vm459, %v5661, %v5617
        %v5663 = vsel %vm461, %v5662, %v5621
        %v5664 = vsel %vm463, %v5663, %v5625
        %v5665 = vsel %vm465, %v5664, %v5629
        %v5666 = vsel %vm453, %v5575, %v5633
        %v5667 = vsel %vm455, %v5666, %v5637
        %v5668 = vsel %vm457, %v5667, %v5641
        %v5669 = vsel %vm459, %v5668, %v5645
        %v5670 = vsel %vm461, %v5669, %v5649
        %v5671 = vsel %vm463, %v5670, %v5653
        %v5672 = vsel %vm465, %v5671, %v5657
        %v5673 = vld [vmem:[#allocation2 + $0x1] sm:$0xff]
        %v5674 = vld [vmem:[#allocation2 + $0x9] sm:$0xff]
        %v5675 = vld [vmem:[#allocation2 + $0x19] sm:$0xff]
        %v5676 = vld [vmem:[#allocation2 + $0x21] sm:$0xff]
        %v5677 = vld [vmem:[#allocation2 + $0x31] sm:$0xff]
        %v5678 = vld [vmem:[#allocation2 + $0x39] sm:$0xff]
        %v5679 = vld [vmem:[#allocation2 + $0x49] sm:$0xff]
        %v5680 = vld [vmem:[#allocation2 + $0x51] sm:$0xff]
        %v5681 = vcombine.low %v5673, %v5677
        %v5682 = vcombine.high %v5673, %v5677
        %v5684 = vunpack.c.l.s4 1983009808
        %v5685 = vunpack.c.0.s8 %v5684
        %v5686 = vlaneseq
        %v5687 = vshrl.u32 %v5686, 7
        %v5688 = vsub.s32 %v5685, %v5687
        %v5689 = vrot.slane %v5681, %v5688
        %v5691 = vunpack.c.l.s4 1983009808
        %v5692 = vunpack.c.0.s8 %v5691
        %v5693 = vlaneseq
        %v5694 = vshrl.u32 %v5693, 7
        %v5695 = vsub.s32 %v5692, %v5694
        %v5696 = vrot.slane %v5682, %v5695
        %v5697 = vcombine.low %v5675, %v5679
        %v5698 = vcombine.high %v5675, %v5679
        %v5700 = vunpack.c.l.s4 1983009808
        %v5701 = vunpack.c.0.s8 %v5700
        %v5702 = vlaneseq
        %v5703 = vshrl.u32 %v5702, 7
        %v5704 = vsub.s32 %v5701, %v5703
        %v5705 = vrot.slane %v5697, %v5704
        %v5707 = vunpack.c.l.s4 1983009808
        %v5708 = vunpack.c.0.s8 %v5707
        %v5709 = vlaneseq
        %v5710 = vshrl.u32 %v5709, 7
        %v5711 = vsub.s32 %v5708, %v5710
        %v5712 = vrot.slane %v5698, %v5711
        %v5713 = vcombine.low %v5689, %v5705
        %v5714 = vcombine.high %v5689, %v5705
        %v5716 = vunpack.c.l.s4 1934713408
        %v5717 = vunpack.c.0.s8 %v5716
        %v5718 = vlaneseq
        %v5719 = vshrl.u32 %v5718, 7
        %v5720 = vsub.s32 %v5717, %v5719
        %v5721 = vrot.slane %v5713, %v5720
        %v5723 = vunpack.c.l.s4 1934713408
        %v5724 = vunpack.c.0.s8 %v5723
        %v5725 = vlaneseq
        %v5726 = vshrl.u32 %v5725, 7
        %v5727 = vsub.s32 %v5724, %v5726
        %v5728 = vrot.slane %v5714, %v5727
        %v5729 = vcombine.low %v5696, %v5712
        %v5730 = vcombine.high %v5696, %v5712
        %v5732 = vunpack.c.l.s4 1934713408
        %v5733 = vunpack.c.0.s8 %v5732
        %v5734 = vlaneseq
        %v5735 = vshrl.u32 %v5734, 7
        %v5736 = vsub.s32 %v5733, %v5735
        %v5737 = vrot.slane %v5729, %v5736
        %v5739 = vunpack.c.l.s4 1934713408
        %v5740 = vunpack.c.0.s8 %v5739
        %v5741 = vlaneseq
        %v5742 = vshrl.u32 %v5741, 7
        %v5743 = vsub.s32 %v5740, %v5742
        %v5744 = vrot.slane %v5730, %v5743
        %v5745 = vcombine.high %v5721, 0.0
        %v5746 = vcombine.high %v5728, 0.0
        %v5747 = vcombine.high %v5737, 0.0
        %v5748 = vcombine.high %v5744, 0.0
        %v5749 = vcombine.low %v5674, %v5678
        %v5750 = vcombine.high %v5674, %v5678
        %v5752 = vunpack.c.l.s4 1983009808
        %v5753 = vunpack.c.0.s8 %v5752
        %v5754 = vlaneseq
        %v5755 = vshrl.u32 %v5754, 7
        %v5756 = vsub.s32 %v5753, %v5755
        %v5757 = vrot.slane %v5749, %v5756
        %v5759 = vunpack.c.l.s4 1983009808
        %v5760 = vunpack.c.0.s8 %v5759
        %v5761 = vlaneseq
        %v5762 = vshrl.u32 %v5761, 7
        %v5763 = vsub.s32 %v5760, %v5762
        %v5764 = vrot.slane %v5750, %v5763
        %v5765 = vcombine.low %v5676, %v5680
        %v5766 = vcombine.high %v5676, %v5680
        %v5768 = vunpack.c.l.s4 1983009808
        %v5769 = vunpack.c.0.s8 %v5768
        %v5770 = vlaneseq
        %v5771 = vshrl.u32 %v5770, 7
        %v5772 = vsub.s32 %v5769, %v5771
        %v5773 = vrot.slane %v5765, %v5772
        %v5775 = vunpack.c.l.s4 1983009808
        %v5776 = vunpack.c.0.s8 %v5775
        %v5777 = vlaneseq
        %v5778 = vshrl.u32 %v5777, 7
        %v5779 = vsub.s32 %v5776, %v5778
        %v5780 = vrot.slane %v5766, %v5779
        %v5781 = vcombine.low %v5757, %v5773
        %v5782 = vcombine.high %v5757, %v5773
        %v5784 = vunpack.c.l.s4 1934713408
        %v5785 = vunpack.c.0.s8 %v5784
        %v5786 = vlaneseq
        %v5787 = vshrl.u32 %v5786, 7
        %v5788 = vsub.s32 %v5785, %v5787
        %v5789 = vrot.slane %v5781, %v5788
        %v5791 = vunpack.c.l.s4 1934713408
        %v5792 = vunpack.c.0.s8 %v5791
        %v5793 = vlaneseq
        %v5794 = vshrl.u32 %v5793, 7
        %v5795 = vsub.s32 %v5792, %v5794
        %v5796 = vrot.slane %v5782, %v5795
        %v5797 = vcombine.low %v5764, %v5780
        %v5798 = vcombine.high %v5764, %v5780
        %v5800 = vunpack.c.l.s4 1934713408
        %v5801 = vunpack.c.0.s8 %v5800
        %v5802 = vlaneseq
        %v5803 = vshrl.u32 %v5802, 7
        %v5804 = vsub.s32 %v5801, %v5803
        %v5805 = vrot.slane %v5797, %v5804
        %v5807 = vunpack.c.l.s4 1934713408
        %v5808 = vunpack.c.0.s8 %v5807
        %v5809 = vlaneseq
        %v5810 = vshrl.u32 %v5809, 7
        %v5811 = vsub.s32 %v5808, %v5810
        %v5812 = vrot.slane %v5798, %v5811
        %v5813 = vcombine.high %v5789, 0.0
        %v5814 = vcombine.high %v5796, 0.0
        %v5815 = vcombine.high %v5805, 0.0
        %v5816 = vcombine.high %v5812, 0.0
        %5818 = vrot.lane.b32.xlu0 %v5745, 16
        %v5819 = vpop.permute.xlu0 %5818
        %5822 = vrot.lane.b32.xlu0 %v5728, 32
        %v5823 = vpop.permute.xlu0 %5822
        %5826 = vrot.lane.b32.xlu0 %v5746, 48
        %v5827 = vpop.permute.xlu0 %5826
        %5830 = vrot.lane.b32.xlu0 %v5737, 64
        %v5831 = vpop.permute.xlu0 %5830
        %5834 = vrot.lane.b32.xlu0 %v5747, 80
        %v5835 = vpop.permute.xlu0 %5834
        %5838 = vrot.lane.b32.xlu0 %v5744, 96
        %v5839 = vpop.permute.xlu0 %5838
        %5842 = vrot.lane.b32.xlu0 %v5748, 112
        %v5843 = vpop.permute.xlu0 %5842
        %5846 = vrot.lane.b32.xlu0 %v5813, 16
        %v5847 = vpop.permute.xlu0 %5846
        %5850 = vrot.lane.b32.xlu0 %v5796, 32
        %v5851 = vpop.permute.xlu0 %5850
        %5854 = vrot.lane.b32.xlu0 %v5814, 48
        %v5855 = vpop.permute.xlu0 %5854
        %5858 = vrot.lane.b32.xlu0 %v5805, 64
        %v5859 = vpop.permute.xlu0 %5858
        %5862 = vrot.lane.b32.xlu0 %v5815, 80
        %v5863 = vpop.permute.xlu0 %5862
        %5866 = vrot.lane.b32.xlu0 %v5812, 96
        %v5867 = vpop.permute.xlu0 %5866
        %5870 = vrot.lane.b32.xlu0 %v5816, 112
        %v5871 = vpop.permute.xlu0 %5870
        %v5873 = vsel %vm453, %v5721, %v5819
        %v5874 = vsel %vm455, %v5873, %v5823
        %v5875 = vsel %vm457, %v5874, %v5827
        %v5876 = vsel %vm459, %v5875, %v5831
        %v5877 = vsel %vm461, %v5876, %v5835
        %v5878 = vsel %vm463, %v5877, %v5839
        %v5879 = vsel %vm465, %v5878, %v5843
        %v5880 = vsel %vm453, %v5789, %v5847
        %v5881 = vsel %vm455, %v5880, %v5851
        %v5882 = vsel %vm457, %v5881, %v5855
        %v5883 = vsel %vm459, %v5882, %v5859
        %v5884 = vsel %vm461, %v5883, %v5863
        %v5885 = vsel %vm463, %v5884, %v5867
        %v5886 = vsel %vm465, %v5885, %v5871
        %5895 = vrot.lane.b32.xlu0 %v5673, 127
        %v5896 = vpop.permute.xlu0 %5895
        %5897 = vrot.lane.b32.xlu0 %v5674, 127
        %v5898 = vpop.permute.xlu0 %5897
        %5899 = vrot.lane.b32.xlu0 %v5675, 127
        %v5900 = vpop.permute.xlu0 %5899
        %5901 = vrot.lane.b32.xlu0 %v5676, 127
        %v5902 = vpop.permute.xlu0 %5901
        %5903 = vrot.lane.b32.xlu0 %v5677, 127
        %v5904 = vpop.permute.xlu0 %5903
        %5905 = vrot.lane.b32.xlu0 %v5678, 127
        %v5906 = vpop.permute.xlu0 %5905
        %5907 = vrot.lane.b32.xlu0 %v5679, 127
        %v5908 = vpop.permute.xlu0 %5907
        %5909 = vrot.lane.b32.xlu0 %v5680, 127
        %v5910 = vpop.permute.xlu0 %5909
        %v5919 = vcombine.low %v5896, %v5904
        %v5920 = vcombine.high %v5896, %v5904
        %v5922 = vunpack.c.l.s4 1983009808
        %v5923 = vunpack.c.0.s8 %v5922
        %v5924 = vlaneseq
        %v5925 = vshrl.u32 %v5924, 7
        %v5926 = vsub.s32 %v5923, %v5925
        %v5927 = vrot.slane %v5919, %v5926
        %v5929 = vunpack.c.l.s4 1983009808
        %v5930 = vunpack.c.0.s8 %v5929
        %v5931 = vlaneseq
        %v5932 = vshrl.u32 %v5931, 7
        %v5933 = vsub.s32 %v5930, %v5932
        %v5934 = vrot.slane %v5920, %v5933
        %v5935 = vcombine.low %v5900, %v5908
        %v5936 = vcombine.high %v5900, %v5908
        %v5938 = vunpack.c.l.s4 1983009808
        %v5939 = vunpack.c.0.s8 %v5938
        %v5940 = vlaneseq
        %v5941 = vshrl.u32 %v5940, 7
        %v5942 = vsub.s32 %v5939, %v5941
        %v5943 = vrot.slane %v5935, %v5942
        %v5945 = vunpack.c.l.s4 1983009808
        %v5946 = vunpack.c.0.s8 %v5945
        %v5947 = vlaneseq
        %v5948 = vshrl.u32 %v5947, 7
        %v5949 = vsub.s32 %v5946, %v5948
        %v5950 = vrot.slane %v5936, %v5949
        %v5951 = vcombine.low %v5927, %v5943
        %v5952 = vcombine.high %v5927, %v5943
        %v5954 = vunpack.c.l.s4 1934713408
        %v5955 = vunpack.c.0.s8 %v5954
        %v5956 = vlaneseq
        %v5957 = vshrl.u32 %v5956, 7
        %v5958 = vsub.s32 %v5955, %v5957
        %v5959 = vrot.slane %v5951, %v5958
        %v5961 = vunpack.c.l.s4 1934713408
        %v5962 = vunpack.c.0.s8 %v5961
        %v5963 = vlaneseq
        %v5964 = vshrl.u32 %v5963, 7
        %v5965 = vsub.s32 %v5962, %v5964
        %v5966 = vrot.slane %v5952, %v5965
        %v5967 = vcombine.low %v5934, %v5950
        %v5968 = vcombine.high %v5934, %v5950
        %v5970 = vunpack.c.l.s4 1934713408
        %v5971 = vunpack.c.0.s8 %v5970
        %v5972 = vlaneseq
        %v5973 = vshrl.u32 %v5972, 7
        %v5974 = vsub.s32 %v5971, %v5973
        %v5975 = vrot.slane %v5967, %v5974
        %v5977 = vunpack.c.l.s4 1934713408
        %v5978 = vunpack.c.0.s8 %v5977
        %v5979 = vlaneseq
        %v5980 = vshrl.u32 %v5979, 7
        %v5981 = vsub.s32 %v5978, %v5980
        %v5982 = vrot.slane %v5968, %v5981
        %v5983 = vcombine.high %v5959, 0.0
        %v5984 = vcombine.high %v5966, 0.0
        %v5985 = vcombine.high %v5975, 0.0
        %v5986 = vcombine.high %v5982, 0.0
        %v5987 = vcombine.low %v5898, %v5906
        %v5988 = vcombine.high %v5898, %v5906
        %v5990 = vunpack.c.l.s4 1983009808
        %v5991 = vunpack.c.0.s8 %v5990
        %v5992 = vlaneseq
        %v5993 = vshrl.u32 %v5992, 7
        %v5994 = vsub.s32 %v5991, %v5993
        %v5995 = vrot.slane %v5987, %v5994
        %v5997 = vunpack.c.l.s4 1983009808
        %v5998 = vunpack.c.0.s8 %v5997
        %v5999 = vlaneseq
        %v6000 = vshrl.u32 %v5999, 7
        %v6001 = vsub.s32 %v5998, %v6000
        %v6002 = vrot.slane %v5988, %v6001
        %v6003 = vcombine.low %v5902, %v5910
        %v6004 = vcombine.high %v5902, %v5910
        %v6006 = vunpack.c.l.s4 1983009808
        %v6007 = vunpack.c.0.s8 %v6006
        %v6008 = vlaneseq
        %v6009 = vshrl.u32 %v6008, 7
        %v6010 = vsub.s32 %v6007, %v6009
        %v6011 = vrot.slane %v6003, %v6010
        %v6013 = vunpack.c.l.s4 1983009808
        %v6014 = vunpack.c.0.s8 %v6013
        %v6015 = vlaneseq
        %v6016 = vshrl.u32 %v6015, 7
        %v6017 = vsub.s32 %v6014, %v6016
        %v6018 = vrot.slane %v6004, %v6017
        %v6019 = vcombine.low %v5995, %v6011
        %v6020 = vcombine.high %v5995, %v6011
        %v6022 = vunpack.c.l.s4 1934713408
        %v6023 = vunpack.c.0.s8 %v6022
        %v6024 = vlaneseq
        %v6025 = vshrl.u32 %v6024, 7
        %v6026 = vsub.s32 %v6023, %v6025
        %v6027 = vrot.slane %v6019, %v6026
        %v6029 = vunpack.c.l.s4 1934713408
        %v6030 = vunpack.c.0.s8 %v6029
        %v6031 = vlaneseq
        %v6032 = vshrl.u32 %v6031, 7
        %v6033 = vsub.s32 %v6030, %v6032
        %v6034 = vrot.slane %v6020, %v6033
        %v6035 = vcombine.low %v6002, %v6018
        %v6036 = vcombine.high %v6002, %v6018
        %v6038 = vunpack.c.l.s4 1934713408
        %v6039 = vunpack.c.0.s8 %v6038
        %v6040 = vlaneseq
        %v6041 = vshrl.u32 %v6040, 7
        %v6042 = vsub.s32 %v6039, %v6041
        %v6043 = vrot.slane %v6035, %v6042
        %v6045 = vunpack.c.l.s4 1934713408
        %v6046 = vunpack.c.0.s8 %v6045
        %v6047 = vlaneseq
        %v6048 = vshrl.u32 %v6047, 7
        %v6049 = vsub.s32 %v6046, %v6048
        %v6050 = vrot.slane %v6036, %v6049
        %v6051 = vcombine.high %v6027, 0.0
        %v6052 = vcombine.high %v6034, 0.0
        %v6053 = vcombine.high %v6043, 0.0
        %v6054 = vcombine.high %v6050, 0.0
        %6056 = vrot.lane.b32.xlu0 %v5983, 16
        %v6057 = vpop.permute.xlu0 %6056
        %6060 = vrot.lane.b32.xlu0 %v5966, 32
        %v6061 = vpop.permute.xlu0 %6060
        %6064 = vrot.lane.b32.xlu0 %v5984, 48
        %v6065 = vpop.permute.xlu0 %6064
        %6068 = vrot.lane.b32.xlu0 %v5975, 64
        %v6069 = vpop.permute.xlu0 %6068
        %6072 = vrot.lane.b32.xlu0 %v5985, 80
        %v6073 = vpop.permute.xlu0 %6072
        %6076 = vrot.lane.b32.xlu0 %v5982, 96
        %v6077 = vpop.permute.xlu0 %6076
        %6080 = vrot.lane.b32.xlu0 %v5986, 112
        %v6081 = vpop.permute.xlu0 %6080
        %6084 = vrot.lane.b32.xlu0 %v6051, 16
        %v6085 = vpop.permute.xlu0 %6084
        %6088 = vrot.lane.b32.xlu0 %v6034, 32
        %v6089 = vpop.permute.xlu0 %6088
        %6092 = vrot.lane.b32.xlu0 %v6052, 48
        %v6093 = vpop.permute.xlu0 %6092
        %6096 = vrot.lane.b32.xlu0 %v6043, 64
        %v6097 = vpop.permute.xlu0 %6096
        %6100 = vrot.lane.b32.xlu0 %v6053, 80
        %v6101 = vpop.permute.xlu0 %6100
        %6104 = vrot.lane.b32.xlu0 %v6050, 96
        %v6105 = vpop.permute.xlu0 %6104
        %6108 = vrot.lane.b32.xlu0 %v6054, 112
        %v6109 = vpop.permute.xlu0 %6108
        %v6111 = vsel %vm453, %v5959, %v6057
        %v6112 = vsel %vm455, %v6111, %v6061
        %v6113 = vsel %vm457, %v6112, %v6065
        %v6114 = vsel %vm459, %v6113, %v6069
        %v6115 = vsel %vm461, %v6114, %v6073
        %v6116 = vsel %vm463, %v6115, %v6077
        %v6117 = vsel %vm465, %v6116, %v6081
        %v6118 = vsel %vm453, %v6027, %v6085
        %v6119 = vsel %vm455, %v6118, %v6089
        %v6120 = vsel %vm457, %v6119, %v6093
        %v6121 = vsel %vm459, %v6120, %v6097
        %v6122 = vsel %vm461, %v6121, %v6101
        %v6123 = vsel %vm463, %v6122, %v6105
        %v6124 = vsel %vm465, %v6123, %v6109
        %6125 = vrot.lane.b32.xlu0 %v5673, 126
        %v6126 = vpop.permute.xlu0 %6125
        %6127 = vrot.lane.b32.xlu0 %v5674, 126
        %v6128 = vpop.permute.xlu0 %6127
        %6129 = vrot.lane.b32.xlu0 %v5675, 126
        %v6130 = vpop.permute.xlu0 %6129
        %6131 = vrot.lane.b32.xlu0 %v5676, 126
        %v6132 = vpop.permute.xlu0 %6131
        %6133 = vrot.lane.b32.xlu0 %v5677, 126
        %v6134 = vpop.permute.xlu0 %6133
        %6135 = vrot.lane.b32.xlu0 %v5678, 126
        %v6136 = vpop.permute.xlu0 %6135
        %6137 = vrot.lane.b32.xlu0 %v5679, 126
        %v6138 = vpop.permute.xlu0 %6137
        %6139 = vrot.lane.b32.xlu0 %v5680, 126
        %v6140 = vpop.permute.xlu0 %6139
        %v6149 = vcombine.low %v6126, %v6134
        %v6150 = vcombine.high %v6126, %v6134
        %v6152 = vunpack.c.l.s4 1983009808
        %v6153 = vunpack.c.0.s8 %v6152
        %v6154 = vlaneseq
        %v6155 = vshrl.u32 %v6154, 7
        %v6156 = vsub.s32 %v6153, %v6155
        %v6157 = vrot.slane %v6149, %v6156
        %v6159 = vunpack.c.l.s4 1983009808
        %v6160 = vunpack.c.0.s8 %v6159
        %v6161 = vlaneseq
        %v6162 = vshrl.u32 %v6161, 7
        %v6163 = vsub.s32 %v6160, %v6162
        %v6164 = vrot.slane %v6150, %v6163
        %v6165 = vcombine.low %v6130, %v6138
        %v6166 = vcombine.high %v6130, %v6138
        %v6168 = vunpack.c.l.s4 1983009808
        %v6169 = vunpack.c.0.s8 %v6168
        %v6170 = vlaneseq
        %v6171 = vshrl.u32 %v6170, 7
        %v6172 = vsub.s32 %v6169, %v6171
        %v6173 = vrot.slane %v6165, %v6172
        %v6175 = vunpack.c.l.s4 1983009808
        %v6176 = vunpack.c.0.s8 %v6175
        %v6177 = vlaneseq
        %v6178 = vshrl.u32 %v6177, 7
        %v6179 = vsub.s32 %v6176, %v6178
        %v6180 = vrot.slane %v6166, %v6179
        %v6181 = vcombine.low %v6157, %v6173
        %v6182 = vcombine.high %v6157, %v6173
        %v6184 = vunpack.c.l.s4 1934713408
        %v6185 = vunpack.c.0.s8 %v6184
        %v6186 = vlaneseq
        %v6187 = vshrl.u32 %v6186, 7
        %v6188 = vsub.s32 %v6185, %v6187
        %v6189 = vrot.slane %v6181, %v6188
        %v6191 = vunpack.c.l.s4 1934713408
        %v6192 = vunpack.c.0.s8 %v6191
        %v6193 = vlaneseq
        %v6194 = vshrl.u32 %v6193, 7
        %v6195 = vsub.s32 %v6192, %v6194
        %v6196 = vrot.slane %v6182, %v6195
        %v6197 = vcombine.low %v6164, %v6180
        %v6198 = vcombine.high %v6164, %v6180
        %v6200 = vunpack.c.l.s4 1934713408
        %v6201 = vunpack.c.0.s8 %v6200
        %v6202 = vlaneseq
        %v6203 = vshrl.u32 %v6202, 7
        %v6204 = vsub.s32 %v6201, %v6203
        %v6205 = vrot.slane %v6197, %v6204
        %v6207 = vunpack.c.l.s4 1934713408
        %v6208 = vunpack.c.0.s8 %v6207
        %v6209 = vlaneseq
        %v6210 = vshrl.u32 %v6209, 7
        %v6211 = vsub.s32 %v6208, %v6210
        %v6212 = vrot.slane %v6198, %v6211
        %v6213 = vcombine.high %v6189, 0.0
        %v6214 = vcombine.high %v6196, 0.0
        %v6215 = vcombine.high %v6205, 0.0
        %v6216 = vcombine.high %v6212, 0.0
        %v6217 = vcombine.low %v6128, %v6136
        %v6218 = vcombine.high %v6128, %v6136
        %v6220 = vunpack.c.l.s4 1983009808
        %v6221 = vunpack.c.0.s8 %v6220
        %v6222 = vlaneseq
        %v6223 = vshrl.u32 %v6222, 7
        %v6224 = vsub.s32 %v6221, %v6223
        %v6225 = vrot.slane %v6217, %v6224
        %v6227 = vunpack.c.l.s4 1983009808
        %v6228 = vunpack.c.0.s8 %v6227
        %v6229 = vlaneseq
        %v6230 = vshrl.u32 %v6229, 7
        %v6231 = vsub.s32 %v6228, %v6230
        %v6232 = vrot.slane %v6218, %v6231
        %v6233 = vcombine.low %v6132, %v6140
        %v6234 = vcombine.high %v6132, %v6140
        %v6236 = vunpack.c.l.s4 1983009808
        %v6237 = vunpack.c.0.s8 %v6236
        %v6238 = vlaneseq
        %v6239 = vshrl.u32 %v6238, 7
        %v6240 = vsub.s32 %v6237, %v6239
        %v6241 = vrot.slane %v6233, %v6240
        %v6243 = vunpack.c.l.s4 1983009808
        %v6244 = vunpack.c.0.s8 %v6243
        %v6245 = vlaneseq
        %v6246 = vshrl.u32 %v6245, 7
        %v6247 = vsub.s32 %v6244, %v6246
        %v6248 = vrot.slane %v6234, %v6247
        %v6249 = vcombine.low %v6225, %v6241
        %v6250 = vcombine.high %v6225, %v6241
        %v6252 = vunpack.c.l.s4 1934713408
        %v6253 = vunpack.c.0.s8 %v6252
        %v6254 = vlaneseq
        %v6255 = vshrl.u32 %v6254, 7
        %v6256 = vsub.s32 %v6253, %v6255
        %v6257 = vrot.slane %v6249, %v6256
        %v6259 = vunpack.c.l.s4 1934713408
        %v6260 = vunpack.c.0.s8 %v6259
        %v6261 = vlaneseq
        %v6262 = vshrl.u32 %v6261, 7
        %v6263 = vsub.s32 %v6260, %v6262
        %v6264 = vrot.slane %v6250, %v6263
        %v6265 = vcombine.low %v6232, %v6248
        %v6266 = vcombine.high %v6232, %v6248
        %v6268 = vunpack.c.l.s4 1934713408
        %v6269 = vunpack.c.0.s8 %v6268
        %v6270 = vlaneseq
        %v6271 = vshrl.u32 %v6270, 7
        %v6272 = vsub.s32 %v6269, %v6271
        %v6273 = vrot.slane %v6265, %v6272
        %v6275 = vunpack.c.l.s4 1934713408
        %v6276 = vunpack.c.0.s8 %v6275
        %v6277 = vlaneseq
        %v6278 = vshrl.u32 %v6277, 7
        %v6279 = vsub.s32 %v6276, %v6278
        %v6280 = vrot.slane %v6266, %v6279
        %v6281 = vcombine.high %v6257, 0.0
        %v6282 = vcombine.high %v6264, 0.0
        %v6283 = vcombine.high %v6273, 0.0
        %v6284 = vcombine.high %v6280, 0.0
        %6286 = vrot.lane.b32.xlu0 %v6213, 16
        %v6287 = vpop.permute.xlu0 %6286
        %6290 = vrot.lane.b32.xlu0 %v6196, 32
        %v6291 = vpop.permute.xlu0 %6290
        %6294 = vrot.lane.b32.xlu0 %v6214, 48
        %v6295 = vpop.permute.xlu0 %6294
        %6298 = vrot.lane.b32.xlu0 %v6205, 64
        %v6299 = vpop.permute.xlu0 %6298
        %6302 = vrot.lane.b32.xlu0 %v6215, 80
        %v6303 = vpop.permute.xlu0 %6302
        %6306 = vrot.lane.b32.xlu0 %v6212, 96
        %v6307 = vpop.permute.xlu0 %6306
        %6310 = vrot.lane.b32.xlu0 %v6216, 112
        %v6311 = vpop.permute.xlu0 %6310
        %6314 = vrot.lane.b32.xlu0 %v6281, 16
        %v6315 = vpop.permute.xlu0 %6314
        %6318 = vrot.lane.b32.xlu0 %v6264, 32
        %v6319 = vpop.permute.xlu0 %6318
        %6322 = vrot.lane.b32.xlu0 %v6282, 48
        %v6323 = vpop.permute.xlu0 %6322
        %6326 = vrot.lane.b32.xlu0 %v6273, 64
        %v6327 = vpop.permute.xlu0 %6326
        %6330 = vrot.lane.b32.xlu0 %v6283, 80
        %v6331 = vpop.permute.xlu0 %6330
        %6334 = vrot.lane.b32.xlu0 %v6280, 96
        %v6335 = vpop.permute.xlu0 %6334
        %6338 = vrot.lane.b32.xlu0 %v6284, 112
        %v6339 = vpop.permute.xlu0 %6338
        %v6341 = vsel %vm453, %v6189, %v6287
        %v6342 = vsel %vm455, %v6341, %v6291
        %v6343 = vsel %vm457, %v6342, %v6295
        %v6344 = vsel %vm459, %v6343, %v6299
        %v6345 = vsel %vm461, %v6344, %v6303
        %v6346 = vsel %vm463, %v6345, %v6307
        %v6347 = vsel %vm465, %v6346, %v6311
        %v6348 = vsel %vm453, %v6257, %v6315
        %v6349 = vsel %vm455, %v6348, %v6319
        %v6350 = vsel %vm457, %v6349, %v6323
        %v6351 = vsel %vm459, %v6350, %v6327
        %v6352 = vsel %vm461, %v6351, %v6331
        %v6353 = vsel %vm463, %v6352, %v6335
        %v6354 = vsel %vm465, %v6353, %v6339
        %v6355 = vld [vmem:[#allocation2 + $0x2] sm:$0xff]
        %v6356 = vld [vmem:[#allocation2 + $0xa] sm:$0xff]
        %v6357 = vld [vmem:[#allocation2 + $0x1a] sm:$0xff]
        %v6358 = vld [vmem:[#allocation2 + $0x22] sm:$0xff]
        %v6359 = vld [vmem:[#allocation2 + $0x32] sm:$0xff]
        %v6360 = vld [vmem:[#allocation2 + $0x3a] sm:$0xff]
        %v6361 = vld [vmem:[#allocation2 + $0x4a] sm:$0xff]
        %v6362 = vld [vmem:[#allocation2 + $0x52] sm:$0xff]
        %v6363 = vcombine.low %v6355, %v6359
        %v6364 = vcombine.high %v6355, %v6359
        %v6366 = vunpack.c.l.s4 1983009808
        %v6367 = vunpack.c.0.s8 %v6366
        %v6368 = vlaneseq
        %v6369 = vshrl.u32 %v6368, 7
        %v6370 = vsub.s32 %v6367, %v6369
        %v6371 = vrot.slane %v6363, %v6370
        %v6373 = vunpack.c.l.s4 1983009808
        %v6374 = vunpack.c.0.s8 %v6373
        %v6375 = vlaneseq
        %v6376 = vshrl.u32 %v6375, 7
        %v6377 = vsub.s32 %v6374, %v6376
        %v6378 = vrot.slane %v6364, %v6377
        %v6379 = vcombine.low %v6357, %v6361
        %v6380 = vcombine.high %v6357, %v6361
        %v6382 = vunpack.c.l.s4 1983009808
        %v6383 = vunpack.c.0.s8 %v6382
        %v6384 = vlaneseq
        %v6385 = vshrl.u32 %v6384, 7
        %v6386 = vsub.s32 %v6383, %v6385
        %v6387 = vrot.slane %v6379, %v6386
        %v6389 = vunpack.c.l.s4 1983009808
        %v6390 = vunpack.c.0.s8 %v6389
        %v6391 = vlaneseq
        %v6392 = vshrl.u32 %v6391, 7
        %v6393 = vsub.s32 %v6390, %v6392
        %v6394 = vrot.slane %v6380, %v6393
        %v6395 = vcombine.low %v6371, %v6387
        %v6396 = vcombine.high %v6371, %v6387
        %v6398 = vunpack.c.l.s4 1934713408
        %v6399 = vunpack.c.0.s8 %v6398
        %v6400 = vlaneseq
        %v6401 = vshrl.u32 %v6400, 7
        %v6402 = vsub.s32 %v6399, %v6401
        %v6403 = vrot.slane %v6395, %v6402
        %v6405 = vunpack.c.l.s4 1934713408
        %v6406 = vunpack.c.0.s8 %v6405
        %v6407 = vlaneseq
        %v6408 = vshrl.u32 %v6407, 7
        %v6409 = vsub.s32 %v6406, %v6408
        %v6410 = vrot.slane %v6396, %v6409
        %v6411 = vcombine.low %v6378, %v6394
        %v6412 = vcombine.high %v6378, %v6394
        %v6414 = vunpack.c.l.s4 1934713408
        %v6415 = vunpack.c.0.s8 %v6414
        %v6416 = vlaneseq
        %v6417 = vshrl.u32 %v6416, 7
        %v6418 = vsub.s32 %v6415, %v6417
        %v6419 = vrot.slane %v6411, %v6418
        %v6421 = vunpack.c.l.s4 1934713408
        %v6422 = vunpack.c.0.s8 %v6421
        %v6423 = vlaneseq
        %v6424 = vshrl.u32 %v6423, 7
        %v6425 = vsub.s32 %v6422, %v6424
        %v6426 = vrot.slane %v6412, %v6425
        %v6427 = vcombine.high %v6403, 0.0
        %v6428 = vcombine.high %v6410, 0.0
        %v6429 = vcombine.high %v6419, 0.0
        %v6430 = vcombine.high %v6426, 0.0
        %v6431 = vcombine.low %v6356, %v6360
        %v6432 = vcombine.high %v6356, %v6360
        %v6434 = vunpack.c.l.s4 1983009808
        %v6435 = vunpack.c.0.s8 %v6434
        %v6436 = vlaneseq
        %v6437 = vshrl.u32 %v6436, 7
        %v6438 = vsub.s32 %v6435, %v6437
        %v6439 = vrot.slane %v6431, %v6438
        %v6441 = vunpack.c.l.s4 1983009808
        %v6442 = vunpack.c.0.s8 %v6441
        %v6443 = vlaneseq
        %v6444 = vshrl.u32 %v6443, 7
        %v6445 = vsub.s32 %v6442, %v6444
        %v6446 = vrot.slane %v6432, %v6445
        %v6447 = vcombine.low %v6358, %v6362
        %v6448 = vcombine.high %v6358, %v6362
        %v6450 = vunpack.c.l.s4 1983009808
        %v6451 = vunpack.c.0.s8 %v6450
        %v6452 = vlaneseq
        %v6453 = vshrl.u32 %v6452, 7
        %v6454 = vsub.s32 %v6451, %v6453
        %v6455 = vrot.slane %v6447, %v6454
        %v6457 = vunpack.c.l.s4 1983009808
        %v6458 = vunpack.c.0.s8 %v6457
        %v6459 = vlaneseq
        %v6460 = vshrl.u32 %v6459, 7
        %v6461 = vsub.s32 %v6458, %v6460
        %v6462 = vrot.slane %v6448, %v6461
        %v6463 = vcombine.low %v6439, %v6455
        %v6464 = vcombine.high %v6439, %v6455
        %v6466 = vunpack.c.l.s4 1934713408
        %v6467 = vunpack.c.0.s8 %v6466
        %v6468 = vlaneseq
        %v6469 = vshrl.u32 %v6468, 7
        %v6470 = vsub.s32 %v6467, %v6469
        %v6471 = vrot.slane %v6463, %v6470
        %v6473 = vunpack.c.l.s4 1934713408
        %v6474 = vunpack.c.0.s8 %v6473
        %v6475 = vlaneseq
        %v6476 = vshrl.u32 %v6475, 7
        %v6477 = vsub.s32 %v6474, %v6476
        %v6478 = vrot.slane %v6464, %v6477
        %v6479 = vcombine.low %v6446, %v6462
        %v6480 = vcombine.high %v6446, %v6462
        %v6482 = vunpack.c.l.s4 1934713408
        %v6483 = vunpack.c.0.s8 %v6482
        %v6484 = vlaneseq
        %v6485 = vshrl.u32 %v6484, 7
        %v6486 = vsub.s32 %v6483, %v6485
        %v6487 = vrot.slane %v6479, %v6486
        %v6489 = vunpack.c.l.s4 1934713408
        %v6490 = vunpack.c.0.s8 %v6489
        %v6491 = vlaneseq
        %v6492 = vshrl.u32 %v6491, 7
        %v6493 = vsub.s32 %v6490, %v6492
        %v6494 = vrot.slane %v6480, %v6493
        %v6495 = vcombine.high %v6471, 0.0
        %v6496 = vcombine.high %v6478, 0.0
        %v6497 = vcombine.high %v6487, 0.0
        %v6498 = vcombine.high %v6494, 0.0
        %6500 = vrot.lane.b32.xlu0 %v6427, 16
        %v6501 = vpop.permute.xlu0 %6500
        %6504 = vrot.lane.b32.xlu0 %v6410, 32
        %v6505 = vpop.permute.xlu0 %6504
        %6508 = vrot.lane.b32.xlu0 %v6428, 48
        %v6509 = vpop.permute.xlu0 %6508
        %6512 = vrot.lane.b32.xlu0 %v6419, 64
        %v6513 = vpop.permute.xlu0 %6512
        %6516 = vrot.lane.b32.xlu0 %v6429, 80
        %v6517 = vpop.permute.xlu0 %6516
        %6520 = vrot.lane.b32.xlu0 %v6426, 96
        %v6521 = vpop.permute.xlu0 %6520
        %6524 = vrot.lane.b32.xlu0 %v6430, 112
        %v6525 = vpop.permute.xlu0 %6524
        %6528 = vrot.lane.b32.xlu0 %v6495, 16
        %v6529 = vpop.permute.xlu0 %6528
        %6532 = vrot.lane.b32.xlu0 %v6478, 32
        %v6533 = vpop.permute.xlu0 %6532
        %6536 = vrot.lane.b32.xlu0 %v6496, 48
        %v6537 = vpop.permute.xlu0 %6536
        %6540 = vrot.lane.b32.xlu0 %v6487, 64
        %v6541 = vpop.permute.xlu0 %6540
        %6544 = vrot.lane.b32.xlu0 %v6497, 80
        %v6545 = vpop.permute.xlu0 %6544
        %6548 = vrot.lane.b32.xlu0 %v6494, 96
        %v6549 = vpop.permute.xlu0 %6548
        %6552 = vrot.lane.b32.xlu0 %v6498, 112
        %v6553 = vpop.permute.xlu0 %6552
        %v6555 = vsel %vm453, %v6403, %v6501
        %v6556 = vsel %vm455, %v6555, %v6505
        %v6557 = vsel %vm457, %v6556, %v6509
        %v6558 = vsel %vm459, %v6557, %v6513
        %v6559 = vsel %vm461, %v6558, %v6517
        %v6560 = vsel %vm463, %v6559, %v6521
        %v6561 = vsel %vm465, %v6560, %v6525
        %v6562 = vsel %vm453, %v6471, %v6529
        %v6563 = vsel %vm455, %v6562, %v6533
        %v6564 = vsel %vm457, %v6563, %v6537
        %v6565 = vsel %vm459, %v6564, %v6541
        %v6566 = vsel %vm461, %v6565, %v6545
        %v6567 = vsel %vm463, %v6566, %v6549
        %v6568 = vsel %vm465, %v6567, %v6553
        %6577 = vrot.lane.b32.xlu0 %v6355, 127
        %v6578 = vpop.permute.xlu0 %6577
        %6579 = vrot.lane.b32.xlu0 %v6356, 127
        %v6580 = vpop.permute.xlu0 %6579
        %6581 = vrot.lane.b32.xlu0 %v6357, 127
        %v6582 = vpop.permute.xlu0 %6581
        %6583 = vrot.lane.b32.xlu0 %v6358, 127
        %v6584 = vpop.permute.xlu0 %6583
        %6585 = vrot.lane.b32.xlu0 %v6359, 127
        %v6586 = vpop.permute.xlu0 %6585
        %6587 = vrot.lane.b32.xlu0 %v6360, 127
        %v6588 = vpop.permute.xlu0 %6587
        %6589 = vrot.lane.b32.xlu0 %v6361, 127
        %v6590 = vpop.permute.xlu0 %6589
        %6591 = vrot.lane.b32.xlu0 %v6362, 127
        %v6592 = vpop.permute.xlu0 %6591
        %v6601 = vcombine.low %v6578, %v6586
        %v6602 = vcombine.high %v6578, %v6586
        %v6604 = vunpack.c.l.s4 1983009808
        %v6605 = vunpack.c.0.s8 %v6604
        %v6606 = vlaneseq
        %v6607 = vshrl.u32 %v6606, 7
        %v6608 = vsub.s32 %v6605, %v6607
        %v6609 = vrot.slane %v6601, %v6608
        %v6611 = vunpack.c.l.s4 1983009808
        %v6612 = vunpack.c.0.s8 %v6611
        %v6613 = vlaneseq
        %v6614 = vshrl.u32 %v6613, 7
        %v6615 = vsub.s32 %v6612, %v6614
        %v6616 = vrot.slane %v6602, %v6615
        %v6617 = vcombine.low %v6582, %v6590
        %v6618 = vcombine.high %v6582, %v6590
        %v6620 = vunpack.c.l.s4 1983009808
        %v6621 = vunpack.c.0.s8 %v6620
        %v6622 = vlaneseq
        %v6623 = vshrl.u32 %v6622, 7
        %v6624 = vsub.s32 %v6621, %v6623
        %v6625 = vrot.slane %v6617, %v6624
        %v6627 = vunpack.c.l.s4 1983009808
        %v6628 = vunpack.c.0.s8 %v6627
        %v6629 = vlaneseq
        %v6630 = vshrl.u32 %v6629, 7
        %v6631 = vsub.s32 %v6628, %v6630
        %v6632 = vrot.slane %v6618, %v6631
        %v6633 = vcombine.low %v6609, %v6625
        %v6634 = vcombine.high %v6609, %v6625
        %v6636 = vunpack.c.l.s4 1934713408
        %v6637 = vunpack.c.0.s8 %v6636
        %v6638 = vlaneseq
        %v6639 = vshrl.u32 %v6638, 7
        %v6640 = vsub.s32 %v6637, %v6639
        %v6641 = vrot.slane %v6633, %v6640
        %v6643 = vunpack.c.l.s4 1934713408
        %v6644 = vunpack.c.0.s8 %v6643
        %v6645 = vlaneseq
        %v6646 = vshrl.u32 %v6645, 7
        %v6647 = vsub.s32 %v6644, %v6646
        %v6648 = vrot.slane %v6634, %v6647
        %v6649 = vcombine.low %v6616, %v6632
        %v6650 = vcombine.high %v6616, %v6632
        %v6652 = vunpack.c.l.s4 1934713408
        %v6653 = vunpack.c.0.s8 %v6652
        %v6654 = vlaneseq
        %v6655 = vshrl.u32 %v6654, 7
        %v6656 = vsub.s32 %v6653, %v6655
        %v6657 = vrot.slane %v6649, %v6656
        %v6659 = vunpack.c.l.s4 1934713408
        %v6660 = vunpack.c.0.s8 %v6659
        %v6661 = vlaneseq
        %v6662 = vshrl.u32 %v6661, 7
        %v6663 = vsub.s32 %v6660, %v6662
        %v6664 = vrot.slane %v6650, %v6663
        %v6665 = vcombine.high %v6641, 0.0
        %v6666 = vcombine.high %v6648, 0.0
        %v6667 = vcombine.high %v6657, 0.0
        %v6668 = vcombine.high %v6664, 0.0
        %v6669 = vcombine.low %v6580, %v6588
        %v6670 = vcombine.high %v6580, %v6588
        %v6672 = vunpack.c.l.s4 1983009808
        %v6673 = vunpack.c.0.s8 %v6672
        %v6674 = vlaneseq
        %v6675 = vshrl.u32 %v6674, 7
        %v6676 = vsub.s32 %v6673, %v6675
        %v6677 = vrot.slane %v6669, %v6676
        %v6679 = vunpack.c.l.s4 1983009808
        %v6680 = vunpack.c.0.s8 %v6679
        %v6681 = vlaneseq
        %v6682 = vshrl.u32 %v6681, 7
        %v6683 = vsub.s32 %v6680, %v6682
        %v6684 = vrot.slane %v6670, %v6683
        %v6685 = vcombine.low %v6584, %v6592
        %v6686 = vcombine.high %v6584, %v6592
        %v6688 = vunpack.c.l.s4 1983009808
        %v6689 = vunpack.c.0.s8 %v6688
        %v6690 = vlaneseq
        %v6691 = vshrl.u32 %v6690, 7
        %v6692 = vsub.s32 %v6689, %v6691
        %v6693 = vrot.slane %v6685, %v6692
        %v6695 = vunpack.c.l.s4 1983009808
        %v6696 = vunpack.c.0.s8 %v6695
        %v6697 = vlaneseq
        %v6698 = vshrl.u32 %v6697, 7
        %v6699 = vsub.s32 %v6696, %v6698
        %v6700 = vrot.slane %v6686, %v6699
        %v6701 = vcombine.low %v6677, %v6693
        %v6702 = vcombine.high %v6677, %v6693
        %v6704 = vunpack.c.l.s4 1934713408
        %v6705 = vunpack.c.0.s8 %v6704
        %v6706 = vlaneseq
        %v6707 = vshrl.u32 %v6706, 7
        %v6708 = vsub.s32 %v6705, %v6707
        %v6709 = vrot.slane %v6701, %v6708
        %v6711 = vunpack.c.l.s4 1934713408
        %v6712 = vunpack.c.0.s8 %v6711
        %v6713 = vlaneseq
        %v6714 = vshrl.u32 %v6713, 7
        %v6715 = vsub.s32 %v6712, %v6714
        %v6716 = vrot.slane %v6702, %v6715
        %v6717 = vcombine.low %v6684, %v6700
        %v6718 = vcombine.high %v6684, %v6700
        %v6720 = vunpack.c.l.s4 1934713408
        %v6721 = vunpack.c.0.s8 %v6720
        %v6722 = vlaneseq
        %v6723 = vshrl.u32 %v6722, 7
        %v6724 = vsub.s32 %v6721, %v6723
        %v6725 = vrot.slane %v6717, %v6724
        %v6727 = vunpack.c.l.s4 1934713408
        %v6728 = vunpack.c.0.s8 %v6727
        %v6729 = vlaneseq
        %v6730 = vshrl.u32 %v6729, 7
        %v6731 = vsub.s32 %v6728, %v6730
        %v6732 = vrot.slane %v6718, %v6731
        %v6733 = vcombine.high %v6709, 0.0
        %v6734 = vcombine.high %v6716, 0.0
        %v6735 = vcombine.high %v6725, 0.0
        %v6736 = vcombine.high %v6732, 0.0
        %6738 = vrot.lane.b32.xlu0 %v6665, 16
        %v6739 = vpop.permute.xlu0 %6738
        %6742 = vrot.lane.b32.xlu0 %v6648, 32
        %v6743 = vpop.permute.xlu0 %6742
        %6746 = vrot.lane.b32.xlu0 %v6666, 48
        %v6747 = vpop.permute.xlu0 %6746
        %6750 = vrot.lane.b32.xlu0 %v6657, 64
        %v6751 = vpop.permute.xlu0 %6750
        %6754 = vrot.lane.b32.xlu0 %v6667, 80
        %v6755 = vpop.permute.xlu0 %6754
        %6758 = vrot.lane.b32.xlu0 %v6664, 96
        %v6759 = vpop.permute.xlu0 %6758
        %6762 = vrot.lane.b32.xlu0 %v6668, 112
        %v6763 = vpop.permute.xlu0 %6762
        %6766 = vrot.lane.b32.xlu0 %v6733, 16
        %v6767 = vpop.permute.xlu0 %6766
        %6770 = vrot.lane.b32.xlu0 %v6716, 32
        %v6771 = vpop.permute.xlu0 %6770
        %6774 = vrot.lane.b32.xlu0 %v6734, 48
        %v6775 = vpop.permute.xlu0 %6774
        %6778 = vrot.lane.b32.xlu0 %v6725, 64
        %v6779 = vpop.permute.xlu0 %6778
        %6782 = vrot.lane.b32.xlu0 %v6735, 80
        %v6783 = vpop.permute.xlu0 %6782
        %6786 = vrot.lane.b32.xlu0 %v6732, 96
        %v6787 = vpop.permute.xlu0 %6786
        %6790 = vrot.lane.b32.xlu0 %v6736, 112
        %v6791 = vpop.permute.xlu0 %6790
        %v6793 = vsel %vm453, %v6641, %v6739
        %v6794 = vsel %vm455, %v6793, %v6743
        %v6795 = vsel %vm457, %v6794, %v6747
        %v6796 = vsel %vm459, %v6795, %v6751
        %v6797 = vsel %vm461, %v6796, %v6755
        %v6798 = vsel %vm463, %v6797, %v6759
        %v6799 = vsel %vm465, %v6798, %v6763
        %v6800 = vsel %vm453, %v6709, %v6767
        %v6801 = vsel %vm455, %v6800, %v6771
        %v6802 = vsel %vm457, %v6801, %v6775
        %v6803 = vsel %vm459, %v6802, %v6779
        %v6804 = vsel %vm461, %v6803, %v6783
        %v6805 = vsel %vm463, %v6804, %v6787
        %v6806 = vsel %vm465, %v6805, %v6791
        %6807 = vrot.lane.b32.xlu0 %v6355, 126
        %v6808 = vpop.permute.xlu0 %6807
        %6809 = vrot.lane.b32.xlu0 %v6356, 126
        %v6810 = vpop.permute.xlu0 %6809
        %6811 = vrot.lane.b32.xlu0 %v6357, 126
        %v6812 = vpop.permute.xlu0 %6811
        %6813 = vrot.lane.b32.xlu0 %v6358, 126
        %v6814 = vpop.permute.xlu0 %6813
        %6815 = vrot.lane.b32.xlu0 %v6359, 126
        %v6816 = vpop.permute.xlu0 %6815
        %6817 = vrot.lane.b32.xlu0 %v6360, 126
        %v6818 = vpop.permute.xlu0 %6817
        %6819 = vrot.lane.b32.xlu0 %v6361, 126
        %v6820 = vpop.permute.xlu0 %6819
        %6821 = vrot.lane.b32.xlu0 %v6362, 126
        %v6822 = vpop.permute.xlu0 %6821
        %v6831 = vcombine.low %v6808, %v6816
        %v6832 = vcombine.high %v6808, %v6816
        %v6834 = vunpack.c.l.s4 1983009808
        %v6835 = vunpack.c.0.s8 %v6834
        %v6836 = vlaneseq
        %v6837 = vshrl.u32 %v6836, 7
        %v6838 = vsub.s32 %v6835, %v6837
        %v6839 = vrot.slane %v6831, %v6838
        %v6841 = vunpack.c.l.s4 1983009808
        %v6842 = vunpack.c.0.s8 %v6841
        %v6843 = vlaneseq
        %v6844 = vshrl.u32 %v6843, 7
        %v6845 = vsub.s32 %v6842, %v6844
        %v6846 = vrot.slane %v6832, %v6845
        %v6847 = vcombine.low %v6812, %v6820
        %v6848 = vcombine.high %v6812, %v6820
        %v6850 = vunpack.c.l.s4 1983009808
        %v6851 = vunpack.c.0.s8 %v6850
        %v6852 = vlaneseq
        %v6853 = vshrl.u32 %v6852, 7
        %v6854 = vsub.s32 %v6851, %v6853
        %v6855 = vrot.slane %v6847, %v6854
        %v6857 = vunpack.c.l.s4 1983009808
        %v6858 = vunpack.c.0.s8 %v6857
        %v6859 = vlaneseq
        %v6860 = vshrl.u32 %v6859, 7
        %v6861 = vsub.s32 %v6858, %v6860
        %v6862 = vrot.slane %v6848, %v6861
        %v6863 = vcombine.low %v6839, %v6855
        %v6864 = vcombine.high %v6839, %v6855
        %v6866 = vunpack.c.l.s4 1934713408
        %v6867 = vunpack.c.0.s8 %v6866
        %v6868 = vlaneseq
        %v6869 = vshrl.u32 %v6868, 7
        %v6870 = vsub.s32 %v6867, %v6869
        %v6871 = vrot.slane %v6863, %v6870
        %v6873 = vunpack.c.l.s4 1934713408
        %v6874 = vunpack.c.0.s8 %v6873
        %v6875 = vlaneseq
        %v6876 = vshrl.u32 %v6875, 7
        %v6877 = vsub.s32 %v6874, %v6876
        %v6878 = vrot.slane %v6864, %v6877
        %v6879 = vcombine.low %v6846, %v6862
        %v6880 = vcombine.high %v6846, %v6862
        %v6882 = vunpack.c.l.s4 1934713408
        %v6883 = vunpack.c.0.s8 %v6882
        %v6884 = vlaneseq
        %v6885 = vshrl.u32 %v6884, 7
        %v6886 = vsub.s32 %v6883, %v6885
        %v6887 = vrot.slane %v6879, %v6886
        %v6889 = vunpack.c.l.s4 1934713408
        %v6890 = vunpack.c.0.s8 %v6889
        %v6891 = vlaneseq
        %v6892 = vshrl.u32 %v6891, 7
        %v6893 = vsub.s32 %v6890, %v6892
        %v6894 = vrot.slane %v6880, %v6893
        %v6895 = vcombine.high %v6871, 0.0
        %v6896 = vcombine.high %v6878, 0.0
        %v6897 = vcombine.high %v6887, 0.0
        %v6898 = vcombine.high %v6894, 0.0
        %v6899 = vcombine.low %v6810, %v6818
        %v6900 = vcombine.high %v6810, %v6818
        %v6902 = vunpack.c.l.s4 1983009808
        %v6903 = vunpack.c.0.s8 %v6902
        %v6904 = vlaneseq
        %v6905 = vshrl.u32 %v6904, 7
        %v6906 = vsub.s32 %v6903, %v6905
        %v6907 = vrot.slane %v6899, %v6906
        %v6909 = vunpack.c.l.s4 1983009808
        %v6910 = vunpack.c.0.s8 %v6909
        %v6911 = vlaneseq
        %v6912 = vshrl.u32 %v6911, 7
        %v6913 = vsub.s32 %v6910, %v6912
        %v6914 = vrot.slane %v6900, %v6913
        %v6915 = vcombine.low %v6814, %v6822
        %v6916 = vcombine.high %v6814, %v6822
        %v6918 = vunpack.c.l.s4 1983009808
        %v6919 = vunpack.c.0.s8 %v6918
        %v6920 = vlaneseq
        %v6921 = vshrl.u32 %v6920, 7
        %v6922 = vsub.s32 %v6919, %v6921
        %v6923 = vrot.slane %v6915, %v6922
        %v6925 = vunpack.c.l.s4 1983009808
        %v6926 = vunpack.c.0.s8 %v6925
        %v6927 = vlaneseq
        %v6928 = vshrl.u32 %v6927, 7
        %v6929 = vsub.s32 %v6926, %v6928
        %v6930 = vrot.slane %v6916, %v6929
        %v6931 = vcombine.low %v6907, %v6923
        %v6932 = vcombine.high %v6907, %v6923
        %v6934 = vunpack.c.l.s4 1934713408
        %v6935 = vunpack.c.0.s8 %v6934
        %v6936 = vlaneseq
        %v6937 = vshrl.u32 %v6936, 7
        %v6938 = vsub.s32 %v6935, %v6937
        %v6939 = vrot.slane %v6931, %v6938
        %v6941 = vunpack.c.l.s4 1934713408
        %v6942 = vunpack.c.0.s8 %v6941
        %v6943 = vlaneseq
        %v6944 = vshrl.u32 %v6943, 7
        %v6945 = vsub.s32 %v6942, %v6944
        %v6946 = vrot.slane %v6932, %v6945
        %v6947 = vcombine.low %v6914, %v6930
        %v6948 = vcombine.high %v6914, %v6930
        %v6950 = vunpack.c.l.s4 1934713408
        %v6951 = vunpack.c.0.s8 %v6950
        %v6952 = vlaneseq
        %v6953 = vshrl.u32 %v6952, 7
        %v6954 = vsub.s32 %v6951, %v6953
        %v6955 = vrot.slane %v6947, %v6954
        %v6957 = vunpack.c.l.s4 1934713408
        %v6958 = vunpack.c.0.s8 %v6957
        %v6959 = vlaneseq
        %v6960 = vshrl.u32 %v6959, 7
        %v6961 = vsub.s32 %v6958, %v6960
        %v6962 = vrot.slane %v6948, %v6961
        %v6963 = vcombine.high %v6939, 0.0
        %v6964 = vcombine.high %v6946, 0.0
        %v6965 = vcombine.high %v6955, 0.0
        %v6966 = vcombine.high %v6962, 0.0
        %6968 = vrot.lane.b32.xlu0 %v6895, 16
        %v6969 = vpop.permute.xlu0 %6968
        %6972 = vrot.lane.b32.xlu0 %v6878, 32
        %v6973 = vpop.permute.xlu0 %6972
        %6976 = vrot.lane.b32.xlu0 %v6896, 48
        %v6977 = vpop.permute.xlu0 %6976
        %6980 = vrot.lane.b32.xlu0 %v6887, 64
        %v6981 = vpop.permute.xlu0 %6980
        %6984 = vrot.lane.b32.xlu0 %v6897, 80
        %v6985 = vpop.permute.xlu0 %6984
        %6988 = vrot.lane.b32.xlu0 %v6894, 96
        %v6989 = vpop.permute.xlu0 %6988
        %6992 = vrot.lane.b32.xlu0 %v6898, 112
        %v6993 = vpop.permute.xlu0 %6992
        %6996 = vrot.lane.b32.xlu0 %v6963, 16
        %v6997 = vpop.permute.xlu0 %6996
        %7000 = vrot.lane.b32.xlu0 %v6946, 32
        %v7001 = vpop.permute.xlu0 %7000
        %7004 = vrot.lane.b32.xlu0 %v6964, 48
        %v7005 = vpop.permute.xlu0 %7004
        %7008 = vrot.lane.b32.xlu0 %v6955, 64
        %v7009 = vpop.permute.xlu0 %7008
        %7012 = vrot.lane.b32.xlu0 %v6965, 80
        %v7013 = vpop.permute.xlu0 %7012
        %7016 = vrot.lane.b32.xlu0 %v6962, 96
        %v7017 = vpop.permute.xlu0 %7016
        %7020 = vrot.lane.b32.xlu0 %v6966, 112
        %v7021 = vpop.permute.xlu0 %7020
        %v7023 = vsel %vm453, %v6871, %v6969
        %v7024 = vsel %vm455, %v7023, %v6973
        %v7025 = vsel %vm457, %v7024, %v6977
        %v7026 = vsel %vm459, %v7025, %v6981
        %v7027 = vsel %vm461, %v7026, %v6985
        %v7028 = vsel %vm463, %v7027, %v6989
        %v7029 = vsel %vm465, %v7028, %v6993
        %v7030 = vsel %vm453, %v6939, %v6997
        %v7031 = vsel %vm455, %v7030, %v7001
        %v7032 = vsel %vm457, %v7031, %v7005
        %v7033 = vsel %vm459, %v7032, %v7009
        %v7034 = vsel %vm461, %v7033, %v7013
        %v7035 = vsel %vm463, %v7034, %v7017
        %v7036 = vsel %vm465, %v7035, %v7021
        %v7039 = vrot.slane %v5435, 4
        %v7040 = vrot.slane %v5442, 4
        %v7045 = vrot.slane %v5879, 4
        %v7046 = vrot.slane %v5886, 4
        %v7051 = vrot.slane %v6347, 4
        %v7052 = vrot.slane %v6354, 4
        %v7057 = vrot.slane %v6799, 4
        %v7058 = vrot.slane %v6806, 4
        %v7061 = vsel %vm2330, %v5197, %v7039
        %v7062 = vsel %vm2330, %v5204, %v7040
        %v7063 = vsel %vm2330, %v5665, %v7045
        %v7064 = vsel %vm2330, %v5672, %v7046
        %v7065 = vsel %vm2330, %v6117, %v7051
        %v7066 = vsel %vm2330, %v6124, %v7052
        %v7067 = vsel %vm2330, %v6561, %v7057
        %v7068 = vsel %vm2330, %v6568, %v7058
        %v7069 = vpack.c.bf16 %v7063, %v7061
        %v7070 = vpack.c.bf16 %v7064, %v7062
        %v7071 = vpack.c.bf16 %v7067, %v7065
        %v7072 = vpack.c.bf16 %v7068, %v7066
        %v7073 = vpack.c.bf16 %v7029, %v7029
        %v7074 = vpack.c.bf16 %v7036, %v7036
        %s7075 = scalar_lea.vmem %s1, 4
        %v7076 = vld [vmem:[%s7075] sm:$0x3]
        %s7077 = scalar_lea.vmem %s2, 8
        %v7078 = vld [vmem:[%s7077] sm:$0xf]
        %7080 = vset.pattern.permute.xlu0 0
        %7081 = vperm.xlu0 %7080, %v7078
        %v7082 = vpop.permute.xlu0 %7081
        %v7085 = vsel %vm2352, %v7076, 0
        %v7088 = vsel %vm2356, %v7073, 0
        %v7091 = vsel %vm2356, %v7074, 0
        %7093 = vmatprep.subr.bf16.mxu0 0
        %7094 = vmatpush1.bf16.msra.mxu0 0
        %7095 = vmatprep.subr.bf16.mxu0 0
        %7096 = vmatpush1.bf16.msra.mxu0 0
        %7097 = vmatprep.subr.bf16.mxu0 0
        %7098 = vmatpush1.bf16.msra.mxu0 0
        %7099 = vmatprep.subr.bf16.mxu0 0
        %7100 = vmatpush1.bf16.msra.mxu0 0
        %7101 = vmatprep.subr.bf16.mxu0 0
        %7102 = vmatpush1.bf16.msra.mxu0 0
        %7103 = vmatprep.subr.bf16.mxu0 %v7091
        %7104 = vmatpush1.bf16.msra.mxu0 %v7088
        %7105 = vmatprep.subr.bf16.mxu0 %v7072
        %7106 = vmatpush1.bf16.msra.mxu0 %v7071
        %7107 = vmatprep.subr.bf16.mxu0 %v7070
        %7108 = vmatpush1.bf16.msra.mxu0 %v7069
        %7109 = vmatprep.subr.bf16.mxu0 0
        %7110 = vmatpush2.bf16.msra.mxu0 0
        %7111 = vmatprep.subr.bf16.mxu0 0
        %7112 = vmatpush2.bf16.msra.mxu0 0
        %7113 = vmatprep.subr.bf16.mxu0 0
        %7114 = vmatpush2.bf16.msra.mxu0 0
        %7115 = vmatprep.subr.bf16.mxu0 0
        %7116 = vmatpush2.bf16.msra.mxu0 0
        %7117 = vmatprep.subr.bf16.mxu0 0
        %7118 = vmatpush2.bf16.msra.mxu0 0
        %7119 = vmatprep.subr.bf16.mxu0 0
        %7120 = vmatpush2.bf16.msra.mxu0 0
        %7121 = vmatprep.subr.bf16.mxu0 0
        %7122 = vmatpush2.bf16.msra.mxu0 0
        %7123 = vmatprep.subr.bf16.mxu0 0
        %7124 = vmatpush2.bf16.msra.mxu0 0
        %7125 = vmatprep.mubr.bf16.mxu0 0
        %7126 = vmatmul.mubr.bf16.gmra.mxu0 %v7085
        %v7127 = vpop.f32.mrf.mxu0
        %v7128 = vadd.f32 %v7082, %v7127
        %v7129 = vpop.f32.mrf.mxu0
        %v7130 = vadd.f32 %v7082, %v7129
        %v7131 = vpop.f32.mrf.mxu0
        %v7132 = vpop.f32.mrf.mxu0
        %7133 = vdwg.mxu0
        %v7134 = vmax.f32 %v7128, 0.0
        %v7135 = vmax.f32 %v7130, 0.0
        %7137 = vrot.lane.b32.xlu0 %v7134, 112
        %v7138 = vpop.permute.xlu0 %7137
        %7140 = vrot.lane.b32.xlu0 %v7134, 96
        %v7141 = vpop.permute.xlu0 %7140
        %7143 = vrot.lane.b32.xlu0 %v7134, 80
        %v7144 = vpop.permute.xlu0 %7143
        %7146 = vrot.lane.b32.xlu0 %v7134, 64
        %v7147 = vpop.permute.xlu0 %7146
        %7149 = vrot.lane.b32.xlu0 %v7134, 48
        %v7150 = vpop.permute.xlu0 %7149
        %7152 = vrot.lane.b32.xlu0 %v7134, 32
        %v7153 = vpop.permute.xlu0 %7152
        %7155 = vrot.lane.b32.xlu0 %v7134, 16
        %v7156 = vpop.permute.xlu0 %7155
        %7159 = vrot.lane.b32.xlu0 %v7135, 112
        %v7160 = vpop.permute.xlu0 %7159
        %7162 = vrot.lane.b32.xlu0 %v7135, 96
        %v7163 = vpop.permute.xlu0 %7162
        %7165 = vrot.lane.b32.xlu0 %v7135, 80
        %v7166 = vpop.permute.xlu0 %7165
        %7168 = vrot.lane.b32.xlu0 %v7135, 64
        %v7169 = vpop.permute.xlu0 %7168
        %7171 = vrot.lane.b32.xlu0 %v7135, 48
        %v7172 = vpop.permute.xlu0 %7171
        %7174 = vrot.lane.b32.xlu0 %v7135, 32
        %v7175 = vpop.permute.xlu0 %7174
        %7177 = vrot.lane.b32.xlu0 %v7135, 16
        %v7178 = vpop.permute.xlu0 %7177
        %v7180 = vcombine.low %v7134, %v7141
        %v7182 = vunpack.c.l.s4 1983009808
        %v7183 = vunpack.c.0.s8 %v7182
        %v7184 = vlaneseq
        %v7185 = vshrl.u32 %v7184, 7
        %v7186 = vsub.s32 %v7183, %v7185
        %v7187 = vrot.slane %v7180, %v7186
        %v7188 = vcombine.low %v7138, %v7144
        %v7190 = vunpack.c.l.s4 1983009808
        %v7191 = vunpack.c.0.s8 %v7190
        %v7192 = vlaneseq
        %v7193 = vshrl.u32 %v7192, 7
        %v7194 = vsub.s32 %v7191, %v7193
        %v7195 = vrot.slane %v7188, %v7194
        %v7196 = vcombine.low %v7147, %v7153
        %v7198 = vunpack.c.l.s4 1983009808
        %v7199 = vunpack.c.0.s8 %v7198
        %v7200 = vlaneseq
        %v7201 = vshrl.u32 %v7200, 7
        %v7202 = vsub.s32 %v7199, %v7201
        %v7203 = vrot.slane %v7196, %v7202
        %v7204 = vcombine.low %v7150, %v7156
        %v7206 = vunpack.c.l.s4 1983009808
        %v7207 = vunpack.c.0.s8 %v7206
        %v7208 = vlaneseq
        %v7209 = vshrl.u32 %v7208, 7
        %v7210 = vsub.s32 %v7207, %v7209
        %v7211 = vrot.slane %v7204, %v7210
        %v7212 = vcombine.low %v7187, %v7195
        %v7213 = vcombine.high %v7187, %v7195
        %v7215 = vunpack.c.l.s4 1934713408
        %v7216 = vunpack.c.0.s8 %v7215
        %v7217 = vlaneseq
        %v7218 = vshrl.u32 %v7217, 7
        %v7219 = vsub.s32 %v7216, %v7218
        %v7220 = vrot.slane %v7212, %v7219
        %v7222 = vunpack.c.l.s4 1934713408
        %v7223 = vunpack.c.0.s8 %v7222
        %v7224 = vlaneseq
        %v7225 = vshrl.u32 %v7224, 7
        %v7226 = vsub.s32 %v7223, %v7225
        %v7227 = vrot.slane %v7213, %v7226
        %v7228 = vcombine.low %v7203, %v7211
        %v7229 = vcombine.high %v7203, %v7211
        %v7231 = vunpack.c.l.s4 1934713408
        %v7232 = vunpack.c.0.s8 %v7231
        %v7233 = vlaneseq
        %v7234 = vshrl.u32 %v7233, 7
        %v7235 = vsub.s32 %v7232, %v7234
        %v7236 = vrot.slane %v7228, %v7235
        %v7238 = vunpack.c.l.s4 1934713408
        %v7239 = vunpack.c.0.s8 %v7238
        %v7240 = vlaneseq
        %v7241 = vshrl.u32 %v7240, 7
        %v7242 = vsub.s32 %v7239, %v7241
        %v7243 = vrot.slane %v7229, %v7242
        %v7244 = vcombine.low %v7220, %v7236
        %v7245 = vcombine.high %v7220, %v7236
        %v7246 = vcombine.low %v7227, %v7243
        %v7247 = vcombine.high %v7227, %v7243
        %v7248 = vcombine.low %v7135, %v7163
        %v7250 = vunpack.c.l.s4 1983009808
        %v7251 = vunpack.c.0.s8 %v7250
        %v7252 = vlaneseq
        %v7253 = vshrl.u32 %v7252, 7
        %v7254 = vsub.s32 %v7251, %v7253
        %v7255 = vrot.slane %v7248, %v7254
        %v7256 = vcombine.low %v7160, %v7166
        %v7258 = vunpack.c.l.s4 1983009808
        %v7259 = vunpack.c.0.s8 %v7258
        %v7260 = vlaneseq
        %v7261 = vshrl.u32 %v7260, 7
        %v7262 = vsub.s32 %v7259, %v7261
        %v7263 = vrot.slane %v7256, %v7262
        %v7264 = vcombine.low %v7169, %v7175
        %v7266 = vunpack.c.l.s4 1983009808
        %v7267 = vunpack.c.0.s8 %v7266
        %v7268 = vlaneseq
        %v7269 = vshrl.u32 %v7268, 7
        %v7270 = vsub.s32 %v7267, %v7269
        %v7271 = vrot.slane %v7264, %v7270
        %v7272 = vcombine.low %v7172, %v7178
        %v7274 = vunpack.c.l.s4 1983009808
        %v7275 = vunpack.c.0.s8 %v7274
        %v7276 = vlaneseq
        %v7277 = vshrl.u32 %v7276, 7
        %v7278 = vsub.s32 %v7275, %v7277
        %v7279 = vrot.slane %v7272, %v7278
        %v7280 = vcombine.low %v7255, %v7263
        %v7281 = vcombine.high %v7255, %v7263
        %v7283 = vunpack.c.l.s4 1934713408
        %v7284 = vunpack.c.0.s8 %v7283
        %v7285 = vlaneseq
        %v7286 = vshrl.u32 %v7285, 7
        %v7287 = vsub.s32 %v7284, %v7286
        %v7288 = vrot.slane %v7280, %v7287
        %v7290 = vunpack.c.l.s4 1934713408
        %v7291 = vunpack.c.0.s8 %v7290
        %v7292 = vlaneseq
        %v7293 = vshrl.u32 %v7292, 7
        %v7294 = vsub.s32 %v7291, %v7293
        %v7295 = vrot.slane %v7281, %v7294
        %v7296 = vcombine.low %v7271, %v7279
        %v7297 = vcombine.high %v7271, %v7279
        %v7299 = vunpack.c.l.s4 1934713408
        %v7300 = vunpack.c.0.s8 %v7299
        %v7301 = vlaneseq
        %v7302 = vshrl.u32 %v7301, 7
        %v7303 = vsub.s32 %v7300, %v7302
        %v7304 = vrot.slane %v7296, %v7303
        %v7306 = vunpack.c.l.s4 1934713408
        %v7307 = vunpack.c.0.s8 %v7306
        %v7308 = vlaneseq
        %v7309 = vshrl.u32 %v7308, 7
        %v7310 = vsub.s32 %v7307, %v7309
        %v7311 = vrot.slane %v7297, %v7310
        %v7312 = vcombine.low %v7288, %v7304
        %v7313 = vcombine.high %v7288, %v7304
        %v7314 = vcombine.low %v7295, %v7311
        %v7315 = vcombine.high %v7295, %v7311
        %7324 = vrot.lane.b32.xlu0 %v7244, 1
        %v7325 = vpop.permute.xlu0 %7324
        %7326 = vrot.lane.b32.xlu0 %v7312, 1
        %v7327 = vpop.permute.xlu0 %7326
        %7328 = vrot.lane.b32.xlu0 %v7245, 1
        %v7329 = vpop.permute.xlu0 %7328
        %7330 = vrot.lane.b32.xlu0 %v7313, 1
        %v7331 = vpop.permute.xlu0 %7330
        %7332 = vrot.lane.b32.xlu0 %v7246, 1
        %v7333 = vpop.permute.xlu0 %7332
        %7334 = vrot.lane.b32.xlu0 %v7314, 1
        %v7335 = vpop.permute.xlu0 %7334
        %7336 = vrot.lane.b32.xlu0 %v7247, 1
        %v7337 = vpop.permute.xlu0 %7336
        %7338 = vrot.lane.b32.xlu0 %v7315, 1
        %v7339 = vpop.permute.xlu0 %7338
        %7348 = vst.msk [vmem:[#allocation2 + $0x1] sm:$0xff] %vm244, %v7325
        %7349 = vst.msk [vmem:[#allocation2 + $0x9] sm:$0xff] %vm244, %v7327
        %7350 = vst.msk [vmem:[#allocation2 + $0x19] sm:$0xff] %vm244, %v7329
        %7351 = vst.msk [vmem:[#allocation2 + $0x21] sm:$0xff] %vm244, %v7331
        %7352 = vst.msk [vmem:[#allocation2 + $0x31] sm:$0xff] %vm244, %v7333
        %7353 = vst.msk [vmem:[#allocation2 + $0x39] sm:$0xff] %vm244, %v7335
        %7354 = vst.msk [vmem:[#allocation2 + $0x49] sm:$0xff] %vm244, %v7337
        %7355 = vst.msk [vmem:[#allocation2 + $0x51] sm:$0xff] %vm244, %v7339
        %v7356 = vld [vmem:[#allocation2] sm:$0xff]
        %v7357 = vld [vmem:[#allocation2 + $0x8] sm:$0xff]
        %v7358 = vld [vmem:[#allocation2 + $0x18] sm:$0xff]
        %v7359 = vld [vmem:[#allocation2 + $0x20] sm:$0xff]
        %v7360 = vld [vmem:[#allocation2 + $0x30] sm:$0xff]
        %v7361 = vld [vmem:[#allocation2 + $0x38] sm:$0xff]
        %v7362 = vld [vmem:[#allocation2 + $0x48] sm:$0xff]
        %v7363 = vld [vmem:[#allocation2 + $0x50] sm:$0xff]
        %v7364 = vcombine.low %v7356, %v7360
        %v7365 = vcombine.high %v7356, %v7360
        %v7367 = vunpack.c.l.s4 1983009808
        %v7368 = vunpack.c.0.s8 %v7367
        %v7369 = vlaneseq
        %v7370 = vshrl.u32 %v7369, 7
        %v7371 = vsub.s32 %v7368, %v7370
        %v7372 = vrot.slane %v7364, %v7371
        %v7374 = vunpack.c.l.s4 1983009808
        %v7375 = vunpack.c.0.s8 %v7374
        %v7376 = vlaneseq
        %v7377 = vshrl.u32 %v7376, 7
        %v7378 = vsub.s32 %v7375, %v7377
        %v7379 = vrot.slane %v7365, %v7378
        %v7380 = vcombine.low %v7358, %v7362
        %v7381 = vcombine.high %v7358, %v7362
        %v7383 = vunpack.c.l.s4 1983009808
        %v7384 = vunpack.c.0.s8 %v7383
        %v7385 = vlaneseq
        %v7386 = vshrl.u32 %v7385, 7
        %v7387 = vsub.s32 %v7384, %v7386
        %v7388 = vrot.slane %v7380, %v7387
        %v7390 = vunpack.c.l.s4 1983009808
        %v7391 = vunpack.c.0.s8 %v7390
        %v7392 = vlaneseq
        %v7393 = vshrl.u32 %v7392, 7
        %v7394 = vsub.s32 %v7391, %v7393
        %v7395 = vrot.slane %v7381, %v7394
        %v7396 = vcombine.low %v7372, %v7388
        %v7397 = vcombine.high %v7372, %v7388
        %v7399 = vunpack.c.l.s4 1934713408
        %v7400 = vunpack.c.0.s8 %v7399
        %v7401 = vlaneseq
        %v7402 = vshrl.u32 %v7401, 7
        %v7403 = vsub.s32 %v7400, %v7402
        %v7404 = vrot.slane %v7396, %v7403
        %v7406 = vunpack.c.l.s4 1934713408
        %v7407 = vunpack.c.0.s8 %v7406
        %v7408 = vlaneseq
        %v7409 = vshrl.u32 %v7408, 7
        %v7410 = vsub.s32 %v7407, %v7409
        %v7411 = vrot.slane %v7397, %v7410
        %v7412 = vcombine.low %v7379, %v7395
        %v7413 = vcombine.high %v7379, %v7395
        %v7415 = vunpack.c.l.s4 1934713408
        %v7416 = vunpack.c.0.s8 %v7415
        %v7417 = vlaneseq
        %v7418 = vshrl.u32 %v7417, 7
        %v7419 = vsub.s32 %v7416, %v7418
        %v7420 = vrot.slane %v7412, %v7419
        %v7422 = vunpack.c.l.s4 1934713408
        %v7423 = vunpack.c.0.s8 %v7422
        %v7424 = vlaneseq
        %v7425 = vshrl.u32 %v7424, 7
        %v7426 = vsub.s32 %v7423, %v7425
        %v7427 = vrot.slane %v7413, %v7426
        %v7428 = vcombine.high %v7404, 0.0
        %v7429 = vcombine.high %v7411, 0.0
        %v7430 = vcombine.high %v7420, 0.0
        %v7431 = vcombine.high %v7427, 0.0
        %v7432 = vcombine.low %v7357, %v7361
        %v7433 = vcombine.high %v7357, %v7361
        %v7435 = vunpack.c.l.s4 1983009808
        %v7436 = vunpack.c.0.s8 %v7435
        %v7437 = vlaneseq
        %v7438 = vshrl.u32 %v7437, 7
        %v7439 = vsub.s32 %v7436, %v7438
        %v7440 = vrot.slane %v7432, %v7439
        %v7442 = vunpack.c.l.s4 1983009808
        %v7443 = vunpack.c.0.s8 %v7442
        %v7444 = vlaneseq
        %v7445 = vshrl.u32 %v7444, 7
        %v7446 = vsub.s32 %v7443, %v7445
        %v7447 = vrot.slane %v7433, %v7446
        %v7448 = vcombine.low %v7359, %v7363
        %v7449 = vcombine.high %v7359, %v7363
        %v7451 = vunpack.c.l.s4 1983009808
        %v7452 = vunpack.c.0.s8 %v7451
        %v7453 = vlaneseq
        %v7454 = vshrl.u32 %v7453, 7
        %v7455 = vsub.s32 %v7452, %v7454
        %v7456 = vrot.slane %v7448, %v7455
        %v7458 = vunpack.c.l.s4 1983009808
        %v7459 = vunpack.c.0.s8 %v7458
        %v7460 = vlaneseq
        %v7461 = vshrl.u32 %v7460, 7
        %v7462 = vsub.s32 %v7459, %v7461
        %v7463 = vrot.slane %v7449, %v7462
        %v7464 = vcombine.low %v7440, %v7456
        %v7465 = vcombine.high %v7440, %v7456
        %v7467 = vunpack.c.l.s4 1934713408
        %v7468 = vunpack.c.0.s8 %v7467
        %v7469 = vlaneseq
        %v7470 = vshrl.u32 %v7469, 7
        %v7471 = vsub.s32 %v7468, %v7470
        %v7472 = vrot.slane %v7464, %v7471
        %v7474 = vunpack.c.l.s4 1934713408
        %v7475 = vunpack.c.0.s8 %v7474
        %v7476 = vlaneseq
        %v7477 = vshrl.u32 %v7476, 7
        %v7478 = vsub.s32 %v7475, %v7477
        %v7479 = vrot.slane %v7465, %v7478
        %v7480 = vcombine.low %v7447, %v7463
        %v7481 = vcombine.high %v7447, %v7463
        %v7483 = vunpack.c.l.s4 1934713408
        %v7484 = vunpack.c.0.s8 %v7483
        %v7485 = vlaneseq
        %v7486 = vshrl.u32 %v7485, 7
        %v7487 = vsub.s32 %v7484, %v7486
        %v7488 = vrot.slane %v7480, %v7487
        %v7490 = vunpack.c.l.s4 1934713408
        %v7491 = vunpack.c.0.s8 %v7490
        %v7492 = vlaneseq
        %v7493 = vshrl.u32 %v7492, 7
        %v7494 = vsub.s32 %v7491, %v7493
        %v7495 = vrot.slane %v7481, %v7494
        %v7496 = vcombine.high %v7472, 0.0
        %v7497 = vcombine.high %v7479, 0.0
        %v7498 = vcombine.high %v7488, 0.0
        %v7499 = vcombine.high %v7495, 0.0
        %7501 = vrot.lane.b32.xlu0 %v7428, 16
        %v7502 = vpop.permute.xlu0 %7501
        %7505 = vrot.lane.b32.xlu0 %v7411, 32
        %v7506 = vpop.permute.xlu0 %7505
        %7509 = vrot.lane.b32.xlu0 %v7429, 48
        %v7510 = vpop.permute.xlu0 %7509
        %7513 = vrot.lane.b32.xlu0 %v7420, 64
        %v7514 = vpop.permute.xlu0 %7513
        %7517 = vrot.lane.b32.xlu0 %v7430, 80
        %v7518 = vpop.permute.xlu0 %7517
        %7521 = vrot.lane.b32.xlu0 %v7427, 96
        %v7522 = vpop.permute.xlu0 %7521
        %7525 = vrot.lane.b32.xlu0 %v7431, 112
        %v7526 = vpop.permute.xlu0 %7525
        %7529 = vrot.lane.b32.xlu0 %v7496, 16
        %v7530 = vpop.permute.xlu0 %7529
        %7533 = vrot.lane.b32.xlu0 %v7479, 32
        %v7534 = vpop.permute.xlu0 %7533
        %7537 = vrot.lane.b32.xlu0 %v7497, 48
        %v7538 = vpop.permute.xlu0 %7537
        %7541 = vrot.lane.b32.xlu0 %v7488, 64
        %v7542 = vpop.permute.xlu0 %7541
        %7545 = vrot.lane.b32.xlu0 %v7498, 80
        %v7546 = vpop.permute.xlu0 %7545
        %7549 = vrot.lane.b32.xlu0 %v7495, 96
        %v7550 = vpop.permute.xlu0 %7549
        %7553 = vrot.lane.b32.xlu0 %v7499, 112
        %v7554 = vpop.permute.xlu0 %7553
        %v7556 = vsel %vm453, %v7404, %v7502
        %v7557 = vsel %vm455, %v7556, %v7506
        %v7558 = vsel %vm457, %v7557, %v7510
        %v7559 = vsel %vm459, %v7558, %v7514
        %v7560 = vsel %vm461, %v7559, %v7518
        %v7561 = vsel %vm463, %v7560, %v7522
        %v7562 = vsel %vm465, %v7561, %v7526
        %v7563 = vsel %vm453, %v7472, %v7530
        %v7564 = vsel %vm455, %v7563, %v7534
        %v7565 = vsel %vm457, %v7564, %v7538
        %v7566 = vsel %vm459, %v7565, %v7542
        %v7567 = vsel %vm461, %v7566, %v7546
        %v7568 = vsel %vm463, %v7567, %v7550
        %v7569 = vsel %vm465, %v7568, %v7554
        %7578 = vrot.lane.b32.xlu0 %v7356, 127
        %v7579 = vpop.permute.xlu0 %7578
        %7580 = vrot.lane.b32.xlu0 %v7357, 127
        %v7581 = vpop.permute.xlu0 %7580
        %7582 = vrot.lane.b32.xlu0 %v7358, 127
        %v7583 = vpop.permute.xlu0 %7582
        %7584 = vrot.lane.b32.xlu0 %v7359, 127
        %v7585 = vpop.permute.xlu0 %7584
        %7586 = vrot.lane.b32.xlu0 %v7360, 127
        %v7587 = vpop.permute.xlu0 %7586
        %7588 = vrot.lane.b32.xlu0 %v7361, 127
        %v7589 = vpop.permute.xlu0 %7588
        %7590 = vrot.lane.b32.xlu0 %v7362, 127
        %v7591 = vpop.permute.xlu0 %7590
        %7592 = vrot.lane.b32.xlu0 %v7363, 127
        %v7593 = vpop.permute.xlu0 %7592
        %v7602 = vcombine.low %v7579, %v7587
        %v7603 = vcombine.high %v7579, %v7587
        %v7605 = vunpack.c.l.s4 1983009808
        %v7606 = vunpack.c.0.s8 %v7605
        %v7607 = vlaneseq
        %v7608 = vshrl.u32 %v7607, 7
        %v7609 = vsub.s32 %v7606, %v7608
        %v7610 = vrot.slane %v7602, %v7609
        %v7612 = vunpack.c.l.s4 1983009808
        %v7613 = vunpack.c.0.s8 %v7612
        %v7614 = vlaneseq
        %v7615 = vshrl.u32 %v7614, 7
        %v7616 = vsub.s32 %v7613, %v7615
        %v7617 = vrot.slane %v7603, %v7616
        %v7618 = vcombine.low %v7583, %v7591
        %v7619 = vcombine.high %v7583, %v7591
        %v7621 = vunpack.c.l.s4 1983009808
        %v7622 = vunpack.c.0.s8 %v7621
        %v7623 = vlaneseq
        %v7624 = vshrl.u32 %v7623, 7
        %v7625 = vsub.s32 %v7622, %v7624
        %v7626 = vrot.slane %v7618, %v7625
        %v7628 = vunpack.c.l.s4 1983009808
        %v7629 = vunpack.c.0.s8 %v7628
        %v7630 = vlaneseq
        %v7631 = vshrl.u32 %v7630, 7
        %v7632 = vsub.s32 %v7629, %v7631
        %v7633 = vrot.slane %v7619, %v7632
        %v7634 = vcombine.low %v7610, %v7626
        %v7635 = vcombine.high %v7610, %v7626
        %v7637 = vunpack.c.l.s4 1934713408
        %v7638 = vunpack.c.0.s8 %v7637
        %v7639 = vlaneseq
        %v7640 = vshrl.u32 %v7639, 7
        %v7641 = vsub.s32 %v7638, %v7640
        %v7642 = vrot.slane %v7634, %v7641
        %v7644 = vunpack.c.l.s4 1934713408
        %v7645 = vunpack.c.0.s8 %v7644
        %v7646 = vlaneseq
        %v7647 = vshrl.u32 %v7646, 7
        %v7648 = vsub.s32 %v7645, %v7647
        %v7649 = vrot.slane %v7635, %v7648
        %v7650 = vcombine.low %v7617, %v7633
        %v7651 = vcombine.high %v7617, %v7633
        %v7653 = vunpack.c.l.s4 1934713408
        %v7654 = vunpack.c.0.s8 %v7653
        %v7655 = vlaneseq
        %v7656 = vshrl.u32 %v7655, 7
        %v7657 = vsub.s32 %v7654, %v7656
        %v7658 = vrot.slane %v7650, %v7657
        %v7660 = vunpack.c.l.s4 1934713408
        %v7661 = vunpack.c.0.s8 %v7660
        %v7662 = vlaneseq
        %v7663 = vshrl.u32 %v7662, 7
        %v7664 = vsub.s32 %v7661, %v7663
        %v7665 = vrot.slane %v7651, %v7664
        %v7666 = vcombine.high %v7642, 0.0
        %v7667 = vcombine.high %v7649, 0.0
        %v7668 = vcombine.high %v7658, 0.0
        %v7669 = vcombine.high %v7665, 0.0
        %v7670 = vcombine.low %v7581, %v7589
        %v7671 = vcombine.high %v7581, %v7589
        %v7673 = vunpack.c.l.s4 1983009808
        %v7674 = vunpack.c.0.s8 %v7673
        %v7675 = vlaneseq
        %v7676 = vshrl.u32 %v7675, 7
        %v7677 = vsub.s32 %v7674, %v7676
        %v7678 = vrot.slane %v7670, %v7677
        %v7680 = vunpack.c.l.s4 1983009808
        %v7681 = vunpack.c.0.s8 %v7680
        %v7682 = vlaneseq
        %v7683 = vshrl.u32 %v7682, 7
        %v7684 = vsub.s32 %v7681, %v7683
        %v7685 = vrot.slane %v7671, %v7684
        %v7686 = vcombine.low %v7585, %v7593
        %v7687 = vcombine.high %v7585, %v7593
        %v7689 = vunpack.c.l.s4 1983009808
        %v7690 = vunpack.c.0.s8 %v7689
        %v7691 = vlaneseq
        %v7692 = vshrl.u32 %v7691, 7
        %v7693 = vsub.s32 %v7690, %v7692
        %v7694 = vrot.slane %v7686, %v7693
        %v7696 = vunpack.c.l.s4 1983009808
        %v7697 = vunpack.c.0.s8 %v7696
        %v7698 = vlaneseq
        %v7699 = vshrl.u32 %v7698, 7
        %v7700 = vsub.s32 %v7697, %v7699
        %v7701 = vrot.slane %v7687, %v7700
        %v7702 = vcombine.low %v7678, %v7694
        %v7703 = vcombine.high %v7678, %v7694
        %v7705 = vunpack.c.l.s4 1934713408
        %v7706 = vunpack.c.0.s8 %v7705
        %v7707 = vlaneseq
        %v7708 = vshrl.u32 %v7707, 7
        %v7709 = vsub.s32 %v7706, %v7708
        %v7710 = vrot.slane %v7702, %v7709
        %v7712 = vunpack.c.l.s4 1934713408
        %v7713 = vunpack.c.0.s8 %v7712
        %v7714 = vlaneseq
        %v7715 = vshrl.u32 %v7714, 7
        %v7716 = vsub.s32 %v7713, %v7715
        %v7717 = vrot.slane %v7703, %v7716
        %v7718 = vcombine.low %v7685, %v7701
        %v7719 = vcombine.high %v7685, %v7701
        %v7721 = vunpack.c.l.s4 1934713408
        %v7722 = vunpack.c.0.s8 %v7721
        %v7723 = vlaneseq
        %v7724 = vshrl.u32 %v7723, 7
        %v7725 = vsub.s32 %v7722, %v7724
        %v7726 = vrot.slane %v7718, %v7725
        %v7728 = vunpack.c.l.s4 1934713408
        %v7729 = vunpack.c.0.s8 %v7728
        %v7730 = vlaneseq
        %v7731 = vshrl.u32 %v7730, 7
        %v7732 = vsub.s32 %v7729, %v7731
        %v7733 = vrot.slane %v7719, %v7732
        %v7734 = vcombine.high %v7710, 0.0
        %v7735 = vcombine.high %v7717, 0.0
        %v7736 = vcombine.high %v7726, 0.0
        %v7737 = vcombine.high %v7733, 0.0
        %7739 = vrot.lane.b32.xlu0 %v7666, 16
        %v7740 = vpop.permute.xlu0 %7739
        %7743 = vrot.lane.b32.xlu0 %v7649, 32
        %v7744 = vpop.permute.xlu0 %7743
        %7747 = vrot.lane.b32.xlu0 %v7667, 48
        %v7748 = vpop.permute.xlu0 %7747
        %7751 = vrot.lane.b32.xlu0 %v7658, 64
        %v7752 = vpop.permute.xlu0 %7751
        %7755 = vrot.lane.b32.xlu0 %v7668, 80
        %v7756 = vpop.permute.xlu0 %7755
        %7759 = vrot.lane.b32.xlu0 %v7665, 96
        %v7760 = vpop.permute.xlu0 %7759
        %7763 = vrot.lane.b32.xlu0 %v7669, 112
        %v7764 = vpop.permute.xlu0 %7763
        %7767 = vrot.lane.b32.xlu0 %v7734, 16
        %v7768 = vpop.permute.xlu0 %7767
        %7771 = vrot.lane.b32.xlu0 %v7717, 32
        %v7772 = vpop.permute.xlu0 %7771
        %7775 = vrot.lane.b32.xlu0 %v7735, 48
        %v7776 = vpop.permute.xlu0 %7775
        %7779 = vrot.lane.b32.xlu0 %v7726, 64
        %v7780 = vpop.permute.xlu0 %7779
        %7783 = vrot.lane.b32.xlu0 %v7736, 80
        %v7784 = vpop.permute.xlu0 %7783
        %7787 = vrot.lane.b32.xlu0 %v7733, 96
        %v7788 = vpop.permute.xlu0 %7787
        %7791 = vrot.lane.b32.xlu0 %v7737, 112
        %v7792 = vpop.permute.xlu0 %7791
        %v7794 = vsel %vm453, %v7642, %v7740
        %v7795 = vsel %vm455, %v7794, %v7744
        %v7796 = vsel %vm457, %v7795, %v7748
        %v7797 = vsel %vm459, %v7796, %v7752
        %v7798 = vsel %vm461, %v7797, %v7756
        %v7799 = vsel %vm463, %v7798, %v7760
        %v7800 = vsel %vm465, %v7799, %v7764
        %v7801 = vsel %vm453, %v7710, %v7768
        %v7802 = vsel %vm455, %v7801, %v7772
        %v7803 = vsel %vm457, %v7802, %v7776
        %v7804 = vsel %vm459, %v7803, %v7780
        %v7805 = vsel %vm461, %v7804, %v7784
        %v7806 = vsel %vm463, %v7805, %v7788
        %v7807 = vsel %vm465, %v7806, %v7792
        %7808 = vrot.lane.b32.xlu0 %v7356, 126
        %v7809 = vpop.permute.xlu0 %7808
        %7810 = vrot.lane.b32.xlu0 %v7357, 126
        %v7811 = vpop.permute.xlu0 %7810
        %7812 = vrot.lane.b32.xlu0 %v7358, 126
        %v7813 = vpop.permute.xlu0 %7812
        %7814 = vrot.lane.b32.xlu0 %v7359, 126
        %v7815 = vpop.permute.xlu0 %7814
        %7816 = vrot.lane.b32.xlu0 %v7360, 126
        %v7817 = vpop.permute.xlu0 %7816
        %7818 = vrot.lane.b32.xlu0 %v7361, 126
        %v7819 = vpop.permute.xlu0 %7818
        %7820 = vrot.lane.b32.xlu0 %v7362, 126
        %v7821 = vpop.permute.xlu0 %7820
        %7822 = vrot.lane.b32.xlu0 %v7363, 126
        %v7823 = vpop.permute.xlu0 %7822
        %v7832 = vcombine.low %v7809, %v7817
        %v7833 = vcombine.high %v7809, %v7817
        %v7835 = vunpack.c.l.s4 1983009808
        %v7836 = vunpack.c.0.s8 %v7835
        %v7837 = vlaneseq
        %v7838 = vshrl.u32 %v7837, 7
        %v7839 = vsub.s32 %v7836, %v7838
        %v7840 = vrot.slane %v7832, %v7839
        %v7842 = vunpack.c.l.s4 1983009808
        %v7843 = vunpack.c.0.s8 %v7842
        %v7844 = vlaneseq
        %v7845 = vshrl.u32 %v7844, 7
        %v7846 = vsub.s32 %v7843, %v7845
        %v7847 = vrot.slane %v7833, %v7846
        %v7848 = vcombine.low %v7813, %v7821
        %v7849 = vcombine.high %v7813, %v7821
        %v7851 = vunpack.c.l.s4 1983009808
        %v7852 = vunpack.c.0.s8 %v7851
        %v7853 = vlaneseq
        %v7854 = vshrl.u32 %v7853, 7
        %v7855 = vsub.s32 %v7852, %v7854
        %v7856 = vrot.slane %v7848, %v7855
        %v7858 = vunpack.c.l.s4 1983009808
        %v7859 = vunpack.c.0.s8 %v7858
        %v7860 = vlaneseq
        %v7861 = vshrl.u32 %v7860, 7
        %v7862 = vsub.s32 %v7859, %v7861
        %v7863 = vrot.slane %v7849, %v7862
        %v7864 = vcombine.low %v7840, %v7856
        %v7865 = vcombine.high %v7840, %v7856
        %v7867 = vunpack.c.l.s4 1934713408
        %v7868 = vunpack.c.0.s8 %v7867
        %v7869 = vlaneseq
        %v7870 = vshrl.u32 %v7869, 7
        %v7871 = vsub.s32 %v7868, %v7870
        %v7872 = vrot.slane %v7864, %v7871
        %v7874 = vunpack.c.l.s4 1934713408
        %v7875 = vunpack.c.0.s8 %v7874
        %v7876 = vlaneseq
        %v7877 = vshrl.u32 %v7876, 7
        %v7878 = vsub.s32 %v7875, %v7877
        %v7879 = vrot.slane %v7865, %v7878
        %v7880 = vcombine.low %v7847, %v7863
        %v7881 = vcombine.high %v7847, %v7863
        %v7883 = vunpack.c.l.s4 1934713408
        %v7884 = vunpack.c.0.s8 %v7883
        %v7885 = vlaneseq
        %v7886 = vshrl.u32 %v7885, 7
        %v7887 = vsub.s32 %v7884, %v7886
        %v7888 = vrot.slane %v7880, %v7887
        %v7890 = vunpack.c.l.s4 1934713408
        %v7891 = vunpack.c.0.s8 %v7890
        %v7892 = vlaneseq
        %v7893 = vshrl.u32 %v7892, 7
        %v7894 = vsub.s32 %v7891, %v7893
        %v7895 = vrot.slane %v7881, %v7894
        %v7896 = vcombine.high %v7872, 0.0
        %v7897 = vcombine.high %v7879, 0.0
        %v7898 = vcombine.high %v7888, 0.0
        %v7899 = vcombine.high %v7895, 0.0
        %v7900 = vcombine.low %v7811, %v7819
        %v7901 = vcombine.high %v7811, %v7819
        %v7903 = vunpack.c.l.s4 1983009808
        %v7904 = vunpack.c.0.s8 %v7903
        %v7905 = vlaneseq
        %v7906 = vshrl.u32 %v7905, 7
        %v7907 = vsub.s32 %v7904, %v7906
        %v7908 = vrot.slane %v7900, %v7907
        %v7910 = vunpack.c.l.s4 1983009808
        %v7911 = vunpack.c.0.s8 %v7910
        %v7912 = vlaneseq
        %v7913 = vshrl.u32 %v7912, 7
        %v7914 = vsub.s32 %v7911, %v7913
        %v7915 = vrot.slane %v7901, %v7914
        %v7916 = vcombine.low %v7815, %v7823
        %v7917 = vcombine.high %v7815, %v7823
        %v7919 = vunpack.c.l.s4 1983009808
        %v7920 = vunpack.c.0.s8 %v7919
        %v7921 = vlaneseq
        %v7922 = vshrl.u32 %v7921, 7
        %v7923 = vsub.s32 %v7920, %v7922
        %v7924 = vrot.slane %v7916, %v7923
        %v7926 = vunpack.c.l.s4 1983009808
        %v7927 = vunpack.c.0.s8 %v7926
        %v7928 = vlaneseq
        %v7929 = vshrl.u32 %v7928, 7
        %v7930 = vsub.s32 %v7927, %v7929
        %v7931 = vrot.slane %v7917, %v7930
        %v7932 = vcombine.low %v7908, %v7924
        %v7933 = vcombine.high %v7908, %v7924
        %v7935 = vunpack.c.l.s4 1934713408
        %v7936 = vunpack.c.0.s8 %v7935
        %v7937 = vlaneseq
        %v7938 = vshrl.u32 %v7937, 7
        %v7939 = vsub.s32 %v7936, %v7938
        %v7940 = vrot.slane %v7932, %v7939
        %v7942 = vunpack.c.l.s4 1934713408
        %v7943 = vunpack.c.0.s8 %v7942
        %v7944 = vlaneseq
        %v7945 = vshrl.u32 %v7944, 7
        %v7946 = vsub.s32 %v7943, %v7945
        %v7947 = vrot.slane %v7933, %v7946
        %v7948 = vcombine.low %v7915, %v7931
        %v7949 = vcombine.high %v7915, %v7931
        %v7951 = vunpack.c.l.s4 1934713408
        %v7952 = vunpack.c.0.s8 %v7951
        %v7953 = vlaneseq
        %v7954 = vshrl.u32 %v7953, 7
        %v7955 = vsub.s32 %v7952, %v7954
        %v7956 = vrot.slane %v7948, %v7955
        %v7958 = vunpack.c.l.s4 1934713408
        %v7959 = vunpack.c.0.s8 %v7958
        %v7960 = vlaneseq
        %v7961 = vshrl.u32 %v7960, 7
        %v7962 = vsub.s32 %v7959, %v7961
        %v7963 = vrot.slane %v7949, %v7962
        %v7964 = vcombine.high %v7940, 0.0
        %v7965 = vcombine.high %v7947, 0.0
        %v7966 = vcombine.high %v7956, 0.0
        %v7967 = vcombine.high %v7963, 0.0
        %7969 = vrot.lane.b32.xlu0 %v7896, 16
        %v7970 = vpop.permute.xlu0 %7969
        %7973 = vrot.lane.b32.xlu0 %v7879, 32
        %v7974 = vpop.permute.xlu0 %7973
        %7977 = vrot.lane.b32.xlu0 %v7897, 48
        %v7978 = vpop.permute.xlu0 %7977
        %7981 = vrot.lane.b32.xlu0 %v7888, 64
        %v7982 = vpop.permute.xlu0 %7981
        %7985 = vrot.lane.b32.xlu0 %v7898, 80
        %v7986 = vpop.permute.xlu0 %7985
        %7989 = vrot.lane.b32.xlu0 %v7895, 96
        %v7990 = vpop.permute.xlu0 %7989
        %7993 = vrot.lane.b32.xlu0 %v7899, 112
        %v7994 = vpop.permute.xlu0 %7993
        %7997 = vrot.lane.b32.xlu0 %v7964, 16
        %v7998 = vpop.permute.xlu0 %7997
        %8001 = vrot.lane.b32.xlu0 %v7947, 32
        %v8002 = vpop.permute.xlu0 %8001
        %8005 = vrot.lane.b32.xlu0 %v7965, 48
        %v8006 = vpop.permute.xlu0 %8005
        %8009 = vrot.lane.b32.xlu0 %v7956, 64
        %v8010 = vpop.permute.xlu0 %8009
        %8013 = vrot.lane.b32.xlu0 %v7966, 80
        %v8014 = vpop.permute.xlu0 %8013
        %8017 = vrot.lane.b32.xlu0 %v7963, 96
        %v8018 = vpop.permute.xlu0 %8017
        %8021 = vrot.lane.b32.xlu0 %v7967, 112
        %v8022 = vpop.permute.xlu0 %8021
        %v8024 = vsel %vm453, %v7872, %v7970
        %v8025 = vsel %vm455, %v8024, %v7974
        %v8026 = vsel %vm457, %v8025, %v7978
        %v8027 = vsel %vm459, %v8026, %v7982
        %v8028 = vsel %vm461, %v8027, %v7986
        %v8029 = vsel %vm463, %v8028, %v7990
        %v8030 = vsel %vm465, %v8029, %v7994
        %v8031 = vsel %vm453, %v7940, %v7998
        %v8032 = vsel %vm455, %v8031, %v8002
        %v8033 = vsel %vm457, %v8032, %v8006
        %v8034 = vsel %vm459, %v8033, %v8010
        %v8035 = vsel %vm461, %v8034, %v8014
        %v8036 = vsel %vm463, %v8035, %v8018
        %v8037 = vsel %vm465, %v8036, %v8022
        %v8038 = vld [vmem:[#allocation2 + $0x1] sm:$0xff]
        %v8039 = vld [vmem:[#allocation2 + $0x9] sm:$0xff]
        %v8040 = vld [vmem:[#allocation2 + $0x19] sm:$0xff]
        %v8041 = vld [vmem:[#allocation2 + $0x21] sm:$0xff]
        %v8042 = vld [vmem:[#allocation2 + $0x31] sm:$0xff]
        %v8043 = vld [vmem:[#allocation2 + $0x39] sm:$0xff]
        %v8044 = vld [vmem:[#allocation2 + $0x49] sm:$0xff]
        %v8045 = vld [vmem:[#allocation2 + $0x51] sm:$0xff]
        %v8046 = vcombine.low %v8038, %v8042
        %v8047 = vcombine.high %v8038, %v8042
        %v8049 = vunpack.c.l.s4 1983009808
        %v8050 = vunpack.c.0.s8 %v8049
        %v8051 = vlaneseq
        %v8052 = vshrl.u32 %v8051, 7
        %v8053 = vsub.s32 %v8050, %v8052
        %v8054 = vrot.slane %v8046, %v8053
        %v8056 = vunpack.c.l.s4 1983009808
        %v8057 = vunpack.c.0.s8 %v8056
        %v8058 = vlaneseq
        %v8059 = vshrl.u32 %v8058, 7
        %v8060 = vsub.s32 %v8057, %v8059
        %v8061 = vrot.slane %v8047, %v8060
        %v8062 = vcombine.low %v8040, %v8044
        %v8063 = vcombine.high %v8040, %v8044
        %v8065 = vunpack.c.l.s4 1983009808
        %v8066 = vunpack.c.0.s8 %v8065
        %v8067 = vlaneseq
        %v8068 = vshrl.u32 %v8067, 7
        %v8069 = vsub.s32 %v8066, %v8068
        %v8070 = vrot.slane %v8062, %v8069
        %v8072 = vunpack.c.l.s4 1983009808
        %v8073 = vunpack.c.0.s8 %v8072
        %v8074 = vlaneseq
        %v8075 = vshrl.u32 %v8074, 7
        %v8076 = vsub.s32 %v8073, %v8075
        %v8077 = vrot.slane %v8063, %v8076
        %v8078 = vcombine.low %v8054, %v8070
        %v8079 = vcombine.high %v8054, %v8070
        %v8081 = vunpack.c.l.s4 1934713408
        %v8082 = vunpack.c.0.s8 %v8081
        %v8083 = vlaneseq
        %v8084 = vshrl.u32 %v8083, 7
        %v8085 = vsub.s32 %v8082, %v8084
        %v8086 = vrot.slane %v8078, %v8085
        %v8088 = vunpack.c.l.s4 1934713408
        %v8089 = vunpack.c.0.s8 %v8088
        %v8090 = vlaneseq
        %v8091 = vshrl.u32 %v8090, 7
        %v8092 = vsub.s32 %v8089, %v8091
        %v8093 = vrot.slane %v8079, %v8092
        %v8094 = vcombine.low %v8061, %v8077
        %v8095 = vcombine.high %v8061, %v8077
        %v8097 = vunpack.c.l.s4 1934713408
        %v8098 = vunpack.c.0.s8 %v8097
        %v8099 = vlaneseq
        %v8100 = vshrl.u32 %v8099, 7
        %v8101 = vsub.s32 %v8098, %v8100
        %v8102 = vrot.slane %v8094, %v8101
        %v8104 = vunpack.c.l.s4 1934713408
        %v8105 = vunpack.c.0.s8 %v8104
        %v8106 = vlaneseq
        %v8107 = vshrl.u32 %v8106, 7
        %v8108 = vsub.s32 %v8105, %v8107
        %v8109 = vrot.slane %v8095, %v8108
        %v8110 = vcombine.high %v8086, 0.0
        %v8111 = vcombine.high %v8093, 0.0
        %v8112 = vcombine.high %v8102, 0.0
        %v8113 = vcombine.high %v8109, 0.0
        %v8114 = vcombine.low %v8039, %v8043
        %v8115 = vcombine.high %v8039, %v8043
        %v8117 = vunpack.c.l.s4 1983009808
        %v8118 = vunpack.c.0.s8 %v8117
        %v8119 = vlaneseq
        %v8120 = vshrl.u32 %v8119, 7
        %v8121 = vsub.s32 %v8118, %v8120
        %v8122 = vrot.slane %v8114, %v8121
        %v8124 = vunpack.c.l.s4 1983009808
        %v8125 = vunpack.c.0.s8 %v8124
        %v8126 = vlaneseq
        %v8127 = vshrl.u32 %v8126, 7
        %v8128 = vsub.s32 %v8125, %v8127
        %v8129 = vrot.slane %v8115, %v8128
        %v8130 = vcombine.low %v8041, %v8045
        %v8131 = vcombine.high %v8041, %v8045
        %v8133 = vunpack.c.l.s4 1983009808
        %v8134 = vunpack.c.0.s8 %v8133
        %v8135 = vlaneseq
        %v8136 = vshrl.u32 %v8135, 7
        %v8137 = vsub.s32 %v8134, %v8136
        %v8138 = vrot.slane %v8130, %v8137
        %v8140 = vunpack.c.l.s4 1983009808
        %v8141 = vunpack.c.0.s8 %v8140
        %v8142 = vlaneseq
        %v8143 = vshrl.u32 %v8142, 7
        %v8144 = vsub.s32 %v8141, %v8143
        %v8145 = vrot.slane %v8131, %v8144
        %v8146 = vcombine.low %v8122, %v8138
        %v8147 = vcombine.high %v8122, %v8138
        %v8149 = vunpack.c.l.s4 1934713408
        %v8150 = vunpack.c.0.s8 %v8149
        %v8151 = vlaneseq
        %v8152 = vshrl.u32 %v8151, 7
        %v8153 = vsub.s32 %v8150, %v8152
        %v8154 = vrot.slane %v8146, %v8153
        %v8156 = vunpack.c.l.s4 1934713408
        %v8157 = vunpack.c.0.s8 %v8156
        %v8158 = vlaneseq
        %v8159 = vshrl.u32 %v8158, 7
        %v8160 = vsub.s32 %v8157, %v8159
        %v8161 = vrot.slane %v8147, %v8160
        %v8162 = vcombine.low %v8129, %v8145
        %v8163 = vcombine.high %v8129, %v8145
        %v8165 = vunpack.c.l.s4 1934713408
        %v8166 = vunpack.c.0.s8 %v8165
        %v8167 = vlaneseq
        %v8168 = vshrl.u32 %v8167, 7
        %v8169 = vsub.s32 %v8166, %v8168
        %v8170 = vrot.slane %v8162, %v8169
        %v8172 = vunpack.c.l.s4 1934713408
        %v8173 = vunpack.c.0.s8 %v8172
        %v8174 = vlaneseq
        %v8175 = vshrl.u32 %v8174, 7
        %v8176 = vsub.s32 %v8173, %v8175
        %v8177 = vrot.slane %v8163, %v8176
        %v8178 = vcombine.high %v8154, 0.0
        %v8179 = vcombine.high %v8161, 0.0
        %v8180 = vcombine.high %v8170, 0.0
        %v8181 = vcombine.high %v8177, 0.0
        %8183 = vrot.lane.b32.xlu0 %v8110, 16
        %v8184 = vpop.permute.xlu0 %8183
        %8187 = vrot.lane.b32.xlu0 %v8093, 32
        %v8188 = vpop.permute.xlu0 %8187
        %8191 = vrot.lane.b32.xlu0 %v8111, 48
        %v8192 = vpop.permute.xlu0 %8191
        %8195 = vrot.lane.b32.xlu0 %v8102, 64
        %v8196 = vpop.permute.xlu0 %8195
        %8199 = vrot.lane.b32.xlu0 %v8112, 80
        %v8200 = vpop.permute.xlu0 %8199
        %8203 = vrot.lane.b32.xlu0 %v8109, 96
        %v8204 = vpop.permute.xlu0 %8203
        %8207 = vrot.lane.b32.xlu0 %v8113, 112
        %v8208 = vpop.permute.xlu0 %8207
        %8211 = vrot.lane.b32.xlu0 %v8178, 16
        %v8212 = vpop.permute.xlu0 %8211
        %8215 = vrot.lane.b32.xlu0 %v8161, 32
        %v8216 = vpop.permute.xlu0 %8215
        %8219 = vrot.lane.b32.xlu0 %v8179, 48
        %v8220 = vpop.permute.xlu0 %8219
        %8223 = vrot.lane.b32.xlu0 %v8170, 64
        %v8224 = vpop.permute.xlu0 %8223
        %8227 = vrot.lane.b32.xlu0 %v8180, 80
        %v8228 = vpop.permute.xlu0 %8227
        %8231 = vrot.lane.b32.xlu0 %v8177, 96
        %v8232 = vpop.permute.xlu0 %8231
        %8235 = vrot.lane.b32.xlu0 %v8181, 112
        %v8236 = vpop.permute.xlu0 %8235
        %v8238 = vsel %vm453, %v8086, %v8184
        %v8239 = vsel %vm455, %v8238, %v8188
        %v8240 = vsel %vm457, %v8239, %v8192
        %v8241 = vsel %vm459, %v8240, %v8196
        %v8242 = vsel %vm461, %v8241, %v8200
        %v8243 = vsel %vm463, %v8242, %v8204
        %v8244 = vsel %vm465, %v8243, %v8208
        %v8245 = vsel %vm453, %v8154, %v8212
        %v8246 = vsel %vm455, %v8245, %v8216
        %v8247 = vsel %vm457, %v8246, %v8220
        %v8248 = vsel %vm459, %v8247, %v8224
        %v8249 = vsel %vm461, %v8248, %v8228
        %v8250 = vsel %vm463, %v8249, %v8232
        %v8251 = vsel %vm465, %v8250, %v8236
        %8260 = vrot.lane.b32.xlu0 %v8038, 127
        %v8261 = vpop.permute.xlu0 %8260
        %8262 = vrot.lane.b32.xlu0 %v8039, 127
        %v8263 = vpop.permute.xlu0 %8262
        %8264 = vrot.lane.b32.xlu0 %v8040, 127
        %v8265 = vpop.permute.xlu0 %8264
        %8266 = vrot.lane.b32.xlu0 %v8041, 127
        %v8267 = vpop.permute.xlu0 %8266
        %8268 = vrot.lane.b32.xlu0 %v8042, 127
        %v8269 = vpop.permute.xlu0 %8268
        %8270 = vrot.lane.b32.xlu0 %v8043, 127
        %v8271 = vpop.permute.xlu0 %8270
        %8272 = vrot.lane.b32.xlu0 %v8044, 127
        %v8273 = vpop.permute.xlu0 %8272
        %8274 = vrot.lane.b32.xlu0 %v8045, 127
        %v8275 = vpop.permute.xlu0 %8274
        %v8284 = vcombine.low %v8261, %v8269
        %v8285 = vcombine.high %v8261, %v8269
        %v8287 = vunpack.c.l.s4 1983009808
        %v8288 = vunpack.c.0.s8 %v8287
        %v8289 = vlaneseq
        %v8290 = vshrl.u32 %v8289, 7
        %v8291 = vsub.s32 %v8288, %v8290
        %v8292 = vrot.slane %v8284, %v8291
        %v8294 = vunpack.c.l.s4 1983009808
        %v8295 = vunpack.c.0.s8 %v8294
        %v8296 = vlaneseq
        %v8297 = vshrl.u32 %v8296, 7
        %v8298 = vsub.s32 %v8295, %v8297
        %v8299 = vrot.slane %v8285, %v8298
        %v8300 = vcombine.low %v8265, %v8273
        %v8301 = vcombine.high %v8265, %v8273
        %v8303 = vunpack.c.l.s4 1983009808
        %v8304 = vunpack.c.0.s8 %v8303
        %v8305 = vlaneseq
        %v8306 = vshrl.u32 %v8305, 7
        %v8307 = vsub.s32 %v8304, %v8306
        %v8308 = vrot.slane %v8300, %v8307
        %v8310 = vunpack.c.l.s4 1983009808
        %v8311 = vunpack.c.0.s8 %v8310
        %v8312 = vlaneseq
        %v8313 = vshrl.u32 %v8312, 7
        %v8314 = vsub.s32 %v8311, %v8313
        %v8315 = vrot.slane %v8301, %v8314
        %v8316 = vcombine.low %v8292, %v8308
        %v8317 = vcombine.high %v8292, %v8308
        %v8319 = vunpack.c.l.s4 1934713408
        %v8320 = vunpack.c.0.s8 %v8319
        %v8321 = vlaneseq
        %v8322 = vshrl.u32 %v8321, 7
        %v8323 = vsub.s32 %v8320, %v8322
        %v8324 = vrot.slane %v8316, %v8323
        %v8326 = vunpack.c.l.s4 1934713408
        %v8327 = vunpack.c.0.s8 %v8326
        %v8328 = vlaneseq
        %v8329 = vshrl.u32 %v8328, 7
        %v8330 = vsub.s32 %v8327, %v8329
        %v8331 = vrot.slane %v8317, %v8330
        %v8332 = vcombine.low %v8299, %v8315
        %v8333 = vcombine.high %v8299, %v8315
        %v8335 = vunpack.c.l.s4 1934713408
        %v8336 = vunpack.c.0.s8 %v8335
        %v8337 = vlaneseq
        %v8338 = vshrl.u32 %v8337, 7
        %v8339 = vsub.s32 %v8336, %v8338
        %v8340 = vrot.slane %v8332, %v8339
        %v8342 = vunpack.c.l.s4 1934713408
        %v8343 = vunpack.c.0.s8 %v8342
        %v8344 = vlaneseq
        %v8345 = vshrl.u32 %v8344, 7
        %v8346 = vsub.s32 %v8343, %v8345
        %v8347 = vrot.slane %v8333, %v8346
        %v8348 = vcombine.high %v8324, 0.0
        %v8349 = vcombine.high %v8331, 0.0
        %v8350 = vcombine.high %v8340, 0.0
        %v8351 = vcombine.high %v8347, 0.0
        %v8352 = vcombine.low %v8263, %v8271
        %v8353 = vcombine.high %v8263, %v8271
        %v8355 = vunpack.c.l.s4 1983009808
        %v8356 = vunpack.c.0.s8 %v8355
        %v8357 = vlaneseq
        %v8358 = vshrl.u32 %v8357, 7
        %v8359 = vsub.s32 %v8356, %v8358
        %v8360 = vrot.slane %v8352, %v8359
        %v8362 = vunpack.c.l.s4 1983009808
        %v8363 = vunpack.c.0.s8 %v8362
        %v8364 = vlaneseq
        %v8365 = vshrl.u32 %v8364, 7
        %v8366 = vsub.s32 %v8363, %v8365
        %v8367 = vrot.slane %v8353, %v8366
        %v8368 = vcombine.low %v8267, %v8275
        %v8369 = vcombine.high %v8267, %v8275
        %v8371 = vunpack.c.l.s4 1983009808
        %v8372 = vunpack.c.0.s8 %v8371
        %v8373 = vlaneseq
        %v8374 = vshrl.u32 %v8373, 7
        %v8375 = vsub.s32 %v8372, %v8374
        %v8376 = vrot.slane %v8368, %v8375
        %v8378 = vunpack.c.l.s4 1983009808
        %v8379 = vunpack.c.0.s8 %v8378
        %v8380 = vlaneseq
        %v8381 = vshrl.u32 %v8380, 7
        %v8382 = vsub.s32 %v8379, %v8381
        %v8383 = vrot.slane %v8369, %v8382
        %v8384 = vcombine.low %v8360, %v8376
        %v8385 = vcombine.high %v8360, %v8376
        %v8387 = vunpack.c.l.s4 1934713408
        %v8388 = vunpack.c.0.s8 %v8387
        %v8389 = vlaneseq
        %v8390 = vshrl.u32 %v8389, 7
        %v8391 = vsub.s32 %v8388, %v8390
        %v8392 = vrot.slane %v8384, %v8391
        %v8394 = vunpack.c.l.s4 1934713408
        %v8395 = vunpack.c.0.s8 %v8394
        %v8396 = vlaneseq
        %v8397 = vshrl.u32 %v8396, 7
        %v8398 = vsub.s32 %v8395, %v8397
        %v8399 = vrot.slane %v8385, %v8398
        %v8400 = vcombine.low %v8367, %v8383
        %v8401 = vcombine.high %v8367, %v8383
        %v8403 = vunpack.c.l.s4 1934713408
        %v8404 = vunpack.c.0.s8 %v8403
        %v8405 = vlaneseq
        %v8406 = vshrl.u32 %v8405, 7
        %v8407 = vsub.s32 %v8404, %v8406
        %v8408 = vrot.slane %v8400, %v8407
        %v8410 = vunpack.c.l.s4 1934713408
        %v8411 = vunpack.c.0.s8 %v8410
        %v8412 = vlaneseq
        %v8413 = vshrl.u32 %v8412, 7
        %v8414 = vsub.s32 %v8411, %v8413
        %v8415 = vrot.slane %v8401, %v8414
        %v8416 = vcombine.high %v8392, 0.0
        %v8417 = vcombine.high %v8399, 0.0
        %v8418 = vcombine.high %v8408, 0.0
        %v8419 = vcombine.high %v8415, 0.0
        %8421 = vrot.lane.b32.xlu0 %v8348, 16
        %v8422 = vpop.permute.xlu0 %8421
        %8425 = vrot.lane.b32.xlu0 %v8331, 32
        %v8426 = vpop.permute.xlu0 %8425
        %8429 = vrot.lane.b32.xlu0 %v8349, 48
        %v8430 = vpop.permute.xlu0 %8429
        %8433 = vrot.lane.b32.xlu0 %v8340, 64
        %v8434 = vpop.permute.xlu0 %8433
        %8437 = vrot.lane.b32.xlu0 %v8350, 80
        %v8438 = vpop.permute.xlu0 %8437
        %8441 = vrot.lane.b32.xlu0 %v8347, 96
        %v8442 = vpop.permute.xlu0 %8441
        %8445 = vrot.lane.b32.xlu0 %v8351, 112
        %v8446 = vpop.permute.xlu0 %8445
        %8449 = vrot.lane.b32.xlu0 %v8416, 16
        %v8450 = vpop.permute.xlu0 %8449
        %8453 = vrot.lane.b32.xlu0 %v8399, 32
        %v8454 = vpop.permute.xlu0 %8453
        %8457 = vrot.lane.b32.xlu0 %v8417, 48
        %v8458 = vpop.permute.xlu0 %8457
        %8461 = vrot.lane.b32.xlu0 %v8408, 64
        %v8462 = vpop.permute.xlu0 %8461
        %8465 = vrot.lane.b32.xlu0 %v8418, 80
        %v8466 = vpop.permute.xlu0 %8465
        %8469 = vrot.lane.b32.xlu0 %v8415, 96
        %v8470 = vpop.permute.xlu0 %8469
        %8473 = vrot.lane.b32.xlu0 %v8419, 112
        %v8474 = vpop.permute.xlu0 %8473
        %v8476 = vsel %vm453, %v8324, %v8422
        %v8477 = vsel %vm455, %v8476, %v8426
        %v8478 = vsel %vm457, %v8477, %v8430
        %v8479 = vsel %vm459, %v8478, %v8434
        %v8480 = vsel %vm461, %v8479, %v8438
        %v8481 = vsel %vm463, %v8480, %v8442
        %v8482 = vsel %vm465, %v8481, %v8446
        %v8483 = vsel %vm453, %v8392, %v8450
        %v8484 = vsel %vm455, %v8483, %v8454
        %v8485 = vsel %vm457, %v8484, %v8458
        %v8486 = vsel %vm459, %v8485, %v8462
        %v8487 = vsel %vm461, %v8486, %v8466
        %v8488 = vsel %vm463, %v8487, %v8470
        %v8489 = vsel %vm465, %v8488, %v8474
        %8490 = vrot.lane.b32.xlu0 %v8038, 126
        %v8491 = vpop.permute.xlu0 %8490
        %8492 = vrot.lane.b32.xlu0 %v8039, 126
        %v8493 = vpop.permute.xlu0 %8492
        %8494 = vrot.lane.b32.xlu0 %v8040, 126
        %v8495 = vpop.permute.xlu0 %8494
        %8496 = vrot.lane.b32.xlu0 %v8041, 126
        %v8497 = vpop.permute.xlu0 %8496
        %8498 = vrot.lane.b32.xlu0 %v8042, 126
        %v8499 = vpop.permute.xlu0 %8498
        %8500 = vrot.lane.b32.xlu0 %v8043, 126
        %v8501 = vpop.permute.xlu0 %8500
        %8502 = vrot.lane.b32.xlu0 %v8044, 126
        %v8503 = vpop.permute.xlu0 %8502
        %8504 = vrot.lane.b32.xlu0 %v8045, 126
        %v8505 = vpop.permute.xlu0 %8504
        %v8514 = vcombine.low %v8491, %v8499
        %v8515 = vcombine.high %v8491, %v8499
        %v8517 = vunpack.c.l.s4 1983009808
        %v8518 = vunpack.c.0.s8 %v8517
        %v8519 = vlaneseq
        %v8520 = vshrl.u32 %v8519, 7
        %v8521 = vsub.s32 %v8518, %v8520
        %v8522 = vrot.slane %v8514, %v8521
        %v8524 = vunpack.c.l.s4 1983009808
        %v8525 = vunpack.c.0.s8 %v8524
        %v8526 = vlaneseq
        %v8527 = vshrl.u32 %v8526, 7
        %v8528 = vsub.s32 %v8525, %v8527
        %v8529 = vrot.slane %v8515, %v8528
        %v8530 = vcombine.low %v8495, %v8503
        %v8531 = vcombine.high %v8495, %v8503
        %v8533 = vunpack.c.l.s4 1983009808
        %v8534 = vunpack.c.0.s8 %v8533
        %v8535 = vlaneseq
        %v8536 = vshrl.u32 %v8535, 7
        %v8537 = vsub.s32 %v8534, %v8536
        %v8538 = vrot.slane %v8530, %v8537
        %v8540 = vunpack.c.l.s4 1983009808
        %v8541 = vunpack.c.0.s8 %v8540
        %v8542 = vlaneseq
        %v8543 = vshrl.u32 %v8542, 7
        %v8544 = vsub.s32 %v8541, %v8543
        %v8545 = vrot.slane %v8531, %v8544
        %v8546 = vcombine.low %v8522, %v8538
        %v8547 = vcombine.high %v8522, %v8538
        %v8549 = vunpack.c.l.s4 1934713408
        %v8550 = vunpack.c.0.s8 %v8549
        %v8551 = vlaneseq
        %v8552 = vshrl.u32 %v8551, 7
        %v8553 = vsub.s32 %v8550, %v8552
        %v8554 = vrot.slane %v8546, %v8553
        %v8556 = vunpack.c.l.s4 1934713408
        %v8557 = vunpack.c.0.s8 %v8556
        %v8558 = vlaneseq
        %v8559 = vshrl.u32 %v8558, 7
        %v8560 = vsub.s32 %v8557, %v8559
        %v8561 = vrot.slane %v8547, %v8560
        %v8562 = vcombine.low %v8529, %v8545
        %v8563 = vcombine.high %v8529, %v8545
        %v8565 = vunpack.c.l.s4 1934713408
        %v8566 = vunpack.c.0.s8 %v8565
        %v8567 = vlaneseq
        %v8568 = vshrl.u32 %v8567, 7
        %v8569 = vsub.s32 %v8566, %v8568
        %v8570 = vrot.slane %v8562, %v8569
        %v8572 = vunpack.c.l.s4 1934713408
        %v8573 = vunpack.c.0.s8 %v8572
        %v8574 = vlaneseq
        %v8575 = vshrl.u32 %v8574, 7
        %v8576 = vsub.s32 %v8573, %v8575
        %v8577 = vrot.slane %v8563, %v8576
        %v8578 = vcombine.high %v8554, 0.0
        %v8579 = vcombine.high %v8561, 0.0
        %v8580 = vcombine.high %v8570, 0.0
        %v8581 = vcombine.high %v8577, 0.0
        %v8582 = vcombine.low %v8493, %v8501
        %v8583 = vcombine.high %v8493, %v8501
        %v8585 = vunpack.c.l.s4 1983009808
        %v8586 = vunpack.c.0.s8 %v8585
        %v8587 = vlaneseq
        %v8588 = vshrl.u32 %v8587, 7
        %v8589 = vsub.s32 %v8586, %v8588
        %v8590 = vrot.slane %v8582, %v8589
        %v8592 = vunpack.c.l.s4 1983009808
        %v8593 = vunpack.c.0.s8 %v8592
        %v8594 = vlaneseq
        %v8595 = vshrl.u32 %v8594, 7
        %v8596 = vsub.s32 %v8593, %v8595
        %v8597 = vrot.slane %v8583, %v8596
        %v8598 = vcombine.low %v8497, %v8505
        %v8599 = vcombine.high %v8497, %v8505
        %v8601 = vunpack.c.l.s4 1983009808
        %v8602 = vunpack.c.0.s8 %v8601
        %v8603 = vlaneseq
        %v8604 = vshrl.u32 %v8603, 7
        %v8605 = vsub.s32 %v8602, %v8604
        %v8606 = vrot.slane %v8598, %v8605
        %v8608 = vunpack.c.l.s4 1983009808
        %v8609 = vunpack.c.0.s8 %v8608
        %v8610 = vlaneseq
        %v8611 = vshrl.u32 %v8610, 7
        %v8612 = vsub.s32 %v8609, %v8611
        %v8613 = vrot.slane %v8599, %v8612
        %v8614 = vcombine.low %v8590, %v8606
        %v8615 = vcombine.high %v8590, %v8606
        %v8617 = vunpack.c.l.s4 1934713408
        %v8618 = vunpack.c.0.s8 %v8617
        %v8619 = vlaneseq
        %v8620 = vshrl.u32 %v8619, 7
        %v8621 = vsub.s32 %v8618, %v8620
        %v8622 = vrot.slane %v8614, %v8621
        %v8624 = vunpack.c.l.s4 1934713408
        %v8625 = vunpack.c.0.s8 %v8624
        %v8626 = vlaneseq
        %v8627 = vshrl.u32 %v8626, 7
        %v8628 = vsub.s32 %v8625, %v8627
        %v8629 = vrot.slane %v8615, %v8628
        %v8630 = vcombine.low %v8597, %v8613
        %v8631 = vcombine.high %v8597, %v8613
        %v8633 = vunpack.c.l.s4 1934713408
        %v8634 = vunpack.c.0.s8 %v8633
        %v8635 = vlaneseq
        %v8636 = vshrl.u32 %v8635, 7
        %v8637 = vsub.s32 %v8634, %v8636
        %v8638 = vrot.slane %v8630, %v8637
        %v8640 = vunpack.c.l.s4 1934713408
        %v8641 = vunpack.c.0.s8 %v8640
        %v8642 = vlaneseq
        %v8643 = vshrl.u32 %v8642, 7
        %v8644 = vsub.s32 %v8641, %v8643
        %v8645 = vrot.slane %v8631, %v8644
        %v8646 = vcombine.high %v8622, 0.0
        %v8647 = vcombine.high %v8629, 0.0
        %v8648 = vcombine.high %v8638, 0.0
        %v8649 = vcombine.high %v8645, 0.0
        %8651 = vrot.lane.b32.xlu0 %v8578, 16
        %v8652 = vpop.permute.xlu0 %8651
        %8655 = vrot.lane.b32.xlu0 %v8561, 32
        %v8656 = vpop.permute.xlu0 %8655
        %8659 = vrot.lane.b32.xlu0 %v8579, 48
        %v8660 = vpop.permute.xlu0 %8659
        %8663 = vrot.lane.b32.xlu0 %v8570, 64
        %v8664 = vpop.permute.xlu0 %8663
        %8667 = vrot.lane.b32.xlu0 %v8580, 80
        %v8668 = vpop.permute.xlu0 %8667
        %8671 = vrot.lane.b32.xlu0 %v8577, 96
        %v8672 = vpop.permute.xlu0 %8671
        %8675 = vrot.lane.b32.xlu0 %v8581, 112
        %v8676 = vpop.permute.xlu0 %8675
        %8679 = vrot.lane.b32.xlu0 %v8646, 16
        %v8680 = vpop.permute.xlu0 %8679
        %8683 = vrot.lane.b32.xlu0 %v8629, 32
        %v8684 = vpop.permute.xlu0 %8683
        %8687 = vrot.lane.b32.xlu0 %v8647, 48
        %v8688 = vpop.permute.xlu0 %8687
        %8691 = vrot.lane.b32.xlu0 %v8638, 64
        %v8692 = vpop.permute.xlu0 %8691
        %8695 = vrot.lane.b32.xlu0 %v8648, 80
        %v8696 = vpop.permute.xlu0 %8695
        %8699 = vrot.lane.b32.xlu0 %v8645, 96
        %v8700 = vpop.permute.xlu0 %8699
        %8703 = vrot.lane.b32.xlu0 %v8649, 112
        %v8704 = vpop.permute.xlu0 %8703
        %v8706 = vsel %vm453, %v8554, %v8652
        %v8707 = vsel %vm455, %v8706, %v8656
        %v8708 = vsel %vm457, %v8707, %v8660
        %v8709 = vsel %vm459, %v8708, %v8664
        %v8710 = vsel %vm461, %v8709, %v8668
        %v8711 = vsel %vm463, %v8710, %v8672
        %v8712 = vsel %vm465, %v8711, %v8676
        %v8713 = vsel %vm453, %v8622, %v8680
        %v8714 = vsel %vm455, %v8713, %v8684
        %v8715 = vsel %vm457, %v8714, %v8688
        %v8716 = vsel %vm459, %v8715, %v8692
        %v8717 = vsel %vm461, %v8716, %v8696
        %v8718 = vsel %vm463, %v8717, %v8700
        %v8719 = vsel %vm465, %v8718, %v8704
        %v8720 = vld [vmem:[#allocation2 + $0x2] sm:$0xff]
        %v8721 = vld [vmem:[#allocation2 + $0xa] sm:$0xff]
        %v8722 = vld [vmem:[#allocation2 + $0x1a] sm:$0xff]
        %v8723 = vld [vmem:[#allocation2 + $0x22] sm:$0xff]
        %v8724 = vld [vmem:[#allocation2 + $0x32] sm:$0xff]
        %v8725 = vld [vmem:[#allocation2 + $0x3a] sm:$0xff]
        %v8726 = vld [vmem:[#allocation2 + $0x4a] sm:$0xff]
        %v8727 = vld [vmem:[#allocation2 + $0x52] sm:$0xff]
        %v8728 = vcombine.low %v8720, %v8724
        %v8729 = vcombine.high %v8720, %v8724
        %v8731 = vunpack.c.l.s4 1983009808
        %v8732 = vunpack.c.0.s8 %v8731
        %v8733 = vlaneseq
        %v8734 = vshrl.u32 %v8733, 7
        %v8735 = vsub.s32 %v8732, %v8734
        %v8736 = vrot.slane %v8728, %v8735
        %v8738 = vunpack.c.l.s4 1983009808
        %v8739 = vunpack.c.0.s8 %v8738
        %v8740 = vlaneseq
        %v8741 = vshrl.u32 %v8740, 7
        %v8742 = vsub.s32 %v8739, %v8741
        %v8743 = vrot.slane %v8729, %v8742
        %v8744 = vcombine.low %v8722, %v8726
        %v8745 = vcombine.high %v8722, %v8726
        %v8747 = vunpack.c.l.s4 1983009808
        %v8748 = vunpack.c.0.s8 %v8747
        %v8749 = vlaneseq
        %v8750 = vshrl.u32 %v8749, 7
        %v8751 = vsub.s32 %v8748, %v8750
        %v8752 = vrot.slane %v8744, %v8751
        %v8754 = vunpack.c.l.s4 1983009808
        %v8755 = vunpack.c.0.s8 %v8754
        %v8756 = vlaneseq
        %v8757 = vshrl.u32 %v8756, 7
        %v8758 = vsub.s32 %v8755, %v8757
        %v8759 = vrot.slane %v8745, %v8758
        %v8760 = vcombine.low %v8736, %v8752
        %v8761 = vcombine.high %v8736, %v8752
        %v8763 = vunpack.c.l.s4 1934713408
        %v8764 = vunpack.c.0.s8 %v8763
        %v8765 = vlaneseq
        %v8766 = vshrl.u32 %v8765, 7
        %v8767 = vsub.s32 %v8764, %v8766
        %v8768 = vrot.slane %v8760, %v8767
        %v8770 = vunpack.c.l.s4 1934713408
        %v8771 = vunpack.c.0.s8 %v8770
        %v8772 = vlaneseq
        %v8773 = vshrl.u32 %v8772, 7
        %v8774 = vsub.s32 %v8771, %v8773
        %v8775 = vrot.slane %v8761, %v8774
        %v8776 = vcombine.low %v8743, %v8759
        %v8777 = vcombine.high %v8743, %v8759
        %v8779 = vunpack.c.l.s4 1934713408
        %v8780 = vunpack.c.0.s8 %v8779
        %v8781 = vlaneseq
        %v8782 = vshrl.u32 %v8781, 7
        %v8783 = vsub.s32 %v8780, %v8782
        %v8784 = vrot.slane %v8776, %v8783
        %v8786 = vunpack.c.l.s4 1934713408
        %v8787 = vunpack.c.0.s8 %v8786
        %v8788 = vlaneseq
        %v8789 = vshrl.u32 %v8788, 7
        %v8790 = vsub.s32 %v8787, %v8789
        %v8791 = vrot.slane %v8777, %v8790
        %v8792 = vcombine.high %v8768, 0.0
        %v8793 = vcombine.high %v8775, 0.0
        %v8794 = vcombine.high %v8784, 0.0
        %v8795 = vcombine.high %v8791, 0.0
        %v8796 = vcombine.low %v8721, %v8725
        %v8797 = vcombine.high %v8721, %v8725
        %v8799 = vunpack.c.l.s4 1983009808
        %v8800 = vunpack.c.0.s8 %v8799
        %v8801 = vlaneseq
        %v8802 = vshrl.u32 %v8801, 7
        %v8803 = vsub.s32 %v8800, %v8802
        %v8804 = vrot.slane %v8796, %v8803
        %v8806 = vunpack.c.l.s4 1983009808
        %v8807 = vunpack.c.0.s8 %v8806
        %v8808 = vlaneseq
        %v8809 = vshrl.u32 %v8808, 7
        %v8810 = vsub.s32 %v8807, %v8809
        %v8811 = vrot.slane %v8797, %v8810
        %v8812 = vcombine.low %v8723, %v8727
        %v8813 = vcombine.high %v8723, %v8727
        %v8815 = vunpack.c.l.s4 1983009808
        %v8816 = vunpack.c.0.s8 %v8815
        %v8817 = vlaneseq
        %v8818 = vshrl.u32 %v8817, 7
        %v8819 = vsub.s32 %v8816, %v8818
        %v8820 = vrot.slane %v8812, %v8819
        %v8822 = vunpack.c.l.s4 1983009808
        %v8823 = vunpack.c.0.s8 %v8822
        %v8824 = vlaneseq
        %v8825 = vshrl.u32 %v8824, 7
        %v8826 = vsub.s32 %v8823, %v8825
        %v8827 = vrot.slane %v8813, %v8826
        %v8828 = vcombine.low %v8804, %v8820
        %v8829 = vcombine.high %v8804, %v8820
        %v8831 = vunpack.c.l.s4 1934713408
        %v8832 = vunpack.c.0.s8 %v8831
        %v8833 = vlaneseq
        %v8834 = vshrl.u32 %v8833, 7
        %v8835 = vsub.s32 %v8832, %v8834
        %v8836 = vrot.slane %v8828, %v8835
        %v8838 = vunpack.c.l.s4 1934713408
        %v8839 = vunpack.c.0.s8 %v8838
        %v8840 = vlaneseq
        %v8841 = vshrl.u32 %v8840, 7
        %v8842 = vsub.s32 %v8839, %v8841
        %v8843 = vrot.slane %v8829, %v8842
        %v8844 = vcombine.low %v8811, %v8827
        %v8845 = vcombine.high %v8811, %v8827
        %v8847 = vunpack.c.l.s4 1934713408
        %v8848 = vunpack.c.0.s8 %v8847
        %v8849 = vlaneseq
        %v8850 = vshrl.u32 %v8849, 7
        %v8851 = vsub.s32 %v8848, %v8850
        %v8852 = vrot.slane %v8844, %v8851
        %v8854 = vunpack.c.l.s4 1934713408
        %v8855 = vunpack.c.0.s8 %v8854
        %v8856 = vlaneseq
        %v8857 = vshrl.u32 %v8856, 7
        %v8858 = vsub.s32 %v8855, %v8857
        %v8859 = vrot.slane %v8845, %v8858
        %v8860 = vcombine.high %v8836, 0.0
        %v8861 = vcombine.high %v8843, 0.0
        %v8862 = vcombine.high %v8852, 0.0
        %v8863 = vcombine.high %v8859, 0.0
        %8865 = vrot.lane.b32.xlu0 %v8792, 16
        %v8866 = vpop.permute.xlu0 %8865
        %8869 = vrot.lane.b32.xlu0 %v8775, 32
        %v8870 = vpop.permute.xlu0 %8869
        %8873 = vrot.lane.b32.xlu0 %v8793, 48
        %v8874 = vpop.permute.xlu0 %8873
        %8877 = vrot.lane.b32.xlu0 %v8784, 64
        %v8878 = vpop.permute.xlu0 %8877
        %8881 = vrot.lane.b32.xlu0 %v8794, 80
        %v8882 = vpop.permute.xlu0 %8881
        %8885 = vrot.lane.b32.xlu0 %v8791, 96
        %v8886 = vpop.permute.xlu0 %8885
        %8889 = vrot.lane.b32.xlu0 %v8795, 112
        %v8890 = vpop.permute.xlu0 %8889
        %8893 = vrot.lane.b32.xlu0 %v8860, 16
        %v8894 = vpop.permute.xlu0 %8893
        %8897 = vrot.lane.b32.xlu0 %v8843, 32
        %v8898 = vpop.permute.xlu0 %8897
        %8901 = vrot.lane.b32.xlu0 %v8861, 48
        %v8902 = vpop.permute.xlu0 %8901
        %8905 = vrot.lane.b32.xlu0 %v8852, 64
        %v8906 = vpop.permute.xlu0 %8905
        %8909 = vrot.lane.b32.xlu0 %v8862, 80
        %v8910 = vpop.permute.xlu0 %8909
        %8913 = vrot.lane.b32.xlu0 %v8859, 96
        %v8914 = vpop.permute.xlu0 %8913
        %8917 = vrot.lane.b32.xlu0 %v8863, 112
        %v8918 = vpop.permute.xlu0 %8917
        %v8920 = vsel %vm453, %v8768, %v8866
        %v8921 = vsel %vm455, %v8920, %v8870
        %v8922 = vsel %vm457, %v8921, %v8874
        %v8923 = vsel %vm459, %v8922, %v8878
        %v8924 = vsel %vm461, %v8923, %v8882
        %v8925 = vsel %vm463, %v8924, %v8886
        %v8926 = vsel %vm465, %v8925, %v8890
        %v8927 = vsel %vm453, %v8836, %v8894
        %v8928 = vsel %vm455, %v8927, %v8898
        %v8929 = vsel %vm457, %v8928, %v8902
        %v8930 = vsel %vm459, %v8929, %v8906
        %v8931 = vsel %vm461, %v8930, %v8910
        %v8932 = vsel %vm463, %v8931, %v8914
        %v8933 = vsel %vm465, %v8932, %v8918
        %8942 = vrot.lane.b32.xlu0 %v8720, 127
        %v8943 = vpop.permute.xlu0 %8942
        %8944 = vrot.lane.b32.xlu0 %v8721, 127
        %v8945 = vpop.permute.xlu0 %8944
        %8946 = vrot.lane.b32.xlu0 %v8722, 127
        %v8947 = vpop.permute.xlu0 %8946
        %8948 = vrot.lane.b32.xlu0 %v8723, 127
        %v8949 = vpop.permute.xlu0 %8948
        %8950 = vrot.lane.b32.xlu0 %v8724, 127
        %v8951 = vpop.permute.xlu0 %8950
        %8952 = vrot.lane.b32.xlu0 %v8725, 127
        %v8953 = vpop.permute.xlu0 %8952
        %8954 = vrot.lane.b32.xlu0 %v8726, 127
        %v8955 = vpop.permute.xlu0 %8954
        %8956 = vrot.lane.b32.xlu0 %v8727, 127
        %v8957 = vpop.permute.xlu0 %8956
        %v8966 = vcombine.low %v8943, %v8951
        %v8967 = vcombine.high %v8943, %v8951
        %v8969 = vunpack.c.l.s4 1983009808
        %v8970 = vunpack.c.0.s8 %v8969
        %v8971 = vlaneseq
        %v8972 = vshrl.u32 %v8971, 7
        %v8973 = vsub.s32 %v8970, %v8972
        %v8974 = vrot.slane %v8966, %v8973
        %v8976 = vunpack.c.l.s4 1983009808
        %v8977 = vunpack.c.0.s8 %v8976
        %v8978 = vlaneseq
        %v8979 = vshrl.u32 %v8978, 7
        %v8980 = vsub.s32 %v8977, %v8979
        %v8981 = vrot.slane %v8967, %v8980
        %v8982 = vcombine.low %v8947, %v8955
        %v8983 = vcombine.high %v8947, %v8955
        %v8985 = vunpack.c.l.s4 1983009808
        %v8986 = vunpack.c.0.s8 %v8985
        %v8987 = vlaneseq
        %v8988 = vshrl.u32 %v8987, 7
        %v8989 = vsub.s32 %v8986, %v8988
        %v8990 = vrot.slane %v8982, %v8989
        %v8992 = vunpack.c.l.s4 1983009808
        %v8993 = vunpack.c.0.s8 %v8992
        %v8994 = vlaneseq
        %v8995 = vshrl.u32 %v8994, 7
        %v8996 = vsub.s32 %v8993, %v8995
        %v8997 = vrot.slane %v8983, %v8996
        %v8998 = vcombine.low %v8974, %v8990
        %v8999 = vcombine.high %v8974, %v8990
        %v9001 = vunpack.c.l.s4 1934713408
        %v9002 = vunpack.c.0.s8 %v9001
        %v9003 = vlaneseq
        %v9004 = vshrl.u32 %v9003, 7
        %v9005 = vsub.s32 %v9002, %v9004
        %v9006 = vrot.slane %v8998, %v9005
        %v9008 = vunpack.c.l.s4 1934713408
        %v9009 = vunpack.c.0.s8 %v9008
        %v9010 = vlaneseq
        %v9011 = vshrl.u32 %v9010, 7
        %v9012 = vsub.s32 %v9009, %v9011
        %v9013 = vrot.slane %v8999, %v9012
        %v9014 = vcombine.low %v8981, %v8997
        %v9015 = vcombine.high %v8981, %v8997
        %v9017 = vunpack.c.l.s4 1934713408
        %v9018 = vunpack.c.0.s8 %v9017
        %v9019 = vlaneseq
        %v9020 = vshrl.u32 %v9019, 7
        %v9021 = vsub.s32 %v9018, %v9020
        %v9022 = vrot.slane %v9014, %v9021
        %v9024 = vunpack.c.l.s4 1934713408
        %v9025 = vunpack.c.0.s8 %v9024
        %v9026 = vlaneseq
        %v9027 = vshrl.u32 %v9026, 7
        %v9028 = vsub.s32 %v9025, %v9027
        %v9029 = vrot.slane %v9015, %v9028
        %v9030 = vcombine.high %v9006, 0.0
        %v9031 = vcombine.high %v9013, 0.0
        %v9032 = vcombine.high %v9022, 0.0
        %v9033 = vcombine.high %v9029, 0.0
        %v9034 = vcombine.low %v8945, %v8953
        %v9035 = vcombine.high %v8945, %v8953
        %v9037 = vunpack.c.l.s4 1983009808
        %v9038 = vunpack.c.0.s8 %v9037
        %v9039 = vlaneseq
        %v9040 = vshrl.u32 %v9039, 7
        %v9041 = vsub.s32 %v9038, %v9040
        %v9042 = vrot.slane %v9034, %v9041
        %v9044 = vunpack.c.l.s4 1983009808
        %v9045 = vunpack.c.0.s8 %v9044
        %v9046 = vlaneseq
        %v9047 = vshrl.u32 %v9046, 7
        %v9048 = vsub.s32 %v9045, %v9047
        %v9049 = vrot.slane %v9035, %v9048
        %v9050 = vcombine.low %v8949, %v8957
        %v9051 = vcombine.high %v8949, %v8957
        %v9053 = vunpack.c.l.s4 1983009808
        %v9054 = vunpack.c.0.s8 %v9053
        %v9055 = vlaneseq
        %v9056 = vshrl.u32 %v9055, 7
        %v9057 = vsub.s32 %v9054, %v9056
        %v9058 = vrot.slane %v9050, %v9057
        %v9060 = vunpack.c.l.s4 1983009808
        %v9061 = vunpack.c.0.s8 %v9060
        %v9062 = vlaneseq
        %v9063 = vshrl.u32 %v9062, 7
        %v9064 = vsub.s32 %v9061, %v9063
        %v9065 = vrot.slane %v9051, %v9064
        %v9066 = vcombine.low %v9042, %v9058
        %v9067 = vcombine.high %v9042, %v9058
        %v9069 = vunpack.c.l.s4 1934713408
        %v9070 = vunpack.c.0.s8 %v9069
        %v9071 = vlaneseq
        %v9072 = vshrl.u32 %v9071, 7
        %v9073 = vsub.s32 %v9070, %v9072
        %v9074 = vrot.slane %v9066, %v9073
        %v9076 = vunpack.c.l.s4 1934713408
        %v9077 = vunpack.c.0.s8 %v9076
        %v9078 = vlaneseq
        %v9079 = vshrl.u32 %v9078, 7
        %v9080 = vsub.s32 %v9077, %v9079
        %v9081 = vrot.slane %v9067, %v9080
        %v9082 = vcombine.low %v9049, %v9065
        %v9083 = vcombine.high %v9049, %v9065
        %v9085 = vunpack.c.l.s4 1934713408
        %v9086 = vunpack.c.0.s8 %v9085
        %v9087 = vlaneseq
        %v9088 = vshrl.u32 %v9087, 7
        %v9089 = vsub.s32 %v9086, %v9088
        %v9090 = vrot.slane %v9082, %v9089
        %v9092 = vunpack.c.l.s4 1934713408
        %v9093 = vunpack.c.0.s8 %v9092
        %v9094 = vlaneseq
        %v9095 = vshrl.u32 %v9094, 7
        %v9096 = vsub.s32 %v9093, %v9095
        %v9097 = vrot.slane %v9083, %v9096
        %v9098 = vcombine.high %v9074, 0.0
        %v9099 = vcombine.high %v9081, 0.0
        %v9100 = vcombine.high %v9090, 0.0
        %v9101 = vcombine.high %v9097, 0.0
        %9103 = vrot.lane.b32.xlu0 %v9030, 16
        %v9104 = vpop.permute.xlu0 %9103
        %9107 = vrot.lane.b32.xlu0 %v9013, 32
        %v9108 = vpop.permute.xlu0 %9107
        %9111 = vrot.lane.b32.xlu0 %v9031, 48
        %v9112 = vpop.permute.xlu0 %9111
        %9115 = vrot.lane.b32.xlu0 %v9022, 64
        %v9116 = vpop.permute.xlu0 %9115
        %9119 = vrot.lane.b32.xlu0 %v9032, 80
        %v9120 = vpop.permute.xlu0 %9119
        %9123 = vrot.lane.b32.xlu0 %v9029, 96
        %v9124 = vpop.permute.xlu0 %9123
        %9127 = vrot.lane.b32.xlu0 %v9033, 112
        %v9128 = vpop.permute.xlu0 %9127
        %9131 = vrot.lane.b32.xlu0 %v9098, 16
        %v9132 = vpop.permute.xlu0 %9131
        %9135 = vrot.lane.b32.xlu0 %v9081, 32
        %v9136 = vpop.permute.xlu0 %9135
        %9139 = vrot.lane.b32.xlu0 %v9099, 48
        %v9140 = vpop.permute.xlu0 %9139
        %9143 = vrot.lane.b32.xlu0 %v9090, 64
        %v9144 = vpop.permute.xlu0 %9143
        %9147 = vrot.lane.b32.xlu0 %v9100, 80
        %v9148 = vpop.permute.xlu0 %9147
        %9151 = vrot.lane.b32.xlu0 %v9097, 96
        %v9152 = vpop.permute.xlu0 %9151
        %9155 = vrot.lane.b32.xlu0 %v9101, 112
        %v9156 = vpop.permute.xlu0 %9155
        %v9158 = vsel %vm453, %v9006, %v9104
        %v9159 = vsel %vm455, %v9158, %v9108
        %v9160 = vsel %vm457, %v9159, %v9112
        %v9161 = vsel %vm459, %v9160, %v9116
        %v9162 = vsel %vm461, %v9161, %v9120
        %v9163 = vsel %vm463, %v9162, %v9124
        %v9164 = vsel %vm465, %v9163, %v9128
        %v9165 = vsel %vm453, %v9074, %v9132
        %v9166 = vsel %vm455, %v9165, %v9136
        %v9167 = vsel %vm457, %v9166, %v9140
        %v9168 = vsel %vm459, %v9167, %v9144
        %v9169 = vsel %vm461, %v9168, %v9148
        %v9170 = vsel %vm463, %v9169, %v9152
        %v9171 = vsel %vm465, %v9170, %v9156
        %9172 = vrot.lane.b32.xlu0 %v8720, 126
        %v9173 = vpop.permute.xlu0 %9172
        %9174 = vrot.lane.b32.xlu0 %v8721, 126
        %v9175 = vpop.permute.xlu0 %9174
        %9176 = vrot.lane.b32.xlu0 %v8722, 126
        %v9177 = vpop.permute.xlu0 %9176
        %9178 = vrot.lane.b32.xlu0 %v8723, 126
        %v9179 = vpop.permute.xlu0 %9178
        %9180 = vrot.lane.b32.xlu0 %v8724, 126
        %v9181 = vpop.permute.xlu0 %9180
        %9182 = vrot.lane.b32.xlu0 %v8725, 126
        %v9183 = vpop.permute.xlu0 %9182
        %9184 = vrot.lane.b32.xlu0 %v8726, 126
        %v9185 = vpop.permute.xlu0 %9184
        %9186 = vrot.lane.b32.xlu0 %v8727, 126
        %v9187 = vpop.permute.xlu0 %9186
        %v9196 = vcombine.low %v9173, %v9181
        %v9197 = vcombine.high %v9173, %v9181
        %v9199 = vunpack.c.l.s4 1983009808
        %v9200 = vunpack.c.0.s8 %v9199
        %v9201 = vlaneseq
        %v9202 = vshrl.u32 %v9201, 7
        %v9203 = vsub.s32 %v9200, %v9202
        %v9204 = vrot.slane %v9196, %v9203
        %v9206 = vunpack.c.l.s4 1983009808
        %v9207 = vunpack.c.0.s8 %v9206
        %v9208 = vlaneseq
        %v9209 = vshrl.u32 %v9208, 7
        %v9210 = vsub.s32 %v9207, %v9209
        %v9211 = vrot.slane %v9197, %v9210
        %v9212 = vcombine.low %v9177, %v9185
        %v9213 = vcombine.high %v9177, %v9185
        %v9215 = vunpack.c.l.s4 1983009808
        %v9216 = vunpack.c.0.s8 %v9215
        %v9217 = vlaneseq
        %v9218 = vshrl.u32 %v9217, 7
        %v9219 = vsub.s32 %v9216, %v9218
        %v9220 = vrot.slane %v9212, %v9219
        %v9222 = vunpack.c.l.s4 1983009808
        %v9223 = vunpack.c.0.s8 %v9222
        %v9224 = vlaneseq
        %v9225 = vshrl.u32 %v9224, 7
        %v9226 = vsub.s32 %v9223, %v9225
        %v9227 = vrot.slane %v9213, %v9226
        %v9228 = vcombine.low %v9204, %v9220
        %v9229 = vcombine.high %v9204, %v9220
        %v9231 = vunpack.c.l.s4 1934713408
        %v9232 = vunpack.c.0.s8 %v9231
        %v9233 = vlaneseq
        %v9234 = vshrl.u32 %v9233, 7
        %v9235 = vsub.s32 %v9232, %v9234
        %v9236 = vrot.slane %v9228, %v9235
        %v9238 = vunpack.c.l.s4 1934713408
        %v9239 = vunpack.c.0.s8 %v9238
        %v9240 = vlaneseq
        %v9241 = vshrl.u32 %v9240, 7
        %v9242 = vsub.s32 %v9239, %v9241
        %v9243 = vrot.slane %v9229, %v9242
        %v9244 = vcombine.low %v9211, %v9227
        %v9245 = vcombine.high %v9211, %v9227
        %v9247 = vunpack.c.l.s4 1934713408
        %v9248 = vunpack.c.0.s8 %v9247
        %v9249 = vlaneseq
        %v9250 = vshrl.u32 %v9249, 7
        %v9251 = vsub.s32 %v9248, %v9250
        %v9252 = vrot.slane %v9244, %v9251
        %v9254 = vunpack.c.l.s4 1934713408
        %v9255 = vunpack.c.0.s8 %v9254
        %v9256 = vlaneseq
        %v9257 = vshrl.u32 %v9256, 7
        %v9258 = vsub.s32 %v9255, %v9257
        %v9259 = vrot.slane %v9245, %v9258
        %v9260 = vcombine.high %v9236, 0.0
        %v9261 = vcombine.high %v9243, 0.0
        %v9262 = vcombine.high %v9252, 0.0
        %v9263 = vcombine.high %v9259, 0.0
        %v9264 = vcombine.low %v9175, %v9183
        %v9265 = vcombine.high %v9175, %v9183
        %v9267 = vunpack.c.l.s4 1983009808
        %v9268 = vunpack.c.0.s8 %v9267
        %v9269 = vlaneseq
        %v9270 = vshrl.u32 %v9269, 7
        %v9271 = vsub.s32 %v9268, %v9270
        %v9272 = vrot.slane %v9264, %v9271
        %v9274 = vunpack.c.l.s4 1983009808
        %v9275 = vunpack.c.0.s8 %v9274
        %v9276 = vlaneseq
        %v9277 = vshrl.u32 %v9276, 7
        %v9278 = vsub.s32 %v9275, %v9277
        %v9279 = vrot.slane %v9265, %v9278
        %v9280 = vcombine.low %v9179, %v9187
        %v9281 = vcombine.high %v9179, %v9187
        %v9283 = vunpack.c.l.s4 1983009808
        %v9284 = vunpack.c.0.s8 %v9283
        %v9285 = vlaneseq
        %v9286 = vshrl.u32 %v9285, 7
        %v9287 = vsub.s32 %v9284, %v9286
        %v9288 = vrot.slane %v9280, %v9287
        %v9290 = vunpack.c.l.s4 1983009808
        %v9291 = vunpack.c.0.s8 %v9290
        %v9292 = vlaneseq
        %v9293 = vshrl.u32 %v9292, 7
        %v9294 = vsub.s32 %v9291, %v9293
        %v9295 = vrot.slane %v9281, %v9294
        %v9296 = vcombine.low %v9272, %v9288
        %v9297 = vcombine.high %v9272, %v9288
        %v9299 = vunpack.c.l.s4 1934713408
        %v9300 = vunpack.c.0.s8 %v9299
        %v9301 = vlaneseq
        %v9302 = vshrl.u32 %v9301, 7
        %v9303 = vsub.s32 %v9300, %v9302
        %v9304 = vrot.slane %v9296, %v9303
        %v9306 = vunpack.c.l.s4 1934713408
        %v9307 = vunpack.c.0.s8 %v9306
        %v9308 = vlaneseq
        %v9309 = vshrl.u32 %v9308, 7
        %v9310 = vsub.s32 %v9307, %v9309
        %v9311 = vrot.slane %v9297, %v9310
        %v9312 = vcombine.low %v9279, %v9295
        %v9313 = vcombine.high %v9279, %v9295
        %v9315 = vunpack.c.l.s4 1934713408
        %v9316 = vunpack.c.0.s8 %v9315
        %v9317 = vlaneseq
        %v9318 = vshrl.u32 %v9317, 7
        %v9319 = vsub.s32 %v9316, %v9318
        %v9320 = vrot.slane %v9312, %v9319
        %v9322 = vunpack.c.l.s4 1934713408
        %v9323 = vunpack.c.0.s8 %v9322
        %v9324 = vlaneseq
        %v9325 = vshrl.u32 %v9324, 7
        %v9326 = vsub.s32 %v9323, %v9325
        %v9327 = vrot.slane %v9313, %v9326
        %v9328 = vcombine.high %v9304, 0.0
        %v9329 = vcombine.high %v9311, 0.0
        %v9330 = vcombine.high %v9320, 0.0
        %v9331 = vcombine.high %v9327, 0.0
        %9333 = vrot.lane.b32.xlu0 %v9260, 16
        %v9334 = vpop.permute.xlu0 %9333
        %9337 = vrot.lane.b32.xlu0 %v9243, 32
        %v9338 = vpop.permute.xlu0 %9337
        %9341 = vrot.lane.b32.xlu0 %v9261, 48
        %v9342 = vpop.permute.xlu0 %9341
        %9345 = vrot.lane.b32.xlu0 %v9252, 64
        %v9346 = vpop.permute.xlu0 %9345
        %9349 = vrot.lane.b32.xlu0 %v9262, 80
        %v9350 = vpop.permute.xlu0 %9349
        %9353 = vrot.lane.b32.xlu0 %v9259, 96
        %v9354 = vpop.permute.xlu0 %9353
        %9357 = vrot.lane.b32.xlu0 %v9263, 112
        %v9358 = vpop.permute.xlu0 %9357
        %9361 = vrot.lane.b32.xlu0 %v9328, 16
        %v9362 = vpop.permute.xlu0 %9361
        %9365 = vrot.lane.b32.xlu0 %v9311, 32
        %v9366 = vpop.permute.xlu0 %9365
        %9369 = vrot.lane.b32.xlu0 %v9329, 48
        %v9370 = vpop.permute.xlu0 %9369
        %9373 = vrot.lane.b32.xlu0 %v9320, 64
        %v9374 = vpop.permute.xlu0 %9373
        %9377 = vrot.lane.b32.xlu0 %v9330, 80
        %v9378 = vpop.permute.xlu0 %9377
        %9381 = vrot.lane.b32.xlu0 %v9327, 96
        %v9382 = vpop.permute.xlu0 %9381
        %9385 = vrot.lane.b32.xlu0 %v9331, 112
        %v9386 = vpop.permute.xlu0 %9385
        %v9388 = vsel %vm453, %v9236, %v9334
        %v9389 = vsel %vm455, %v9388, %v9338
        %v9390 = vsel %vm457, %v9389, %v9342
        %v9391 = vsel %vm459, %v9390, %v9346
        %v9392 = vsel %vm461, %v9391, %v9350
        %v9393 = vsel %vm463, %v9392, %v9354
        %v9394 = vsel %vm465, %v9393, %v9358
        %v9395 = vsel %vm453, %v9304, %v9362
        %v9396 = vsel %vm455, %v9395, %v9366
        %v9397 = vsel %vm457, %v9396, %v9370
        %v9398 = vsel %vm459, %v9397, %v9374
        %v9399 = vsel %vm461, %v9398, %v9378
        %v9400 = vsel %vm463, %v9399, %v9382
        %v9401 = vsel %vm465, %v9400, %v9386
        %v9404 = vrot.slane %v7800, 4
        %v9405 = vrot.slane %v7807, 4
        %v9410 = vrot.slane %v8244, 4
        %v9411 = vrot.slane %v8251, 4
        %v9416 = vrot.slane %v8712, 4
        %v9417 = vrot.slane %v8719, 4
        %v9422 = vrot.slane %v9164, 4
        %v9423 = vrot.slane %v9171, 4
        %v9426 = vsel %vm2330, %v7562, %v9404
        %v9427 = vsel %vm2330, %v7569, %v9405
        %v9428 = vsel %vm2330, %v8030, %v9410
        %v9429 = vsel %vm2330, %v8037, %v9411
        %v9430 = vsel %vm2330, %v8482, %v9416
        %v9431 = vsel %vm2330, %v8489, %v9417
        %v9432 = vsel %vm2330, %v8926, %v9422
        %v9433 = vsel %vm2330, %v8933, %v9423
        %v9434 = vpack.c.bf16 %v9428, %v9426
        %v9435 = vpack.c.bf16 %v9429, %v9427
        %v9436 = vpack.c.bf16 %v9432, %v9430
        %v9437 = vpack.c.bf16 %v9433, %v9431
        %v9438 = vpack.c.bf16 %v9394, %v9394
        %v9439 = vpack.c.bf16 %v9401, %v9401
        %s9440 = scalar_lea.vmem %s1, 6
        %v9441 = vld [vmem:[%s9440] sm:$0x3]
        %s9442 = scalar_lea.vmem %s2, 12
        %v9443 = vld [vmem:[%s9442] sm:$0xf]
        %9445 = vset.pattern.permute.xlu0 0
        %9446 = vperm.xlu0 %9445, %v9443
        %v9447 = vpop.permute.xlu0 %9446
        %v9450 = vsel %vm2352, %v9441, 0
        %v9453 = vsel %vm2356, %v9438, 0
        %v9456 = vsel %vm2356, %v9439, 0
        %9458 = vmatprep.subr.bf16.mxu0 0
        %9459 = vmatpush1.bf16.msra.mxu0 0
        %9460 = vmatprep.subr.bf16.mxu0 0
        %9461 = vmatpush1.bf16.msra.mxu0 0
        %9462 = vmatprep.subr.bf16.mxu0 0
        %9463 = vmatpush1.bf16.msra.mxu0 0
        %9464 = vmatprep.subr.bf16.mxu0 0
        %9465 = vmatpush1.bf16.msra.mxu0 0
        %9466 = vmatprep.subr.bf16.mxu0 0
        %9467 = vmatpush1.bf16.msra.mxu0 0
        %9468 = vmatprep.subr.bf16.mxu0 %v9456
        %9469 = vmatpush1.bf16.msra.mxu0 %v9453
        %9470 = vmatprep.subr.bf16.mxu0 %v9437
        %9471 = vmatpush1.bf16.msra.mxu0 %v9436
        %9472 = vmatprep.subr.bf16.mxu0 %v9435
        %9473 = vmatpush1.bf16.msra.mxu0 %v9434
        %9474 = vmatprep.subr.bf16.mxu0 0
        %9475 = vmatpush2.bf16.msra.mxu0 0
        %9476 = vmatprep.subr.bf16.mxu0 0
        %9477 = vmatpush2.bf16.msra.mxu0 0
        %9478 = vmatprep.subr.bf16.mxu0 0
        %9479 = vmatpush2.bf16.msra.mxu0 0
        %9480 = vmatprep.subr.bf16.mxu0 0
        %9481 = vmatpush2.bf16.msra.mxu0 0
        %9482 = vmatprep.subr.bf16.mxu0 0
        %9483 = vmatpush2.bf16.msra.mxu0 0
        %9484 = vmatprep.subr.bf16.mxu0 0
        %9485 = vmatpush2.bf16.msra.mxu0 0
        %9486 = vmatprep.subr.bf16.mxu0 0
        %9487 = vmatpush2.bf16.msra.mxu0 0
        %9488 = vmatprep.subr.bf16.mxu0 0
        %9489 = vmatpush2.bf16.msra.mxu0 0
        %9490 = vmatprep.mubr.bf16.mxu0 0
        %9491 = vmatmul.mubr.bf16.gmra.mxu0 %v9450
        %v9492 = vpop.f32.mrf.mxu0
        %v9493 = vadd.f32 %v9447, %v9492
        %v9494 = vpop.f32.mrf.mxu0
        %v9495 = vadd.f32 %v9447, %v9494
        %v9496 = vpop.f32.mrf.mxu0
        %v9497 = vpop.f32.mrf.mxu0
        %9498 = vdwg.mxu0
        %v9499 = vmax.f32 %v9493, 0.0
        %v9500 = vmax.f32 %v9495, 0.0
        %v9501 = vrot.slane %v4769, 4
        %v9502 = vrot.slane %v4770, 4
        %v9507 = vrot.slane %v9499, 4
        %v9508 = vrot.slane %v9500, 4
        %v9511 = vsel %vm2330, %v2404, %v9501
        %v9512 = vsel %vm2330, %v2405, %v9502
        %v9513 = vsel %vm2330, %v7134, %v9507
        %v9514 = vsel %vm2330, %v7135, %v9508
        %9515 = vst [vmem:[%s188] sm:$0xff] %v9511
        %9516 = vst [vmem:[%s188 + $0x8] sm:$0xff] %v9512
        %9517 = vst [vmem:[%s188 + $0x10] sm:$0xff] %v9513
        %9518 = vst [vmem:[%s188 + $0x18] sm:$0xff] %v9514
        %s9519 = sand.u32 %s96, 1
        %s9520 = scalar_lea.sflag [#allocation5], %s9519
        %s9521 = sand.u32 %s96, 1
        %s9522 = smul.addr %s9521, 32
        %s9523 = scalar_lea.vmem [#allocation6], %s9522
        // Predicated region
        $region37: #{tpu_custom_call.1} parent=31 // pred_check
          %p9524 = pneg %p106
        $region38: #{tpu_custom_call.1} parent=31 // pred_check_branch
          %9526 = sbr.rel (%p9524) target = $region40
        $region39: #{tpu_custom_call.1} parent=31 // pred_region
          %s9528 = ssub.s32 512, 512
          %9529 = vsyncadd %s9520, %s9528
          %s9530 = smul.addr %s20, 4
          %s9531 = smul.addr %s9530, 128
          %s9532 = scalar_lea.hbm %s3, %s9531
          %s9533 = sshll.u32 %s9523, 4
          %s9534 = int_to_ptr.vmem [resolvable:$true] %s9533
          %9539 = dma.vmem_to_hbm [thread:$0]  %s9534, 512, %s9532, %s9520, 256, 256, 16
        $region40: #{tpu_custom_call.1} parent=31 // pred_fallthru
          _
      $region32: #{tpu_custom_call.1} parent=5 // pred_fallthru
        _
      %p9540 = scmp.le.s32.totalorder 2, %s15
      // Predicated region
      $region41: #{tpu_custom_call.1} parent=5 // pred_check
        %p9541 = pneg %p9540
      $region42: #{tpu_custom_call.1} parent=5 // pred_check_branch
        %9543 = sbr.rel (%p9541) target = $region44
      $region43: #{tpu_custom_call.1} parent=5 // pred_region
        %s9544 = ssub.s32 %s15, 2
        // Predicated region
        $region45: #{tpu_custom_call.1} parent=43 // pred_check
          %p9545 = pneg %p112
        $region46: #{tpu_custom_call.1} parent=43 // pred_check_branch
          %9547 = sbr.rel (%p9545) target = $region48
        $region47: #{tpu_custom_call.1} parent=43 // pred_region
          %s9548 = sand.u32 %s97, 1
          %s9549 = scalar_lea.sflag [#allocation5], %s9548
          %s9550 = sand.u32 %s97, 1
          %s9551 = smul.addr %s9550, 32
          %s9552 = scalar_lea.vmem [#allocation6], %s9551
          %9553 = dma.done %s9549, 512
        $region48: #{tpu_custom_call.1} parent=43 // pred_fallthru
          _
      $region44: #{tpu_custom_call.1} parent=5 // pred_fallthru
        _
    $region6: #{tpu_custom_call.1} parent=1 // loop_footer
      %s19 = sadd.s32 1, %s15
    $region7: #{tpu_custom_call.1} parent=1 // loop_footer_branch
      %14 = sbr.rel target = $region3
    $region8: #{tpu_custom_call.1} parent=1 // loop_exit
      _
    %9554 = vsyncpa [#allocation4], 1
    %s9555 = scalar_lea.sflag [#allocation4], 1
    %9556 = vsyncpa %s9555, 1
    %9557 = vsyncpa [#allocation5], 1
    %s9558 = scalar_lea.sflag [#allocation5], 1
    %9559 = vsyncpa %s9558, 1

</llo_original>
